<compile_context>
chip_gen: v7x
topology: tpu7x:2x2x1
jax: 0.10.0
libtpu: 0.0.40
codegen_flags: <defaults>
</compile_context>

<pallas_src>
import functools

import jax
import jax.numpy as jnp
from jax.experimental import pallas as pl
from jax.experimental.pallas import tpu as pltpu

SEGMENT_SIZE = 8
LN_EPS = 1e-5


def _layer_norm(x, gamma, beta):
    mu = jnp.mean(x, axis=-1, keepdims=True)
    var = jnp.mean((x - mu) ** 2, axis=-1, keepdims=True)
    return (x - mu) * jax.lax.rsqrt(var + LN_EPS) * gamma + beta


def seg_attn_kernel(tok_ref, pool_ref, bias_ref, hmask_ref, outpool_ref,
                    wq_ref, wk_ref, wv_ref, bq_ref, bk_ref, bv_ref,
                    wo_ref, bo_ref, w1_ref, b1_ref, w2_ref, b2_ref,
                    ln1w_ref, ln1b_ref, ln2w_ref, ln2b_ref,
                    out_ref, *, n_layers, n_heads):
    f32 = jnp.float32

    # Segment-mean pooling as ONE MXU matmul:
    #   (TB*n_seg, 8*D) @ (8*D, D) -> (TB*n_seg, D)
    x = jnp.dot(tok_ref[...], pool_ref[...], preferred_element_type=f32)

    for l in range(n_layers):
        # Q/K/V projections on the stacked (TB*n_seg, D) activation.
        # wq / bq already carry the 1/sqrt(head_dim) scale (folded in wrapper).
        q = jnp.dot(x, wq_ref[l], preferred_element_type=f32) + bq_ref[l]
        k = jnp.dot(x, wk_ref[l], preferred_element_type=f32) + bk_ref[l]
        v = jnp.dot(x, wv_ref[l], preferred_element_type=f32) + bv_ref[l]

        attn = jnp.zeros_like(x)
        for h in range(n_heads):
            mh = hmask_ref[h]                       # (1, D) head-column mask
            # Head-h scores: zero the other head's columns of q and contract
            # over the full D (lane-contiguous, no 16-wide lane slices).
            s = jax.lax.dot_general(q * mh, k, (((1,), (1,)), ((), ())),
                                    preferred_element_type=f32)
            s = s + bias_ref[...]                   # block-diag batch mask
            m = jnp.max(s, axis=-1, keepdims=True)
            e = jnp.exp(s - m)
            p = e * pl.reciprocal(jnp.sum(e, axis=-1, keepdims=True),
                                  approx=True)
            # v*mh is zero outside head h's columns, so summing the per-head
            # outputs is exactly the head concatenation.
            attn = attn + jnp.dot(p, v * mh, preferred_element_type=f32)

        attn = jnp.dot(attn, wo_ref[l], preferred_element_type=f32) + bo_ref[l]
        x = _layer_norm(x + attn, ln1w_ref[l], ln1b_ref[l])

        h1 = jnp.maximum(
            jnp.dot(x, w1_ref[l], preferred_element_type=f32) + b1_ref[l], 0.0)
        ff = jnp.dot(h1, w2_ref[l], preferred_element_type=f32) + b2_ref[l]
        x = _layer_norm(x + ff, ln2w_ref[l], ln2b_ref[l])

    # Per-batch mean over segments as one matmul; lane-dense (TB, D) store.
    out_ref[...] = jnp.dot(outpool_ref[...], x,
                           preferred_element_type=f32).astype(out_ref.dtype)


def segment_level_self_attention(tok, params, *, n_heads=2, target_rows=128):
    """tok: (B, N, D) float32 -> (B, D) float32."""
    B, N, D = tok.shape
    n_seg = N // SEGMENT_SIZE
    hd = D // n_heads
    scale = 1.0 / float(hd) ** 0.5

    (wqkv, bqkv, wo, bo, w1, b1, w2, b2, ln1w, ln1b, ln2w, ln2b) = params
    L = wqkv.shape[0]

    # One-time wrapper-side weight preprocessing (outside the kernel):
    # split fused QKV, transpose everything to (in_features, out_features),
    # fold the per-head 1/sqrt(hd) scale into the Q projection.
    wq = jnp.transpose(wqkv[:, 0 * D:1 * D, :], (0, 2, 1)) * scale
    wk = jnp.transpose(wqkv[:, 1 * D:2 * D, :], (0, 2, 1))
    wv = jnp.transpose(wqkv[:, 2 * D:3 * D, :], (0, 2, 1))
    bq = bqkv[:, :, 0 * D:1 * D] * scale
    bk = bqkv[:, :, 1 * D:2 * D]
    bv = bqkv[:, :, 2 * D:3 * D]
    woT = jnp.transpose(wo, (0, 2, 1))
    w1T = jnp.transpose(w1, (0, 2, 1))
    w2T = jnp.transpose(w2, (0, 2, 1))
    weights = [wq, wk, wv, bq, bk, bv, woT, bo, w1T, b1, w2T, b2,
               ln1w, ln1b, ln2w, ln2b]

    # Batch blocking: stack TB batches (TB * n_seg rows) per grid step.
    TB = max(1, target_rows // n_seg)
    if TB < B:
        TB = max(8, (TB // 8) * 8)          # keep blocked dims 8-aligned
    else:
        TB = B                              # single block == full arrays
    n_blocks = pl.cdiv(B, TB)
    B_pad = n_blocks * TB
    rows = TB * n_seg

    tok_c = tok[:, :n_seg * SEGMENT_SIZE, :]
    if B_pad != B:
        tok_c = jnp.concatenate(
            [tok_c,
             jnp.zeros((B_pad - B, n_seg * SEGMENT_SIZE, D), tok.dtype)],
            axis=0)
    # (B_pad, n_seg*8, D) -> (B_pad*n_seg, 8*D): one segment per row.
    tok2d = tok_c.reshape(B_pad * n_seg, SEGMENT_SIZE * D).astype(jnp.float32)

    # Grid-invariant constant operands.
    pool = (jnp.tile(jnp.eye(D, dtype=jnp.float32), (SEGMENT_SIZE, 1))
            / SEGMENT_SIZE)                                     # (8*D, D)
    bidx = jnp.arange(rows, dtype=jnp.int32) // n_seg
    attn_bias = jnp.where(bidx[:, None] == bidx[None, :],
                          0.0, -1e30).astype(jnp.float32)       # (rows, rows)
    head_of_col = jnp.arange(D, dtype=jnp.int32) // hd
    hmask = (head_of_col[None, None, :]
             == jnp.arange(n_heads, dtype=jnp.int32)[:, None, None]
             ).astype(jnp.float32)                              # (H, 1, D)
    outpool = jnp.where(
        jnp.arange(TB, dtype=jnp.int32)[:, None] == bidx[None, :],
        1.0 / n_seg, 0.0).astype(jnp.float32)                   # (TB, rows)

    def const_spec(a):
        return pl.BlockSpec(a.shape, lambda i, nd=a.ndim: (0,) * nd)

    in_specs = [pl.BlockSpec((rows, SEGMENT_SIZE * D), lambda i: (i, 0)),
                const_spec(pool), const_spec(attn_bias),
                const_spec(hmask), const_spec(outpool)]
    in_specs += [const_spec(w) for w in weights]

    kern = functools.partial(seg_attn_kernel, n_layers=L, n_heads=n_heads)

    out = pl.pallas_call(
        kern,
        out_shape=jax.ShapeDtypeStruct((B_pad, D), jnp.float32),
        grid=(n_blocks,),
        in_specs=in_specs,
        out_specs=pl.BlockSpec((TB, D), lambda i: (i, 0)),
        compiler_params=pltpu.CompilerParams(
            dimension_semantics=("parallel",)),
    )(tok2d, pool, attn_bias, hmask, outpool, *weights)
    return out[:B]


def init_params(key, d, heads=2, layers=2, f=256):
    ks = jax.random.split(key, 8)
    s = 0.05
    wqkv = s * jax.random.normal(ks[0], (layers, 3 * d, d), jnp.float32)
    bqkv = s * jax.random.normal(ks[1], (layers, 1, 3 * d), jnp.float32)
    wo = s * jax.random.normal(ks[2], (layers, d, d), jnp.float32)
    bo = s * jax.random.normal(ks[3], (layers, 1, d), jnp.float32)
    w1 = s * jax.random.normal(ks[4], (layers, f, d), jnp.float32)
    b1 = s * jax.random.normal(ks[5], (layers, 1, f), jnp.float32)
    w2 = s * jax.random.normal(ks[6], (layers, d, f), jnp.float32)
    b2 = s * jax.random.normal(ks[7], (layers, 1, d), jnp.float32)
    ln1w = jnp.ones((layers, 1, d), jnp.float32)
    ln1b = jnp.zeros((layers, 1, d), jnp.float32)
    ln2w = jnp.ones((layers, 1, d), jnp.float32)
    ln2b = jnp.zeros((layers, 1, d), jnp.float32)
    return (wqkv, bqkv, wo, bo, w1, b1, w2, b2, ln1w, ln1b, ln2w, ln2b)


def reference_jax(tok, params, *, n_heads=2):
    """Pure-JAX reference mirroring the PyTorch forward (eval mode)."""
    (wqkv, bqkv, wo, bo, w1, b1, w2, b2, ln1w, ln1b, ln2w, ln2b) = params
    B, N, D = tok.shape
    n = N // SEGMENT_SIZE
    x = tok[:, :n * SEGMENT_SIZE, :].reshape(B, n, SEGMENT_SIZE, D).mean(2)
    L = wqkv.shape[0]
    hd = D // n_heads
    for l in range(L):
        qkv = jnp.einsum('bnd,ed->bne', x, wqkv[l]) + bqkv[l]
        q, k, v = jnp.split(qkv, 3, axis=-1)
        q = q.reshape(B, n, n_heads, hd).transpose(0, 2, 1, 3) / (hd ** 0.5)
        k = k.reshape(B, n, n_heads, hd).transpose(0, 2, 1, 3)
        v = v.reshape(B, n, n_heads, hd).transpose(0, 2, 1, 3)
        p = jax.nn.softmax(jnp.einsum('bhqd,bhkd->bhqk', q, k), axis=-1)
        a = jnp.einsum('bhqk,bhkd->bhqd', p, v).transpose(0, 2, 1, 3).reshape(B, n, D)
        a = jnp.einsum('bnd,ed->bne', a, wo[l]) + bo[l]
        x = _layer_norm(x + a, ln1w[l], ln1b[l])
        h1 = jax.nn.relu(jnp.einsum('bnd,fd->bnf', x, w1[l]) + b1[l])
        ff = jnp.einsum('bnf,df->bnd', h1, w2[l]) + b2[l]
        x = _layer_norm(x + ff, ln2w[l], ln2b[l])
    return x.mean(1)


if __name__ == "__main__":
    key = jax.random.PRNGKey(0)
    k_tok, k_par = jax.random.split(key)

    # B=24 exercises both full 128-row blocks (TB=16) and batch padding.
    B, N, D = 24, 64, 32          # n_seg = N // SEGMENT_SIZE = 8 segments
    tok = jax.random.normal(k_tok, (B, N, D), jnp.float32)
    params = init_params(k_par, D, heads=2, layers=2, f=256)

    out = segment_level_self_attention(tok, params, n_heads=2)
    out = jax.block_until_ready(out)

    ref = reference_jax(tok, params, n_heads=2)
    assert out.shape == (B, D)
    assert bool(jnp.all(jnp.isfinite(out)))
    assert bool(jnp.allclose(out, ref, atol=1e-3, rtol=1e-3))

    print("KERNEL_OK")
</pallas_src>

<mosaic_0001>
module attributes {stable_mosaic.version = 11 : i64} {
  func.func @seg_attn_kernel(%arg0: i32, %arg1: memref<128x256xf32, #tpu.memory_space<vmem>>, %arg2: memref<256x32xf32, #tpu.memory_space<vmem>>, %arg3: memref<128x128xf32, #tpu.memory_space<vmem>>, %arg4: memref<2x1x32xf32, #tpu.memory_space<vmem>>, %arg5: memref<16x128xf32, #tpu.memory_space<vmem>>, %arg6: memref<2x32x32xf32, #tpu.memory_space<vmem>>, %arg7: memref<2x32x32xf32, #tpu.memory_space<vmem>>, %arg8: memref<2x32x32xf32, #tpu.memory_space<vmem>>, %arg9: memref<2x1x32xf32, #tpu.memory_space<vmem>>, %arg10: memref<2x1x32xf32, #tpu.memory_space<vmem>>, %arg11: memref<2x1x32xf32, #tpu.memory_space<vmem>>, %arg12: memref<2x32x32xf32, #tpu.memory_space<vmem>>, %arg13: memref<2x1x32xf32, #tpu.memory_space<vmem>>, %arg14: memref<2x32x256xf32, #tpu.memory_space<vmem>>, %arg15: memref<2x1x256xf32, #tpu.memory_space<vmem>>, %arg16: memref<2x256x32xf32, #tpu.memory_space<vmem>>, %arg17: memref<2x1x32xf32, #tpu.memory_space<vmem>>, %arg18: memref<2x1x32xf32, #tpu.memory_space<vmem>>, %arg19: memref<2x1x32xf32, #tpu.memory_space<vmem>>, %arg20: memref<2x1x32xf32, #tpu.memory_space<vmem>>, %arg21: memref<2x1x32xf32, #tpu.memory_space<vmem>>, %arg22: memref<16x32xf32, #tpu.memory_space<vmem>>) attributes {dimension_semantics = [#tpu.dimension_semantics<parallel>], iteration_bounds = array<i64: 2>, scalar_prefetch = 0 : i64, scratch_operands = 0 : i64, tpu.core_type = #tpu.core_type<tc>, window_params = [{transform_indices = @transform_0, window_bounds = array<i64: 128, 256>}, {pipeline_mode = #tpu.pipeline_mode<synchronous>, transform_indices = @transform_1, window_bounds = array<i64: 256, 32>}, {pipeline_mode = #tpu.pipeline_mode<synchronous>, transform_indices = @transform_2, window_bounds = array<i64: 128, 128>}, {pipeline_mode = #tpu.pipeline_mode<synchronous>, transform_indices = @transform_3, window_bounds = array<i64: 2, 1, 32>}, {pipeline_mode = #tpu.pipeline_mode<synchronous>, transform_indices = @transform_4, window_bounds = array<i64: 16, 128>}, {pipeline_mode = #tpu.pipeline_mode<synchronous>, transform_indices = @transform_5, window_bounds = array<i64: 2, 32, 32>}, {pipeline_mode = #tpu.pipeline_mode<synchronous>, transform_indices = @transform_6, window_bounds = array<i64: 2, 32, 32>}, {pipeline_mode = #tpu.pipeline_mode<synchronous>, transform_indices = @transform_7, window_bounds = array<i64: 2, 32, 32>}, {pipeline_mode = #tpu.pipeline_mode<synchronous>, transform_indices = @transform_8, window_bounds = array<i64: 2, 1, 32>}, {pipeline_mode = #tpu.pipeline_mode<synchronous>, transform_indices = @transform_9, window_bounds = array<i64: 2, 1, 32>}, {pipeline_mode = #tpu.pipeline_mode<synchronous>, transform_indices = @transform_10, window_bounds = array<i64: 2, 1, 32>}, {pipeline_mode = #tpu.pipeline_mode<synchronous>, transform_indices = @transform_11, window_bounds = array<i64: 2, 32, 32>}, {pipeline_mode = #tpu.pipeline_mode<synchronous>, transform_indices = @transform_12, window_bounds = array<i64: 2, 1, 32>}, {pipeline_mode = #tpu.pipeline_mode<synchronous>, transform_indices = @transform_13, window_bounds = array<i64: 2, 32, 256>}, {pipeline_mode = #tpu.pipeline_mode<synchronous>, transform_indices = @transform_14, window_bounds = array<i64: 2, 1, 256>}, {pipeline_mode = #tpu.pipeline_mode<synchronous>, transform_indices = @transform_15, window_bounds = array<i64: 2, 256, 32>}, {pipeline_mode = #tpu.pipeline_mode<synchronous>, transform_indices = @transform_16, window_bounds = array<i64: 2, 1, 32>}, {pipeline_mode = #tpu.pipeline_mode<synchronous>, transform_indices = @transform_17, window_bounds = array<i64: 2, 1, 32>}, {pipeline_mode = #tpu.pipeline_mode<synchronous>, transform_indices = @transform_18, window_bounds = array<i64: 2, 1, 32>}, {pipeline_mode = #tpu.pipeline_mode<synchronous>, transform_indices = @transform_19, window_bounds = array<i64: 2, 1, 32>}, {pipeline_mode = #tpu.pipeline_mode<synchronous>, transform_indices = @transform_20, window_bounds = array<i64: 2, 1, 32>}, {transform_indices = @transform_21, window_bounds = array<i64: 16, 32>}]} {
    %c0 = arith.constant 0 : index
    %c0_0 = arith.constant 0 : index
    %0 = vector.load %arg1[%c0, %c0_0] : memref<128x256xf32, #tpu.memory_space<vmem>>, vector<128x256xf32>
    %c0_1 = arith.constant 0 : index
    %c0_2 = arith.constant 0 : index
    %1 = vector.load %arg2[%c0_1, %c0_2] : memref<256x32xf32, #tpu.memory_space<vmem>>, vector<256x32xf32>
    %cst = arith.constant dense<0.000000e+00> : vector<128x32xf32>
    %2 = tpu.matmul %0, %1, %cst {dimension_numbers = #tpu.dot_dimension_numbers<[1], [0], [0], [1], [0, 0, 1, 1], [], []>} : vector<128x256xf32>, vector<256x32xf32>, vector<128x32xf32> -> vector<128x32xf32>
    %c0_3 = arith.constant 0 : index
    %c0_4 = arith.constant 0 : index
    %c0_5 = arith.constant 0 : index
    %3 = vector.load %arg6[%c0_3, %c0_4, %c0_5] : memref<2x32x32xf32, #tpu.memory_space<vmem>>, vector<1x32x32xf32>
    %4 = vector.shape_cast %3 : vector<1x32x32xf32> to vector<32x32xf32>
    %cst_6 = arith.constant dense<0.000000e+00> : vector<128x32xf32>
    %5 = tpu.matmul %2, %4, %cst_6 {dimension_numbers = #tpu.dot_dimension_numbers<[1], [0], [0], [1], [0, 0, 1, 1], [], []>} : vector<128x32xf32>, vector<32x32xf32>, vector<128x32xf32> -> vector<128x32xf32>
    %c0_7 = arith.constant 0 : index
    %c0_8 = arith.constant 0 : index
    %c0_9 = arith.constant 0 : index
    %6 = vector.load %arg9[%c0_7, %c0_8, %c0_9] : memref<2x1x32xf32, #tpu.memory_space<vmem>>, vector<1x1x32xf32>
    %7 = vector.shape_cast %6 : vector<1x1x32xf32> to vector<1x32xf32>
    %8 = vector.broadcast %7 : vector<1x32xf32> to vector<128x32xf32>
    %9 = arith.addf %5, %8 : vector<128x32xf32>
    %c0_10 = arith.constant 0 : index
    %c0_11 = arith.constant 0 : index
    %c0_12 = arith.constant 0 : index
    %10 = vector.load %arg7[%c0_10, %c0_11, %c0_12] : memref<2x32x32xf32, #tpu.memory_space<vmem>>, vector<1x32x32xf32>
    %11 = vector.shape_cast %10 : vector<1x32x32xf32> to vector<32x32xf32>
    %cst_13 = arith.constant dense<0.000000e+00> : vector<128x32xf32>
    %12 = tpu.matmul %2, %11, %cst_13 {dimension_numbers = #tpu.dot_dimension_numbers<[1], [0], [0], [1], [0, 0, 1, 1], [], []>} : vector<128x32xf32>, vector<32x32xf32>, vector<128x32xf32> -> vector<128x32xf32>
    %c0_14 = arith.constant 0 : index
    %c0_15 = arith.constant 0 : index
    %c0_16 = arith.constant 0 : index
    %13 = vector.load %arg10[%c0_14, %c0_15, %c0_16] : memref<2x1x32xf32, #tpu.memory_space<vmem>>, vector<1x1x32xf32>
    %14 = vector.shape_cast %13 : vector<1x1x32xf32> to vector<1x32xf32>
    %15 = vector.broadcast %14 : vector<1x32xf32> to vector<128x32xf32>
    %16 = arith.addf %12, %15 : vector<128x32xf32>
    %c0_17 = arith.constant 0 : index
    %c0_18 = arith.constant 0 : index
    %c0_19 = arith.constant 0 : index
    %17 = vector.load %arg8[%c0_17, %c0_18, %c0_19] : memref<2x32x32xf32, #tpu.memory_space<vmem>>, vector<1x32x32xf32>
    %18 = vector.shape_cast %17 : vector<1x32x32xf32> to vector<32x32xf32>
    %cst_20 = arith.constant dense<0.000000e+00> : vector<128x32xf32>
    %19 = tpu.matmul %2, %18, %cst_20 {dimension_numbers = #tpu.dot_dimension_numbers<[1], [0], [0], [1], [0, 0, 1, 1], [], []>} : vector<128x32xf32>, vector<32x32xf32>, vector<128x32xf32> -> vector<128x32xf32>
    %c0_21 = arith.constant 0 : index
    %c0_22 = arith.constant 0 : index
    %c0_23 = arith.constant 0 : index
    %20 = vector.load %arg11[%c0_21, %c0_22, %c0_23] : memref<2x1x32xf32, #tpu.memory_space<vmem>>, vector<1x1x32xf32>
    %21 = vector.shape_cast %20 : vector<1x1x32xf32> to vector<1x32xf32>
    %22 = vector.broadcast %21 : vector<1x32xf32> to vector<128x32xf32>
    %23 = arith.addf %19, %22 : vector<128x32xf32>
    %cst_24 = arith.constant 0.000000e+00 : f32
    %24 = vector.broadcast %cst_24 : f32 to vector<128x32xf32>
    %c0_25 = arith.constant 0 : index
    %c0_26 = arith.constant 0 : index
    %c0_27 = arith.constant 0 : index
    %25 = vector.load %arg4[%c0_25, %c0_26, %c0_27] : memref<2x1x32xf32, #tpu.memory_space<vmem>>, vector<1x1x32xf32>
    %26 = vector.shape_cast %25 : vector<1x1x32xf32> to vector<1x32xf32>
    %27 = vector.broadcast %26 : vector<1x32xf32> to vector<128x32xf32>
    %28 = arith.mulf %9, %27 : vector<128x32xf32>
    %cst_28 = arith.constant dense<0.000000e+00> : vector<128x128xf32>
    %29 = tpu.matmul %28, %16, %cst_28 {dimension_numbers = #tpu.dot_dimension_numbers<[1], [1], [0], [0], [0, 0, 1, 0], [], []>} : vector<128x32xf32>, vector<128x32xf32>, vector<128x128xf32> -> vector<128x128xf32>
    %c0_29 = arith.constant 0 : index
    %c0_30 = arith.constant 0 : index
    %30 = vector.load %arg3[%c0_29, %c0_30] : memref<128x128xf32, #tpu.memory_space<vmem>>, vector<128x128xf32>
    %31 = arith.addf %29, %30 : vector<128x128xf32>
    %cst_31 = arith.constant dense<0xFF800000> : vector<128xf32>
    %32 = vector.multi_reduction <maximumf>, %31, %cst_31 [1] : vector<128x128xf32> to vector<128xf32>
    %33 = vector.shape_cast %32 : vector<128xf32> to vector<128x1xf32>
    %34 = vector.broadcast %33 : vector<128x1xf32> to vector<128x128xf32>
    %35 = arith.subf %31, %34 : vector<128x128xf32>
    %36 = math.exp %35 : vector<128x128xf32>
    %cst_32 = arith.constant dense<0.000000e+00> : vector<128xf32>
    %37 = vector.multi_reduction <add>, %36, %cst_32 [1] : vector<128x128xf32> to vector<128xf32>
    %38 = vector.shape_cast %37 : vector<128xf32> to vector<128x1xf32>
    %39 = tpu.reciprocal %38 {approx = true} : vector<128x1xf32> -> vector<128x1xf32>
    %40 = vector.broadcast %39 : vector<128x1xf32> to vector<128x128xf32>
    %41 = arith.mulf %36, %40 : vector<128x128xf32>
    %42 = vector.broadcast %26 : vector<1x32xf32> to vector<128x32xf32>
    %43 = arith.mulf %23, %42 : vector<128x32xf32>
    %cst_33 = arith.constant dense<0.000000e+00> : vector<128x32xf32>
    %44 = tpu.matmul %41, %43, %cst_33 {dimension_numbers = #tpu.dot_dimension_numbers<[1], [0], [0], [1], [0, 0, 1, 1], [], []>} : vector<128x128xf32>, vector<128x32xf32>, vector<128x32xf32> -> vector<128x32xf32>
    %45 = arith.addf %24, %44 : vector<128x32xf32>
    %c1 = arith.constant 1 : index
    %c0_34 = arith.constant 0 : index
    %c0_35 = arith.constant 0 : index
    %46 = vector.load %arg4[%c1, %c0_34, %c0_35] : memref<2x1x32xf32, #tpu.memory_space<vmem>>, vector<1x1x32xf32>
    %47 = vector.shape_cast %46 : vector<1x1x32xf32> to vector<1x32xf32>
    %48 = vector.broadcast %47 : vector<1x32xf32> to vector<128x32xf32>
    %49 = arith.mulf %9, %48 : vector<128x32xf32>
    %cst_36 = arith.constant dense<0.000000e+00> : vector<128x128xf32>
    %50 = tpu.matmul %49, %16, %cst_36 {dimension_numbers = #tpu.dot_dimension_numbers<[1], [1], [0], [0], [0, 0, 1, 0], [], []>} : vector<128x32xf32>, vector<128x32xf32>, vector<128x128xf32> -> vector<128x128xf32>
    %c0_37 = arith.constant 0 : index
    %c0_38 = arith.constant 0 : index
    %51 = vector.load %arg3[%c0_37, %c0_38] : memref<128x128xf32, #tpu.memory_space<vmem>>, vector<128x128xf32>
    %52 = arith.addf %50, %51 : vector<128x128xf32>
    %cst_39 = arith.constant dense<0xFF800000> : vector<128xf32>
    %53 = vector.multi_reduction <maximumf>, %52, %cst_39 [1] : vector<128x128xf32> to vector<128xf32>
    %54 = vector.shape_cast %53 : vector<128xf32> to vector<128x1xf32>
    %55 = vector.broadcast %54 : vector<128x1xf32> to vector<128x128xf32>
    %56 = arith.subf %52, %55 : vector<128x128xf32>
    %57 = math.exp %56 : vector<128x128xf32>
    %cst_40 = arith.constant dense<0.000000e+00> : vector<128xf32>
    %58 = vector.multi_reduction <add>, %57, %cst_40 [1] : vector<128x128xf32> to vector<128xf32>
    %59 = vector.shape_cast %58 : vector<128xf32> to vector<128x1xf32>
    %60 = tpu.reciprocal %59 {approx = true} : vector<128x1xf32> -> vector<128x1xf32>
    %61 = vector.broadcast %60 : vector<128x1xf32> to vector<128x128xf32>
    %62 = arith.mulf %57, %61 : vector<128x128xf32>
    %63 = vector.broadcast %47 : vector<1x32xf32> to vector<128x32xf32>
    %64 = arith.mulf %23, %63 : vector<128x32xf32>
    %cst_41 = arith.constant dense<0.000000e+00> : vector<128x32xf32>
    %65 = tpu.matmul %62, %64, %cst_41 {dimension_numbers = #tpu.dot_dimension_numbers<[1], [0], [0], [1], [0, 0, 1, 1], [], []>} : vector<128x128xf32>, vector<128x32xf32>, vector<128x32xf32> -> vector<128x32xf32>
    %66 = arith.addf %45, %65 : vector<128x32xf32>
    %c0_42 = arith.constant 0 : index
    %c0_43 = arith.constant 0 : index
    %c0_44 = arith.constant 0 : index
    %67 = vector.load %arg12[%c0_42, %c0_43, %c0_44] : memref<2x32x32xf32, #tpu.memory_space<vmem>>, vector<1x32x32xf32>
    %68 = vector.shape_cast %67 : vector<1x32x32xf32> to vector<32x32xf32>
    %cst_45 = arith.constant dense<0.000000e+00> : vector<128x32xf32>
    %69 = tpu.matmul %66, %68, %cst_45 {dimension_numbers = #tpu.dot_dimension_numbers<[1], [0], [0], [1], [0, 0, 1, 1], [], []>} : vector<128x32xf32>, vector<32x32xf32>, vector<128x32xf32> -> vector<128x32xf32>
    %c0_46 = arith.constant 0 : index
    %c0_47 = arith.constant 0 : index
    %c0_48 = arith.constant 0 : index
    %70 = vector.load %arg13[%c0_46, %c0_47, %c0_48] : memref<2x1x32xf32, #tpu.memory_space<vmem>>, vector<1x1x32xf32>
    %71 = vector.shape_cast %70 : vector<1x1x32xf32> to vector<1x32xf32>
    %72 = vector.broadcast %71 : vector<1x32xf32> to vector<128x32xf32>
    %73 = arith.addf %69, %72 : vector<128x32xf32>
    %74 = arith.addf %2, %73 : vector<128x32xf32>
    %c0_49 = arith.constant 0 : index
    %c0_50 = arith.constant 0 : index
    %c0_51 = arith.constant 0 : index
    %75 = vector.load %arg18[%c0_49, %c0_50, %c0_51] : memref<2x1x32xf32, #tpu.memory_space<vmem>>, vector<1x1x32xf32>
    %76 = vector.shape_cast %75 : vector<1x1x32xf32> to vector<1x32xf32>
    %c0_52 = arith.constant 0 : index
    %c0_53 = arith.constant 0 : index
    %c0_54 = arith.constant 0 : index
    %77 = vector.load %arg19[%c0_52, %c0_53, %c0_54] : memref<2x1x32xf32, #tpu.memory_space<vmem>>, vector<1x1x32xf32>
    %78 = vector.shape_cast %77 : vector<1x1x32xf32> to vector<1x32xf32>
    %cst_55 = arith.constant dense<0.000000e+00> : vector<128xf32>
    %79 = vector.multi_reduction <add>, %74, %cst_55 [1] : vector<128x32xf32> to vector<128xf32>
    %80 = vector.shape_cast %79 : vector<128xf32> to vector<128x1xf32>
    %cst_56 = arith.constant 3.200000e+01 : f32
    %81 = vector.broadcast %cst_56 : f32 to vector<128x1xf32>
    %82 = arith.divf %80, %81 : vector<128x1xf32>
    %83 = vector.broadcast %82 : vector<128x1xf32> to vector<128x32xf32>
    %84 = arith.subf %74, %83 : vector<128x32xf32>
    %85 = arith.mulf %84, %84 : vector<128x32xf32>
    %cst_57 = arith.constant dense<0.000000e+00> : vector<128xf32>
    %86 = vector.multi_reduction <add>, %85, %cst_57 [1] : vector<128x32xf32> to vector<128xf32>
    %87 = vector.shape_cast %86 : vector<128xf32> to vector<128x1xf32>
    %cst_58 = arith.constant 3.200000e+01 : f32
    %88 = vector.broadcast %cst_58 : f32 to vector<128x1xf32>
    %89 = arith.divf %87, %88 : vector<128x1xf32>
    %90 = vector.broadcast %82 : vector<128x1xf32> to vector<128x32xf32>
    %91 = arith.subf %74, %90 : vector<128x32xf32>
    %cst_59 = arith.constant 9.99999974E-6 : f32
    %92 = vector.broadcast %cst_59 : f32 to vector<128x1xf32>
    %93 = arith.addf %89, %92 : vector<128x1xf32>
    %94 = math.rsqrt %93 : vector<128x1xf32>
    %95 = vector.broadcast %94 : vector<128x1xf32> to vector<128x32xf32>
    %96 = arith.mulf %91, %95 : vector<128x32xf32>
    %97 = vector.broadcast %76 : vector<1x32xf32> to vector<128x32xf32>
    %98 = arith.mulf %96, %97 : vector<128x32xf32>
    %99 = vector.broadcast %78 : vector<1x32xf32> to vector<128x32xf32>
    %100 = arith.addf %98, %99 : vector<128x32xf32>
    %c0_60 = arith.constant 0 : index
    %c0_61 = arith.constant 0 : index
    %c0_62 = arith.constant 0 : index
    %101 = vector.load %arg14[%c0_60, %c0_61, %c0_62] : memref<2x32x256xf32, #tpu.memory_space<vmem>>, vector<1x32x256xf32>
    %102 = vector.shape_cast %101 : vector<1x32x256xf32> to vector<32x256xf32>
    %cst_63 = arith.constant dense<0.000000e+00> : vector<128x256xf32>
    %103 = tpu.matmul %100, %102, %cst_63 {dimension_numbers = #tpu.dot_dimension_numbers<[1], [0], [0], [1], [0, 0, 1, 1], [], []>} : vector<128x32xf32>, vector<32x256xf32>, vector<128x256xf32> -> vector<128x256xf32>
    %c0_64 = arith.constant 0 : index
    %c0_65 = arith.constant 0 : index
    %c0_66 = arith.constant 0 : index
    %104 = vector.load %arg15[%c0_64, %c0_65, %c0_66] : memref<2x1x256xf32, #tpu.memory_space<vmem>>, vector<1x1x256xf32>
    %105 = vector.shape_cast %104 : vector<1x1x256xf32> to vector<1x256xf32>
    %106 = vector.broadcast %105 : vector<1x256xf32> to vector<128x256xf32>
    %107 = arith.addf %103, %106 : vector<128x256xf32>
    %cst_67 = arith.constant 0.000000e+00 : f32
    %108 = vector.broadcast %cst_67 : f32 to vector<128x256xf32>
    %109 = arith.maximumf %107, %108 : vector<128x256xf32>
    %c0_68 = arith.constant 0 : index
    %c0_69 = arith.constant 0 : index
    %c0_70 = arith.constant 0 : index
    %110 = vector.load %arg16[%c0_68, %c0_69, %c0_70] : memref<2x256x32xf32, #tpu.memory_space<vmem>>, vector<1x256x32xf32>
    %111 = vector.shape_cast %110 : vector<1x256x32xf32> to vector<256x32xf32>
    %cst_71 = arith.constant dense<0.000000e+00> : vector<128x32xf32>
    %112 = tpu.matmul %109, %111, %cst_71 {dimension_numbers = #tpu.dot_dimension_numbers<[1], [0], [0], [1], [0, 0, 1, 1], [], []>} : vector<128x256xf32>, vector<256x32xf32>, vector<128x32xf32> -> vector<128x32xf32>
    %c0_72 = arith.constant 0 : index
    %c0_73 = arith.constant 0 : index
    %c0_74 = arith.constant 0 : index
    %113 = vector.load %arg17[%c0_72, %c0_73, %c0_74] : memref<2x1x32xf32, #tpu.memory_space<vmem>>, vector<1x1x32xf32>
    %114 = vector.shape_cast %113 : vector<1x1x32xf32> to vector<1x32xf32>
    %115 = vector.broadcast %114 : vector<1x32xf32> to vector<128x32xf32>
    %116 = arith.addf %112, %115 : vector<128x32xf32>
    %117 = arith.addf %100, %116 : vector<128x32xf32>
    %c0_75 = arith.constant 0 : index
    %c0_76 = arith.constant 0 : index
    %c0_77 = arith.constant 0 : index
    %118 = vector.load %arg20[%c0_75, %c0_76, %c0_77] : memref<2x1x32xf32, #tpu.memory_space<vmem>>, vector<1x1x32xf32>
    %119 = vector.shape_cast %118 : vector<1x1x32xf32> to vector<1x32xf32>
    %c0_78 = arith.constant 0 : index
    %c0_79 = arith.constant 0 : index
    %c0_80 = arith.constant 0 : index
    %120 = vector.load %arg21[%c0_78, %c0_79, %c0_80] : memref<2x1x32xf32, #tpu.memory_space<vmem>>, vector<1x1x32xf32>
    %121 = vector.shape_cast %120 : vector<1x1x32xf32> to vector<1x32xf32>
    %cst_81 = arith.constant dense<0.000000e+00> : vector<128xf32>
    %122 = vector.multi_reduction <add>, %117, %cst_81 [1] : vector<128x32xf32> to vector<128xf32>
    %123 = vector.shape_cast %122 : vector<128xf32> to vector<128x1xf32>
    %cst_82 = arith.constant 3.200000e+01 : f32
    %124 = vector.broadcast %cst_82 : f32 to vector<128x1xf32>
    %125 = arith.divf %123, %124 : vector<128x1xf32>
    %126 = vector.broadcast %125 : vector<128x1xf32> to vector<128x32xf32>
    %127 = arith.subf %117, %126 : vector<128x32xf32>
    %128 = arith.mulf %127, %127 : vector<128x32xf32>
    %cst_83 = arith.constant dense<0.000000e+00> : vector<128xf32>
    %129 = vector.multi_reduction <add>, %128, %cst_83 [1] : vector<128x32xf32> to vector<128xf32>
    %130 = vector.shape_cast %129 : vector<128xf32> to vector<128x1xf32>
    %cst_84 = arith.constant 3.200000e+01 : f32
    %131 = vector.broadcast %cst_84 : f32 to vector<128x1xf32>
    %132 = arith.divf %130, %131 : vector<128x1xf32>
    %133 = vector.broadcast %125 : vector<128x1xf32> to vector<128x32xf32>
    %134 = arith.subf %117, %133 : vector<128x32xf32>
    %cst_85 = arith.constant 9.99999974E-6 : f32
    %135 = vector.broadcast %cst_85 : f32 to vector<128x1xf32>
    %136 = arith.addf %132, %135 : vector<128x1xf32>
    %137 = math.rsqrt %136 : vector<128x1xf32>
    %138 = vector.broadcast %137 : vector<128x1xf32> to vector<128x32xf32>
    %139 = arith.mulf %134, %138 : vector<128x32xf32>
    %140 = vector.broadcast %119 : vector<1x32xf32> to vector<128x32xf32>
    %141 = arith.mulf %139, %140 : vector<128x32xf32>
    %142 = vector.broadcast %121 : vector<1x32xf32> to vector<128x32xf32>
    %143 = arith.addf %141, %142 : vector<128x32xf32>
    %c1_86 = arith.constant 1 : index
    %c0_87 = arith.constant 0 : index
    %c0_88 = arith.constant 0 : index
    %144 = vector.load %arg6[%c1_86, %c0_87, %c0_88] : memref<2x32x32xf32, #tpu.memory_space<vmem>>, vector<1x32x32xf32>
    %145 = vector.shape_cast %144 : vector<1x32x32xf32> to vector<32x32xf32>
    %cst_89 = arith.constant dense<0.000000e+00> : vector<128x32xf32>
    %146 = tpu.matmul %143, %145, %cst_89 {dimension_numbers = #tpu.dot_dimension_numbers<[1], [0], [0], [1], [0, 0, 1, 1], [], []>} : vector<128x32xf32>, vector<32x32xf32>, vector<128x32xf32> -> vector<128x32xf32>
    %c1_90 = arith.constant 1 : index
    %c0_91 = arith.constant 0 : index
    %c0_92 = arith.constant 0 : index
    %147 = vector.load %arg9[%c1_90, %c0_91, %c0_92] : memref<2x1x32xf32, #tpu.memory_space<vmem>>, vector<1x1x32xf32>
    %148 = vector.shape_cast %147 : vector<1x1x32xf32> to vector<1x32xf32>
    %149 = vector.broadcast %148 : vector<1x32xf32> to vector<128x32xf32>
    %150 = arith.addf %146, %149 : vector<128x32xf32>
    %c1_93 = arith.constant 1 : index
    %c0_94 = arith.constant 0 : index
    %c0_95 = arith.constant 0 : index
    %151 = vector.load %arg7[%c1_93, %c0_94, %c0_95] : memref<2x32x32xf32, #tpu.memory_space<vmem>>, vector<1x32x32xf32>
    %152 = vector.shape_cast %151 : vector<1x32x32xf32> to vector<32x32xf32>
    %cst_96 = arith.constant dense<0.000000e+00> : vector<128x32xf32>
    %153 = tpu.matmul %143, %152, %cst_96 {dimension_numbers = #tpu.dot_dimension_numbers<[1], [0], [0], [1], [0, 0, 1, 1], [], []>} : vector<128x32xf32>, vector<32x32xf32>, vector<128x32xf32> -> vector<128x32xf32>
    %c1_97 = arith.constant 1 : index
    %c0_98 = arith.constant 0 : index
    %c0_99 = arith.constant 0 : index
    %154 = vector.load %arg10[%c1_97, %c0_98, %c0_99] : memref<2x1x32xf32, #tpu.memory_space<vmem>>, vector<1x1x32xf32>
    %155 = vector.shape_cast %154 : vector<1x1x32xf32> to vector<1x32xf32>
    %156 = vector.broadcast %155 : vector<1x32xf32> to vector<128x32xf32>
    %157 = arith.addf %153, %156 : vector<128x32xf32>
    %c1_100 = arith.constant 1 : index
    %c0_101 = arith.constant 0 : index
    %c0_102 = arith.constant 0 : index
    %158 = vector.load %arg8[%c1_100, %c0_101, %c0_102] : memref<2x32x32xf32, #tpu.memory_space<vmem>>, vector<1x32x32xf32>
    %159 = vector.shape_cast %158 : vector<1x32x32xf32> to vector<32x32xf32>
    %cst_103 = arith.constant dense<0.000000e+00> : vector<128x32xf32>
    %160 = tpu.matmul %143, %159, %cst_103 {dimension_numbers = #tpu.dot_dimension_numbers<[1], [0], [0], [1], [0, 0, 1, 1], [], []>} : vector<128x32xf32>, vector<32x32xf32>, vector<128x32xf32> -> vector<128x32xf32>
    %c1_104 = arith.constant 1 : index
    %c0_105 = arith.constant 0 : index
    %c0_106 = arith.constant 0 : index
    %161 = vector.load %arg11[%c1_104, %c0_105, %c0_106] : memref<2x1x32xf32, #tpu.memory_space<vmem>>, vector<1x1x32xf32>
    %162 = vector.shape_cast %161 : vector<1x1x32xf32> to vector<1x32xf32>
    %163 = vector.broadcast %162 : vector<1x32xf32> to vector<128x32xf32>
    %164 = arith.addf %160, %163 : vector<128x32xf32>
    %cst_107 = arith.constant 0.000000e+00 : f32
    %165 = vector.broadcast %cst_107 : f32 to vector<128x32xf32>
    %c0_108 = arith.constant 0 : index
    %c0_109 = arith.constant 0 : index
    %c0_110 = arith.constant 0 : index
    %166 = vector.load %arg4[%c0_108, %c0_109, %c0_110] : memref<2x1x32xf32, #tpu.memory_space<vmem>>, vector<1x1x32xf32>
    %167 = vector.shape_cast %166 : vector<1x1x32xf32> to vector<1x32xf32>
    %168 = vector.broadcast %167 : vector<1x32xf32> to vector<128x32xf32>
    %169 = arith.mulf %150, %168 : vector<128x32xf32>
    %cst_111 = arith.constant dense<0.000000e+00> : vector<128x128xf32>
    %170 = tpu.matmul %169, %157, %cst_111 {dimension_numbers = #tpu.dot_dimension_numbers<[1], [1], [0], [0], [0, 0, 1, 0], [], []>} : vector<128x32xf32>, vector<128x32xf32>, vector<128x128xf32> -> vector<128x128xf32>
    %c0_112 = arith.constant 0 : index
    %c0_113 = arith.constant 0 : index
    %171 = vector.load %arg3[%c0_112, %c0_113] : memref<128x128xf32, #tpu.memory_space<vmem>>, vector<128x128xf32>
    %172 = arith.addf %170, %171 : vector<128x128xf32>
    %cst_114 = arith.constant dense<0xFF800000> : vector<128xf32>
    %173 = vector.multi_reduction <maximumf>, %172, %cst_114 [1] : vector<128x128xf32> to vector<128xf32>
    %174 = vector.shape_cast %173 : vector<128xf32> to vector<128x1xf32>
    %175 = vector.broadcast %174 : vector<128x1xf32> to vector<128x128xf32>
    %176 = arith.subf %172, %175 : vector<128x128xf32>
    %177 = math.exp %176 : vector<128x128xf32>
    %cst_115 = arith.constant dense<0.000000e+00> : vector<128xf32>
    %178 = vector.multi_reduction <add>, %177, %cst_115 [1] : vector<128x128xf32> to vector<128xf32>
    %179 = vector.shape_cast %178 : vector<128xf32> to vector<128x1xf32>
    %180 = tpu.reciprocal %179 {approx = true} : vector<128x1xf32> -> vector<128x1xf32>
    %181 = vector.broadcast %180 : vector<128x1xf32> to vector<128x128xf32>
    %182 = arith.mulf %177, %181 : vector<128x128xf32>
    %183 = vector.broadcast %167 : vector<1x32xf32> to vector<128x32xf32>
    %184 = arith.mulf %164, %183 : vector<128x32xf32>
    %cst_116 = arith.constant dense<0.000000e+00> : vector<128x32xf32>
    %185 = tpu.matmul %182, %184, %cst_116 {dimension_numbers = #tpu.dot_dimension_numbers<[1], [0], [0], [1], [0, 0, 1, 1], [], []>} : vector<128x128xf32>, vector<128x32xf32>, vector<128x32xf32> -> vector<128x32xf32>
    %186 = arith.addf %165, %185 : vector<128x32xf32>
    %c1_117 = arith.constant 1 : index
    %c0_118 = arith.constant 0 : index
    %c0_119 = arith.constant 0 : index
    %187 = vector.load %arg4[%c1_117, %c0_118, %c0_119] : memref<2x1x32xf32, #tpu.memory_space<vmem>>, vector<1x1x32xf32>
    %188 = vector.shape_cast %187 : vector<1x1x32xf32> to vector<1x32xf32>
    %189 = vector.broadcast %188 : vector<1x32xf32> to vector<128x32xf32>
    %190 = arith.mulf %150, %189 : vector<128x32xf32>
    %cst_120 = arith.constant dense<0.000000e+00> : vector<128x128xf32>
    %191 = tpu.matmul %190, %157, %cst_120 {dimension_numbers = #tpu.dot_dimension_numbers<[1], [1], [0], [0], [0, 0, 1, 0], [], []>} : vector<128x32xf32>, vector<128x32xf32>, vector<128x128xf32> -> vector<128x128xf32>
    %c0_121 = arith.constant 0 : index
    %c0_122 = arith.constant 0 : index
    %192 = vector.load %arg3[%c0_121, %c0_122] : memref<128x128xf32, #tpu.memory_space<vmem>>, vector<128x128xf32>
    %193 = arith.addf %191, %192 : vector<128x128xf32>
    %cst_123 = arith.constant dense<0xFF800000> : vector<128xf32>
    %194 = vector.multi_reduction <maximumf>, %193, %cst_123 [1] : vector<128x128xf32> to vector<128xf32>
    %195 = vector.shape_cast %194 : vector<128xf32> to vector<128x1xf32>
    %196 = vector.broadcast %195 : vector<128x1xf32> to vector<128x128xf32>
    %197 = arith.subf %193, %196 : vector<128x128xf32>
    %198 = math.exp %197 : vector<128x128xf32>
    %cst_124 = arith.constant dense<0.000000e+00> : vector<128xf32>
    %199 = vector.multi_reduction <add>, %198, %cst_124 [1] : vector<128x128xf32> to vector<128xf32>
    %200 = vector.shape_cast %199 : vector<128xf32> to vector<128x1xf32>
    %201 = tpu.reciprocal %200 {approx = true} : vector<128x1xf32> -> vector<128x1xf32>
    %202 = vector.broadcast %201 : vector<128x1xf32> to vector<128x128xf32>
    %203 = arith.mulf %198, %202 : vector<128x128xf32>
    %204 = vector.broadcast %188 : vector<1x32xf32> to vector<128x32xf32>
    %205 = arith.mulf %164, %204 : vector<128x32xf32>
    %cst_125 = arith.constant dense<0.000000e+00> : vector<128x32xf32>
    %206 = tpu.matmul %203, %205, %cst_125 {dimension_numbers = #tpu.dot_dimension_numbers<[1], [0], [0], [1], [0, 0, 1, 1], [], []>} : vector<128x128xf32>, vector<128x32xf32>, vector<128x32xf32> -> vector<128x32xf32>
    %207 = arith.addf %186, %206 : vector<128x32xf32>
    %c1_126 = arith.constant 1 : index
    %c0_127 = arith.constant 0 : index
    %c0_128 = arith.constant 0 : index
    %208 = vector.load %arg12[%c1_126, %c0_127, %c0_128] : memref<2x32x32xf32, #tpu.memory_space<vmem>>, vector<1x32x32xf32>
    %209 = vector.shape_cast %208 : vector<1x32x32xf32> to vector<32x32xf32>
    %cst_129 = arith.constant dense<0.000000e+00> : vector<128x32xf32>
    %210 = tpu.matmul %207, %209, %cst_129 {dimension_numbers = #tpu.dot_dimension_numbers<[1], [0], [0], [1], [0, 0, 1, 1], [], []>} : vector<128x32xf32>, vector<32x32xf32>, vector<128x32xf32> -> vector<128x32xf32>
    %c1_130 = arith.constant 1 : index
    %c0_131 = arith.constant 0 : index
    %c0_132 = arith.constant 0 : index
    %211 = vector.load %arg13[%c1_130, %c0_131, %c0_132] : memref<2x1x32xf32, #tpu.memory_space<vmem>>, vector<1x1x32xf32>
    %212 = vector.shape_cast %211 : vector<1x1x32xf32> to vector<1x32xf32>
    %213 = vector.broadcast %212 : vector<1x32xf32> to vector<128x32xf32>
    %214 = arith.addf %210, %213 : vector<128x32xf32>
    %215 = arith.addf %143, %214 : vector<128x32xf32>
    %c1_133 = arith.constant 1 : index
    %c0_134 = arith.constant 0 : index
    %c0_135 = arith.constant 0 : index
    %216 = vector.load %arg18[%c1_133, %c0_134, %c0_135] : memref<2x1x32xf32, #tpu.memory_space<vmem>>, vector<1x1x32xf32>
    %217 = vector.shape_cast %216 : vector<1x1x32xf32> to vector<1x32xf32>
    %c1_136 = arith.constant 1 : index
    %c0_137 = arith.constant 0 : index
    %c0_138 = arith.constant 0 : index
    %218 = vector.load %arg19[%c1_136, %c0_137, %c0_138] : memref<2x1x32xf32, #tpu.memory_space<vmem>>, vector<1x1x32xf32>
    %219 = vector.shape_cast %218 : vector<1x1x32xf32> to vector<1x32xf32>
    %cst_139 = arith.constant dense<0.000000e+00> : vector<128xf32>
    %220 = vector.multi_reduction <add>, %215, %cst_139 [1] : vector<128x32xf32> to vector<128xf32>
    %221 = vector.shape_cast %220 : vector<128xf32> to vector<128x1xf32>
    %cst_140 = arith.constant 3.200000e+01 : f32
    %222 = vector.broadcast %cst_140 : f32 to vector<128x1xf32>
    %223 = arith.divf %221, %222 : vector<128x1xf32>
    %224 = vector.broadcast %223 : vector<128x1xf32> to vector<128x32xf32>
    %225 = arith.subf %215, %224 : vector<128x32xf32>
    %226 = arith.mulf %225, %225 : vector<128x32xf32>
    %cst_141 = arith.constant dense<0.000000e+00> : vector<128xf32>
    %227 = vector.multi_reduction <add>, %226, %cst_141 [1] : vector<128x32xf32> to vector<128xf32>
    %228 = vector.shape_cast %227 : vector<128xf32> to vector<128x1xf32>
    %cst_142 = arith.constant 3.200000e+01 : f32
    %229 = vector.broadcast %cst_142 : f32 to vector<128x1xf32>
    %230 = arith.divf %228, %229 : vector<128x1xf32>
    %231 = vector.broadcast %223 : vector<128x1xf32> to vector<128x32xf32>
    %232 = arith.subf %215, %231 : vector<128x32xf32>
    %cst_143 = arith.constant 9.99999974E-6 : f32
    %233 = vector.broadcast %cst_143 : f32 to vector<128x1xf32>
    %234 = arith.addf %230, %233 : vector<128x1xf32>
    %235 = math.rsqrt %234 : vector<128x1xf32>
    %236 = vector.broadcast %235 : vector<128x1xf32> to vector<128x32xf32>
    %237 = arith.mulf %232, %236 : vector<128x32xf32>
    %238 = vector.broadcast %217 : vector<1x32xf32> to vector<128x32xf32>
    %239 = arith.mulf %237, %238 : vector<128x32xf32>
    %240 = vector.broadcast %219 : vector<1x32xf32> to vector<128x32xf32>
    %241 = arith.addf %239, %240 : vector<128x32xf32>
    %c1_144 = arith.constant 1 : index
    %c0_145 = arith.constant 0 : index
    %c0_146 = arith.constant 0 : index
    %242 = vector.load %arg14[%c1_144, %c0_145, %c0_146] : memref<2x32x256xf32, #tpu.memory_space<vmem>>, vector<1x32x256xf32>
    %243 = vector.shape_cast %242 : vector<1x32x256xf32> to vector<32x256xf32>
    %cst_147 = arith.constant dense<0.000000e+00> : vector<128x256xf32>
    %244 = tpu.matmul %241, %243, %cst_147 {dimension_numbers = #tpu.dot_dimension_numbers<[1], [0], [0], [1], [0, 0, 1, 1], [], []>} : vector<128x32xf32>, vector<32x256xf32>, vector<128x256xf32> -> vector<128x256xf32>
    %c1_148 = arith.constant 1 : index
    %c0_149 = arith.constant 0 : index
    %c0_150 = arith.constant 0 : index
    %245 = vector.load %arg15[%c1_148, %c0_149, %c0_150] : memref<2x1x256xf32, #tpu.memory_space<vmem>>, vector<1x1x256xf32>
    %246 = vector.shape_cast %245 : vector<1x1x256xf32> to vector<1x256xf32>
    %247 = vector.broadcast %246 : vector<1x256xf32> to vector<128x256xf32>
    %248 = arith.addf %244, %247 : vector<128x256xf32>
    %cst_151 = arith.constant 0.000000e+00 : f32
    %249 = vector.broadcast %cst_151 : f32 to vector<128x256xf32>
    %250 = arith.maximumf %248, %249 : vector<128x256xf32>
    %c1_152 = arith.constant 1 : index
    %c0_153 = arith.constant 0 : index
    %c0_154 = arith.constant 0 : index
    %251 = vector.load %arg16[%c1_152, %c0_153, %c0_154] : memref<2x256x32xf32, #tpu.memory_space<vmem>>, vector<1x256x32xf32>
    %252 = vector.shape_cast %251 : vector<1x256x32xf32> to vector<256x32xf32>
    %cst_155 = arith.constant dense<0.000000e+00> : vector<128x32xf32>
    %253 = tpu.matmul %250, %252, %cst_155 {dimension_numbers = #tpu.dot_dimension_numbers<[1], [0], [0], [1], [0, 0, 1, 1], [], []>} : vector<128x256xf32>, vector<256x32xf32>, vector<128x32xf32> -> vector<128x32xf32>
    %c1_156 = arith.constant 1 : index
    %c0_157 = arith.constant 0 : index
    %c0_158 = arith.constant 0 : index
    %254 = vector.load %arg17[%c1_156, %c0_157, %c0_158] : memref<2x1x32xf32, #tpu.memory_space<vmem>>, vector<1x1x32xf32>
    %255 = vector.shape_cast %254 : vector<1x1x32xf32> to vector<1x32xf32>
    %256 = vector.broadcast %255 : vector<1x32xf32> to vector<128x32xf32>
    %257 = arith.addf %253, %256 : vector<128x32xf32>
    %258 = arith.addf %241, %257 : vector<128x32xf32>
    %c1_159 = arith.constant 1 : index
    %c0_160 = arith.constant 0 : index
    %c0_161 = arith.constant 0 : index
    %259 = vector.load %arg20[%c1_159, %c0_160, %c0_161] : memref<2x1x32xf32, #tpu.memory_space<vmem>>, vector<1x1x32xf32>
    %260 = vector.shape_cast %259 : vector<1x1x32xf32> to vector<1x32xf32>
    %c1_162 = arith.constant 1 : index
    %c0_163 = arith.constant 0 : index
    %c0_164 = arith.constant 0 : index
    %261 = vector.load %arg21[%c1_162, %c0_163, %c0_164] : memref<2x1x32xf32, #tpu.memory_space<vmem>>, vector<1x1x32xf32>
    %262 = vector.shape_cast %261 : vector<1x1x32xf32> to vector<1x32xf32>
    %cst_165 = arith.constant dense<0.000000e+00> : vector<128xf32>
    %263 = vector.multi_reduction <add>, %258, %cst_165 [1] : vector<128x32xf32> to vector<128xf32>
    %264 = vector.shape_cast %263 : vector<128xf32> to vector<128x1xf32>
    %cst_166 = arith.constant 3.200000e+01 : f32
    %265 = vector.broadcast %cst_166 : f32 to vector<128x1xf32>
    %266 = arith.divf %264, %265 : vector<128x1xf32>
    %267 = vector.broadcast %266 : vector<128x1xf32> to vector<128x32xf32>
    %268 = arith.subf %258, %267 : vector<128x32xf32>
    %269 = arith.mulf %268, %268 : vector<128x32xf32>
    %cst_167 = arith.constant dense<0.000000e+00> : vector<128xf32>
    %270 = vector.multi_reduction <add>, %269, %cst_167 [1] : vector<128x32xf32> to vector<128xf32>
    %271 = vector.shape_cast %270 : vector<128xf32> to vector<128x1xf32>
    %cst_168 = arith.constant 3.200000e+01 : f32
    %272 = vector.broadcast %cst_168 : f32 to vector<128x1xf32>
    %273 = arith.divf %271, %272 : vector<128x1xf32>
    %274 = vector.broadcast %266 : vector<128x1xf32> to vector<128x32xf32>
    %275 = arith.subf %258, %274 : vector<128x32xf32>
    %cst_169 = arith.constant 9.99999974E-6 : f32
    %276 = vector.broadcast %cst_169 : f32 to vector<128x1xf32>
    %277 = arith.addf %273, %276 : vector<128x1xf32>
    %278 = math.rsqrt %277 : vector<128x1xf32>
    %279 = vector.broadcast %278 : vector<128x1xf32> to vector<128x32xf32>
    %280 = arith.mulf %275, %279 : vector<128x32xf32>
    %281 = vector.broadcast %260 : vector<1x32xf32> to vector<128x32xf32>
    %282 = arith.mulf %280, %281 : vector<128x32xf32>
    %283 = vector.broadcast %262 : vector<1x32xf32> to vector<128x32xf32>
    %284 = arith.addf %282, %283 : vector<128x32xf32>
    %c0_170 = arith.constant 0 : index
    %c0_171 = arith.constant 0 : index
    %285 = vector.load %arg5[%c0_170, %c0_171] : memref<16x128xf32, #tpu.memory_space<vmem>>, vector<16x128xf32>
    %cst_172 = arith.constant dense<0.000000e+00> : vector<16x32xf32>
    %286 = tpu.matmul %285, %284, %cst_172 {dimension_numbers = #tpu.dot_dimension_numbers<[1], [0], [0], [1], [0, 0, 1, 1], [], []>} : vector<16x128xf32>, vector<128x32xf32>, vector<16x32xf32> -> vector<16x32xf32>
    %c0_173 = arith.constant 0 : index
    %c0_174 = arith.constant 0 : index
    %287 = vector.load %arg22[%c0_173, %c0_174] : memref<16x32xf32, #tpu.memory_space<vmem>>, vector<16x32xf32>
    tpu.vector_store %arg22[%c0_173, %c0_174], %286 {strides = array<i32>} : memref<16x32xf32, #tpu.memory_space<vmem>>, vector<16x32xf32>,
    return
  }
  func.func @transform_0(%arg0: i32) -> (i32, i32) {
    %c0_i32 = arith.constant 0 : i32
    %c0_i32_0 = arith.constant 0 : i32
    return %arg0, %c0_i32 : i32, i32
  }
  func.func @transform_1(%arg0: i32) -> (i32, i32) {
    %c0_i32 = arith.constant 0 : i32
    %c0_i32_0 = arith.constant 0 : i32
    %c0_i32_1 = arith.constant 0 : i32
    return %c0_i32, %c0_i32_0 : i32, i32
  }
  func.func @transform_2(%arg0: i32) -> (i32, i32) {
    %c0_i32 = arith.constant 0 : i32
    %c0_i32_0 = arith.constant 0 : i32
    %c0_i32_1 = arith.constant 0 : i32
    return %c0_i32, %c0_i32_0 : i32, i32
  }
  func.func @transform_3(%arg0: i32) -> (i32, i32, i32) {
    %c0_i32 = arith.constant 0 : i32
    %c0_i32_0 = arith.constant 0 : i32
    %c0_i32_1 = arith.constant 0 : i32
    %c0_i32_2 = arith.constant 0 : i32
    return %c0_i32, %c0_i32_0, %c0_i32_1 : i32, i32, i32
  }
  func.func @transform_4(%arg0: i32) -> (i32, i32) {
    %c0_i32 = arith.constant 0 : i32
    %c0_i32_0 = arith.constant 0 : i32
    %c0_i32_1 = arith.constant 0 : i32
    return %c0_i32, %c0_i32_0 : i32, i32
  }
  func.func @transform_5(%arg0: i32) -> (i32, i32, i32) {
    %c0_i32 = arith.constant 0 : i32
    %c0_i32_0 = arith.constant 0 : i32
    %c0_i32_1 = arith.constant 0 : i32
    %c0_i32_2 = arith.constant 0 : i32
    return %c0_i32, %c0_i32_0, %c0_i32_1 : i32, i32, i32
  }
  func.func @transform_6(%arg0: i32) -> (i32, i32, i32) {
    %c0_i32 = arith.constant 0 : i32
    %c0_i32_0 = arith.constant 0 : i32
    %c0_i32_1 = arith.constant 0 : i32
    %c0_i32_2 = arith.constant 0 : i32
    return %c0_i32, %c0_i32_0, %c0_i32_1 : i32, i32, i32
  }
  func.func @transform_7(%arg0: i32) -> (i32, i32, i32) {
    %c0_i32 = arith.constant 0 : i32
    %c0_i32_0 = arith.constant 0 : i32
    %c0_i32_1 = arith.constant 0 : i32
    %c0_i32_2 = arith.constant 0 : i32
    return %c0_i32, %c0_i32_0, %c0_i32_1 : i32, i32, i32
  }
  func.func @transform_8(%arg0: i32) -> (i32, i32, i32) {
    %c0_i32 = arith.constant 0 : i32
    %c0_i32_0 = arith.constant 0 : i32
    %c0_i32_1 = arith.constant 0 : i32
    %c0_i32_2 = arith.constant 0 : i32
    return %c0_i32, %c0_i32_0, %c0_i32_1 : i32, i32, i32
  }
  func.func @transform_9(%arg0: i32) -> (i32, i32, i32) {
    %c0_i32 = arith.constant 0 : i32
    %c0_i32_0 = arith.constant 0 : i32
    %c0_i32_1 = arith.constant 0 : i32
    %c0_i32_2 = arith.constant 0 : i32
    return %c0_i32, %c0_i32_0, %c0_i32_1 : i32, i32, i32
  }
  func.func @transform_10(%arg0: i32) -> (i32, i32, i32) {
    %c0_i32 = arith.constant 0 : i32
    %c0_i32_0 = arith.constant 0 : i32
    %c0_i32_1 = arith.constant 0 : i32
    %c0_i32_2 = arith.constant 0 : i32
    return %c0_i32, %c0_i32_0, %c0_i32_1 : i32, i32, i32
  }
  func.func @transform_11(%arg0: i32) -> (i32, i32, i32) {
    %c0_i32 = arith.constant 0 : i32
    %c0_i32_0 = arith.constant 0 : i32
    %c0_i32_1 = arith.constant 0 : i32
    %c0_i32_2 = arith.constant 0 : i32
    return %c0_i32, %c0_i32_0, %c0_i32_1 : i32, i32, i32
  }
  func.func @transform_12(%arg0: i32) -> (i32, i32, i32) {
    %c0_i32 = arith.constant 0 : i32
    %c0_i32_0 = arith.constant 0 : i32
    %c0_i32_1 = arith.constant 0 : i32
    %c0_i32_2 = arith.constant 0 : i32
    return %c0_i32, %c0_i32_0, %c0_i32_1 : i32, i32, i32
  }
  func.func @transform_13(%arg0: i32) -> (i32, i32, i32) {
    %c0_i32 = arith.constant 0 : i32
    %c0_i32_0 = arith.constant 0 : i32
    %c0_i32_1 = arith.constant 0 : i32
    %c0_i32_2 = arith.constant 0 : i32
    return %c0_i32, %c0_i32_0, %c0_i32_1 : i32, i32, i32
  }
  func.func @transform_14(%arg0: i32) -> (i32, i32, i32) {
    %c0_i32 = arith.constant 0 : i32
    %c0_i32_0 = arith.constant 0 : i32
    %c0_i32_1 = arith.constant 0 : i32
    %c0_i32_2 = arith.constant 0 : i32
    return %c0_i32, %c0_i32_0, %c0_i32_1 : i32, i32, i32
  }
  func.func @transform_15(%arg0: i32) -> (i32, i32, i32) {
    %c0_i32 = arith.constant 0 : i32
    %c0_i32_0 = arith.constant 0 : i32
    %c0_i32_1 = arith.constant 0 : i32
    %c0_i32_2 = arith.constant 0 : i32
    return %c0_i32, %c0_i32_0, %c0_i32_1 : i32, i32, i32
  }
  func.func @transform_16(%arg0: i32) -> (i32, i32, i32) {
    %c0_i32 = arith.constant 0 : i32
    %c0_i32_0 = arith.constant 0 : i32
    %c0_i32_1 = arith.constant 0 : i32
    %c0_i32_2 = arith.constant 0 : i32
    return %c0_i32, %c0_i32_0, %c0_i32_1 : i32, i32, i32
  }
  func.func @transform_17(%arg0: i32) -> (i32, i32, i32) {
    %c0_i32 = arith.constant 0 : i32
    %c0_i32_0 = arith.constant 0 : i32
    %c0_i32_1 = arith.constant 0 : i32
    %c0_i32_2 = arith.constant 0 : i32
    return %c0_i32, %c0_i32_0, %c0_i32_1 : i32, i32, i32
  }
  func.func @transform_18(%arg0: i32) -> (i32, i32, i32) {
    %c0_i32 = arith.constant 0 : i32
    %c0_i32_0 = arith.constant 0 : i32
    %c0_i32_1 = arith.constant 0 : i32
    %c0_i32_2 = arith.constant 0 : i32
    return %c0_i32, %c0_i32_0, %c0_i32_1 : i32, i32, i32
  }
  func.func @transform_19(%arg0: i32) -> (i32, i32, i32) {
    %c0_i32 = arith.constant 0 : i32
    %c0_i32_0 = arith.constant 0 : i32
    %c0_i32_1 = arith.constant 0 : i32
    %c0_i32_2 = arith.constant 0 : i32
    return %c0_i32, %c0_i32_0, %c0_i32_1 : i32, i32, i32
  }
  func.func @transform_20(%arg0: i32) -> (i32, i32, i32) {
    %c0_i32 = arith.constant 0 : i32
    %c0_i32_0 = arith.constant 0 : i32
    %c0_i32_1 = arith.constant 0 : i32
    %c0_i32_2 = arith.constant 0 : i32
    return %c0_i32, %c0_i32_0, %c0_i32_1 : i32, i32, i32
  }
  func.func @transform_21(%arg0: i32) -> (i32, i32) {
    %c0_i32 = arith.constant 0 : i32
    %c0_i32_0 = arith.constant 0 : i32
    return %arg0, %c0_i32 : i32, i32
  }
}

</mosaic_0001>

<llo_original>
// kernel: tpu_custom_call.1
$region0: #{tpu_custom_call.1}
  #allocation0 [shape = 'u32[]', space=smem, size = 0x4, offset = 0x4, fixed_abs, tag = 'smem constant byte address 0x4 - core index']
  #allocation1 [shape = 'u32[144,128]{1,0:T(1,128)}', space=vmem, size = 0x12000, scoped, tag = 'internal scratch']
  %s0 = inlined_call_operand.vmem [shape: f32[256,256], index: 0, kind: input, shape index: {}]
  %s1 = inlined_call_operand.vmem [shape: f32[256,32], index: 1, kind: input, shape index: {}]
  %s2 = inlined_call_operand.vmem [shape: f32[128,128], index: 2, kind: input, shape index: {}]
  %s3 = inlined_call_operand.vmem [shape: f32[2,1,32], index: 3, kind: input, shape index: {}]
  %s4 = inlined_call_operand.hbm [shape: f32[16,128], index: 4, kind: input, shape index: {}]
  %s5 = inlined_call_operand.vmem [shape: f32[2,32,32], index: 5, kind: input, shape index: {}]
  %s6 = inlined_call_operand.hbm [shape: f32[2,32,32], index: 6, kind: input, shape index: {}]
  %s7 = inlined_call_operand.hbm [shape: f32[2,32,32], index: 7, kind: input, shape index: {}]
  %s8 = inlined_call_operand.vmem [shape: f32[2,1,32], index: 8, kind: input, shape index: {}]
  %s9 = inlined_call_operand.vmem [shape: f32[2,1,32], index: 9, kind: input, shape index: {}]
  %s10 = inlined_call_operand.vmem [shape: f32[2,1,32], index: 10, kind: input, shape index: {}]
  %s11 = inlined_call_operand.hbm [shape: f32[2,32,32], index: 11, kind: input, shape index: {}]
  %s12 = inlined_call_operand.vmem [shape: f32[2,1,32], index: 12, kind: input, shape index: {}]
  %s13 = inlined_call_operand.vmem [shape: f32[2,32,256], index: 13, kind: input, shape index: {}]
  %s14 = inlined_call_operand.vmem [shape: f32[2,1,256], index: 14, kind: input, shape index: {}]
  %s15 = inlined_call_operand.vmem [shape: f32[2,256,32], index: 15, kind: input, shape index: {}]
  %s16 = inlined_call_operand.vmem [shape: f32[2,1,32], index: 16, kind: input, shape index: {}]
  %s17 = inlined_call_operand.vmem [shape: f32[2,1,32], index: 17, kind: input, shape index: {}]
  %s18 = inlined_call_operand.vmem [shape: f32[2,1,32], index: 18, kind: input, shape index: {}]
  %s19 = inlined_call_operand.vmem [shape: f32[2,1,32], index: 19, kind: input, shape index: {}]
  %s20 = inlined_call_operand.vmem [shape: f32[2,1,32], index: 20, kind: input, shape index: {}]
  %s21 = inlined_call_operand.hbm [shape: f32[32,32], index: 21, kind: output, shape index: {}]
  %s22 = sld [smem:[#allocation0]]
  $region133: #{tpu_custom_call.1} parent=0
    _
  %s24 = ssub.s32 1, %s22
  %s25 = scalar_select 0, %s24, %s22
  $region1: #{tpu_custom_call.1} parent=0
    #allocation2 [shape = 'u8[8192]{0}', space=vmem, size = 0x2000, scoped, tag = 'input window, operand 4, single buffered']
    #allocation3 [shape = 's32[2]{0}', space=sflag, size = 0x8, scoped, tag = 'scoped memory for tpu_custom_call.1']
    #allocation4 [shape = 's32[2]{0}', space=sflag, size = 0x8, scoped, tag = 'scoped memory for tpu_custom_call.1']
    #allocation5 [shape = 'u8[32768]{0}', space=vmem, size = 0x8000, scoped, tag = 'input window, operand 6, single buffered']
    #allocation6 [shape = 's32[1]{0}', space=sflag, size = 0x4, scoped, tag = 'scoped memory for tpu_custom_call.1']
    #allocation7 [shape = 'u8[32768]{0}', space=vmem, size = 0x8000, scoped, tag = 'input window, operand 7, single buffered']
    #allocation8 [shape = 'u8[32768]{0}', space=vmem, size = 0x8000, scoped, tag = 'input window, operand 11, single buffered']
    #allocation9 [shape = 's32[1]{0}', space=sflag, size = 0x4, scoped, tag = 'scoped memory for tpu_custom_call.1']
    #allocation10 [shape = 'u8[16384]{0}', space=vmem, size = 0x4000, scoped, tag = 'output window, operand 0']
    %26 = vsyncpa [#allocation3], 0
    %27 = vsyncpa [#allocation6], 0
    %28 = vsyncpa [#allocation9], 0
    %29 = vsyncpa [#allocation4], 0
    %s30 = scalar_lea.sflag [#allocation4], 1
    %31 = vsyncpa %s30, 0
    loop: start=0, step=1, limit=4
    $region2: #{tpu_custom_call.1} parent=1 // loop_pre_header
      _
    $region3: #{tpu_custom_call.1} parent=1 // loop_header
      %s33 = sphi 0, %s37
      %p34 = scmp.ge.s32.totalorder %s33, 4
      %s43 = sphi 0, %s45
      %s46 = sphi 0, %s43
      %s47 = sphi 0, %s46
      %s63 = sphi 0, %s47
      %s67 = sphi 0, %s67
      %s69 = sphi 0, %s67
      %s70 = sphi 0, %s69
      %s84 = sphi 0, %s70
      %s88 = sphi 0, %s88
      %s90 = sphi 0, %s88
      %s91 = sphi 0, %s90
      %s105 = sphi 0, %s91
      %s109 = sphi 0, %s109
      %s111 = sphi 0, %s109
      %s112 = sphi 0, %s111
      %s126 = sphi 0, %s112
      %s130 = sphi 0, %s130
      %s132 = sphi 0, %s130
      %s133 = sphi 0, %s132
      %s147 = sphi 0, %s133
      %s151 = sphi 0, %s151
      %s153 = sphi 0, %s151
      %s154 = sphi 0, %s153
      %s168 = sphi 0, %s154
      %s172 = sphi 0, %s172
      %s174 = sphi 0, %s172
      %s175 = sphi 0, %s174
      %s189 = sphi 0, %s175
      %s193 = sphi 0, %s193
      %s195 = sphi 0, %s193
      %s196 = sphi 0, %s195
      %s210 = sphi 0, %s196
      %s214 = sphi 0, %s214
      %s216 = sphi 0, %s214
      %s217 = sphi 0, %s216
      %s231 = sphi 0, %s217
      %s235 = sphi 0, %s235
      %s237 = sphi 0, %s235
      %s238 = sphi 0, %s237
      %s252 = sphi 0, %s238
      %s256 = sphi 0, %s256
      %s258 = sphi 0, %s256
      %s259 = sphi 0, %s258
      %s273 = sphi 0, %s259
      %s277 = sphi 0, %s277
      %s279 = sphi 0, %s277
      %s280 = sphi 0, %s279
      %s294 = sphi 0, %s280
      %s298 = sphi 0, %s298
      %s300 = sphi 0, %s298
      %s301 = sphi 0, %s300
      %s315 = sphi 0, %s301
      %s319 = sphi 0, %s319
      %s321 = sphi 0, %s319
      %s322 = sphi 0, %s321
      %s336 = sphi 0, %s322
      %s340 = sphi 0, %s340
      %s342 = sphi 0, %s340
      %s343 = sphi 0, %s342
      %s357 = sphi 0, %s343
      %s361 = sphi 0, %s361
      %s363 = sphi 0, %s361
      %s364 = sphi 0, %s363
      %s378 = sphi 0, %s364
      %s382 = sphi 0, %s382
      %s384 = sphi 0, %s382
      %s385 = sphi 0, %s384
      %s399 = sphi 0, %s385
      %s403 = sphi 0, %s403
      %s405 = sphi 0, %s403
      %s406 = sphi 0, %s405
      %s420 = sphi 0, %s406
      %s424 = sphi 0, %s424
      %s426 = sphi 0, %s424
      %s427 = sphi 0, %s426
      %s441 = sphi 0, %s427
      %s445 = sphi 0, %s445
      %s447 = sphi 0, %s445
      %s448 = sphi 0, %s447
      %s462 = sphi 0, %s448
      %s466 = sphi 0, %s466
      %s468 = sphi 0, %s466
      %s469 = sphi 0, %s468
      %s483 = sphi 0, %s469
      %s489 = sphi 0, %s491
      %s492 = sphi 0, %s489
      %s493 = sphi 0, %s492
      %s509 = sphi 0, %s493
    $region4: #{tpu_custom_call.1} parent=1 // loop_header_branch
      %36 = sbr.rel (%p34) target = $region8
    $region5: #{tpu_custom_call.1} parent=1 // loop_body
      %s38 = ssub.s32 %s33, 1
      %s39 = ssub.s32 %s33, 2
      %s40 = sadd.s32 %s33, 1
      %s41 = ssub.s32 %s33, %s40
      %p42 = scmp.eq.s32.totalorder %s41, 0
      %s44 = sadd.s32 %s43, 1
      %s45 = scalar_select %p42, %s43, %s44
      %p48 = pneg %p42
      %p49 = scmp.eq.s32.totalorder %s33, 1
      %p50 = por %p48, %p49
      %p51 = scmp.ne.s32.totalorder %s43, %s46
      %p52 = scmp.eq.s32.totalorder %s33, 0
      %p53 = por %p51, %p52
      %p54 = scmp.ne.s32.totalorder %s43, %s46
      %p55 = scmp.eq.s32.totalorder %s38, 1
      %p56 = por %p54, %p55
      %p57 = scmp.ne.s32.totalorder %s46, %s47
      %p58 = scmp.eq.s32.totalorder %s38, 0
      %p59 = por %p57, %p58
      %p60 = scmp.ne.s32.totalorder %s46, %s47
      %p61 = scmp.eq.s32.totalorder %s39, 1
      %p62 = por %p60, %p61
      %p64 = scmp.ne.s32.totalorder %s47, %s63
      %p65 = scmp.eq.s32.totalorder %s39, 0
      %p66 = por %p64, %p65
      %s68 = sadd.s32 %s67, 1
      %p71 = scmp.eq.s32.totalorder %s33, 1
      %p72 = scmp.ne.s32.totalorder %s67, %s69
      %p73 = scmp.eq.s32.totalorder %s33, 0
      %p74 = por %p72, %p73
      %p75 = scmp.ne.s32.totalorder %s67, %s69
      %p76 = scmp.eq.s32.totalorder %s38, 1
      %p77 = por %p75, %p76
      %p78 = scmp.ne.s32.totalorder %s69, %s70
      %p79 = scmp.eq.s32.totalorder %s38, 0
      %p80 = por %p78, %p79
      %p81 = scmp.ne.s32.totalorder %s69, %s70
      %p82 = scmp.eq.s32.totalorder %s39, 1
      %p83 = por %p81, %p82
      %p85 = scmp.ne.s32.totalorder %s70, %s84
      %p86 = scmp.eq.s32.totalorder %s39, 0
      %p87 = por %p85, %p86
      %s89 = sadd.s32 %s88, 1
      %p92 = scmp.eq.s32.totalorder %s33, 1
      %p93 = scmp.ne.s32.totalorder %s88, %s90
      %p94 = scmp.eq.s32.totalorder %s33, 0
      %p95 = por %p93, %p94
      %p96 = scmp.ne.s32.totalorder %s88, %s90
      %p97 = scmp.eq.s32.totalorder %s38, 1
      %p98 = por %p96, %p97
      %p99 = scmp.ne.s32.totalorder %s90, %s91
      %p100 = scmp.eq.s32.totalorder %s38, 0
      %p101 = por %p99, %p100
      %p102 = scmp.ne.s32.totalorder %s90, %s91
      %p103 = scmp.eq.s32.totalorder %s39, 1
      %p104 = por %p102, %p103
      %p106 = scmp.ne.s32.totalorder %s91, %s105
      %p107 = scmp.eq.s32.totalorder %s39, 0
      %p108 = por %p106, %p107
      %s110 = sadd.s32 %s109, 1
      %p113 = scmp.eq.s32.totalorder %s33, 1
      %p114 = scmp.ne.s32.totalorder %s109, %s111
      %p115 = scmp.eq.s32.totalorder %s33, 0
      %p116 = por %p114, %p115
      %p117 = scmp.ne.s32.totalorder %s109, %s111
      %p118 = scmp.eq.s32.totalorder %s38, 1
      %p119 = por %p117, %p118
      %p120 = scmp.ne.s32.totalorder %s111, %s112
      %p121 = scmp.eq.s32.totalorder %s38, 0
      %p122 = por %p120, %p121
      %p123 = scmp.ne.s32.totalorder %s111, %s112
      %p124 = scmp.eq.s32.totalorder %s39, 1
      %p125 = por %p123, %p124
      %p127 = scmp.ne.s32.totalorder %s112, %s126
      %p128 = scmp.eq.s32.totalorder %s39, 0
      %p129 = por %p127, %p128
      %s131 = sadd.s32 %s130, 1
      %p134 = scmp.eq.s32.totalorder %s33, 1
      %p135 = scmp.ne.s32.totalorder %s130, %s132
      %p136 = scmp.eq.s32.totalorder %s33, 0
      %p137 = por %p135, %p136
      %p138 = scmp.ne.s32.totalorder %s130, %s132
      %p139 = scmp.eq.s32.totalorder %s38, 1
      %p140 = por %p138, %p139
      %p141 = scmp.ne.s32.totalorder %s132, %s133
      %p142 = scmp.eq.s32.totalorder %s38, 0
      %p143 = por %p141, %p142
      %p144 = scmp.ne.s32.totalorder %s132, %s133
      %p145 = scmp.eq.s32.totalorder %s39, 1
      %p146 = por %p144, %p145
      %p148 = scmp.ne.s32.totalorder %s133, %s147
      %p149 = scmp.eq.s32.totalorder %s39, 0
      %p150 = por %p148, %p149
      %s152 = sadd.s32 %s151, 1
      %p155 = scmp.eq.s32.totalorder %s33, 1
      %p156 = scmp.ne.s32.totalorder %s151, %s153
      %p157 = scmp.eq.s32.totalorder %s33, 0
      %p158 = por %p156, %p157
      %p159 = scmp.ne.s32.totalorder %s151, %s153
      %p160 = scmp.eq.s32.totalorder %s38, 1
      %p161 = por %p159, %p160
      %p162 = scmp.ne.s32.totalorder %s153, %s154
      %p163 = scmp.eq.s32.totalorder %s38, 0
      %p164 = por %p162, %p163
      %p165 = scmp.ne.s32.totalorder %s153, %s154
      %p166 = scmp.eq.s32.totalorder %s39, 1
      %p167 = por %p165, %p166
      %p169 = scmp.ne.s32.totalorder %s154, %s168
      %p170 = scmp.eq.s32.totalorder %s39, 0
      %p171 = por %p169, %p170
      %s173 = sadd.s32 %s172, 1
      %p176 = scmp.eq.s32.totalorder %s33, 1
      %p177 = scmp.ne.s32.totalorder %s172, %s174
      %p178 = scmp.eq.s32.totalorder %s33, 0
      %p179 = por %p177, %p178
      %p180 = scmp.ne.s32.totalorder %s172, %s174
      %p181 = scmp.eq.s32.totalorder %s38, 1
      %p182 = por %p180, %p181
      %p183 = scmp.ne.s32.totalorder %s174, %s175
      %p184 = scmp.eq.s32.totalorder %s38, 0
      %p185 = por %p183, %p184
      %p186 = scmp.ne.s32.totalorder %s174, %s175
      %p187 = scmp.eq.s32.totalorder %s39, 1
      %p188 = por %p186, %p187
      %p190 = scmp.ne.s32.totalorder %s175, %s189
      %p191 = scmp.eq.s32.totalorder %s39, 0
      %p192 = por %p190, %p191
      %s194 = sadd.s32 %s193, 1
      %p197 = scmp.eq.s32.totalorder %s33, 1
      %p198 = scmp.ne.s32.totalorder %s193, %s195
      %p199 = scmp.eq.s32.totalorder %s33, 0
      %p200 = por %p198, %p199
      %p201 = scmp.ne.s32.totalorder %s193, %s195
      %p202 = scmp.eq.s32.totalorder %s38, 1
      %p203 = por %p201, %p202
      %p204 = scmp.ne.s32.totalorder %s195, %s196
      %p205 = scmp.eq.s32.totalorder %s38, 0
      %p206 = por %p204, %p205
      %p207 = scmp.ne.s32.totalorder %s195, %s196
      %p208 = scmp.eq.s32.totalorder %s39, 1
      %p209 = por %p207, %p208
      %p211 = scmp.ne.s32.totalorder %s196, %s210
      %p212 = scmp.eq.s32.totalorder %s39, 0
      %p213 = por %p211, %p212
      %s215 = sadd.s32 %s214, 1
      %p218 = scmp.eq.s32.totalorder %s33, 1
      %p219 = scmp.ne.s32.totalorder %s214, %s216
      %p220 = scmp.eq.s32.totalorder %s33, 0
      %p221 = por %p219, %p220
      %p222 = scmp.ne.s32.totalorder %s214, %s216
      %p223 = scmp.eq.s32.totalorder %s38, 1
      %p224 = por %p222, %p223
      %p225 = scmp.ne.s32.totalorder %s216, %s217
      %p226 = scmp.eq.s32.totalorder %s38, 0
      %p227 = por %p225, %p226
      %p228 = scmp.ne.s32.totalorder %s216, %s217
      %p229 = scmp.eq.s32.totalorder %s39, 1
      %p230 = por %p228, %p229
      %p232 = scmp.ne.s32.totalorder %s217, %s231
      %p233 = scmp.eq.s32.totalorder %s39, 0
      %p234 = por %p232, %p233
      %s236 = sadd.s32 %s235, 1
      %p239 = scmp.eq.s32.totalorder %s33, 1
      %p240 = scmp.ne.s32.totalorder %s235, %s237
      %p241 = scmp.eq.s32.totalorder %s33, 0
      %p242 = por %p240, %p241
      %p243 = scmp.ne.s32.totalorder %s235, %s237
      %p244 = scmp.eq.s32.totalorder %s38, 1
      %p245 = por %p243, %p244
      %p246 = scmp.ne.s32.totalorder %s237, %s238
      %p247 = scmp.eq.s32.totalorder %s38, 0
      %p248 = por %p246, %p247
      %p249 = scmp.ne.s32.totalorder %s237, %s238
      %p250 = scmp.eq.s32.totalorder %s39, 1
      %p251 = por %p249, %p250
      %p253 = scmp.ne.s32.totalorder %s238, %s252
      %p254 = scmp.eq.s32.totalorder %s39, 0
      %p255 = por %p253, %p254
      %s257 = sadd.s32 %s256, 1
      %p260 = scmp.eq.s32.totalorder %s33, 1
      %p261 = scmp.ne.s32.totalorder %s256, %s258
      %p262 = scmp.eq.s32.totalorder %s33, 0
      %p263 = por %p261, %p262
      %p264 = scmp.ne.s32.totalorder %s256, %s258
      %p265 = scmp.eq.s32.totalorder %s38, 1
      %p266 = por %p264, %p265
      %p267 = scmp.ne.s32.totalorder %s258, %s259
      %p268 = scmp.eq.s32.totalorder %s38, 0
      %p269 = por %p267, %p268
      %p270 = scmp.ne.s32.totalorder %s258, %s259
      %p271 = scmp.eq.s32.totalorder %s39, 1
      %p272 = por %p270, %p271
      %p274 = scmp.ne.s32.totalorder %s259, %s273
      %p275 = scmp.eq.s32.totalorder %s39, 0
      %p276 = por %p274, %p275
      %s278 = sadd.s32 %s277, 1
      %p281 = scmp.eq.s32.totalorder %s33, 1
      %p282 = scmp.ne.s32.totalorder %s277, %s279
      %p283 = scmp.eq.s32.totalorder %s33, 0
      %p284 = por %p282, %p283
      %p285 = scmp.ne.s32.totalorder %s277, %s279
      %p286 = scmp.eq.s32.totalorder %s38, 1
      %p287 = por %p285, %p286
      %p288 = scmp.ne.s32.totalorder %s279, %s280
      %p289 = scmp.eq.s32.totalorder %s38, 0
      %p290 = por %p288, %p289
      %p291 = scmp.ne.s32.totalorder %s279, %s280
      %p292 = scmp.eq.s32.totalorder %s39, 1
      %p293 = por %p291, %p292
      %p295 = scmp.ne.s32.totalorder %s280, %s294
      %p296 = scmp.eq.s32.totalorder %s39, 0
      %p297 = por %p295, %p296
      %s299 = sadd.s32 %s298, 1
      %p302 = scmp.eq.s32.totalorder %s33, 1
      %p303 = scmp.ne.s32.totalorder %s298, %s300
      %p304 = scmp.eq.s32.totalorder %s33, 0
      %p305 = por %p303, %p304
      %p306 = scmp.ne.s32.totalorder %s298, %s300
      %p307 = scmp.eq.s32.totalorder %s38, 1
      %p308 = por %p306, %p307
      %p309 = scmp.ne.s32.totalorder %s300, %s301
      %p310 = scmp.eq.s32.totalorder %s38, 0
      %p311 = por %p309, %p310
      %p312 = scmp.ne.s32.totalorder %s300, %s301
      %p313 = scmp.eq.s32.totalorder %s39, 1
      %p314 = por %p312, %p313
      %p316 = scmp.ne.s32.totalorder %s301, %s315
      %p317 = scmp.eq.s32.totalorder %s39, 0
      %p318 = por %p316, %p317
      %s320 = sadd.s32 %s319, 1
      %p323 = scmp.eq.s32.totalorder %s33, 1
      %p324 = scmp.ne.s32.totalorder %s319, %s321
      %p325 = scmp.eq.s32.totalorder %s33, 0
      %p326 = por %p324, %p325
      %p327 = scmp.ne.s32.totalorder %s319, %s321
      %p328 = scmp.eq.s32.totalorder %s38, 1
      %p329 = por %p327, %p328
      %p330 = scmp.ne.s32.totalorder %s321, %s322
      %p331 = scmp.eq.s32.totalorder %s38, 0
      %p332 = por %p330, %p331
      %p333 = scmp.ne.s32.totalorder %s321, %s322
      %p334 = scmp.eq.s32.totalorder %s39, 1
      %p335 = por %p333, %p334
      %p337 = scmp.ne.s32.totalorder %s322, %s336
      %p338 = scmp.eq.s32.totalorder %s39, 0
      %p339 = por %p337, %p338
      %s341 = sadd.s32 %s340, 1
      %p344 = scmp.eq.s32.totalorder %s33, 1
      %p345 = scmp.ne.s32.totalorder %s340, %s342
      %p346 = scmp.eq.s32.totalorder %s33, 0
      %p347 = por %p345, %p346
      %p348 = scmp.ne.s32.totalorder %s340, %s342
      %p349 = scmp.eq.s32.totalorder %s38, 1
      %p350 = por %p348, %p349
      %p351 = scmp.ne.s32.totalorder %s342, %s343
      %p352 = scmp.eq.s32.totalorder %s38, 0
      %p353 = por %p351, %p352
      %p354 = scmp.ne.s32.totalorder %s342, %s343
      %p355 = scmp.eq.s32.totalorder %s39, 1
      %p356 = por %p354, %p355
      %p358 = scmp.ne.s32.totalorder %s343, %s357
      %p359 = scmp.eq.s32.totalorder %s39, 0
      %p360 = por %p358, %p359
      %s362 = sadd.s32 %s361, 1
      %p365 = scmp.eq.s32.totalorder %s33, 1
      %p366 = scmp.ne.s32.totalorder %s361, %s363
      %p367 = scmp.eq.s32.totalorder %s33, 0
      %p368 = por %p366, %p367
      %p369 = scmp.ne.s32.totalorder %s361, %s363
      %p370 = scmp.eq.s32.totalorder %s38, 1
      %p371 = por %p369, %p370
      %p372 = scmp.ne.s32.totalorder %s363, %s364
      %p373 = scmp.eq.s32.totalorder %s38, 0
      %p374 = por %p372, %p373
      %p375 = scmp.ne.s32.totalorder %s363, %s364
      %p376 = scmp.eq.s32.totalorder %s39, 1
      %p377 = por %p375, %p376
      %p379 = scmp.ne.s32.totalorder %s364, %s378
      %p380 = scmp.eq.s32.totalorder %s39, 0
      %p381 = por %p379, %p380
      %s383 = sadd.s32 %s382, 1
      %p386 = scmp.eq.s32.totalorder %s33, 1
      %p387 = scmp.ne.s32.totalorder %s382, %s384
      %p388 = scmp.eq.s32.totalorder %s33, 0
      %p389 = por %p387, %p388
      %p390 = scmp.ne.s32.totalorder %s382, %s384
      %p391 = scmp.eq.s32.totalorder %s38, 1
      %p392 = por %p390, %p391
      %p393 = scmp.ne.s32.totalorder %s384, %s385
      %p394 = scmp.eq.s32.totalorder %s38, 0
      %p395 = por %p393, %p394
      %p396 = scmp.ne.s32.totalorder %s384, %s385
      %p397 = scmp.eq.s32.totalorder %s39, 1
      %p398 = por %p396, %p397
      %p400 = scmp.ne.s32.totalorder %s385, %s399
      %p401 = scmp.eq.s32.totalorder %s39, 0
      %p402 = por %p400, %p401
      %s404 = sadd.s32 %s403, 1
      %p407 = scmp.eq.s32.totalorder %s33, 1
      %p408 = scmp.ne.s32.totalorder %s403, %s405
      %p409 = scmp.eq.s32.totalorder %s33, 0
      %p410 = por %p408, %p409
      %p411 = scmp.ne.s32.totalorder %s403, %s405
      %p412 = scmp.eq.s32.totalorder %s38, 1
      %p413 = por %p411, %p412
      %p414 = scmp.ne.s32.totalorder %s405, %s406
      %p415 = scmp.eq.s32.totalorder %s38, 0
      %p416 = por %p414, %p415
      %p417 = scmp.ne.s32.totalorder %s405, %s406
      %p418 = scmp.eq.s32.totalorder %s39, 1
      %p419 = por %p417, %p418
      %p421 = scmp.ne.s32.totalorder %s406, %s420
      %p422 = scmp.eq.s32.totalorder %s39, 0
      %p423 = por %p421, %p422
      %s425 = sadd.s32 %s424, 1
      %p428 = scmp.eq.s32.totalorder %s33, 1
      %p429 = scmp.ne.s32.totalorder %s424, %s426
      %p430 = scmp.eq.s32.totalorder %s33, 0
      %p431 = por %p429, %p430
      %p432 = scmp.ne.s32.totalorder %s424, %s426
      %p433 = scmp.eq.s32.totalorder %s38, 1
      %p434 = por %p432, %p433
      %p435 = scmp.ne.s32.totalorder %s426, %s427
      %p436 = scmp.eq.s32.totalorder %s38, 0
      %p437 = por %p435, %p436
      %p438 = scmp.ne.s32.totalorder %s426, %s427
      %p439 = scmp.eq.s32.totalorder %s39, 1
      %p440 = por %p438, %p439
      %p442 = scmp.ne.s32.totalorder %s427, %s441
      %p443 = scmp.eq.s32.totalorder %s39, 0
      %p444 = por %p442, %p443
      %s446 = sadd.s32 %s445, 1
      %p449 = scmp.eq.s32.totalorder %s33, 1
      %p450 = scmp.ne.s32.totalorder %s445, %s447
      %p451 = scmp.eq.s32.totalorder %s33, 0
      %p452 = por %p450, %p451
      %p453 = scmp.ne.s32.totalorder %s445, %s447
      %p454 = scmp.eq.s32.totalorder %s38, 1
      %p455 = por %p453, %p454
      %p456 = scmp.ne.s32.totalorder %s447, %s448
      %p457 = scmp.eq.s32.totalorder %s38, 0
      %p458 = por %p456, %p457
      %p459 = scmp.ne.s32.totalorder %s447, %s448
      %p460 = scmp.eq.s32.totalorder %s39, 1
      %p461 = por %p459, %p460
      %p463 = scmp.ne.s32.totalorder %s448, %s462
      %p464 = scmp.eq.s32.totalorder %s39, 0
      %p465 = por %p463, %p464
      %s467 = sadd.s32 %s466, 1
      %p470 = scmp.eq.s32.totalorder %s33, 1
      %p471 = scmp.ne.s32.totalorder %s466, %s468
      %p472 = scmp.eq.s32.totalorder %s33, 0
      %p473 = por %p471, %p472
      %p474 = scmp.ne.s32.totalorder %s466, %s468
      %p475 = scmp.eq.s32.totalorder %s38, 1
      %p476 = por %p474, %p475
      %p477 = scmp.ne.s32.totalorder %s468, %s469
      %p478 = scmp.eq.s32.totalorder %s38, 0
      %p479 = por %p477, %p478
      %p480 = scmp.ne.s32.totalorder %s468, %s469
      %p481 = scmp.eq.s32.totalorder %s39, 1
      %p482 = por %p480, %p481
      %p484 = scmp.ne.s32.totalorder %s469, %s483
      %p485 = scmp.eq.s32.totalorder %s39, 0
      %p486 = por %p484, %p485
      %s487 = ssub.s32 %s33, %s40
      %p488 = scmp.eq.s32.totalorder %s487, 0
      %s490 = sadd.s32 %s489, 1
      %s491 = scalar_select %p488, %s489, %s490
      %p494 = pneg %p488
      %p495 = scmp.eq.s32.totalorder %s33, 1
      %p496 = por %p494, %p495
      %p497 = scmp.ne.s32.totalorder %s489, %s492
      %p498 = scmp.eq.s32.totalorder %s33, 0
      %p499 = por %p497, %p498
      %p500 = scmp.ne.s32.totalorder %s489, %s492
      %p501 = scmp.eq.s32.totalorder %s38, 1
      %p502 = por %p500, %p501
      %p503 = scmp.ne.s32.totalorder %s492, %s493
      %p504 = scmp.eq.s32.totalorder %s38, 0
      %p505 = por %p503, %p504
      %p506 = scmp.ne.s32.totalorder %s492, %s493
      %p507 = scmp.eq.s32.totalorder %s39, 1
      %p508 = por %p506, %p507
      %p510 = scmp.ne.s32.totalorder %s493, %s509
      %p511 = scmp.eq.s32.totalorder %s39, 0
      %p512 = por %p510, %p511
      %p513 = scmp.le.s32.totalorder 1, %s33
      %p514 = scmp.lt.s32.totalorder %s33, 3
      %p515 = pnand %p513, %p514
      %p516 = pneg %p515
      // Predicated region
      $region9: #{tpu_custom_call.1} parent=5 // pred_check
        _
      $region10: #{tpu_custom_call.1} parent=5 // pred_check_branch
        %518 = sbr.rel (%p515) target = $region12
      $region11: #{tpu_custom_call.1} parent=5 // pred_region
        %s519 = ssub.s32 %s33, 1
        // Predicated region
        $region13: #{tpu_custom_call.1} parent=11 // pred_check
          %p520 = pneg %p80
        $region14: #{tpu_custom_call.1} parent=11 // pred_check_branch
          %522 = sbr.rel (%p520) target = $region16
        $region15: #{tpu_custom_call.1} parent=11 // pred_region
          _
        $region16: #{tpu_custom_call.1} parent=11 // pred_fallthru
          _
        // Predicated region
        $region17: #{tpu_custom_call.1} parent=11 // pred_check
          %p523 = pneg %p101
        $region18: #{tpu_custom_call.1} parent=11 // pred_check_branch
          %525 = sbr.rel (%p523) target = $region20
        $region19: #{tpu_custom_call.1} parent=11 // pred_region
          _
        $region20: #{tpu_custom_call.1} parent=11 // pred_fallthru
          _
        // Predicated region
        $region21: #{tpu_custom_call.1} parent=11 // pred_check
          %p526 = pneg %p122
        $region22: #{tpu_custom_call.1} parent=11 // pred_check_branch
          %528 = sbr.rel (%p526) target = $region24
        $region23: #{tpu_custom_call.1} parent=11 // pred_region
          _
        $region24: #{tpu_custom_call.1} parent=11 // pred_fallthru
          _
        // Predicated region
        $region25: #{tpu_custom_call.1} parent=11 // pred_check
          %p529 = pneg %p143
        $region26: #{tpu_custom_call.1} parent=11 // pred_check_branch
          %531 = sbr.rel (%p529) target = $region28
        $region27: #{tpu_custom_call.1} parent=11 // pred_region
          %s533 = ssub.s32 256, 256
          %534 = vsyncadd [#allocation3], %s533
          %s535 = sshll.u32 [#allocation2], 4
          %s536 = int_to_ptr.vmem [resolvable:$true] %s535
          %541 = dma.hbm_to_vmem [thread:$0]  %s4, 256, %s536, [#allocation3], 128, 128, 8
        $region28: #{tpu_custom_call.1} parent=11 // pred_fallthru
          _
        // Predicated region
        $region29: #{tpu_custom_call.1} parent=11 // pred_check
          %p542 = pneg %p164
        $region30: #{tpu_custom_call.1} parent=11 // pred_check_branch
          %544 = sbr.rel (%p542) target = $region32
        $region31: #{tpu_custom_call.1} parent=11 // pred_region
          _
        $region32: #{tpu_custom_call.1} parent=11 // pred_fallthru
          _
        // Predicated region
        $region33: #{tpu_custom_call.1} parent=11 // pred_check
          %p545 = pneg %p185
        $region34: #{tpu_custom_call.1} parent=11 // pred_check_branch
          %547 = sbr.rel (%p545) target = $region36
        $region35: #{tpu_custom_call.1} parent=11 // pred_region
          %s549 = ssub.s32 1024, 1024
          %550 = vsyncadd [#allocation6], %s549
          %s551 = sshll.u32 [#allocation5], 4
          %s552 = int_to_ptr.vmem [resolvable:$true] %s551
          %557 = dma.hbm_to_vmem [thread:$0]  %s6, 1024, %s552, [#allocation6], 128, 128, 8
        $region36: #{tpu_custom_call.1} parent=11 // pred_fallthru
          _
        // Predicated region
        $region37: #{tpu_custom_call.1} parent=11 // pred_check
          %p558 = pneg %p206
        $region38: #{tpu_custom_call.1} parent=11 // pred_check_branch
          %560 = sbr.rel (%p558) target = $region40
        $region39: #{tpu_custom_call.1} parent=11 // pred_region
          %s562 = ssub.s32 1024, 1024
          %563 = vsyncadd [#allocation6], %s562
          %s564 = sshll.u32 [#allocation7], 4
          %s565 = int_to_ptr.vmem [resolvable:$true] %s564
          %570 = dma.hbm_to_vmem [thread:$0]  %s7, 1024, %s565, [#allocation6], 128, 128, 8
        $region40: #{tpu_custom_call.1} parent=11 // pred_fallthru
          _
        // Predicated region
        $region41: #{tpu_custom_call.1} parent=11 // pred_check
          %p571 = pneg %p227
        $region42: #{tpu_custom_call.1} parent=11 // pred_check_branch
          %573 = sbr.rel (%p571) target = $region44
        $region43: #{tpu_custom_call.1} parent=11 // pred_region
          _
        $region44: #{tpu_custom_call.1} parent=11 // pred_fallthru
          _
        // Predicated region
        $region45: #{tpu_custom_call.1} parent=11 // pred_check
          %p574 = pneg %p248
        $region46: #{tpu_custom_call.1} parent=11 // pred_check_branch
          %576 = sbr.rel (%p574) target = $region48
        $region47: #{tpu_custom_call.1} parent=11 // pred_region
          _
        $region48: #{tpu_custom_call.1} parent=11 // pred_fallthru
          _
        // Predicated region
        $region49: #{tpu_custom_call.1} parent=11 // pred_check
          %p577 = pneg %p269
        $region50: #{tpu_custom_call.1} parent=11 // pred_check_branch
          %579 = sbr.rel (%p577) target = $region52
        $region51: #{tpu_custom_call.1} parent=11 // pred_region
          _
        $region52: #{tpu_custom_call.1} parent=11 // pred_fallthru
          _
        // Predicated region
        $region53: #{tpu_custom_call.1} parent=11 // pred_check
          %p580 = pneg %p290
        $region54: #{tpu_custom_call.1} parent=11 // pred_check_branch
          %582 = sbr.rel (%p580) target = $region56
        $region55: #{tpu_custom_call.1} parent=11 // pred_region
          %s584 = ssub.s32 1024, 1024
          %585 = vsyncadd [#allocation9], %s584
          %s586 = sshll.u32 [#allocation8], 4
          %s587 = int_to_ptr.vmem [resolvable:$true] %s586
          %592 = dma.hbm_to_vmem [thread:$0]  %s11, 1024, %s587, [#allocation9], 128, 128, 8
        $region56: #{tpu_custom_call.1} parent=11 // pred_fallthru
          _
        // Predicated region
        $region57: #{tpu_custom_call.1} parent=11 // pred_check
          %p593 = pneg %p311
        $region58: #{tpu_custom_call.1} parent=11 // pred_check_branch
          %595 = sbr.rel (%p593) target = $region60
        $region59: #{tpu_custom_call.1} parent=11 // pred_region
          _
        $region60: #{tpu_custom_call.1} parent=11 // pred_fallthru
          _
        // Predicated region
        $region61: #{tpu_custom_call.1} parent=11 // pred_check
          %p596 = pneg %p332
        $region62: #{tpu_custom_call.1} parent=11 // pred_check_branch
          %598 = sbr.rel (%p596) target = $region64
        $region63: #{tpu_custom_call.1} parent=11 // pred_region
          _
        $region64: #{tpu_custom_call.1} parent=11 // pred_fallthru
          _
        // Predicated region
        $region65: #{tpu_custom_call.1} parent=11 // pred_check
          %p599 = pneg %p353
        $region66: #{tpu_custom_call.1} parent=11 // pred_check_branch
          %601 = sbr.rel (%p599) target = $region68
        $region67: #{tpu_custom_call.1} parent=11 // pred_region
          _
        $region68: #{tpu_custom_call.1} parent=11 // pred_fallthru
          _
        // Predicated region
        $region69: #{tpu_custom_call.1} parent=11 // pred_check
          %p602 = pneg %p374
        $region70: #{tpu_custom_call.1} parent=11 // pred_check_branch
          %604 = sbr.rel (%p602) target = $region72
        $region71: #{tpu_custom_call.1} parent=11 // pred_region
          _
        $region72: #{tpu_custom_call.1} parent=11 // pred_fallthru
          _
        // Predicated region
        $region73: #{tpu_custom_call.1} parent=11 // pred_check
          %p605 = pneg %p395
        $region74: #{tpu_custom_call.1} parent=11 // pred_check_branch
          %607 = sbr.rel (%p605) target = $region76
        $region75: #{tpu_custom_call.1} parent=11 // pred_region
          _
        $region76: #{tpu_custom_call.1} parent=11 // pred_fallthru
          _
        // Predicated region
        $region77: #{tpu_custom_call.1} parent=11 // pred_check
          %p608 = pneg %p416
        $region78: #{tpu_custom_call.1} parent=11 // pred_check_branch
          %610 = sbr.rel (%p608) target = $region80
        $region79: #{tpu_custom_call.1} parent=11 // pred_region
          _
        $region80: #{tpu_custom_call.1} parent=11 // pred_fallthru
          _
        // Predicated region
        $region81: #{tpu_custom_call.1} parent=11 // pred_check
          %p611 = pneg %p437
        $region82: #{tpu_custom_call.1} parent=11 // pred_check_branch
          %613 = sbr.rel (%p611) target = $region84
        $region83: #{tpu_custom_call.1} parent=11 // pred_region
          _
        $region84: #{tpu_custom_call.1} parent=11 // pred_fallthru
          _
        // Predicated region
        $region85: #{tpu_custom_call.1} parent=11 // pred_check
          %p614 = pneg %p458
        $region86: #{tpu_custom_call.1} parent=11 // pred_check_branch
          %616 = sbr.rel (%p614) target = $region88
        $region87: #{tpu_custom_call.1} parent=11 // pred_region
          _
        $region88: #{tpu_custom_call.1} parent=11 // pred_fallthru
          _
        // Predicated region
        $region89: #{tpu_custom_call.1} parent=11 // pred_check
          %p617 = pneg %p479
        $region90: #{tpu_custom_call.1} parent=11 // pred_check_branch
          %619 = sbr.rel (%p617) target = $region92
        $region91: #{tpu_custom_call.1} parent=11 // pred_region
          _
        $region92: #{tpu_custom_call.1} parent=11 // pred_fallthru
          _
      $region12: #{tpu_custom_call.1} parent=5 // pred_fallthru
        _
      %p620 = scmp.lt.s32.totalorder %s33, 2
      // Predicated region
      $region93: #{tpu_custom_call.1} parent=5 // pred_check
        %p621 = pneg %p620
      $region94: #{tpu_custom_call.1} parent=5 // pred_check_branch
        %623 = sbr.rel (%p621) target = $region96
      $region95: #{tpu_custom_call.1} parent=5 // pred_region
        // Predicated region
        $region97: #{tpu_custom_call.1} parent=95 // pred_check
          %p624 = pneg %p53
        $region98: #{tpu_custom_call.1} parent=95 // pred_check_branch
          %626 = sbr.rel (%p624) target = $region100
        $region99: #{tpu_custom_call.1} parent=95 // pred_region
          %s627 = smul.u32 16, %s33
          %p628 = scmp.lt.s32.totalorder %s627, 31
          %s629 = scalar_select %p628, %s627, 31
          %s630 = smul.addr %s629, 2
          %s631 = smul.addr %s630, 8
          %s632 = scalar_lea.vmem %s0, %s631
          %s633 = smul.u32 16, %s33
        $region100: #{tpu_custom_call.1} parent=95 // pred_fallthru
          _
      $region96: #{tpu_custom_call.1} parent=5 // pred_fallthru
        _
      %p634 = scmp.le.s32.totalorder 1, %s33
      %p635 = scmp.lt.s32.totalorder %s33, 3
      %p636 = pnand %p634, %p635
      %p637 = pneg %p636
      // Predicated region
      $region101: #{tpu_custom_call.1} parent=5 // pred_check
        _
      $region102: #{tpu_custom_call.1} parent=5 // pred_check_branch
        %639 = sbr.rel (%p636) target = $region104
      $region103: #{tpu_custom_call.1} parent=5 // pred_region
        %s640 = ssub.s32 %s33, 1
        // Predicated region
        $region105: #{tpu_custom_call.1} parent=103 // pred_check
          %p641 = pneg %p143
        $region106: #{tpu_custom_call.1} parent=103 // pred_check_branch
          %643 = sbr.rel (%p641) target = $region108
        $region107: #{tpu_custom_call.1} parent=103 // pred_region
          %644 = dma.done [#allocation3], 256
        $region108: #{tpu_custom_call.1} parent=103 // pred_fallthru
          _
        // Predicated region
        $region109: #{tpu_custom_call.1} parent=103 // pred_check
          %p645 = pneg %p185
        $region110: #{tpu_custom_call.1} parent=103 // pred_check_branch
          %647 = sbr.rel (%p645) target = $region112
        $region111: #{tpu_custom_call.1} parent=103 // pred_region
          %648 = dma.done [#allocation6], 1024
        $region112: #{tpu_custom_call.1} parent=103 // pred_fallthru
          _
        // Predicated region
        $region113: #{tpu_custom_call.1} parent=103 // pred_check
          %p649 = pneg %p206
        $region114: #{tpu_custom_call.1} parent=103 // pred_check_branch
          %651 = sbr.rel (%p649) target = $region116
        $region115: #{tpu_custom_call.1} parent=103 // pred_region
          %652 = dma.done [#allocation6], 1024
        $region116: #{tpu_custom_call.1} parent=103 // pred_fallthru
          _
        // Predicated region
        $region117: #{tpu_custom_call.1} parent=103 // pred_check
          %p653 = pneg %p290
        $region118: #{tpu_custom_call.1} parent=103 // pred_check_branch
          %655 = sbr.rel (%p653) target = $region120
        $region119: #{tpu_custom_call.1} parent=103 // pred_region
          %656 = dma.done [#allocation9], 1024
        $region120: #{tpu_custom_call.1} parent=103 // pred_fallthru
          _
        %s657 = smul.u32 16, %s38
        %p658 = scmp.lt.s32.totalorder %s657, 31
        %s659 = scalar_select %p658, %s657, 31
        %s660 = smul.addr %s659, 2
        %s661 = smul.addr %s660, 8
        %s662 = scalar_lea.vmem %s0, %s661
        %p663 = pneg %p59
        %p664 = pneg %p56
        %p665 = pneg %p80
        %p666 = pneg %p77
        %p667 = pneg %p101
        %p668 = pneg %p98
        %p669 = pneg %p122
        %p670 = pneg %p119
        %p671 = pneg %p143
        %p672 = pneg %p140
        %p673 = pneg %p164
        %p674 = pneg %p161
        %p675 = pneg %p185
        %p676 = pneg %p182
        %p677 = pneg %p206
        %p678 = pneg %p203
        %p679 = pneg %p227
        %p680 = pneg %p224
        %p681 = pneg %p248
        %p682 = pneg %p245
        %p683 = pneg %p269
        %p684 = pneg %p266
        %p685 = pneg %p290
        %p686 = pneg %p287
        %p687 = pneg %p311
        %p688 = pneg %p308
        %p689 = pneg %p332
        %p690 = pneg %p329
        %p691 = pneg %p353
        %p692 = pneg %p350
        %p693 = pneg %p374
        %p694 = pneg %p371
        %p695 = pneg %p395
        %p696 = pneg %p392
        %p697 = pneg %p416
        %p698 = pneg %p413
        %p699 = pneg %p437
        %p700 = pneg %p434
        %p701 = pneg %p458
        %p702 = pneg %p455
        %p703 = pneg %p479
        %p704 = pneg %p476
        %p705 = pneg %p505
        %p706 = pneg %p502
        %s707 = sand.u32 %s492, 1
        %s708 = scalar_lea.sflag [#allocation4], %s707
        %s709 = sand.u32 %s492, 1
        %s710 = smul.addr %s709, 16
        %s711 = scalar_lea.vmem [#allocation10], %s710
        %s712 = smul.u32 16, %s38
        %p713 = scmp.lt.s32.totalorder %s712, 31
        %s714 = scalar_select %p713, %s712, 31
        %s715 = smul.addr %s714, 2
        %s716 = smul.addr %s715, 8
        %s717 = scalar_lea.vmem %s0, %s716
        %s718 = smul.u32 16, %s38
        %s719 = smul.u32 2, %s38
        %v720 = vld [vmem:[%s717] sm:$0xff]
        %v721 = vld [vmem:[%s717 + $0x8] sm:$0xff]
        %v722 = vld [vmem:[%s717 + $0x10] sm:$0xff]
        %v723 = vld [vmem:[%s717 + $0x18] sm:$0xff]
        %v724 = vld [vmem:[%s717 + $0x20] sm:$0xff]
        %v725 = vld [vmem:[%s717 + $0x28] sm:$0xff]
        %v726 = vld [vmem:[%s717 + $0x30] sm:$0xff]
        %v727 = vld [vmem:[%s717 + $0x38] sm:$0xff]
        %v728 = vld [vmem:[%s717 + $0x40] sm:$0xff]
        %v729 = vld [vmem:[%s717 + $0x48] sm:$0xff]
        %v730 = vld [vmem:[%s717 + $0x50] sm:$0xff]
        %v731 = vld [vmem:[%s717 + $0x58] sm:$0xff]
        %v732 = vld [vmem:[%s717 + $0x60] sm:$0xff]
        %v733 = vld [vmem:[%s717 + $0x68] sm:$0xff]
        %v734 = vld [vmem:[%s717 + $0x70] sm:$0xff]
        %v735 = vld [vmem:[%s717 + $0x78] sm:$0xff]
        %v736 = vld [vmem:[%s717 + $0x80] sm:$0xff]
        %v737 = vld [vmem:[%s717 + $0x88] sm:$0xff]
        %v738 = vld [vmem:[%s717 + $0x90] sm:$0xff]
        %v739 = vld [vmem:[%s717 + $0x98] sm:$0xff]
        %v740 = vld [vmem:[%s717 + $0xa0] sm:$0xff]
        %v741 = vld [vmem:[%s717 + $0xa8] sm:$0xff]
        %v742 = vld [vmem:[%s717 + $0xb0] sm:$0xff]
        %v743 = vld [vmem:[%s717 + $0xb8] sm:$0xff]
        %v744 = vld [vmem:[%s717 + $0xc0] sm:$0xff]
        %v745 = vld [vmem:[%s717 + $0xc8] sm:$0xff]
        %v746 = vld [vmem:[%s717 + $0xd0] sm:$0xff]
        %v747 = vld [vmem:[%s717 + $0xd8] sm:$0xff]
        %v748 = vld [vmem:[%s717 + $0xe0] sm:$0xff]
        %v749 = vld [vmem:[%s717 + $0xe8] sm:$0xff]
        %v750 = vld [vmem:[%s717 + $0xf0] sm:$0xff]
        %v751 = vld [vmem:[%s717 + $0xf8] sm:$0xff]
        %v752 = vld [vmem:[%s1] sm:$0xff]
        %v753 = vld [vmem:[%s1 + $0x8] sm:$0xff]
        %v754 = vld [vmem:[%s1 + $0x10] sm:$0xff]
        %v755 = vld [vmem:[%s1 + $0x18] sm:$0xff]
        %v756 = vld [vmem:[%s1 + $0x20] sm:$0xff]
        %v757 = vld [vmem:[%s1 + $0x28] sm:$0xff]
        %v758 = vld [vmem:[%s1 + $0x30] sm:$0xff]
        %v759 = vld [vmem:[%s1 + $0x38] sm:$0xff]
        %v760 = vld [vmem:[%s1 + $0x40] sm:$0xff]
        %v761 = vld [vmem:[%s1 + $0x48] sm:$0xff]
        %v762 = vld [vmem:[%s1 + $0x50] sm:$0xff]
        %v763 = vld [vmem:[%s1 + $0x58] sm:$0xff]
        %v764 = vld [vmem:[%s1 + $0x60] sm:$0xff]
        %v765 = vld [vmem:[%s1 + $0x68] sm:$0xff]
        %v766 = vld [vmem:[%s1 + $0x70] sm:$0xff]
        %v767 = vld [vmem:[%s1 + $0x78] sm:$0xff]
        %v768 = vld [vmem:[%s1 + $0x80] sm:$0xff]
        %v769 = vld [vmem:[%s1 + $0x88] sm:$0xff]
        %v770 = vld [vmem:[%s1 + $0x90] sm:$0xff]
        %v771 = vld [vmem:[%s1 + $0x98] sm:$0xff]
        %v772 = vld [vmem:[%s1 + $0xa0] sm:$0xff]
        %v773 = vld [vmem:[%s1 + $0xa8] sm:$0xff]
        %v774 = vld [vmem:[%s1 + $0xb0] sm:$0xff]
        %v775 = vld [vmem:[%s1 + $0xb8] sm:$0xff]
        %v776 = vld [vmem:[%s1 + $0xc0] sm:$0xff]
        %v777 = vld [vmem:[%s1 + $0xc8] sm:$0xff]
        %v778 = vld [vmem:[%s1 + $0xd0] sm:$0xff]
        %v779 = vld [vmem:[%s1 + $0xd8] sm:$0xff]
        %v780 = vld [vmem:[%s1 + $0xe0] sm:$0xff]
        %v781 = vld [vmem:[%s1 + $0xe8] sm:$0xff]
        %v782 = vld [vmem:[%s1 + $0xf0] sm:$0xff]
        %v783 = vld [vmem:[%s1 + $0xf8] sm:$0xff]
        %784 = vmatprep.subr.mxu0 0.0
        %785 = vmatpush1.msra.mxu0 %v752
        %786 = vmatprep.subr.mxu0 0.0
        %787 = vmatpush1.msra.mxu0 %v753
        %788 = vmatprep.subr.mxu0 0.0
        %789 = vmatpush1.msra.mxu0 %v754
        %790 = vmatprep.subr.mxu0 0.0
        %791 = vmatpush1.msra.mxu0 %v755
        %792 = vmatprep.subr.mxu0 0.0
        %793 = vmatpush1.msra.mxu0 %v756
        %794 = vmatprep.subr.mxu0 0.0
        %795 = vmatpush1.msra.mxu0 %v757
        %796 = vmatprep.subr.mxu0 0.0
        %797 = vmatpush1.msra.mxu0 %v758
        %798 = vmatprep.subr.mxu0 0.0
        %799 = vmatpush1.msra.mxu0 %v759
        %800 = vmatprep.subr.mxu0 0.0
        %801 = vmatpush1.msra.mxu0 %v760
        %802 = vmatprep.subr.mxu0 0.0
        %803 = vmatpush1.msra.mxu0 %v761
        %804 = vmatprep.subr.mxu0 0.0
        %805 = vmatpush1.msra.mxu0 %v762
        %806 = vmatprep.subr.mxu0 0.0
        %807 = vmatpush1.msra.mxu0 %v763
        %808 = vmatprep.subr.mxu0 0.0
        %809 = vmatpush1.msra.mxu0 %v764
        %810 = vmatprep.subr.mxu0 0.0
        %811 = vmatpush1.msra.mxu0 %v765
        %812 = vmatprep.subr.mxu0 0.0
        %813 = vmatpush1.msra.mxu0 %v766
        %814 = vmatprep.subr.mxu0 0.0
        %815 = vmatpush1.msra.mxu0 %v767
        %816 = vmatprep.subr.mxu0 0.0
        %817 = vmatpush1.msra.mxu0 %v768
        %818 = vmatprep.subr.mxu0 0.0
        %819 = vmatpush1.msra.mxu0 %v769
        %820 = vmatprep.subr.mxu0 0.0
        %821 = vmatpush1.msra.mxu0 %v770
        %822 = vmatprep.subr.mxu0 0.0
        %823 = vmatpush1.msra.mxu0 %v771
        %824 = vmatprep.subr.mxu0 0.0
        %825 = vmatpush1.msra.mxu0 %v772
        %826 = vmatprep.subr.mxu0 0.0
        %827 = vmatpush1.msra.mxu0 %v773
        %828 = vmatprep.subr.mxu0 0.0
        %829 = vmatpush1.msra.mxu0 %v774
        %830 = vmatprep.subr.mxu0 0.0
        %831 = vmatpush1.msra.mxu0 %v775
        %832 = vmatprep.subr.mxu0 0.0
        %833 = vmatpush1.msra.mxu0 %v776
        %834 = vmatprep.subr.mxu0 0.0
        %835 = vmatpush1.msra.mxu0 %v777
        %836 = vmatprep.subr.mxu0 0.0
        %837 = vmatpush1.msra.mxu0 %v778
        %838 = vmatprep.subr.mxu0 0.0
        %839 = vmatpush1.msra.mxu0 %v779
        %840 = vmatprep.subr.mxu0 0.0
        %841 = vmatpush1.msra.mxu0 %v780
        %842 = vmatprep.subr.mxu0 0.0
        %843 = vmatpush1.msra.mxu0 %v781
        %844 = vmatprep.subr.mxu0 0.0
        %845 = vmatpush1.msra.mxu0 %v782
        %846 = vmatprep.subr.mxu0 0.0
        %847 = vmatpush1.msra.mxu0 %v783
        %848 = vmatprep.mubr.f32.mxu0 %v721
        %849 = vmatmul.mubr.f32.gmra.mrb[0].mxu0 %v720
        %v850 = vpop.f32.mrb[0].mxu0
        %v851 = vadd.f32 0.0, %v850
        %v852 = vpop.f32.mrb[0].mxu0
        %853 = vmatprep.mubr.f32.mxu0 %v723
        %854 = vmatmul.mubr.f32.gmra.mrb[0].mxu0 %v722
        %v855 = vpop.f32.mrb[0].mxu0
        %v856 = vadd.f32 0.0, %v855
        %v857 = vpop.f32.mrb[0].mxu0
        %858 = vmatprep.mubr.f32.mxu0 %v725
        %859 = vmatmul.mubr.f32.gmra.mrb[0].mxu0 %v724
        %v860 = vpop.f32.mrb[0].mxu0
        %v861 = vadd.f32 0.0, %v860
        %v862 = vpop.f32.mrb[0].mxu0
        %863 = vmatprep.mubr.f32.mxu0 %v727
        %864 = vmatmul.mubr.f32.gmra.mrb[0].mxu0 %v726
        %v865 = vpop.f32.mrb[0].mxu0
        %v866 = vadd.f32 0.0, %v865
        %v867 = vpop.f32.mrb[0].mxu0
        %868 = vmatprep.mubr.f32.mxu0 %v729
        %869 = vmatmul.mubr.f32.gmra.mrb[0].mxu0 %v728
        %v870 = vpop.f32.mrb[0].mxu0
        %v871 = vadd.f32 0.0, %v870
        %v872 = vpop.f32.mrb[0].mxu0
        %873 = vmatprep.mubr.f32.mxu0 %v731
        %874 = vmatmul.mubr.f32.gmra.mrb[0].mxu0 %v730
        %v875 = vpop.f32.mrb[0].mxu0
        %v876 = vadd.f32 0.0, %v875
        %v877 = vpop.f32.mrb[0].mxu0
        %878 = vmatprep.mubr.f32.mxu0 %v733
        %879 = vmatmul.mubr.f32.gmra.mrb[0].mxu0 %v732
        %v880 = vpop.f32.mrb[0].mxu0
        %v881 = vadd.f32 0.0, %v880
        %v882 = vpop.f32.mrb[0].mxu0
        %883 = vmatprep.mubr.f32.mxu0 %v735
        %884 = vmatmul.mubr.f32.gmra.mrb[0].mxu0 %v734
        %v885 = vpop.f32.mrb[0].mxu0
        %v886 = vadd.f32 0.0, %v885
        %v887 = vpop.f32.mrb[0].mxu0
        %888 = vmatprep.mubr.f32.mxu0 %v737
        %889 = vmatmul.mubr.f32.gmra.mrb[0].mxu0 %v736
        %v890 = vpop.f32.mrb[0].mxu0
        %v891 = vadd.f32 0.0, %v890
        %v892 = vpop.f32.mrb[0].mxu0
        %893 = vmatprep.mubr.f32.mxu0 %v739
        %894 = vmatmul.mubr.f32.gmra.mrb[0].mxu0 %v738
        %v895 = vpop.f32.mrb[0].mxu0
        %v896 = vadd.f32 0.0, %v895
        %v897 = vpop.f32.mrb[0].mxu0
        %898 = vmatprep.mubr.f32.mxu0 %v741
        %899 = vmatmul.mubr.f32.gmra.mrb[0].mxu0 %v740
        %v900 = vpop.f32.mrb[0].mxu0
        %v901 = vadd.f32 0.0, %v900
        %v902 = vpop.f32.mrb[0].mxu0
        %903 = vmatprep.mubr.f32.mxu0 %v743
        %904 = vmatmul.mubr.f32.gmra.mrb[0].mxu0 %v742
        %v905 = vpop.f32.mrb[0].mxu0
        %v906 = vadd.f32 0.0, %v905
        %v907 = vpop.f32.mrb[0].mxu0
        %908 = vmatprep.mubr.f32.mxu0 %v745
        %909 = vmatmul.mubr.f32.gmra.mrb[0].mxu0 %v744
        %v910 = vpop.f32.mrb[0].mxu0
        %v911 = vadd.f32 0.0, %v910
        %v912 = vpop.f32.mrb[0].mxu0
        %913 = vmatprep.mubr.f32.mxu0 %v747
        %914 = vmatmul.mubr.f32.gmra.mrb[0].mxu0 %v746
        %v915 = vpop.f32.mrb[0].mxu0
        %v916 = vadd.f32 0.0, %v915
        %v917 = vpop.f32.mrb[0].mxu0
        %918 = vmatprep.mubr.f32.mxu0 %v749
        %919 = vmatmul.mubr.f32.gmra.mrb[0].mxu0 %v748
        %v920 = vpop.f32.mrb[0].mxu0
        %v921 = vadd.f32 0.0, %v920
        %v922 = vpop.f32.mrb[0].mxu0
        %923 = vmatprep.mubr.f32.mxu0 %v751
        %924 = vmatmul.mubr.f32.gmra.mrb[0].mxu0 %v750
        %v925 = vpop.f32.mrb[0].mxu0
        %v926 = vadd.f32 0.0, %v925
        %v927 = vpop.f32.mrb[0].mxu0
        %928 = vdwg.mxu0
        %v929 = vld [vmem:[%s5] sm:$0xff]
        %v930 = vld [vmem:[%s5 + $0x8] sm:$0xff]
        %v931 = vld [vmem:[%s5 + $0x10] sm:$0xff]
        %v932 = vld [vmem:[%s5 + $0x18] sm:$0xff]
        %v933 = vld [vmem:[%s8] sm:$0x1]
        %v935 = vlaneseq
        %v936 = vshrl.u32 %v935, 7
        %v937 = vsub.s32 0, %v936
        %v938 = vrot.slane %v933, %v937
        %vm940 = vcmask 261120
        %v942 = vsel %vm940, %v851, 0
        %v945 = vsel %vm940, %v856, 0
        %v948 = vsel %vm940, %v861, 0
        %v951 = vsel %vm940, %v866, 0
        %v954 = vsel %vm940, %v871, 0
        %v957 = vsel %vm940, %v876, 0
        %v960 = vsel %vm940, %v881, 0
        %v963 = vsel %vm940, %v886, 0
        %v966 = vsel %vm940, %v891, 0
        %v969 = vsel %vm940, %v896, 0
        %v972 = vsel %vm940, %v901, 0
        %v975 = vsel %vm940, %v906, 0
        %v978 = vsel %vm940, %v911, 0
        %v981 = vsel %vm940, %v916, 0
        %v984 = vsel %vm940, %v921, 0
        %v987 = vsel %vm940, %v926, 0
        %989 = vmatprep.subr.mxu0 0.0
        %990 = vmatpush1.msra.mxu0 %v929
        %991 = vmatprep.subr.mxu0 0.0
        %992 = vmatpush1.msra.mxu0 %v930
        %993 = vmatprep.subr.mxu0 0.0
        %994 = vmatpush1.msra.mxu0 %v931
        %995 = vmatprep.subr.mxu0 0.0
        %996 = vmatpush1.msra.mxu0 %v932
        %997 = vmatprep.subr.mxu0 0.0
        %998 = vmatpush1.msra.mxu0 0.0
        %999 = vmatprep.subr.mxu0 0.0
        %1000 = vmatpush1.msra.mxu0 0.0
        %1001 = vmatprep.subr.mxu0 0.0
        %1002 = vmatpush1.msra.mxu0 0.0
        %1003 = vmatprep.subr.mxu0 0.0
        %1004 = vmatpush1.msra.mxu0 0.0
        %1005 = vmatprep.subr.mxu0 0.0
        %1006 = vmatpush1.msra.mxu0 0.0
        %1007 = vmatprep.subr.mxu0 0.0
        %1008 = vmatpush1.msra.mxu0 0.0
        %1009 = vmatprep.subr.mxu0 0.0
        %1010 = vmatpush1.msra.mxu0 0.0
        %1011 = vmatprep.subr.mxu0 0.0
        %1012 = vmatpush1.msra.mxu0 0.0
        %1013 = vmatprep.subr.mxu0 0.0
        %1014 = vmatpush1.msra.mxu0 0.0
        %1015 = vmatprep.subr.mxu0 0.0
        %1016 = vmatpush1.msra.mxu0 0.0
        %1017 = vmatprep.subr.mxu0 0.0
        %1018 = vmatpush1.msra.mxu0 0.0
        %1019 = vmatprep.subr.mxu0 0.0
        %1020 = vmatpush1.msra.mxu0 0.0
        %1021 = vmatprep.subr.mxu0 0.0
        %1022 = vmatpush1.msra.mxu0 0.0
        %1023 = vmatprep.subr.mxu0 0.0
        %1024 = vmatpush1.msra.mxu0 0.0
        %1025 = vmatprep.subr.mxu0 0.0
        %1026 = vmatpush1.msra.mxu0 0.0
        %1027 = vmatprep.subr.mxu0 0.0
        %1028 = vmatpush1.msra.mxu0 0.0
        %1029 = vmatprep.subr.mxu0 0.0
        %1030 = vmatpush1.msra.mxu0 0.0
        %1031 = vmatprep.subr.mxu0 0.0
        %1032 = vmatpush1.msra.mxu0 0.0
        %1033 = vmatprep.subr.mxu0 0.0
        %1034 = vmatpush1.msra.mxu0 0.0
        %1035 = vmatprep.subr.mxu0 0.0
        %1036 = vmatpush1.msra.mxu0 0.0
        %1037 = vmatprep.subr.mxu0 0.0
        %1038 = vmatpush1.msra.mxu0 0.0
        %1039 = vmatprep.subr.mxu0 0.0
        %1040 = vmatpush1.msra.mxu0 0.0
        %1041 = vmatprep.subr.mxu0 0.0
        %1042 = vmatpush1.msra.mxu0 0.0
        %1043 = vmatprep.subr.mxu0 0.0
        %1044 = vmatpush1.msra.mxu0 0.0
        %1045 = vmatprep.subr.mxu0 0.0
        %1046 = vmatpush1.msra.mxu0 0.0
        %1047 = vmatprep.subr.mxu0 0.0
        %1048 = vmatpush1.msra.mxu0 0.0
        %1049 = vmatprep.subr.mxu0 0.0
        %1050 = vmatpush1.msra.mxu0 0.0
        %1051 = vmatprep.subr.mxu0 0.0
        %1052 = vmatpush1.msra.mxu0 0.0
        %1053 = vmatprep.mubr.f32.mxu0 0.0
        %1054 = vmatmul.mubr.f32.gmra.mrb[0].mxu0 %v942
        %v1055 = vpop.f32.mrb[0].mxu0
        %v1056 = vadd.f32 %v938, %v1055
        %v1057 = vpop.f32.mrb[0].mxu0
        %1058 = vmatprep.mubr.f32.mxu0 0.0
        %1059 = vmatmul.mubr.f32.gmra.mrb[0].mxu0 %v945
        %v1060 = vpop.f32.mrb[0].mxu0
        %v1061 = vadd.f32 %v938, %v1060
        %v1062 = vpop.f32.mrb[0].mxu0
        %1063 = vmatprep.mubr.f32.mxu0 0.0
        %1064 = vmatmul.mubr.f32.gmra.mrb[0].mxu0 %v948
        %v1065 = vpop.f32.mrb[0].mxu0
        %v1066 = vadd.f32 %v938, %v1065
        %v1067 = vpop.f32.mrb[0].mxu0
        %1068 = vmatprep.mubr.f32.mxu0 0.0
        %1069 = vmatmul.mubr.f32.gmra.mrb[0].mxu0 %v951
        %v1070 = vpop.f32.mrb[0].mxu0
        %v1071 = vadd.f32 %v938, %v1070
        %v1072 = vpop.f32.mrb[0].mxu0
        %1073 = vmatprep.mubr.f32.mxu0 0.0
        %1074 = vmatmul.mubr.f32.gmra.mrb[0].mxu0 %v954
        %v1075 = vpop.f32.mrb[0].mxu0
        %v1076 = vadd.f32 %v938, %v1075
        %v1077 = vpop.f32.mrb[0].mxu0
        %1078 = vmatprep.mubr.f32.mxu0 0.0
        %1079 = vmatmul.mubr.f32.gmra.mrb[0].mxu0 %v957
        %v1080 = vpop.f32.mrb[0].mxu0
        %v1081 = vadd.f32 %v938, %v1080
        %v1082 = vpop.f32.mrb[0].mxu0
        %1083 = vmatprep.mubr.f32.mxu0 0.0
        %1084 = vmatmul.mubr.f32.gmra.mrb[0].mxu0 %v960
        %v1085 = vpop.f32.mrb[0].mxu0
        %v1086 = vadd.f32 %v938, %v1085
        %v1087 = vpop.f32.mrb[0].mxu0
        %1088 = vmatprep.mubr.f32.mxu0 0.0
        %1089 = vmatmul.mubr.f32.gmra.mrb[0].mxu0 %v963
        %v1090 = vpop.f32.mrb[0].mxu0
        %v1091 = vadd.f32 %v938, %v1090
        %v1092 = vpop.f32.mrb[0].mxu0
        %1093 = vmatprep.mubr.f32.mxu0 0.0
        %1094 = vmatmul.mubr.f32.gmra.mrb[0].mxu0 %v966
        %v1095 = vpop.f32.mrb[0].mxu0
        %v1096 = vadd.f32 %v938, %v1095
        %v1097 = vpop.f32.mrb[0].mxu0
        %1098 = vmatprep.mubr.f32.mxu0 0.0
        %1099 = vmatmul.mubr.f32.gmra.mrb[0].mxu0 %v969
        %v1100 = vpop.f32.mrb[0].mxu0
        %v1101 = vadd.f32 %v938, %v1100
        %v1102 = vpop.f32.mrb[0].mxu0
        %1103 = vmatprep.mubr.f32.mxu0 0.0
        %1104 = vmatmul.mubr.f32.gmra.mrb[0].mxu0 %v972
        %v1105 = vpop.f32.mrb[0].mxu0
        %v1106 = vadd.f32 %v938, %v1105
        %v1107 = vpop.f32.mrb[0].mxu0
        %1108 = vmatprep.mubr.f32.mxu0 0.0
        %1109 = vmatmul.mubr.f32.gmra.mrb[0].mxu0 %v975
        %v1110 = vpop.f32.mrb[0].mxu0
        %v1111 = vadd.f32 %v938, %v1110
        %v1112 = vpop.f32.mrb[0].mxu0
        %1113 = vmatprep.mubr.f32.mxu0 0.0
        %1114 = vmatmul.mubr.f32.gmra.mrb[0].mxu0 %v978
        %v1115 = vpop.f32.mrb[0].mxu0
        %v1116 = vadd.f32 %v938, %v1115
        %v1117 = vpop.f32.mrb[0].mxu0
        %1118 = vmatprep.mubr.f32.mxu0 0.0
        %1119 = vmatmul.mubr.f32.gmra.mrb[0].mxu0 %v981
        %v1120 = vpop.f32.mrb[0].mxu0
        %v1121 = vadd.f32 %v938, %v1120
        %v1122 = vpop.f32.mrb[0].mxu0
        %1123 = vmatprep.mubr.f32.mxu0 0.0
        %1124 = vmatmul.mubr.f32.gmra.mrb[0].mxu0 %v984
        %v1125 = vpop.f32.mrb[0].mxu0
        %v1126 = vadd.f32 %v938, %v1125
        %v1127 = vpop.f32.mrb[0].mxu0
        %1128 = vmatprep.mubr.f32.mxu0 0.0
        %1129 = vmatmul.mubr.f32.gmra.mrb[0].mxu0 %v987
        %v1130 = vpop.f32.mrb[0].mxu0
        %v1131 = vadd.f32 %v938, %v1130
        %v1132 = vpop.f32.mrb[0].mxu0
        %1133 = vdwg.mxu0
        %v1134 = vld [vmem:[#allocation5] sm:$0xff]
        %v1135 = vld [vmem:[#allocation5 + $0x8] sm:$0xff]
        %v1136 = vld [vmem:[#allocation5 + $0x10] sm:$0xff]
        %v1137 = vld [vmem:[#allocation5 + $0x18] sm:$0xff]
        %v1138 = vld [vmem:[%s9] sm:$0x1]
        %v1140 = vlaneseq
        %v1141 = vshrl.u32 %v1140, 7
        %v1142 = vsub.s32 0, %v1141
        %v1143 = vrot.slane %v1138, %v1142
        %1145 = vmatprep.subr.mxu0 0.0
        %1146 = vmatpush1.msra.mxu0 %v1134
        %1147 = vmatprep.subr.mxu0 0.0
        %1148 = vmatpush1.msra.mxu0 %v1135
        %1149 = vmatprep.subr.mxu0 0.0
        %1150 = vmatpush1.msra.mxu0 %v1136
        %1151 = vmatprep.subr.mxu0 0.0
        %1152 = vmatpush1.msra.mxu0 %v1137
        %1153 = vmatprep.subr.mxu0 0.0
        %1154 = vmatpush1.msra.mxu0 0.0
        %1155 = vmatprep.subr.mxu0 0.0
        %1156 = vmatpush1.msra.mxu0 0.0
        %1157 = vmatprep.subr.mxu0 0.0
        %1158 = vmatpush1.msra.mxu0 0.0
        %1159 = vmatprep.subr.mxu0 0.0
        %1160 = vmatpush1.msra.mxu0 0.0
        %1161 = vmatprep.subr.mxu0 0.0
        %1162 = vmatpush1.msra.mxu0 0.0
        %1163 = vmatprep.subr.mxu0 0.0
        %1164 = vmatpush1.msra.mxu0 0.0
        %1165 = vmatprep.subr.mxu0 0.0
        %1166 = vmatpush1.msra.mxu0 0.0
        %1167 = vmatprep.subr.mxu0 0.0
        %1168 = vmatpush1.msra.mxu0 0.0
        %1169 = vmatprep.subr.mxu0 0.0
        %1170 = vmatpush1.msra.mxu0 0.0
        %1171 = vmatprep.subr.mxu0 0.0
        %1172 = vmatpush1.msra.mxu0 0.0
        %1173 = vmatprep.subr.mxu0 0.0
        %1174 = vmatpush1.msra.mxu0 0.0
        %1175 = vmatprep.subr.mxu0 0.0
        %1176 = vmatpush1.msra.mxu0 0.0
        %1177 = vmatprep.subr.mxu0 0.0
        %1178 = vmatpush1.msra.mxu0 0.0
        %1179 = vmatprep.subr.mxu0 0.0
        %1180 = vmatpush1.msra.mxu0 0.0
        %1181 = vmatprep.subr.mxu0 0.0
        %1182 = vmatpush1.msra.mxu0 0.0
        %1183 = vmatprep.subr.mxu0 0.0
        %1184 = vmatpush1.msra.mxu0 0.0
        %1185 = vmatprep.subr.mxu0 0.0
        %1186 = vmatpush1.msra.mxu0 0.0
        %1187 = vmatprep.subr.mxu0 0.0
        %1188 = vmatpush1.msra.mxu0 0.0
        %1189 = vmatprep.subr.mxu0 0.0
        %1190 = vmatpush1.msra.mxu0 0.0
        %1191 = vmatprep.subr.mxu0 0.0
        %1192 = vmatpush1.msra.mxu0 0.0
        %1193 = vmatprep.subr.mxu0 0.0
        %1194 = vmatpush1.msra.mxu0 0.0
        %1195 = vmatprep.subr.mxu0 0.0
        %1196 = vmatpush1.msra.mxu0 0.0
        %1197 = vmatprep.subr.mxu0 0.0
        %1198 = vmatpush1.msra.mxu0 0.0
        %1199 = vmatprep.subr.mxu0 0.0
        %1200 = vmatpush1.msra.mxu0 0.0
        %1201 = vmatprep.subr.mxu0 0.0
        %1202 = vmatpush1.msra.mxu0 0.0
        %1203 = vmatprep.subr.mxu0 0.0
        %1204 = vmatpush1.msra.mxu0 0.0
        %1205 = vmatprep.subr.mxu0 0.0
        %1206 = vmatpush1.msra.mxu0 0.0
        %1207 = vmatprep.subr.mxu0 0.0
        %1208 = vmatpush1.msra.mxu0 0.0
        %1209 = vmatprep.mubr.f32.mxu0 0.0
        %1210 = vmatmul.mubr.f32.gmra.mrb[0].mxu0 %v942
        %v1211 = vpop.f32.mrb[0].mxu0
        %v1212 = vadd.f32 %v1143, %v1211
        %v1213 = vpop.f32.mrb[0].mxu0
        %1214 = vmatprep.mubr.f32.mxu0 0.0
        %1215 = vmatmul.mubr.f32.gmra.mrb[0].mxu0 %v945
        %v1216 = vpop.f32.mrb[0].mxu0
        %v1217 = vadd.f32 %v1143, %v1216
        %v1218 = vpop.f32.mrb[0].mxu0
        %1219 = vmatprep.mubr.f32.mxu0 0.0
        %1220 = vmatmul.mubr.f32.gmra.mrb[0].mxu0 %v948
        %v1221 = vpop.f32.mrb[0].mxu0
        %v1222 = vadd.f32 %v1143, %v1221
        %v1223 = vpop.f32.mrb[0].mxu0
        %1224 = vmatprep.mubr.f32.mxu0 0.0
        %1225 = vmatmul.mubr.f32.gmra.mrb[0].mxu0 %v951
        %v1226 = vpop.f32.mrb[0].mxu0
        %v1227 = vadd.f32 %v1143, %v1226
        %v1228 = vpop.f32.mrb[0].mxu0
        %1229 = vmatprep.mubr.f32.mxu0 0.0
        %1230 = vmatmul.mubr.f32.gmra.mrb[0].mxu0 %v954
        %v1231 = vpop.f32.mrb[0].mxu0
        %v1232 = vadd.f32 %v1143, %v1231
        %v1233 = vpop.f32.mrb[0].mxu0
        %1234 = vmatprep.mubr.f32.mxu0 0.0
        %1235 = vmatmul.mubr.f32.gmra.mrb[0].mxu0 %v957
        %v1236 = vpop.f32.mrb[0].mxu0
        %v1237 = vadd.f32 %v1143, %v1236
        %v1238 = vpop.f32.mrb[0].mxu0
        %1239 = vmatprep.mubr.f32.mxu0 0.0
        %1240 = vmatmul.mubr.f32.gmra.mrb[0].mxu0 %v960
        %v1241 = vpop.f32.mrb[0].mxu0
        %v1242 = vadd.f32 %v1143, %v1241
        %v1243 = vpop.f32.mrb[0].mxu0
        %1244 = vmatprep.mubr.f32.mxu0 0.0
        %1245 = vmatmul.mubr.f32.gmra.mrb[0].mxu0 %v963
        %v1246 = vpop.f32.mrb[0].mxu0
        %v1247 = vadd.f32 %v1143, %v1246
        %v1248 = vpop.f32.mrb[0].mxu0
        %1249 = vmatprep.mubr.f32.mxu0 0.0
        %1250 = vmatmul.mubr.f32.gmra.mrb[0].mxu0 %v966
        %v1251 = vpop.f32.mrb[0].mxu0
        %v1252 = vadd.f32 %v1143, %v1251
        %v1253 = vpop.f32.mrb[0].mxu0
        %1254 = vmatprep.mubr.f32.mxu0 0.0
        %1255 = vmatmul.mubr.f32.gmra.mrb[0].mxu0 %v969
        %v1256 = vpop.f32.mrb[0].mxu0
        %v1257 = vadd.f32 %v1143, %v1256
        %v1258 = vpop.f32.mrb[0].mxu0
        %1259 = vmatprep.mubr.f32.mxu0 0.0
        %1260 = vmatmul.mubr.f32.gmra.mrb[0].mxu0 %v972
        %v1261 = vpop.f32.mrb[0].mxu0
        %v1262 = vadd.f32 %v1143, %v1261
        %v1263 = vpop.f32.mrb[0].mxu0
        %1264 = vmatprep.mubr.f32.mxu0 0.0
        %1265 = vmatmul.mubr.f32.gmra.mrb[0].mxu0 %v975
        %v1266 = vpop.f32.mrb[0].mxu0
        %v1267 = vadd.f32 %v1143, %v1266
        %v1268 = vpop.f32.mrb[0].mxu0
        %1269 = vmatprep.mubr.f32.mxu0 0.0
        %1270 = vmatmul.mubr.f32.gmra.mrb[0].mxu0 %v978
        %v1271 = vpop.f32.mrb[0].mxu0
        %v1272 = vadd.f32 %v1143, %v1271
        %v1273 = vpop.f32.mrb[0].mxu0
        %1274 = vmatprep.mubr.f32.mxu0 0.0
        %1275 = vmatmul.mubr.f32.gmra.mrb[0].mxu0 %v981
        %v1276 = vpop.f32.mrb[0].mxu0
        %v1277 = vadd.f32 %v1143, %v1276
        %v1278 = vpop.f32.mrb[0].mxu0
        %1279 = vmatprep.mubr.f32.mxu0 0.0
        %1280 = vmatmul.mubr.f32.gmra.mrb[0].mxu0 %v984
        %v1281 = vpop.f32.mrb[0].mxu0
        %v1282 = vadd.f32 %v1143, %v1281
        %v1283 = vpop.f32.mrb[0].mxu0
        %1284 = vmatprep.mubr.f32.mxu0 0.0
        %1285 = vmatmul.mubr.f32.gmra.mrb[0].mxu0 %v987
        %v1286 = vpop.f32.mrb[0].mxu0
        %v1287 = vadd.f32 %v1143, %v1286
        %v1288 = vpop.f32.mrb[0].mxu0
        %1289 = vdwg.mxu0
        %v1290 = vld [vmem:[#allocation7] sm:$0xff]
        %v1291 = vld [vmem:[#allocation7 + $0x8] sm:$0xff]
        %v1292 = vld [vmem:[#allocation7 + $0x10] sm:$0xff]
        %v1293 = vld [vmem:[#allocation7 + $0x18] sm:$0xff]
        %v1294 = vld [vmem:[%s10] sm:$0x1]
        %v1296 = vlaneseq
        %v1297 = vshrl.u32 %v1296, 7
        %v1298 = vsub.s32 0, %v1297
        %v1299 = vrot.slane %v1294, %v1298
        %1301 = vmatprep.subr.mxu0 0.0
        %1302 = vmatpush1.msra.mxu0 %v1290
        %1303 = vmatprep.subr.mxu0 0.0
        %1304 = vmatpush1.msra.mxu0 %v1291
        %1305 = vmatprep.subr.mxu0 0.0
        %1306 = vmatpush1.msra.mxu0 %v1292
        %1307 = vmatprep.subr.mxu0 0.0
        %1308 = vmatpush1.msra.mxu0 %v1293
        %1309 = vmatprep.subr.mxu0 0.0
        %1310 = vmatpush1.msra.mxu0 0.0
        %1311 = vmatprep.subr.mxu0 0.0
        %1312 = vmatpush1.msra.mxu0 0.0
        %1313 = vmatprep.subr.mxu0 0.0
        %1314 = vmatpush1.msra.mxu0 0.0
        %1315 = vmatprep.subr.mxu0 0.0
        %1316 = vmatpush1.msra.mxu0 0.0
        %1317 = vmatprep.subr.mxu0 0.0
        %1318 = vmatpush1.msra.mxu0 0.0
        %1319 = vmatprep.subr.mxu0 0.0
        %1320 = vmatpush1.msra.mxu0 0.0
        %1321 = vmatprep.subr.mxu0 0.0
        %1322 = vmatpush1.msra.mxu0 0.0
        %1323 = vmatprep.subr.mxu0 0.0
        %1324 = vmatpush1.msra.mxu0 0.0
        %1325 = vmatprep.subr.mxu0 0.0
        %1326 = vmatpush1.msra.mxu0 0.0
        %1327 = vmatprep.subr.mxu0 0.0
        %1328 = vmatpush1.msra.mxu0 0.0
        %1329 = vmatprep.subr.mxu0 0.0
        %1330 = vmatpush1.msra.mxu0 0.0
        %1331 = vmatprep.subr.mxu0 0.0
        %1332 = vmatpush1.msra.mxu0 0.0
        %1333 = vmatprep.subr.mxu0 0.0
        %1334 = vmatpush1.msra.mxu0 0.0
        %1335 = vmatprep.subr.mxu0 0.0
        %1336 = vmatpush1.msra.mxu0 0.0
        %1337 = vmatprep.subr.mxu0 0.0
        %1338 = vmatpush1.msra.mxu0 0.0
        %1339 = vmatprep.subr.mxu0 0.0
        %1340 = vmatpush1.msra.mxu0 0.0
        %1341 = vmatprep.subr.mxu0 0.0
        %1342 = vmatpush1.msra.mxu0 0.0
        %1343 = vmatprep.subr.mxu0 0.0
        %1344 = vmatpush1.msra.mxu0 0.0
        %1345 = vmatprep.subr.mxu0 0.0
        %1346 = vmatpush1.msra.mxu0 0.0
        %1347 = vmatprep.subr.mxu0 0.0
        %1348 = vmatpush1.msra.mxu0 0.0
        %1349 = vmatprep.subr.mxu0 0.0
        %1350 = vmatpush1.msra.mxu0 0.0
        %1351 = vmatprep.subr.mxu0 0.0
        %1352 = vmatpush1.msra.mxu0 0.0
        %1353 = vmatprep.subr.mxu0 0.0
        %1354 = vmatpush1.msra.mxu0 0.0
        %1355 = vmatprep.subr.mxu0 0.0
        %1356 = vmatpush1.msra.mxu0 0.0
        %1357 = vmatprep.subr.mxu0 0.0
        %1358 = vmatpush1.msra.mxu0 0.0
        %1359 = vmatprep.subr.mxu0 0.0
        %1360 = vmatpush1.msra.mxu0 0.0
        %1361 = vmatprep.subr.mxu0 0.0
        %1362 = vmatpush1.msra.mxu0 0.0
        %1363 = vmatprep.subr.mxu0 0.0
        %1364 = vmatpush1.msra.mxu0 0.0
        %1365 = vmatprep.mubr.f32.mxu0 0.0
        %1366 = vmatmul.mubr.f32.gmra.mrb[0].mxu0 %v942
        %v1367 = vpop.f32.mrb[0].mxu0
        %v1368 = vadd.f32 %v1299, %v1367
        %v1369 = vpop.f32.mrb[0].mxu0
        %1370 = vmatprep.mubr.f32.mxu0 0.0
        %1371 = vmatmul.mubr.f32.gmra.mrb[0].mxu0 %v945
        %v1372 = vpop.f32.mrb[0].mxu0
        %v1373 = vadd.f32 %v1299, %v1372
        %v1374 = vpop.f32.mrb[0].mxu0
        %1375 = vmatprep.mubr.f32.mxu0 0.0
        %1376 = vmatmul.mubr.f32.gmra.mrb[0].mxu0 %v948
        %v1377 = vpop.f32.mrb[0].mxu0
        %v1378 = vadd.f32 %v1299, %v1377
        %v1379 = vpop.f32.mrb[0].mxu0
        %1380 = vmatprep.mubr.f32.mxu0 0.0
        %1381 = vmatmul.mubr.f32.gmra.mrb[0].mxu0 %v951
        %v1382 = vpop.f32.mrb[0].mxu0
        %v1383 = vadd.f32 %v1299, %v1382
        %v1384 = vpop.f32.mrb[0].mxu0
        %1385 = vmatprep.mubr.f32.mxu0 0.0
        %1386 = vmatmul.mubr.f32.gmra.mrb[0].mxu0 %v954
        %v1387 = vpop.f32.mrb[0].mxu0
        %v1388 = vadd.f32 %v1299, %v1387
        %v1389 = vpop.f32.mrb[0].mxu0
        %1390 = vmatprep.mubr.f32.mxu0 0.0
        %1391 = vmatmul.mubr.f32.gmra.mrb[0].mxu0 %v957
        %v1392 = vpop.f32.mrb[0].mxu0
        %v1393 = vadd.f32 %v1299, %v1392
        %v1394 = vpop.f32.mrb[0].mxu0
        %1395 = vmatprep.mubr.f32.mxu0 0.0
        %1396 = vmatmul.mubr.f32.gmra.mrb[0].mxu0 %v960
        %v1397 = vpop.f32.mrb[0].mxu0
        %v1398 = vadd.f32 %v1299, %v1397
        %v1399 = vpop.f32.mrb[0].mxu0
        %1400 = vmatprep.mubr.f32.mxu0 0.0
        %1401 = vmatmul.mubr.f32.gmra.mrb[0].mxu0 %v963
        %v1402 = vpop.f32.mrb[0].mxu0
        %v1403 = vadd.f32 %v1299, %v1402
        %v1404 = vpop.f32.mrb[0].mxu0
        %1405 = vmatprep.mubr.f32.mxu0 0.0
        %1406 = vmatmul.mubr.f32.gmra.mrb[0].mxu0 %v966
        %v1407 = vpop.f32.mrb[0].mxu0
        %v1408 = vadd.f32 %v1299, %v1407
        %v1409 = vpop.f32.mrb[0].mxu0
        %1410 = vmatprep.mubr.f32.mxu0 0.0
        %1411 = vmatmul.mubr.f32.gmra.mrb[0].mxu0 %v969
        %v1412 = vpop.f32.mrb[0].mxu0
        %v1413 = vadd.f32 %v1299, %v1412
        %v1414 = vpop.f32.mrb[0].mxu0
        %1415 = vmatprep.mubr.f32.mxu0 0.0
        %1416 = vmatmul.mubr.f32.gmra.mrb[0].mxu0 %v972
        %v1417 = vpop.f32.mrb[0].mxu0
        %v1418 = vadd.f32 %v1299, %v1417
        %v1419 = vpop.f32.mrb[0].mxu0
        %1420 = vmatprep.mubr.f32.mxu0 0.0
        %1421 = vmatmul.mubr.f32.gmra.mrb[0].mxu0 %v975
        %v1422 = vpop.f32.mrb[0].mxu0
        %v1423 = vadd.f32 %v1299, %v1422
        %v1424 = vpop.f32.mrb[0].mxu0
        %1425 = vmatprep.mubr.f32.mxu0 0.0
        %1426 = vmatmul.mubr.f32.gmra.mrb[0].mxu0 %v978
        %v1427 = vpop.f32.mrb[0].mxu0
        %v1428 = vadd.f32 %v1299, %v1427
        %v1429 = vpop.f32.mrb[0].mxu0
        %1430 = vmatprep.mubr.f32.mxu0 0.0
        %1431 = vmatmul.mubr.f32.gmra.mrb[0].mxu0 %v981
        %v1432 = vpop.f32.mrb[0].mxu0
        %v1433 = vadd.f32 %v1299, %v1432
        %v1434 = vpop.f32.mrb[0].mxu0
        %1435 = vmatprep.mubr.f32.mxu0 0.0
        %1436 = vmatmul.mubr.f32.gmra.mrb[0].mxu0 %v984
        %v1437 = vpop.f32.mrb[0].mxu0
        %v1438 = vadd.f32 %v1299, %v1437
        %v1439 = vpop.f32.mrb[0].mxu0
        %1440 = vmatprep.mubr.f32.mxu0 0.0
        %1441 = vmatmul.mubr.f32.gmra.mrb[0].mxu0 %v987
        %v1442 = vpop.f32.mrb[0].mxu0
        %v1443 = vadd.f32 %v1299, %v1442
        %v1444 = vpop.f32.mrb[0].mxu0
        %1445 = vdwg.mxu0
        %v1446 = vld [vmem:[%s3] sm:$0x1]
        %v1448 = vlaneseq
        %v1449 = vshrl.u32 %v1448, 7
        %v1450 = vsub.s32 0, %v1449
        %v1451 = vrot.slane %v1446, %v1450
        %v1453 = vmul.f32 %v1056, %v1451
        %v1454 = vmul.f32 %v1061, %v1451
        %v1455 = vmul.f32 %v1066, %v1451
        %v1456 = vmul.f32 %v1071, %v1451
        %v1457 = vmul.f32 %v1076, %v1451
        %v1458 = vmul.f32 %v1081, %v1451
        %v1459 = vmul.f32 %v1086, %v1451
        %v1460 = vmul.f32 %v1091, %v1451
        %v1461 = vmul.f32 %v1096, %v1451
        %v1462 = vmul.f32 %v1101, %v1451
        %v1463 = vmul.f32 %v1106, %v1451
        %v1464 = vmul.f32 %v1111, %v1451
        %v1465 = vmul.f32 %v1116, %v1451
        %v1466 = vmul.f32 %v1121, %v1451
        %v1467 = vmul.f32 %v1126, %v1451
        %v1468 = vmul.f32 %v1131, %v1451
        %v1469 = vld [vmem:[%s2] sm:$0xff]
        %v1470 = vld [vmem:[%s2 + $0x8] sm:$0xff]
        %v1471 = vld [vmem:[%s2 + $0x10] sm:$0xff]
        %v1472 = vld [vmem:[%s2 + $0x18] sm:$0xff]
        %v1473 = vld [vmem:[%s2 + $0x20] sm:$0xff]
        %v1474 = vld [vmem:[%s2 + $0x28] sm:$0xff]
        %v1475 = vld [vmem:[%s2 + $0x30] sm:$0xff]
        %v1476 = vld [vmem:[%s2 + $0x38] sm:$0xff]
        %v1477 = vld [vmem:[%s2 + $0x40] sm:$0xff]
        %v1478 = vld [vmem:[%s2 + $0x48] sm:$0xff]
        %v1479 = vld [vmem:[%s2 + $0x50] sm:$0xff]
        %v1480 = vld [vmem:[%s2 + $0x58] sm:$0xff]
        %v1481 = vld [vmem:[%s2 + $0x60] sm:$0xff]
        %v1482 = vld [vmem:[%s2 + $0x68] sm:$0xff]
        %v1483 = vld [vmem:[%s2 + $0x70] sm:$0xff]
        %v1484 = vld [vmem:[%s2 + $0x78] sm:$0xff]
        %v1486 = vsel %vm940, %v1453, 0
        %v1489 = vsel %vm940, %v1454, 0
        %v1492 = vsel %vm940, %v1455, 0
        %v1495 = vsel %vm940, %v1456, 0
        %v1498 = vsel %vm940, %v1457, 0
        %v1501 = vsel %vm940, %v1458, 0
        %v1504 = vsel %vm940, %v1459, 0
        %v1507 = vsel %vm940, %v1460, 0
        %v1510 = vsel %vm940, %v1461, 0
        %v1513 = vsel %vm940, %v1462, 0
        %v1516 = vsel %vm940, %v1463, 0
        %v1519 = vsel %vm940, %v1464, 0
        %v1522 = vsel %vm940, %v1465, 0
        %v1525 = vsel %vm940, %v1466, 0
        %v1528 = vsel %vm940, %v1467, 0
        %v1531 = vsel %vm940, %v1468, 0
        %v1534 = vsel %vm940, %v1212, 0
        %v1537 = vsel %vm940, %v1217, 0
        %v1540 = vsel %vm940, %v1222, 0
        %v1543 = vsel %vm940, %v1227, 0
        %v1546 = vsel %vm940, %v1232, 0
        %v1549 = vsel %vm940, %v1237, 0
        %v1552 = vsel %vm940, %v1242, 0
        %v1555 = vsel %vm940, %v1247, 0
        %v1558 = vsel %vm940, %v1252, 0
        %v1561 = vsel %vm940, %v1257, 0
        %v1564 = vsel %vm940, %v1262, 0
        %v1567 = vsel %vm940, %v1267, 0
        %v1570 = vsel %vm940, %v1272, 0
        %v1573 = vsel %vm940, %v1277, 0
        %v1576 = vsel %vm940, %v1282, 0
        %v1579 = vsel %vm940, %v1287, 0
        %1581 = vmatprep.subr.mxu0 0.0
        %1582 = vmatpush1.xpose.msra.mxu0 %v1534
        %1583 = vmatprep.subr.mxu0 0.0
        %1584 = vmatpush1.xpose.msra.mxu0 %v1537
        %1585 = vmatprep.subr.mxu0 0.0
        %1586 = vmatpush1.xpose.msra.mxu0 %v1540
        %1587 = vmatprep.subr.mxu0 0.0
        %1588 = vmatpush1.xpose.msra.mxu0 %v1543
        %1589 = vmatprep.subr.mxu0 0.0
        %1590 = vmatpush1.xpose.msra.mxu0 %v1546
        %1591 = vmatprep.subr.mxu0 0.0
        %1592 = vmatpush1.xpose.msra.mxu0 %v1549
        %1593 = vmatprep.subr.mxu0 0.0
        %1594 = vmatpush1.xpose.msra.mxu0 %v1552
        %1595 = vmatprep.subr.mxu0 0.0
        %1596 = vmatpush1.xpose.msra.mxu0 %v1555
        %1597 = vmatprep.subr.mxu0 0.0
        %1598 = vmatpush1.xpose.msra.mxu0 %v1558
        %1599 = vmatprep.subr.mxu0 0.0
        %1600 = vmatpush1.xpose.msra.mxu0 %v1561
        %1601 = vmatprep.subr.mxu0 0.0
        %1602 = vmatpush1.xpose.msra.mxu0 %v1564
        %1603 = vmatprep.subr.mxu0 0.0
        %1604 = vmatpush1.xpose.msra.mxu0 %v1567
        %1605 = vmatprep.subr.mxu0 0.0
        %1606 = vmatpush1.xpose.msra.mxu0 %v1570
        %1607 = vmatprep.subr.mxu0 0.0
        %1608 = vmatpush1.xpose.msra.mxu0 %v1573
        %1609 = vmatprep.subr.mxu0 0.0
        %1610 = vmatpush1.xpose.msra.mxu0 %v1576
        %1611 = vmatprep.subr.mxu0 0.0
        %1612 = vmatpush1.xpose.msra.mxu0 %v1579
        %1613 = vmatprep.subr.mxu0 0.0
        %1614 = vmatpush1.xpose.msra.mxu0 0.0
        %1615 = vmatprep.subr.mxu0 0.0
        %1616 = vmatpush1.xpose.msra.mxu0 0.0
        %1617 = vmatprep.subr.mxu0 0.0
        %1618 = vmatpush1.xpose.msra.mxu0 0.0
        %1619 = vmatprep.subr.mxu0 0.0
        %1620 = vmatpush1.xpose.msra.mxu0 0.0
        %1621 = vmatprep.subr.mxu0 0.0
        %1622 = vmatpush1.xpose.msra.mxu0 0.0
        %1623 = vmatprep.subr.mxu0 0.0
        %1624 = vmatpush1.xpose.msra.mxu0 0.0
        %1625 = vmatprep.subr.mxu0 0.0
        %1626 = vmatpush1.xpose.msra.mxu0 0.0
        %1627 = vmatprep.subr.mxu0 0.0
        %1628 = vmatpush1.xpose.msra.mxu0 0.0
        %1629 = vmatprep.subr.mxu0 0.0
        %1630 = vmatpush1.xpose.msra.mxu0 0.0
        %1631 = vmatprep.subr.mxu0 0.0
        %1632 = vmatpush1.xpose.msra.mxu0 0.0
        %1633 = vmatprep.subr.mxu0 0.0
        %1634 = vmatpush1.xpose.msra.mxu0 0.0
        %1635 = vmatprep.subr.mxu0 0.0
        %1636 = vmatpush1.xpose.msra.mxu0 0.0
        %1637 = vmatprep.subr.mxu0 0.0
        %1638 = vmatpush1.xpose.msra.mxu0 0.0
        %1639 = vmatprep.subr.mxu0 0.0
        %1640 = vmatpush1.xpose.msra.mxu0 0.0
        %1641 = vmatprep.subr.mxu0 0.0
        %1642 = vmatpush1.xpose.msra.mxu0 0.0
        %1643 = vmatprep.subr.mxu0 0.0
        %1644 = vmatpush1.xpose.msra.mxu0 0.0
        %1645 = vmatprep.mubr.f32.mxu0 0.0
        %1646 = vmatmul.mubr.f32.gmra.mrb[0].mxu0 %v1486
        %v1647 = vpop.f32.mrb[0].mxu0
        %v1648 = vadd.f32 %v1469, %v1647
        %v1649 = vpop.f32.mrb[0].mxu0
        %1650 = vmatprep.mubr.f32.mxu0 0.0
        %1651 = vmatmul.mubr.f32.gmra.mrb[0].mxu0 %v1489
        %v1652 = vpop.f32.mrb[0].mxu0
        %v1653 = vadd.f32 %v1470, %v1652
        %v1654 = vpop.f32.mrb[0].mxu0
        %1655 = vmatprep.mubr.f32.mxu0 0.0
        %1656 = vmatmul.mubr.f32.gmra.mrb[0].mxu0 %v1492
        %v1657 = vpop.f32.mrb[0].mxu0
        %v1658 = vadd.f32 %v1471, %v1657
        %v1659 = vpop.f32.mrb[0].mxu0
        %1660 = vmatprep.mubr.f32.mxu0 0.0
        %1661 = vmatmul.mubr.f32.gmra.mrb[0].mxu0 %v1495
        %v1662 = vpop.f32.mrb[0].mxu0
        %v1663 = vadd.f32 %v1472, %v1662
        %v1664 = vpop.f32.mrb[0].mxu0
        %1665 = vmatprep.mubr.f32.mxu0 0.0
        %1666 = vmatmul.mubr.f32.gmra.mrb[0].mxu0 %v1498
        %v1667 = vpop.f32.mrb[0].mxu0
        %v1668 = vadd.f32 %v1473, %v1667
        %v1669 = vpop.f32.mrb[0].mxu0
        %1670 = vmatprep.mubr.f32.mxu0 0.0
        %1671 = vmatmul.mubr.f32.gmra.mrb[0].mxu0 %v1501
        %v1672 = vpop.f32.mrb[0].mxu0
        %v1673 = vadd.f32 %v1474, %v1672
        %v1674 = vpop.f32.mrb[0].mxu0
        %1675 = vmatprep.mubr.f32.mxu0 0.0
        %1676 = vmatmul.mubr.f32.gmra.mrb[0].mxu0 %v1504
        %v1677 = vpop.f32.mrb[0].mxu0
        %v1678 = vadd.f32 %v1475, %v1677
        %v1679 = vpop.f32.mrb[0].mxu0
        %1680 = vmatprep.mubr.f32.mxu0 0.0
        %1681 = vmatmul.mubr.f32.gmra.mrb[0].mxu0 %v1507
        %v1682 = vpop.f32.mrb[0].mxu0
        %v1683 = vadd.f32 %v1476, %v1682
        %v1684 = vpop.f32.mrb[0].mxu0
        %1685 = vmatprep.mubr.f32.mxu0 0.0
        %1686 = vmatmul.mubr.f32.gmra.mrb[0].mxu0 %v1510
        %v1687 = vpop.f32.mrb[0].mxu0
        %v1688 = vadd.f32 %v1477, %v1687
        %v1689 = vpop.f32.mrb[0].mxu0
        %1690 = vmatprep.mubr.f32.mxu0 0.0
        %1691 = vmatmul.mubr.f32.gmra.mrb[0].mxu0 %v1513
        %v1692 = vpop.f32.mrb[0].mxu0
        %v1693 = vadd.f32 %v1478, %v1692
        %v1694 = vpop.f32.mrb[0].mxu0
        %1695 = vmatprep.mubr.f32.mxu0 0.0
        %1696 = vmatmul.mubr.f32.gmra.mrb[0].mxu0 %v1516
        %v1697 = vpop.f32.mrb[0].mxu0
        %v1698 = vadd.f32 %v1479, %v1697
        %v1699 = vpop.f32.mrb[0].mxu0
        %1700 = vmatprep.mubr.f32.mxu0 0.0
        %1701 = vmatmul.mubr.f32.gmra.mrb[0].mxu0 %v1519
        %v1702 = vpop.f32.mrb[0].mxu0
        %v1703 = vadd.f32 %v1480, %v1702
        %v1704 = vpop.f32.mrb[0].mxu0
        %1705 = vmatprep.mubr.f32.mxu0 0.0
        %1706 = vmatmul.mubr.f32.gmra.mrb[0].mxu0 %v1522
        %v1707 = vpop.f32.mrb[0].mxu0
        %v1708 = vadd.f32 %v1481, %v1707
        %v1709 = vpop.f32.mrb[0].mxu0
        %1710 = vmatprep.mubr.f32.mxu0 0.0
        %1711 = vmatmul.mubr.f32.gmra.mrb[0].mxu0 %v1525
        %v1712 = vpop.f32.mrb[0].mxu0
        %v1713 = vadd.f32 %v1482, %v1712
        %v1714 = vpop.f32.mrb[0].mxu0
        %1715 = vmatprep.mubr.f32.mxu0 0.0
        %1716 = vmatmul.mubr.f32.gmra.mrb[0].mxu0 %v1528
        %v1717 = vpop.f32.mrb[0].mxu0
        %v1718 = vadd.f32 %v1483, %v1717
        %v1719 = vpop.f32.mrb[0].mxu0
        %1720 = vmatprep.mubr.f32.mxu0 0.0
        %1721 = vmatmul.mubr.f32.gmra.mrb[0].mxu0 %v1531
        %v1722 = vpop.f32.mrb[0].mxu0
        %v1723 = vadd.f32 %v1484, %v1722
        %v1724 = vpop.f32.mrb[0].mxu0
        %1725 = vdwg.mxu0
        %1726 = vmax.xlane.f32.xlu0 %v1648
        %v1727 = vpop.xlane.xlu0 %1726
        %1728 = vmax.xlane.f32.xlu0 %v1653
        %v1729 = vpop.xlane.xlu0 %1728
        %1730 = vmax.xlane.f32.xlu0 %v1658
        %v1731 = vpop.xlane.xlu0 %1730
        %1732 = vmax.xlane.f32.xlu0 %v1663
        %v1733 = vpop.xlane.xlu0 %1732
        %1734 = vmax.xlane.f32.xlu0 %v1668
        %v1735 = vpop.xlane.xlu0 %1734
        %1736 = vmax.xlane.f32.xlu0 %v1673
        %v1737 = vpop.xlane.xlu0 %1736
        %1738 = vmax.xlane.f32.xlu0 %v1678
        %v1739 = vpop.xlane.xlu0 %1738
        %1740 = vmax.xlane.f32.xlu0 %v1683
        %v1741 = vpop.xlane.xlu0 %1740
        %1742 = vmax.xlane.f32.xlu0 %v1688
        %v1743 = vpop.xlane.xlu0 %1742
        %1744 = vmax.xlane.f32.xlu0 %v1693
        %v1745 = vpop.xlane.xlu0 %1744
        %1746 = vmax.xlane.f32.xlu0 %v1698
        %v1747 = vpop.xlane.xlu0 %1746
        %1748 = vmax.xlane.f32.xlu0 %v1703
        %v1749 = vpop.xlane.xlu0 %1748
        %1750 = vmax.xlane.f32.xlu0 %v1708
        %v1751 = vpop.xlane.xlu0 %1750
        %1752 = vmax.xlane.f32.xlu0 %v1713
        %v1753 = vpop.xlane.xlu0 %1752
        %1754 = vmax.xlane.f32.xlu0 %v1718
        %v1755 = vpop.xlane.xlu0 %1754
        %1756 = vmax.xlane.f32.xlu0 %v1723
        %v1757 = vpop.xlane.xlu0 %1756
        %v1758 = vsub.f32 %v1648, %v1727
        %v1759 = vsub.f32 %v1653, %v1729
        %v1760 = vsub.f32 %v1658, %v1731
        %v1761 = vsub.f32 %v1663, %v1733
        %v1762 = vsub.f32 %v1668, %v1735
        %v1763 = vsub.f32 %v1673, %v1737
        %v1764 = vsub.f32 %v1678, %v1739
        %v1765 = vsub.f32 %v1683, %v1741
        %v1766 = vsub.f32 %v1688, %v1743
        %v1767 = vsub.f32 %v1693, %v1745
        %v1768 = vsub.f32 %v1698, %v1747
        %v1769 = vsub.f32 %v1703, %v1749
        %v1770 = vsub.f32 %v1708, %v1751
        %v1771 = vsub.f32 %v1713, %v1753
        %v1772 = vsub.f32 %v1718, %v1755
        %v1773 = vsub.f32 %v1723, %v1757
        %v1774 = vmul.f32 %v1758, 1.442695
        %v1775 = vpow.pop %v1774
        %v1776 = vmul.f32 %v1759, 1.442695
        %v1777 = vpow.pop %v1776
        %v1778 = vmul.f32 %v1760, 1.442695
        %v1779 = vpow.pop %v1778
        %v1780 = vmul.f32 %v1761, 1.442695
        %v1781 = vpow.pop %v1780
        %v1782 = vmul.f32 %v1762, 1.442695
        %v1783 = vpow.pop %v1782
        %v1784 = vmul.f32 %v1763, 1.442695
        %v1785 = vpow.pop %v1784
        %v1786 = vmul.f32 %v1764, 1.442695
        %v1787 = vpow.pop %v1786
        %v1788 = vmul.f32 %v1765, 1.442695
        %v1789 = vpow.pop %v1788
        %v1790 = vmul.f32 %v1766, 1.442695
        %v1791 = vpow.pop %v1790
        %v1792 = vmul.f32 %v1767, 1.442695
        %v1793 = vpow.pop %v1792
        %v1794 = vmul.f32 %v1768, 1.442695
        %v1795 = vpow.pop %v1794
        %v1796 = vmul.f32 %v1769, 1.442695
        %v1797 = vpow.pop %v1796
        %v1798 = vmul.f32 %v1770, 1.442695
        %v1799 = vpow.pop %v1798
        %v1800 = vmul.f32 %v1771, 1.442695
        %v1801 = vpow.pop %v1800
        %v1802 = vmul.f32 %v1772, 1.442695
        %v1803 = vpow.pop %v1802
        %v1804 = vmul.f32 %v1773, 1.442695
        %v1805 = vpow.pop %v1804
        %1806 = vadd.xlane.f32.xlu0 %v1775
        %v1807 = vpop.xlane.xlu0 %1806
        %1808 = vadd.xlane.f32.xlu0 %v1777
        %v1809 = vpop.xlane.xlu0 %1808
        %1810 = vadd.xlane.f32.xlu0 %v1779
        %v1811 = vpop.xlane.xlu0 %1810
        %1812 = vadd.xlane.f32.xlu0 %v1781
        %v1813 = vpop.xlane.xlu0 %1812
        %1814 = vadd.xlane.f32.xlu0 %v1783
        %v1815 = vpop.xlane.xlu0 %1814
        %1816 = vadd.xlane.f32.xlu0 %v1785
        %v1817 = vpop.xlane.xlu0 %1816
        %1818 = vadd.xlane.f32.xlu0 %v1787
        %v1819 = vpop.xlane.xlu0 %1818
        %1820 = vadd.xlane.f32.xlu0 %v1789
        %v1821 = vpop.xlane.xlu0 %1820
        %1822 = vadd.xlane.f32.xlu0 %v1791
        %v1823 = vpop.xlane.xlu0 %1822
        %1824 = vadd.xlane.f32.xlu0 %v1793
        %v1825 = vpop.xlane.xlu0 %1824
        %1826 = vadd.xlane.f32.xlu0 %v1795
        %v1827 = vpop.xlane.xlu0 %1826
        %1828 = vadd.xlane.f32.xlu0 %v1797
        %v1829 = vpop.xlane.xlu0 %1828
        %1830 = vadd.xlane.f32.xlu0 %v1799
        %v1831 = vpop.xlane.xlu0 %1830
        %1832 = vadd.xlane.f32.xlu0 %v1801
        %v1833 = vpop.xlane.xlu0 %1832
        %1834 = vadd.xlane.f32.xlu0 %v1803
        %v1835 = vpop.xlane.xlu0 %1834
        %1836 = vadd.xlane.f32.xlu0 %v1805
        %v1837 = vpop.xlane.xlu0 %1836
        %v1838 = vrcp.pop %v1807
        %v1839 = vrcp.pop %v1809
        %v1840 = vrcp.pop %v1811
        %v1841 = vrcp.pop %v1813
        %v1842 = vrcp.pop %v1815
        %v1843 = vrcp.pop %v1817
        %v1844 = vrcp.pop %v1819
        %v1845 = vrcp.pop %v1821
        %v1846 = vrcp.pop %v1823
        %v1847 = vrcp.pop %v1825
        %v1848 = vrcp.pop %v1827
        %v1849 = vrcp.pop %v1829
        %v1850 = vrcp.pop %v1831
        %v1851 = vrcp.pop %v1833
        %v1852 = vrcp.pop %v1835
        %v1853 = vrcp.pop %v1837
        %v1854 = vmul.f32 %v1775, %v1838
        %v1855 = vmul.f32 %v1777, %v1839
        %v1856 = vmul.f32 %v1779, %v1840
        %v1857 = vmul.f32 %v1781, %v1841
        %v1858 = vmul.f32 %v1783, %v1842
        %v1859 = vmul.f32 %v1785, %v1843
        %v1860 = vmul.f32 %v1787, %v1844
        %v1861 = vmul.f32 %v1789, %v1845
        %v1862 = vmul.f32 %v1791, %v1846
        %v1863 = vmul.f32 %v1793, %v1847
        %v1864 = vmul.f32 %v1795, %v1848
        %v1865 = vmul.f32 %v1797, %v1849
        %v1866 = vmul.f32 %v1799, %v1850
        %v1867 = vmul.f32 %v1801, %v1851
        %v1868 = vmul.f32 %v1803, %v1852
        %v1869 = vmul.f32 %v1805, %v1853
        %v1870 = vmul.f32 %v1368, %v1451
        %v1871 = vmul.f32 %v1373, %v1451
        %v1872 = vmul.f32 %v1378, %v1451
        %v1873 = vmul.f32 %v1383, %v1451
        %v1874 = vmul.f32 %v1388, %v1451
        %v1875 = vmul.f32 %v1393, %v1451
        %v1876 = vmul.f32 %v1398, %v1451
        %v1877 = vmul.f32 %v1403, %v1451
        %v1878 = vmul.f32 %v1408, %v1451
        %v1879 = vmul.f32 %v1413, %v1451
        %v1880 = vmul.f32 %v1418, %v1451
        %v1881 = vmul.f32 %v1423, %v1451
        %v1882 = vmul.f32 %v1428, %v1451
        %v1883 = vmul.f32 %v1433, %v1451
        %v1884 = vmul.f32 %v1438, %v1451
        %v1885 = vmul.f32 %v1443, %v1451
        %s1886 = scalar_lea.vmem %s3, 1
        %v1887 = vld [vmem:[%s1886] sm:$0x1]
        %v1889 = vlaneseq
        %v1890 = vshrl.u32 %v1889, 7
        %v1891 = vsub.s32 0, %v1890
        %v1892 = vrot.slane %v1887, %v1891
        %v1894 = vmul.f32 %v1056, %v1892
        %v1895 = vmul.f32 %v1061, %v1892
        %v1896 = vmul.f32 %v1066, %v1892
        %v1897 = vmul.f32 %v1071, %v1892
        %v1898 = vmul.f32 %v1076, %v1892
        %v1899 = vmul.f32 %v1081, %v1892
        %v1900 = vmul.f32 %v1086, %v1892
        %v1901 = vmul.f32 %v1091, %v1892
        %v1902 = vmul.f32 %v1096, %v1892
        %v1903 = vmul.f32 %v1101, %v1892
        %v1904 = vmul.f32 %v1106, %v1892
        %v1905 = vmul.f32 %v1111, %v1892
        %v1906 = vmul.f32 %v1116, %v1892
        %v1907 = vmul.f32 %v1121, %v1892
        %v1908 = vmul.f32 %v1126, %v1892
        %v1909 = vmul.f32 %v1131, %v1892
        %v1911 = vsel %vm940, %v1894, 0
        %v1914 = vsel %vm940, %v1895, 0
        %v1917 = vsel %vm940, %v1896, 0
        %v1920 = vsel %vm940, %v1897, 0
        %v1923 = vsel %vm940, %v1898, 0
        %v1926 = vsel %vm940, %v1899, 0
        %v1929 = vsel %vm940, %v1900, 0
        %v1932 = vsel %vm940, %v1901, 0
        %v1935 = vsel %vm940, %v1902, 0
        %v1938 = vsel %vm940, %v1903, 0
        %v1941 = vsel %vm940, %v1904, 0
        %v1944 = vsel %vm940, %v1905, 0
        %v1947 = vsel %vm940, %v1906, 0
        %v1950 = vsel %vm940, %v1907, 0
        %v1953 = vsel %vm940, %v1908, 0
        %v1956 = vsel %vm940, %v1909, 0
        %1958 = vmatprep.subr.mxu0 0.0
        %1959 = vmatpush1.xpose.msra.mxu0 %v1534
        %1960 = vmatprep.subr.mxu0 0.0
        %1961 = vmatpush1.xpose.msra.mxu0 %v1537
        %1962 = vmatprep.subr.mxu0 0.0
        %1963 = vmatpush1.xpose.msra.mxu0 %v1540
        %1964 = vmatprep.subr.mxu0 0.0
        %1965 = vmatpush1.xpose.msra.mxu0 %v1543
        %1966 = vmatprep.subr.mxu0 0.0
        %1967 = vmatpush1.xpose.msra.mxu0 %v1546
        %1968 = vmatprep.subr.mxu0 0.0
        %1969 = vmatpush1.xpose.msra.mxu0 %v1549
        %1970 = vmatprep.subr.mxu0 0.0
        %1971 = vmatpush1.xpose.msra.mxu0 %v1552
        %1972 = vmatprep.subr.mxu0 0.0
        %1973 = vmatpush1.xpose.msra.mxu0 %v1555
        %1974 = vmatprep.subr.mxu0 0.0
        %1975 = vmatpush1.xpose.msra.mxu0 %v1558
        %1976 = vmatprep.subr.mxu0 0.0
        %1977 = vmatpush1.xpose.msra.mxu0 %v1561
        %1978 = vmatprep.subr.mxu0 0.0
        %1979 = vmatpush1.xpose.msra.mxu0 %v1564
        %1980 = vmatprep.subr.mxu0 0.0
        %1981 = vmatpush1.xpose.msra.mxu0 %v1567
        %1982 = vmatprep.subr.mxu0 0.0
        %1983 = vmatpush1.xpose.msra.mxu0 %v1570
        %1984 = vmatprep.subr.mxu0 0.0
        %1985 = vmatpush1.xpose.msra.mxu0 %v1573
        %1986 = vmatprep.subr.mxu0 0.0
        %1987 = vmatpush1.xpose.msra.mxu0 %v1576
        %1988 = vmatprep.subr.mxu0 0.0
        %1989 = vmatpush1.xpose.msra.mxu0 %v1579
        %1990 = vmatprep.subr.mxu0 0.0
        %1991 = vmatpush1.xpose.msra.mxu0 0.0
        %1992 = vmatprep.subr.mxu0 0.0
        %1993 = vmatpush1.xpose.msra.mxu0 0.0
        %1994 = vmatprep.subr.mxu0 0.0
        %1995 = vmatpush1.xpose.msra.mxu0 0.0
        %1996 = vmatprep.subr.mxu0 0.0
        %1997 = vmatpush1.xpose.msra.mxu0 0.0
        %1998 = vmatprep.subr.mxu0 0.0
        %1999 = vmatpush1.xpose.msra.mxu0 0.0
        %2000 = vmatprep.subr.mxu0 0.0
        %2001 = vmatpush1.xpose.msra.mxu0 0.0
        %2002 = vmatprep.subr.mxu0 0.0
        %2003 = vmatpush1.xpose.msra.mxu0 0.0
        %2004 = vmatprep.subr.mxu0 0.0
        %2005 = vmatpush1.xpose.msra.mxu0 0.0
        %2006 = vmatprep.subr.mxu0 0.0
        %2007 = vmatpush1.xpose.msra.mxu0 0.0
        %2008 = vmatprep.subr.mxu0 0.0
        %2009 = vmatpush1.xpose.msra.mxu0 0.0
        %2010 = vmatprep.subr.mxu0 0.0
        %2011 = vmatpush1.xpose.msra.mxu0 0.0
        %2012 = vmatprep.subr.mxu0 0.0
        %2013 = vmatpush1.xpose.msra.mxu0 0.0
        %2014 = vmatprep.subr.mxu0 0.0
        %2015 = vmatpush1.xpose.msra.mxu0 0.0
        %2016 = vmatprep.subr.mxu0 0.0
        %2017 = vmatpush1.xpose.msra.mxu0 0.0
        %2018 = vmatprep.subr.mxu0 0.0
        %2019 = vmatpush1.xpose.msra.mxu0 0.0
        %2020 = vmatprep.subr.mxu0 0.0
        %2021 = vmatpush1.xpose.msra.mxu0 0.0
        %2022 = vmatprep.mubr.f32.mxu0 0.0
        %2023 = vmatmul.mubr.f32.gmra.mrb[0].mxu0 %v1911
        %v2024 = vpop.f32.mrb[0].mxu0
        %v2025 = vadd.f32 %v1469, %v2024
        %v2026 = vpop.f32.mrb[0].mxu0
        %2027 = vmatprep.mubr.f32.mxu0 0.0
        %2028 = vmatmul.mubr.f32.gmra.mrb[0].mxu0 %v1914
        %v2029 = vpop.f32.mrb[0].mxu0
        %v2030 = vadd.f32 %v1470, %v2029
        %v2031 = vpop.f32.mrb[0].mxu0
        %2032 = vmatprep.mubr.f32.mxu0 0.0
        %2033 = vmatmul.mubr.f32.gmra.mrb[0].mxu0 %v1917
        %v2034 = vpop.f32.mrb[0].mxu0
        %v2035 = vadd.f32 %v1471, %v2034
        %v2036 = vpop.f32.mrb[0].mxu0
        %2037 = vmatprep.mubr.f32.mxu0 0.0
        %2038 = vmatmul.mubr.f32.gmra.mrb[0].mxu0 %v1920
        %v2039 = vpop.f32.mrb[0].mxu0
        %v2040 = vadd.f32 %v1472, %v2039
        %v2041 = vpop.f32.mrb[0].mxu0
        %2042 = vmatprep.mubr.f32.mxu0 0.0
        %2043 = vmatmul.mubr.f32.gmra.mrb[0].mxu0 %v1923
        %v2044 = vpop.f32.mrb[0].mxu0
        %v2045 = vadd.f32 %v1473, %v2044
        %v2046 = vpop.f32.mrb[0].mxu0
        %2047 = vmatprep.mubr.f32.mxu0 0.0
        %2048 = vmatmul.mubr.f32.gmra.mrb[0].mxu0 %v1926
        %v2049 = vpop.f32.mrb[0].mxu0
        %v2050 = vadd.f32 %v1474, %v2049
        %v2051 = vpop.f32.mrb[0].mxu0
        %2052 = vmatprep.mubr.f32.mxu0 0.0
        %2053 = vmatmul.mubr.f32.gmra.mrb[0].mxu0 %v1929
        %v2054 = vpop.f32.mrb[0].mxu0
        %v2055 = vadd.f32 %v1475, %v2054
        %v2056 = vpop.f32.mrb[0].mxu0
        %2057 = vmatprep.mubr.f32.mxu0 0.0
        %2058 = vmatmul.mubr.f32.gmra.mrb[0].mxu0 %v1932
        %v2059 = vpop.f32.mrb[0].mxu0
        %v2060 = vadd.f32 %v1476, %v2059
        %v2061 = vpop.f32.mrb[0].mxu0
        %2062 = vmatprep.mubr.f32.mxu0 0.0
        %2063 = vmatmul.mubr.f32.gmra.mrb[0].mxu0 %v1935
        %v2064 = vpop.f32.mrb[0].mxu0
        %v2065 = vadd.f32 %v1477, %v2064
        %v2066 = vpop.f32.mrb[0].mxu0
        %2067 = vmatprep.mubr.f32.mxu0 0.0
        %2068 = vmatmul.mubr.f32.gmra.mrb[0].mxu0 %v1938
        %v2069 = vpop.f32.mrb[0].mxu0
        %v2070 = vadd.f32 %v1478, %v2069
        %v2071 = vpop.f32.mrb[0].mxu0
        %2072 = vmatprep.mubr.f32.mxu0 0.0
        %2073 = vmatmul.mubr.f32.gmra.mrb[0].mxu0 %v1941
        %v2074 = vpop.f32.mrb[0].mxu0
        %v2075 = vadd.f32 %v1479, %v2074
        %v2076 = vpop.f32.mrb[0].mxu0
        %2077 = vmatprep.mubr.f32.mxu0 0.0
        %2078 = vmatmul.mubr.f32.gmra.mrb[0].mxu0 %v1944
        %v2079 = vpop.f32.mrb[0].mxu0
        %v2080 = vadd.f32 %v1480, %v2079
        %v2081 = vpop.f32.mrb[0].mxu0
        %2082 = vmatprep.mubr.f32.mxu0 0.0
        %2083 = vmatmul.mubr.f32.gmra.mrb[0].mxu0 %v1947
        %v2084 = vpop.f32.mrb[0].mxu0
        %v2085 = vadd.f32 %v1481, %v2084
        %v2086 = vpop.f32.mrb[0].mxu0
        %2087 = vmatprep.mubr.f32.mxu0 0.0
        %2088 = vmatmul.mubr.f32.gmra.mrb[0].mxu0 %v1950
        %v2089 = vpop.f32.mrb[0].mxu0
        %v2090 = vadd.f32 %v1482, %v2089
        %v2091 = vpop.f32.mrb[0].mxu0
        %2092 = vmatprep.mubr.f32.mxu0 0.0
        %2093 = vmatmul.mubr.f32.gmra.mrb[0].mxu0 %v1953
        %v2094 = vpop.f32.mrb[0].mxu0
        %v2095 = vadd.f32 %v1483, %v2094
        %v2096 = vpop.f32.mrb[0].mxu0
        %2097 = vmatprep.mubr.f32.mxu0 0.0
        %2098 = vmatmul.mubr.f32.gmra.mrb[0].mxu0 %v1956
        %v2099 = vpop.f32.mrb[0].mxu0
        %v2100 = vadd.f32 %v1484, %v2099
        %v2101 = vpop.f32.mrb[0].mxu0
        %2102 = vdwg.mxu0
        %2103 = vmax.xlane.f32.xlu0 %v2025
        %v2104 = vpop.xlane.xlu0 %2103
        %2105 = vmax.xlane.f32.xlu0 %v2030
        %v2106 = vpop.xlane.xlu0 %2105
        %2107 = vmax.xlane.f32.xlu0 %v2035
        %v2108 = vpop.xlane.xlu0 %2107
        %2109 = vmax.xlane.f32.xlu0 %v2040
        %v2110 = vpop.xlane.xlu0 %2109
        %2111 = vmax.xlane.f32.xlu0 %v2045
        %v2112 = vpop.xlane.xlu0 %2111
        %2113 = vmax.xlane.f32.xlu0 %v2050
        %v2114 = vpop.xlane.xlu0 %2113
        %2115 = vmax.xlane.f32.xlu0 %v2055
        %v2116 = vpop.xlane.xlu0 %2115
        %2117 = vmax.xlane.f32.xlu0 %v2060
        %v2118 = vpop.xlane.xlu0 %2117
        %2119 = vmax.xlane.f32.xlu0 %v2065
        %v2120 = vpop.xlane.xlu0 %2119
        %2121 = vmax.xlane.f32.xlu0 %v2070
        %v2122 = vpop.xlane.xlu0 %2121
        %2123 = vmax.xlane.f32.xlu0 %v2075
        %v2124 = vpop.xlane.xlu0 %2123
        %2125 = vmax.xlane.f32.xlu0 %v2080
        %v2126 = vpop.xlane.xlu0 %2125
        %2127 = vmax.xlane.f32.xlu0 %v2085
        %v2128 = vpop.xlane.xlu0 %2127
        %2129 = vmax.xlane.f32.xlu0 %v2090
        %v2130 = vpop.xlane.xlu0 %2129
        %2131 = vmax.xlane.f32.xlu0 %v2095
        %v2132 = vpop.xlane.xlu0 %2131
        %2133 = vmax.xlane.f32.xlu0 %v2100
        %v2134 = vpop.xlane.xlu0 %2133
        %v2135 = vsub.f32 %v2025, %v2104
        %v2136 = vsub.f32 %v2030, %v2106
        %v2137 = vsub.f32 %v2035, %v2108
        %v2138 = vsub.f32 %v2040, %v2110
        %v2139 = vsub.f32 %v2045, %v2112
        %v2140 = vsub.f32 %v2050, %v2114
        %v2141 = vsub.f32 %v2055, %v2116
        %v2142 = vsub.f32 %v2060, %v2118
        %v2143 = vsub.f32 %v2065, %v2120
        %v2144 = vsub.f32 %v2070, %v2122
        %v2145 = vsub.f32 %v2075, %v2124
        %v2146 = vsub.f32 %v2080, %v2126
        %v2147 = vsub.f32 %v2085, %v2128
        %v2148 = vsub.f32 %v2090, %v2130
        %v2149 = vsub.f32 %v2095, %v2132
        %v2150 = vsub.f32 %v2100, %v2134
        %v2151 = vmul.f32 %v2135, 1.442695
        %v2152 = vpow.pop %v2151
        %v2153 = vmul.f32 %v2136, 1.442695
        %v2154 = vpow.pop %v2153
        %v2155 = vmul.f32 %v2137, 1.442695
        %v2156 = vpow.pop %v2155
        %v2157 = vmul.f32 %v2138, 1.442695
        %v2158 = vpow.pop %v2157
        %v2159 = vmul.f32 %v2139, 1.442695
        %v2160 = vpow.pop %v2159
        %v2161 = vmul.f32 %v2140, 1.442695
        %v2162 = vpow.pop %v2161
        %v2163 = vmul.f32 %v2141, 1.442695
        %v2164 = vpow.pop %v2163
        %v2165 = vmul.f32 %v2142, 1.442695
        %v2166 = vpow.pop %v2165
        %v2167 = vmul.f32 %v2143, 1.442695
        %v2168 = vpow.pop %v2167
        %v2169 = vmul.f32 %v2144, 1.442695
        %v2170 = vpow.pop %v2169
        %v2171 = vmul.f32 %v2145, 1.442695
        %v2172 = vpow.pop %v2171
        %v2173 = vmul.f32 %v2146, 1.442695
        %v2174 = vpow.pop %v2173
        %v2175 = vmul.f32 %v2147, 1.442695
        %v2176 = vpow.pop %v2175
        %v2177 = vmul.f32 %v2148, 1.442695
        %v2178 = vpow.pop %v2177
        %v2179 = vmul.f32 %v2149, 1.442695
        %v2180 = vpow.pop %v2179
        %v2181 = vmul.f32 %v2150, 1.442695
        %v2182 = vpow.pop %v2181
        %2183 = vadd.xlane.f32.xlu0 %v2152
        %v2184 = vpop.xlane.xlu0 %2183
        %2185 = vadd.xlane.f32.xlu0 %v2154
        %v2186 = vpop.xlane.xlu0 %2185
        %2187 = vadd.xlane.f32.xlu0 %v2156
        %v2188 = vpop.xlane.xlu0 %2187
        %2189 = vadd.xlane.f32.xlu0 %v2158
        %v2190 = vpop.xlane.xlu0 %2189
        %2191 = vadd.xlane.f32.xlu0 %v2160
        %v2192 = vpop.xlane.xlu0 %2191
        %2193 = vadd.xlane.f32.xlu0 %v2162
        %v2194 = vpop.xlane.xlu0 %2193
        %2195 = vadd.xlane.f32.xlu0 %v2164
        %v2196 = vpop.xlane.xlu0 %2195
        %2197 = vadd.xlane.f32.xlu0 %v2166
        %v2198 = vpop.xlane.xlu0 %2197
        %2199 = vadd.xlane.f32.xlu0 %v2168
        %v2200 = vpop.xlane.xlu0 %2199
        %2201 = vadd.xlane.f32.xlu0 %v2170
        %v2202 = vpop.xlane.xlu0 %2201
        %2203 = vadd.xlane.f32.xlu0 %v2172
        %v2204 = vpop.xlane.xlu0 %2203
        %2205 = vadd.xlane.f32.xlu0 %v2174
        %v2206 = vpop.xlane.xlu0 %2205
        %2207 = vadd.xlane.f32.xlu0 %v2176
        %v2208 = vpop.xlane.xlu0 %2207
        %2209 = vadd.xlane.f32.xlu0 %v2178
        %v2210 = vpop.xlane.xlu0 %2209
        %2211 = vadd.xlane.f32.xlu0 %v2180
        %v2212 = vpop.xlane.xlu0 %2211
        %2213 = vadd.xlane.f32.xlu0 %v2182
        %v2214 = vpop.xlane.xlu0 %2213
        %v2215 = vrcp.pop %v2184
        %v2216 = vrcp.pop %v2186
        %v2217 = vrcp.pop %v2188
        %v2218 = vrcp.pop %v2190
        %v2219 = vrcp.pop %v2192
        %v2220 = vrcp.pop %v2194
        %v2221 = vrcp.pop %v2196
        %v2222 = vrcp.pop %v2198
        %v2223 = vrcp.pop %v2200
        %v2224 = vrcp.pop %v2202
        %v2225 = vrcp.pop %v2204
        %v2226 = vrcp.pop %v2206
        %v2227 = vrcp.pop %v2208
        %v2228 = vrcp.pop %v2210
        %v2229 = vrcp.pop %v2212
        %v2230 = vrcp.pop %v2214
        %v2231 = vmul.f32 %v2152, %v2215
        %v2232 = vmul.f32 %v2154, %v2216
        %v2233 = vmul.f32 %v2156, %v2217
        %v2234 = vmul.f32 %v2158, %v2218
        %v2235 = vmul.f32 %v2160, %v2219
        %v2236 = vmul.f32 %v2162, %v2220
        %v2237 = vmul.f32 %v2164, %v2221
        %v2238 = vmul.f32 %v2166, %v2222
        %v2239 = vmul.f32 %v2168, %v2223
        %v2240 = vmul.f32 %v2170, %v2224
        %v2241 = vmul.f32 %v2172, %v2225
        %v2242 = vmul.f32 %v2174, %v2226
        %v2243 = vmul.f32 %v2176, %v2227
        %v2244 = vmul.f32 %v2178, %v2228
        %v2245 = vmul.f32 %v2180, %v2229
        %v2246 = vmul.f32 %v2182, %v2230
        %v2247 = vmul.f32 %v1368, %v1892
        %v2248 = vmul.f32 %v1373, %v1892
        %v2249 = vmul.f32 %v1378, %v1892
        %v2250 = vmul.f32 %v1383, %v1892
        %v2251 = vmul.f32 %v1388, %v1892
        %v2252 = vmul.f32 %v1393, %v1892
        %v2253 = vmul.f32 %v1398, %v1892
        %v2254 = vmul.f32 %v1403, %v1892
        %v2255 = vmul.f32 %v1408, %v1892
        %v2256 = vmul.f32 %v1413, %v1892
        %v2257 = vmul.f32 %v1418, %v1892
        %v2258 = vmul.f32 %v1423, %v1892
        %v2259 = vmul.f32 %v1428, %v1892
        %v2260 = vmul.f32 %v1433, %v1892
        %v2261 = vmul.f32 %v1438, %v1892
        %v2262 = vmul.f32 %v1443, %v1892
        %2263 = vmatprep.subr.mxu0 0.0
        %2264 = vmatpush1.msra.mxu0 %v2247
        %2265 = vmatprep.subr.mxu0 0.0
        %2266 = vmatpush1.msra.mxu0 %v2248
        %2267 = vmatprep.subr.mxu0 0.0
        %2268 = vmatpush1.msra.mxu0 %v2249
        %2269 = vmatprep.subr.mxu0 0.0
        %2270 = vmatpush1.msra.mxu0 %v2250
        %2271 = vmatprep.subr.mxu0 0.0
        %2272 = vmatpush1.msra.mxu0 %v2251
        %2273 = vmatprep.subr.mxu0 0.0
        %2274 = vmatpush1.msra.mxu0 %v2252
        %2275 = vmatprep.subr.mxu0 0.0
        %2276 = vmatpush1.msra.mxu0 %v2253
        %2277 = vmatprep.subr.mxu0 0.0
        %2278 = vmatpush1.msra.mxu0 %v2254
        %2279 = vmatprep.subr.mxu0 0.0
        %2280 = vmatpush1.msra.mxu0 %v2255
        %2281 = vmatprep.subr.mxu0 0.0
        %2282 = vmatpush1.msra.mxu0 %v2256
        %2283 = vmatprep.subr.mxu0 0.0
        %2284 = vmatpush1.msra.mxu0 %v2257
        %2285 = vmatprep.subr.mxu0 0.0
        %2286 = vmatpush1.msra.mxu0 %v2258
        %2287 = vmatprep.subr.mxu0 0.0
        %2288 = vmatpush1.msra.mxu0 %v2259
        %2289 = vmatprep.subr.mxu0 0.0
        %2290 = vmatpush1.msra.mxu0 %v2260
        %2291 = vmatprep.subr.mxu0 0.0
        %2292 = vmatpush1.msra.mxu0 %v2261
        %2293 = vmatprep.subr.mxu0 0.0
        %2294 = vmatpush1.msra.mxu0 %v2262
        %2295 = vmatprep.subr.mxu0 0.0
        %2296 = vmatpush1.msra.mxu0 0.0
        %2297 = vmatprep.subr.mxu0 0.0
        %2298 = vmatpush1.msra.mxu0 0.0
        %2299 = vmatprep.subr.mxu0 0.0
        %2300 = vmatpush1.msra.mxu0 0.0
        %2301 = vmatprep.subr.mxu0 0.0
        %2302 = vmatpush1.msra.mxu0 0.0
        %2303 = vmatprep.subr.mxu0 0.0
        %2304 = vmatpush1.msra.mxu0 0.0
        %2305 = vmatprep.subr.mxu0 0.0
        %2306 = vmatpush1.msra.mxu0 0.0
        %2307 = vmatprep.subr.mxu0 0.0
        %2308 = vmatpush1.msra.mxu0 0.0
        %2309 = vmatprep.subr.mxu0 0.0
        %2310 = vmatpush1.msra.mxu0 0.0
        %2311 = vmatprep.subr.mxu0 0.0
        %2312 = vmatpush1.msra.mxu0 0.0
        %2313 = vmatprep.subr.mxu0 0.0
        %2314 = vmatpush1.msra.mxu0 0.0
        %2315 = vmatprep.subr.mxu0 0.0
        %2316 = vmatpush1.msra.mxu0 0.0
        %2317 = vmatprep.subr.mxu0 0.0
        %2318 = vmatpush1.msra.mxu0 0.0
        %2319 = vmatprep.subr.mxu0 0.0
        %2320 = vmatpush1.msra.mxu0 0.0
        %2321 = vmatprep.subr.mxu0 0.0
        %2322 = vmatpush1.msra.mxu0 0.0
        %2323 = vmatprep.subr.mxu0 0.0
        %2324 = vmatpush1.msra.mxu0 0.0
        %2325 = vmatprep.subr.mxu0 0.0
        %2326 = vmatpush1.msra.mxu0 0.0
        %2327 = vmatprep.mubr.f32.mxu0 0.0
        %2328 = vmatmul.mubr.f32.gmra.mrb[0].mxu0 %v2231
        %v2329 = vpop.f32.mrb[0].mxu0
        %v2330 = vadd.f32 0.0, %v2329
        %v2331 = vpop.f32.mrb[0].mxu0
        %2332 = vmatprep.mubr.f32.mxu0 0.0
        %2333 = vmatmul.mubr.f32.gmra.mrb[0].mxu0 %v2232
        %v2334 = vpop.f32.mrb[0].mxu0
        %v2335 = vadd.f32 0.0, %v2334
        %v2336 = vpop.f32.mrb[0].mxu0
        %2337 = vmatprep.mubr.f32.mxu0 0.0
        %2338 = vmatmul.mubr.f32.gmra.mrb[0].mxu0 %v2233
        %v2339 = vpop.f32.mrb[0].mxu0
        %v2340 = vadd.f32 0.0, %v2339
        %v2341 = vpop.f32.mrb[0].mxu0
        %2342 = vmatprep.mubr.f32.mxu0 0.0
        %2343 = vmatmul.mubr.f32.gmra.mrb[0].mxu0 %v2234
        %v2344 = vpop.f32.mrb[0].mxu0
        %v2345 = vadd.f32 0.0, %v2344
        %v2346 = vpop.f32.mrb[0].mxu0
        %2347 = vmatprep.mubr.f32.mxu0 0.0
        %2348 = vmatmul.mubr.f32.gmra.mrb[0].mxu0 %v2235
        %v2349 = vpop.f32.mrb[0].mxu0
        %v2350 = vadd.f32 0.0, %v2349
        %v2351 = vpop.f32.mrb[0].mxu0
        %2352 = vmatprep.mubr.f32.mxu0 0.0
        %2353 = vmatmul.mubr.f32.gmra.mrb[0].mxu0 %v2236
        %v2354 = vpop.f32.mrb[0].mxu0
        %v2355 = vadd.f32 0.0, %v2354
        %v2356 = vpop.f32.mrb[0].mxu0
        %2357 = vmatprep.mubr.f32.mxu0 0.0
        %2358 = vmatmul.mubr.f32.gmra.mrb[0].mxu0 %v2237
        %v2359 = vpop.f32.mrb[0].mxu0
        %v2360 = vadd.f32 0.0, %v2359
        %v2361 = vpop.f32.mrb[0].mxu0
        %2362 = vmatprep.mubr.f32.mxu0 0.0
        %2363 = vmatmul.mubr.f32.gmra.mrb[0].mxu0 %v2238
        %v2364 = vpop.f32.mrb[0].mxu0
        %v2365 = vadd.f32 0.0, %v2364
        %v2366 = vpop.f32.mrb[0].mxu0
        %2367 = vmatprep.mubr.f32.mxu0 0.0
        %2368 = vmatmul.mubr.f32.gmra.mrb[0].mxu0 %v2239
        %v2369 = vpop.f32.mrb[0].mxu0
        %v2370 = vadd.f32 0.0, %v2369
        %v2371 = vpop.f32.mrb[0].mxu0
        %2372 = vmatprep.mubr.f32.mxu0 0.0
        %2373 = vmatmul.mubr.f32.gmra.mrb[0].mxu0 %v2240
        %v2374 = vpop.f32.mrb[0].mxu0
        %v2375 = vadd.f32 0.0, %v2374
        %v2376 = vpop.f32.mrb[0].mxu0
        %2377 = vmatprep.mubr.f32.mxu0 0.0
        %2378 = vmatmul.mubr.f32.gmra.mrb[0].mxu0 %v2241
        %v2379 = vpop.f32.mrb[0].mxu0
        %v2380 = vadd.f32 0.0, %v2379
        %v2381 = vpop.f32.mrb[0].mxu0
        %2382 = vmatprep.mubr.f32.mxu0 0.0
        %2383 = vmatmul.mubr.f32.gmra.mrb[0].mxu0 %v2242
        %v2384 = vpop.f32.mrb[0].mxu0
        %v2385 = vadd.f32 0.0, %v2384
        %v2386 = vpop.f32.mrb[0].mxu0
        %2387 = vmatprep.mubr.f32.mxu0 0.0
        %2388 = vmatmul.mubr.f32.gmra.mrb[0].mxu0 %v2243
        %v2389 = vpop.f32.mrb[0].mxu0
        %v2390 = vadd.f32 0.0, %v2389
        %v2391 = vpop.f32.mrb[0].mxu0
        %2392 = vmatprep.mubr.f32.mxu0 0.0
        %2393 = vmatmul.mubr.f32.gmra.mrb[0].mxu0 %v2244
        %v2394 = vpop.f32.mrb[0].mxu0
        %v2395 = vadd.f32 0.0, %v2394
        %v2396 = vpop.f32.mrb[0].mxu0
        %2397 = vmatprep.mubr.f32.mxu0 0.0
        %2398 = vmatmul.mubr.f32.gmra.mrb[0].mxu0 %v2245
        %v2399 = vpop.f32.mrb[0].mxu0
        %v2400 = vadd.f32 0.0, %v2399
        %v2401 = vpop.f32.mrb[0].mxu0
        %2402 = vmatprep.mubr.f32.mxu0 0.0
        %2403 = vmatmul.mubr.f32.gmra.mrb[0].mxu0 %v2246
        %v2404 = vpop.f32.mrb[0].mxu0
        %v2405 = vadd.f32 0.0, %v2404
        %v2406 = vpop.f32.mrb[0].mxu0
        %2407 = vdwg.mxu0
        %2408 = vmatprep.subr.mxu0 0.0
        %2409 = vmatpush1.msra.mxu0 %v1870
        %2410 = vmatprep.subr.mxu0 0.0
        %2411 = vmatpush1.msra.mxu0 %v1871
        %2412 = vmatprep.subr.mxu0 0.0
        %2413 = vmatpush1.msra.mxu0 %v1872
        %2414 = vmatprep.subr.mxu0 0.0
        %2415 = vmatpush1.msra.mxu0 %v1873
        %2416 = vmatprep.subr.mxu0 0.0
        %2417 = vmatpush1.msra.mxu0 %v1874
        %2418 = vmatprep.subr.mxu0 0.0
        %2419 = vmatpush1.msra.mxu0 %v1875
        %2420 = vmatprep.subr.mxu0 0.0
        %2421 = vmatpush1.msra.mxu0 %v1876
        %2422 = vmatprep.subr.mxu0 0.0
        %2423 = vmatpush1.msra.mxu0 %v1877
        %2424 = vmatprep.subr.mxu0 0.0
        %2425 = vmatpush1.msra.mxu0 %v1878
        %2426 = vmatprep.subr.mxu0 0.0
        %2427 = vmatpush1.msra.mxu0 %v1879
        %2428 = vmatprep.subr.mxu0 0.0
        %2429 = vmatpush1.msra.mxu0 %v1880
        %2430 = vmatprep.subr.mxu0 0.0
        %2431 = vmatpush1.msra.mxu0 %v1881
        %2432 = vmatprep.subr.mxu0 0.0
        %2433 = vmatpush1.msra.mxu0 %v1882
        %2434 = vmatprep.subr.mxu0 0.0
        %2435 = vmatpush1.msra.mxu0 %v1883
        %2436 = vmatprep.subr.mxu0 0.0
        %2437 = vmatpush1.msra.mxu0 %v1884
        %2438 = vmatprep.subr.mxu0 0.0
        %2439 = vmatpush1.msra.mxu0 %v1885
        %2440 = vmatprep.subr.mxu0 0.0
        %2441 = vmatpush1.msra.mxu0 0.0
        %2442 = vmatprep.subr.mxu0 0.0
        %2443 = vmatpush1.msra.mxu0 0.0
        %2444 = vmatprep.subr.mxu0 0.0
        %2445 = vmatpush1.msra.mxu0 0.0
        %2446 = vmatprep.subr.mxu0 0.0
        %2447 = vmatpush1.msra.mxu0 0.0
        %2448 = vmatprep.subr.mxu0 0.0
        %2449 = vmatpush1.msra.mxu0 0.0
        %2450 = vmatprep.subr.mxu0 0.0
        %2451 = vmatpush1.msra.mxu0 0.0
        %2452 = vmatprep.subr.mxu0 0.0
        %2453 = vmatpush1.msra.mxu0 0.0
        %2454 = vmatprep.subr.mxu0 0.0
        %2455 = vmatpush1.msra.mxu0 0.0
        %2456 = vmatprep.subr.mxu0 0.0
        %2457 = vmatpush1.msra.mxu0 0.0
        %2458 = vmatprep.subr.mxu0 0.0
        %2459 = vmatpush1.msra.mxu0 0.0
        %2460 = vmatprep.subr.mxu0 0.0
        %2461 = vmatpush1.msra.mxu0 0.0
        %2462 = vmatprep.subr.mxu0 0.0
        %2463 = vmatpush1.msra.mxu0 0.0
        %2464 = vmatprep.subr.mxu0 0.0
        %2465 = vmatpush1.msra.mxu0 0.0
        %2466 = vmatprep.subr.mxu0 0.0
        %2467 = vmatpush1.msra.mxu0 0.0
        %2468 = vmatprep.subr.mxu0 0.0
        %2469 = vmatpush1.msra.mxu0 0.0
        %2470 = vmatprep.subr.mxu0 0.0
        %2471 = vmatpush1.msra.mxu0 0.0
        %2472 = vmatprep.mubr.f32.mxu0 0.0
        %2473 = vmatmul.mubr.f32.gmra.mrb[0].mxu0 %v1854
        %v2474 = vpop.f32.mrb[0].mxu0
        %v2475 = vadd.f32 %v2330, %v2474
        %v2476 = vpop.f32.mrb[0].mxu0
        %2477 = vmatprep.mubr.f32.mxu0 0.0
        %2478 = vmatmul.mubr.f32.gmra.mrb[0].mxu0 %v1855
        %v2479 = vpop.f32.mrb[0].mxu0
        %v2480 = vadd.f32 %v2335, %v2479
        %v2481 = vpop.f32.mrb[0].mxu0
        %2482 = vmatprep.mubr.f32.mxu0 0.0
        %2483 = vmatmul.mubr.f32.gmra.mrb[0].mxu0 %v1856
        %v2484 = vpop.f32.mrb[0].mxu0
        %v2485 = vadd.f32 %v2340, %v2484
        %v2486 = vpop.f32.mrb[0].mxu0
        %2487 = vmatprep.mubr.f32.mxu0 0.0
        %2488 = vmatmul.mubr.f32.gmra.mrb[0].mxu0 %v1857
        %v2489 = vpop.f32.mrb[0].mxu0
        %v2490 = vadd.f32 %v2345, %v2489
        %v2491 = vpop.f32.mrb[0].mxu0
        %2492 = vmatprep.mubr.f32.mxu0 0.0
        %2493 = vmatmul.mubr.f32.gmra.mrb[0].mxu0 %v1858
        %v2494 = vpop.f32.mrb[0].mxu0
        %v2495 = vadd.f32 %v2350, %v2494
        %v2496 = vpop.f32.mrb[0].mxu0
        %2497 = vmatprep.mubr.f32.mxu0 0.0
        %2498 = vmatmul.mubr.f32.gmra.mrb[0].mxu0 %v1859
        %v2499 = vpop.f32.mrb[0].mxu0
        %v2500 = vadd.f32 %v2355, %v2499
        %v2501 = vpop.f32.mrb[0].mxu0
        %2502 = vmatprep.mubr.f32.mxu0 0.0
        %2503 = vmatmul.mubr.f32.gmra.mrb[0].mxu0 %v1860
        %v2504 = vpop.f32.mrb[0].mxu0
        %v2505 = vadd.f32 %v2360, %v2504
        %v2506 = vpop.f32.mrb[0].mxu0
        %2507 = vmatprep.mubr.f32.mxu0 0.0
        %2508 = vmatmul.mubr.f32.gmra.mrb[0].mxu0 %v1861
        %v2509 = vpop.f32.mrb[0].mxu0
        %v2510 = vadd.f32 %v2365, %v2509
        %v2511 = vpop.f32.mrb[0].mxu0
        %2512 = vmatprep.mubr.f32.mxu0 0.0
        %2513 = vmatmul.mubr.f32.gmra.mrb[0].mxu0 %v1862
        %v2514 = vpop.f32.mrb[0].mxu0
        %v2515 = vadd.f32 %v2370, %v2514
        %v2516 = vpop.f32.mrb[0].mxu0
        %2517 = vmatprep.mubr.f32.mxu0 0.0
        %2518 = vmatmul.mubr.f32.gmra.mrb[0].mxu0 %v1863
        %v2519 = vpop.f32.mrb[0].mxu0
        %v2520 = vadd.f32 %v2375, %v2519
        %v2521 = vpop.f32.mrb[0].mxu0
        %2522 = vmatprep.mubr.f32.mxu0 0.0
        %2523 = vmatmul.mubr.f32.gmra.mrb[0].mxu0 %v1864
        %v2524 = vpop.f32.mrb[0].mxu0
        %v2525 = vadd.f32 %v2380, %v2524
        %v2526 = vpop.f32.mrb[0].mxu0
        %2527 = vmatprep.mubr.f32.mxu0 0.0
        %2528 = vmatmul.mubr.f32.gmra.mrb[0].mxu0 %v1865
        %v2529 = vpop.f32.mrb[0].mxu0
        %v2530 = vadd.f32 %v2385, %v2529
        %v2531 = vpop.f32.mrb[0].mxu0
        %2532 = vmatprep.mubr.f32.mxu0 0.0
        %2533 = vmatmul.mubr.f32.gmra.mrb[0].mxu0 %v1866
        %v2534 = vpop.f32.mrb[0].mxu0
        %v2535 = vadd.f32 %v2390, %v2534
        %v2536 = vpop.f32.mrb[0].mxu0
        %2537 = vmatprep.mubr.f32.mxu0 0.0
        %2538 = vmatmul.mubr.f32.gmra.mrb[0].mxu0 %v1867
        %v2539 = vpop.f32.mrb[0].mxu0
        %v2540 = vadd.f32 %v2395, %v2539
        %v2541 = vpop.f32.mrb[0].mxu0
        %2542 = vmatprep.mubr.f32.mxu0 0.0
        %2543 = vmatmul.mubr.f32.gmra.mrb[0].mxu0 %v1868
        %v2544 = vpop.f32.mrb[0].mxu0
        %v2545 = vadd.f32 %v2400, %v2544
        %v2546 = vpop.f32.mrb[0].mxu0
        %2547 = vmatprep.mubr.f32.mxu0 0.0
        %2548 = vmatmul.mubr.f32.gmra.mrb[0].mxu0 %v1869
        %v2549 = vpop.f32.mrb[0].mxu0
        %v2550 = vadd.f32 %v2405, %v2549
        %v2551 = vpop.f32.mrb[0].mxu0
        %2552 = vdwg.mxu0
        %v2553 = vld [vmem:[#allocation8] sm:$0xff]
        %v2554 = vld [vmem:[#allocation8 + $0x8] sm:$0xff]
        %v2555 = vld [vmem:[#allocation8 + $0x10] sm:$0xff]
        %v2556 = vld [vmem:[#allocation8 + $0x18] sm:$0xff]
        %v2557 = vld [vmem:[%s12] sm:$0x1]
        %v2559 = vlaneseq
        %v2560 = vshrl.u32 %v2559, 7
        %v2561 = vsub.s32 0, %v2560
        %v2562 = vrot.slane %v2557, %v2561
        %v2565 = vsel %vm940, %v2475, 0
        %v2568 = vsel %vm940, %v2480, 0
        %v2571 = vsel %vm940, %v2485, 0
        %v2574 = vsel %vm940, %v2490, 0
        %v2577 = vsel %vm940, %v2495, 0
        %v2580 = vsel %vm940, %v2500, 0
        %v2583 = vsel %vm940, %v2505, 0
        %v2586 = vsel %vm940, %v2510, 0
        %v2589 = vsel %vm940, %v2515, 0
        %v2592 = vsel %vm940, %v2520, 0
        %v2595 = vsel %vm940, %v2525, 0
        %v2598 = vsel %vm940, %v2530, 0
        %v2601 = vsel %vm940, %v2535, 0
        %v2604 = vsel %vm940, %v2540, 0
        %v2607 = vsel %vm940, %v2545, 0
        %v2610 = vsel %vm940, %v2550, 0
        %2612 = vmatprep.subr.mxu0 0.0
        %2613 = vmatpush1.msra.mxu0 %v2553
        %2614 = vmatprep.subr.mxu0 0.0
        %2615 = vmatpush1.msra.mxu0 %v2554
        %2616 = vmatprep.subr.mxu0 0.0
        %2617 = vmatpush1.msra.mxu0 %v2555
        %2618 = vmatprep.subr.mxu0 0.0
        %2619 = vmatpush1.msra.mxu0 %v2556
        %2620 = vmatprep.subr.mxu0 0.0
        %2621 = vmatpush1.msra.mxu0 0.0
        %2622 = vmatprep.subr.mxu0 0.0
        %2623 = vmatpush1.msra.mxu0 0.0
        %2624 = vmatprep.subr.mxu0 0.0
        %2625 = vmatpush1.msra.mxu0 0.0
        %2626 = vmatprep.subr.mxu0 0.0
        %2627 = vmatpush1.msra.mxu0 0.0
        %2628 = vmatprep.subr.mxu0 0.0
        %2629 = vmatpush1.msra.mxu0 0.0
        %2630 = vmatprep.subr.mxu0 0.0
        %2631 = vmatpush1.msra.mxu0 0.0
        %2632 = vmatprep.subr.mxu0 0.0
        %2633 = vmatpush1.msra.mxu0 0.0
        %2634 = vmatprep.subr.mxu0 0.0
        %2635 = vmatpush1.msra.mxu0 0.0
        %2636 = vmatprep.subr.mxu0 0.0
        %2637 = vmatpush1.msra.mxu0 0.0
        %2638 = vmatprep.subr.mxu0 0.0
        %2639 = vmatpush1.msra.mxu0 0.0
        %2640 = vmatprep.subr.mxu0 0.0
        %2641 = vmatpush1.msra.mxu0 0.0
        %2642 = vmatprep.subr.mxu0 0.0
        %2643 = vmatpush1.msra.mxu0 0.0
        %2644 = vmatprep.subr.mxu0 0.0
        %2645 = vmatpush1.msra.mxu0 0.0
        %2646 = vmatprep.subr.mxu0 0.0
        %2647 = vmatpush1.msra.mxu0 0.0
        %2648 = vmatprep.subr.mxu0 0.0
        %2649 = vmatpush1.msra.mxu0 0.0
        %2650 = vmatprep.subr.mxu0 0.0
        %2651 = vmatpush1.msra.mxu0 0.0
        %2652 = vmatprep.subr.mxu0 0.0
        %2653 = vmatpush1.msra.mxu0 0.0
        %2654 = vmatprep.subr.mxu0 0.0
        %2655 = vmatpush1.msra.mxu0 0.0
        %2656 = vmatprep.subr.mxu0 0.0
        %2657 = vmatpush1.msra.mxu0 0.0
        %2658 = vmatprep.subr.mxu0 0.0
        %2659 = vmatpush1.msra.mxu0 0.0
        %2660 = vmatprep.subr.mxu0 0.0
        %2661 = vmatpush1.msra.mxu0 0.0
        %2662 = vmatprep.subr.mxu0 0.0
        %2663 = vmatpush1.msra.mxu0 0.0
        %2664 = vmatprep.subr.mxu0 0.0
        %2665 = vmatpush1.msra.mxu0 0.0
        %2666 = vmatprep.subr.mxu0 0.0
        %2667 = vmatpush1.msra.mxu0 0.0
        %2668 = vmatprep.subr.mxu0 0.0
        %2669 = vmatpush1.msra.mxu0 0.0
        %2670 = vmatprep.subr.mxu0 0.0
        %2671 = vmatpush1.msra.mxu0 0.0
        %2672 = vmatprep.subr.mxu0 0.0
        %2673 = vmatpush1.msra.mxu0 0.0
        %2674 = vmatprep.subr.mxu0 0.0
        %2675 = vmatpush1.msra.mxu0 0.0
        %2676 = vmatprep.mubr.f32.mxu0 0.0
        %2677 = vmatmul.mubr.f32.gmra.mrb[0].mxu0 %v2565
        %v2678 = vpop.f32.mrb[0].mxu0
        %v2679 = vadd.f32 %v2562, %v2678
        %v2680 = vpop.f32.mrb[0].mxu0
        %2681 = vmatprep.mubr.f32.mxu0 0.0
        %2682 = vmatmul.mubr.f32.gmra.mrb[0].mxu0 %v2568
        %v2683 = vpop.f32.mrb[0].mxu0
        %v2684 = vadd.f32 %v2562, %v2683
        %v2685 = vpop.f32.mrb[0].mxu0
        %2686 = vmatprep.mubr.f32.mxu0 0.0
        %2687 = vmatmul.mubr.f32.gmra.mrb[0].mxu0 %v2571
        %v2688 = vpop.f32.mrb[0].mxu0
        %v2689 = vadd.f32 %v2562, %v2688
        %v2690 = vpop.f32.mrb[0].mxu0
        %2691 = vmatprep.mubr.f32.mxu0 0.0
        %2692 = vmatmul.mubr.f32.gmra.mrb[0].mxu0 %v2574
        %v2693 = vpop.f32.mrb[0].mxu0
        %v2694 = vadd.f32 %v2562, %v2693
        %v2695 = vpop.f32.mrb[0].mxu0
        %2696 = vmatprep.mubr.f32.mxu0 0.0
        %2697 = vmatmul.mubr.f32.gmra.mrb[0].mxu0 %v2577
        %v2698 = vpop.f32.mrb[0].mxu0
        %v2699 = vadd.f32 %v2562, %v2698
        %v2700 = vpop.f32.mrb[0].mxu0
        %2701 = vmatprep.mubr.f32.mxu0 0.0
        %2702 = vmatmul.mubr.f32.gmra.mrb[0].mxu0 %v2580
        %v2703 = vpop.f32.mrb[0].mxu0
        %v2704 = vadd.f32 %v2562, %v2703
        %v2705 = vpop.f32.mrb[0].mxu0
        %2706 = vmatprep.mubr.f32.mxu0 0.0
        %2707 = vmatmul.mubr.f32.gmra.mrb[0].mxu0 %v2583
        %v2708 = vpop.f32.mrb[0].mxu0
        %v2709 = vadd.f32 %v2562, %v2708
        %v2710 = vpop.f32.mrb[0].mxu0
        %2711 = vmatprep.mubr.f32.mxu0 0.0
        %2712 = vmatmul.mubr.f32.gmra.mrb[0].mxu0 %v2586
        %v2713 = vpop.f32.mrb[0].mxu0
        %v2714 = vadd.f32 %v2562, %v2713
        %v2715 = vpop.f32.mrb[0].mxu0
        %2716 = vmatprep.mubr.f32.mxu0 0.0
        %2717 = vmatmul.mubr.f32.gmra.mrb[0].mxu0 %v2589
        %v2718 = vpop.f32.mrb[0].mxu0
        %v2719 = vadd.f32 %v2562, %v2718
        %v2720 = vpop.f32.mrb[0].mxu0
        %2721 = vmatprep.mubr.f32.mxu0 0.0
        %2722 = vmatmul.mubr.f32.gmra.mrb[0].mxu0 %v2592
        %v2723 = vpop.f32.mrb[0].mxu0
        %v2724 = vadd.f32 %v2562, %v2723
        %v2725 = vpop.f32.mrb[0].mxu0
        %2726 = vmatprep.mubr.f32.mxu0 0.0
        %2727 = vmatmul.mubr.f32.gmra.mrb[0].mxu0 %v2595
        %v2728 = vpop.f32.mrb[0].mxu0
        %v2729 = vadd.f32 %v2562, %v2728
        %v2730 = vpop.f32.mrb[0].mxu0
        %2731 = vmatprep.mubr.f32.mxu0 0.0
        %2732 = vmatmul.mubr.f32.gmra.mrb[0].mxu0 %v2598
        %v2733 = vpop.f32.mrb[0].mxu0
        %v2734 = vadd.f32 %v2562, %v2733
        %v2735 = vpop.f32.mrb[0].mxu0
        %2736 = vmatprep.mubr.f32.mxu0 0.0
        %2737 = vmatmul.mubr.f32.gmra.mrb[0].mxu0 %v2601
        %v2738 = vpop.f32.mrb[0].mxu0
        %v2739 = vadd.f32 %v2562, %v2738
        %v2740 = vpop.f32.mrb[0].mxu0
        %2741 = vmatprep.mubr.f32.mxu0 0.0
        %2742 = vmatmul.mubr.f32.gmra.mrb[0].mxu0 %v2604
        %v2743 = vpop.f32.mrb[0].mxu0
        %v2744 = vadd.f32 %v2562, %v2743
        %v2745 = vpop.f32.mrb[0].mxu0
        %2746 = vmatprep.mubr.f32.mxu0 0.0
        %2747 = vmatmul.mubr.f32.gmra.mrb[0].mxu0 %v2607
        %v2748 = vpop.f32.mrb[0].mxu0
        %v2749 = vadd.f32 %v2562, %v2748
        %v2750 = vpop.f32.mrb[0].mxu0
        %2751 = vmatprep.mubr.f32.mxu0 0.0
        %2752 = vmatmul.mubr.f32.gmra.mrb[0].mxu0 %v2610
        %v2753 = vpop.f32.mrb[0].mxu0
        %v2754 = vadd.f32 %v2562, %v2753
        %v2755 = vpop.f32.mrb[0].mxu0
        %2756 = vdwg.mxu0
        %v2757 = vadd.f32 %v851, %v2679
        %v2758 = vadd.f32 %v856, %v2684
        %v2759 = vadd.f32 %v861, %v2689
        %v2760 = vadd.f32 %v866, %v2694
        %v2761 = vadd.f32 %v871, %v2699
        %v2762 = vadd.f32 %v876, %v2704
        %v2763 = vadd.f32 %v881, %v2709
        %v2764 = vadd.f32 %v886, %v2714
        %v2765 = vadd.f32 %v891, %v2719
        %v2766 = vadd.f32 %v896, %v2724
        %v2767 = vadd.f32 %v901, %v2729
        %v2768 = vadd.f32 %v906, %v2734
        %v2769 = vadd.f32 %v911, %v2739
        %v2770 = vadd.f32 %v916, %v2744
        %v2771 = vadd.f32 %v921, %v2749
        %v2772 = vadd.f32 %v926, %v2754
        %v2773 = vld [vmem:[%s17] sm:$0x1]
        %v2774 = vld [vmem:[%s18] sm:$0x1]
        %v2775 = vsel %vm940, %v2757, 0.0
        %2776 = vadd.xlane.f32.xlu0 %v2775
        %v2777 = vpop.xlane.xlu0 %2776
        %v2778 = vsel %vm940, %v2758, 0.0
        %2779 = vadd.xlane.f32.xlu0 %v2778
        %v2780 = vpop.xlane.xlu0 %2779
        %v2781 = vsel %vm940, %v2759, 0.0
        %2782 = vadd.xlane.f32.xlu0 %v2781
        %v2783 = vpop.xlane.xlu0 %2782
        %v2784 = vsel %vm940, %v2760, 0.0
        %2785 = vadd.xlane.f32.xlu0 %v2784
        %v2786 = vpop.xlane.xlu0 %2785
        %v2787 = vsel %vm940, %v2761, 0.0
        %2788 = vadd.xlane.f32.xlu0 %v2787
        %v2789 = vpop.xlane.xlu0 %2788
        %v2790 = vsel %vm940, %v2762, 0.0
        %2791 = vadd.xlane.f32.xlu0 %v2790
        %v2792 = vpop.xlane.xlu0 %2791
        %v2793 = vsel %vm940, %v2763, 0.0
        %2794 = vadd.xlane.f32.xlu0 %v2793
        %v2795 = vpop.xlane.xlu0 %2794
        %v2796 = vsel %vm940, %v2764, 0.0
        %2797 = vadd.xlane.f32.xlu0 %v2796
        %v2798 = vpop.xlane.xlu0 %2797
        %v2799 = vsel %vm940, %v2765, 0.0
        %2800 = vadd.xlane.f32.xlu0 %v2799
        %v2801 = vpop.xlane.xlu0 %2800
        %v2802 = vsel %vm940, %v2766, 0.0
        %2803 = vadd.xlane.f32.xlu0 %v2802
        %v2804 = vpop.xlane.xlu0 %2803
        %v2805 = vsel %vm940, %v2767, 0.0
        %2806 = vadd.xlane.f32.xlu0 %v2805
        %v2807 = vpop.xlane.xlu0 %2806
        %v2808 = vsel %vm940, %v2768, 0.0
        %2809 = vadd.xlane.f32.xlu0 %v2808
        %v2810 = vpop.xlane.xlu0 %2809
        %v2811 = vsel %vm940, %v2769, 0.0
        %2812 = vadd.xlane.f32.xlu0 %v2811
        %v2813 = vpop.xlane.xlu0 %2812
        %v2814 = vsel %vm940, %v2770, 0.0
        %2815 = vadd.xlane.f32.xlu0 %v2814
        %v2816 = vpop.xlane.xlu0 %2815
        %v2817 = vsel %vm940, %v2771, 0.0
        %2818 = vadd.xlane.f32.xlu0 %v2817
        %v2819 = vpop.xlane.xlu0 %2818
        %v2820 = vsel %vm940, %v2772, 0.0
        %2821 = vadd.xlane.f32.xlu0 %v2820
        %v2822 = vpop.xlane.xlu0 %2821
        %v2823 = vrcp.pop 32.0
        %v2824 = vmul.f32 %v2777, %v2823
        %v2825 = vmul.f32 %v2780, %v2823
        %v2826 = vmul.f32 %v2783, %v2823
        %v2827 = vmul.f32 %v2786, %v2823
        %v2828 = vmul.f32 %v2789, %v2823
        %v2829 = vmul.f32 %v2792, %v2823
        %v2830 = vmul.f32 %v2795, %v2823
        %v2831 = vmul.f32 %v2798, %v2823
        %v2832 = vmul.f32 %v2801, %v2823
        %v2833 = vmul.f32 %v2804, %v2823
        %v2834 = vmul.f32 %v2807, %v2823
        %v2835 = vmul.f32 %v2810, %v2823
        %v2836 = vmul.f32 %v2813, %v2823
        %v2837 = vmul.f32 %v2816, %v2823
        %v2838 = vmul.f32 %v2819, %v2823
        %v2839 = vmul.f32 %v2822, %v2823
        %v2840 = vsub.f32 %v2757, %v2824
        %v2841 = vsub.f32 %v2758, %v2825
        %v2842 = vsub.f32 %v2759, %v2826
        %v2843 = vsub.f32 %v2760, %v2827
        %v2844 = vsub.f32 %v2761, %v2828
        %v2845 = vsub.f32 %v2762, %v2829
        %v2846 = vsub.f32 %v2763, %v2830
        %v2847 = vsub.f32 %v2764, %v2831
        %v2848 = vsub.f32 %v2765, %v2832
        %v2849 = vsub.f32 %v2766, %v2833
        %v2850 = vsub.f32 %v2767, %v2834
        %v2851 = vsub.f32 %v2768, %v2835
        %v2852 = vsub.f32 %v2769, %v2836
        %v2853 = vsub.f32 %v2770, %v2837
        %v2854 = vsub.f32 %v2771, %v2838
        %v2855 = vsub.f32 %v2772, %v2839
        %v2856 = vmul.f32 %v2840, %v2840
        %v2857 = vmul.f32 %v2841, %v2841
        %v2858 = vmul.f32 %v2842, %v2842
        %v2859 = vmul.f32 %v2843, %v2843
        %v2860 = vmul.f32 %v2844, %v2844
        %v2861 = vmul.f32 %v2845, %v2845
        %v2862 = vmul.f32 %v2846, %v2846
        %v2863 = vmul.f32 %v2847, %v2847
        %v2864 = vmul.f32 %v2848, %v2848
        %v2865 = vmul.f32 %v2849, %v2849
        %v2866 = vmul.f32 %v2850, %v2850
        %v2867 = vmul.f32 %v2851, %v2851
        %v2868 = vmul.f32 %v2852, %v2852
        %v2869 = vmul.f32 %v2853, %v2853
        %v2870 = vmul.f32 %v2854, %v2854
        %v2871 = vmul.f32 %v2855, %v2855
        %v2872 = vsel %vm940, %v2856, 0.0
        %2873 = vadd.xlane.f32.xlu0 %v2872
        %v2874 = vpop.xlane.xlu0 %2873
        %v2875 = vsel %vm940, %v2857, 0.0
        %2876 = vadd.xlane.f32.xlu0 %v2875
        %v2877 = vpop.xlane.xlu0 %2876
        %v2878 = vsel %vm940, %v2858, 0.0
        %2879 = vadd.xlane.f32.xlu0 %v2878
        %v2880 = vpop.xlane.xlu0 %2879
        %v2881 = vsel %vm940, %v2859, 0.0
        %2882 = vadd.xlane.f32.xlu0 %v2881
        %v2883 = vpop.xlane.xlu0 %2882
        %v2884 = vsel %vm940, %v2860, 0.0
        %2885 = vadd.xlane.f32.xlu0 %v2884
        %v2886 = vpop.xlane.xlu0 %2885
        %v2887 = vsel %vm940, %v2861, 0.0
        %2888 = vadd.xlane.f32.xlu0 %v2887
        %v2889 = vpop.xlane.xlu0 %2888
        %v2890 = vsel %vm940, %v2862, 0.0
        %2891 = vadd.xlane.f32.xlu0 %v2890
        %v2892 = vpop.xlane.xlu0 %2891
        %v2893 = vsel %vm940, %v2863, 0.0
        %2894 = vadd.xlane.f32.xlu0 %v2893
        %v2895 = vpop.xlane.xlu0 %2894
        %v2896 = vsel %vm940, %v2864, 0.0
        %2897 = vadd.xlane.f32.xlu0 %v2896
        %v2898 = vpop.xlane.xlu0 %2897
        %v2899 = vsel %vm940, %v2865, 0.0
        %2900 = vadd.xlane.f32.xlu0 %v2899
        %v2901 = vpop.xlane.xlu0 %2900
        %v2902 = vsel %vm940, %v2866, 0.0
        %2903 = vadd.xlane.f32.xlu0 %v2902
        %v2904 = vpop.xlane.xlu0 %2903
        %v2905 = vsel %vm940, %v2867, 0.0
        %2906 = vadd.xlane.f32.xlu0 %v2905
        %v2907 = vpop.xlane.xlu0 %2906
        %v2908 = vsel %vm940, %v2868, 0.0
        %2909 = vadd.xlane.f32.xlu0 %v2908
        %v2910 = vpop.xlane.xlu0 %2909
        %v2911 = vsel %vm940, %v2869, 0.0
        %2912 = vadd.xlane.f32.xlu0 %v2911
        %v2913 = vpop.xlane.xlu0 %2912
        %v2914 = vsel %vm940, %v2870, 0.0
        %2915 = vadd.xlane.f32.xlu0 %v2914
        %v2916 = vpop.xlane.xlu0 %2915
        %v2917 = vsel %vm940, %v2871, 0.0
        %2918 = vadd.xlane.f32.xlu0 %v2917
        %v2919 = vpop.xlane.xlu0 %2918
        %v2920 = vmul.f32 %v2874, %v2823
        %v2921 = vmul.f32 %v2877, %v2823
        %v2922 = vmul.f32 %v2880, %v2823
        %v2923 = vmul.f32 %v2883, %v2823
        %v2924 = vmul.f32 %v2886, %v2823
        %v2925 = vmul.f32 %v2889, %v2823
        %v2926 = vmul.f32 %v2892, %v2823
        %v2927 = vmul.f32 %v2895, %v2823
        %v2928 = vmul.f32 %v2898, %v2823
        %v2929 = vmul.f32 %v2901, %v2823
        %v2930 = vmul.f32 %v2904, %v2823
        %v2931 = vmul.f32 %v2907, %v2823
        %v2932 = vmul.f32 %v2910, %v2823
        %v2933 = vmul.f32 %v2913, %v2823
        %v2934 = vmul.f32 %v2916, %v2823
        %v2935 = vmul.f32 %v2919, %v2823
        %v2936 = vadd.f32 %v2920, 1e-05
        %v2937 = vadd.f32 %v2921, 1e-05
        %v2938 = vadd.f32 %v2922, 1e-05
        %v2939 = vadd.f32 %v2923, 1e-05
        %v2940 = vadd.f32 %v2924, 1e-05
        %v2941 = vadd.f32 %v2925, 1e-05
        %v2942 = vadd.f32 %v2926, 1e-05
        %v2943 = vadd.f32 %v2927, 1e-05
        %v2944 = vadd.f32 %v2928, 1e-05
        %v2945 = vadd.f32 %v2929, 1e-05
        %v2946 = vadd.f32 %v2930, 1e-05
        %v2947 = vadd.f32 %v2931, 1e-05
        %v2948 = vadd.f32 %v2932, 1e-05
        %v2949 = vadd.f32 %v2933, 1e-05
        %v2950 = vadd.f32 %v2934, 1e-05
        %v2951 = vadd.f32 %v2935, 1e-05
        %v2952 = vrsqrt.pop %v2936
        %v2953 = vrsqrt.pop %v2937
        %v2954 = vrsqrt.pop %v2938
        %v2955 = vrsqrt.pop %v2939
        %v2956 = vrsqrt.pop %v2940
        %v2957 = vrsqrt.pop %v2941
        %v2958 = vrsqrt.pop %v2942
        %v2959 = vrsqrt.pop %v2943
        %v2960 = vrsqrt.pop %v2944
        %v2961 = vrsqrt.pop %v2945
        %v2962 = vrsqrt.pop %v2946
        %v2963 = vrsqrt.pop %v2947
        %v2964 = vrsqrt.pop %v2948
        %v2965 = vrsqrt.pop %v2949
        %v2966 = vrsqrt.pop %v2950
        %v2967 = vrsqrt.pop %v2951
        %v2968 = vmul.f32 %v2840, %v2952
        %v2969 = vmul.f32 %v2841, %v2953
        %v2970 = vmul.f32 %v2842, %v2954
        %v2971 = vmul.f32 %v2843, %v2955
        %v2972 = vmul.f32 %v2844, %v2956
        %v2973 = vmul.f32 %v2845, %v2957
        %v2974 = vmul.f32 %v2846, %v2958
        %v2975 = vmul.f32 %v2847, %v2959
        %v2976 = vmul.f32 %v2848, %v2960
        %v2977 = vmul.f32 %v2849, %v2961
        %v2978 = vmul.f32 %v2850, %v2962
        %v2979 = vmul.f32 %v2851, %v2963
        %v2980 = vmul.f32 %v2852, %v2964
        %v2981 = vmul.f32 %v2853, %v2965
        %v2982 = vmul.f32 %v2854, %v2966
        %v2983 = vmul.f32 %v2855, %v2967
        %v2985 = vlaneseq
        %v2986 = vshrl.u32 %v2985, 7
        %v2987 = vsub.s32 0, %v2986
        %v2988 = vrot.slane %v2773, %v2987
        %v2990 = vmul.f32 %v2968, %v2988
        %v2991 = vmul.f32 %v2969, %v2988
        %v2992 = vmul.f32 %v2970, %v2988
        %v2993 = vmul.f32 %v2971, %v2988
        %v2994 = vmul.f32 %v2972, %v2988
        %v2995 = vmul.f32 %v2973, %v2988
        %v2996 = vmul.f32 %v2974, %v2988
        %v2997 = vmul.f32 %v2975, %v2988
        %v2998 = vmul.f32 %v2976, %v2988
        %v2999 = vmul.f32 %v2977, %v2988
        %v3000 = vmul.f32 %v2978, %v2988
        %v3001 = vmul.f32 %v2979, %v2988
        %v3002 = vmul.f32 %v2980, %v2988
        %v3003 = vmul.f32 %v2981, %v2988
        %v3004 = vmul.f32 %v2982, %v2988
        %v3005 = vmul.f32 %v2983, %v2988
        %v3007 = vlaneseq
        %v3008 = vshrl.u32 %v3007, 7
        %v3009 = vsub.s32 0, %v3008
        %v3010 = vrot.slane %v2774, %v3009
        %v3012 = vadd.f32 %v2990, %v3010
        %v3013 = vadd.f32 %v2991, %v3010
        %v3014 = vadd.f32 %v2992, %v3010
        %v3015 = vadd.f32 %v2993, %v3010
        %v3016 = vadd.f32 %v2994, %v3010
        %v3017 = vadd.f32 %v2995, %v3010
        %v3018 = vadd.f32 %v2996, %v3010
        %v3019 = vadd.f32 %v2997, %v3010
        %v3020 = vadd.f32 %v2998, %v3010
        %v3021 = vadd.f32 %v2999, %v3010
        %v3022 = vadd.f32 %v3000, %v3010
        %v3023 = vadd.f32 %v3001, %v3010
        %v3024 = vadd.f32 %v3002, %v3010
        %v3025 = vadd.f32 %v3003, %v3010
        %v3026 = vadd.f32 %v3004, %v3010
        %v3027 = vadd.f32 %v3005, %v3010
        %v3028 = vld [vmem:[%s13] sm:$0xff]
        %v3029 = vld [vmem:[%s13 + $0x8] sm:$0xff]
        %v3030 = vld [vmem:[%s13 + $0x10] sm:$0xff]
        %v3031 = vld [vmem:[%s13 + $0x18] sm:$0xff]
        %v3032 = vld [vmem:[%s13 + $0x20] sm:$0xff]
        %v3033 = vld [vmem:[%s13 + $0x28] sm:$0xff]
        %v3034 = vld [vmem:[%s13 + $0x30] sm:$0xff]
        %v3035 = vld [vmem:[%s13 + $0x38] sm:$0xff]
        %v3036 = vld [vmem:[%s14] sm:$0x3]
        %v3038 = vlaneseq
        %v3039 = vshrl.u32 %v3038, 7
        %v3040 = vsub.s32 0, %v3039
        %v3041 = vrot.slane %v3036, %v3040
        %v3042 = vlaneseq
        %v3043 = vshrl.u32 %v3042, 7
        %v3044 = vsub.s32 1, %v3043
        %v3045 = vrot.slane %v3036, %v3044
        %v3049 = vsel %vm940, %v3012, 0
        %v3052 = vsel %vm940, %v3013, 0
        %v3055 = vsel %vm940, %v3014, 0
        %v3058 = vsel %vm940, %v3015, 0
        %v3061 = vsel %vm940, %v3016, 0
        %v3064 = vsel %vm940, %v3017, 0
        %v3067 = vsel %vm940, %v3018, 0
        %v3070 = vsel %vm940, %v3019, 0
        %v3073 = vsel %vm940, %v3020, 0
        %v3076 = vsel %vm940, %v3021, 0
        %v3079 = vsel %vm940, %v3022, 0
        %v3082 = vsel %vm940, %v3023, 0
        %v3085 = vsel %vm940, %v3024, 0
        %v3088 = vsel %vm940, %v3025, 0
        %v3091 = vsel %vm940, %v3026, 0
        %v3094 = vsel %vm940, %v3027, 0
        %3096 = vmatprep.subr.mxu0 %v3029
        %3097 = vmatpush1.msra.mxu0 %v3028
        %3098 = vmatprep.subr.mxu0 %v3031
        %3099 = vmatpush1.msra.mxu0 %v3030
        %3100 = vmatprep.subr.mxu0 %v3033
        %3101 = vmatpush1.msra.mxu0 %v3032
        %3102 = vmatprep.subr.mxu0 %v3035
        %3103 = vmatpush1.msra.mxu0 %v3034
        %3104 = vmatprep.subr.mxu0 0.0
        %3105 = vmatpush1.msra.mxu0 0.0
        %3106 = vmatprep.subr.mxu0 0.0
        %3107 = vmatpush1.msra.mxu0 0.0
        %3108 = vmatprep.subr.mxu0 0.0
        %3109 = vmatpush1.msra.mxu0 0.0
        %3110 = vmatprep.subr.mxu0 0.0
        %3111 = vmatpush1.msra.mxu0 0.0
        %3112 = vmatprep.subr.mxu0 0.0
        %3113 = vmatpush1.msra.mxu0 0.0
        %3114 = vmatprep.subr.mxu0 0.0
        %3115 = vmatpush1.msra.mxu0 0.0
        %3116 = vmatprep.subr.mxu0 0.0
        %3117 = vmatpush1.msra.mxu0 0.0
        %3118 = vmatprep.subr.mxu0 0.0
        %3119 = vmatpush1.msra.mxu0 0.0
        %3120 = vmatprep.subr.mxu0 0.0
        %3121 = vmatpush1.msra.mxu0 0.0
        %3122 = vmatprep.subr.mxu0 0.0
        %3123 = vmatpush1.msra.mxu0 0.0
        %3124 = vmatprep.subr.mxu0 0.0
        %3125 = vmatpush1.msra.mxu0 0.0
        %3126 = vmatprep.subr.mxu0 0.0
        %3127 = vmatpush1.msra.mxu0 0.0
        %3128 = vmatprep.subr.mxu0 0.0
        %3129 = vmatpush1.msra.mxu0 0.0
        %3130 = vmatprep.subr.mxu0 0.0
        %3131 = vmatpush1.msra.mxu0 0.0
        %3132 = vmatprep.subr.mxu0 0.0
        %3133 = vmatpush1.msra.mxu0 0.0
        %3134 = vmatprep.subr.mxu0 0.0
        %3135 = vmatpush1.msra.mxu0 0.0
        %3136 = vmatprep.subr.mxu0 0.0
        %3137 = vmatpush1.msra.mxu0 0.0
        %3138 = vmatprep.subr.mxu0 0.0
        %3139 = vmatpush1.msra.mxu0 0.0
        %3140 = vmatprep.subr.mxu0 0.0
        %3141 = vmatpush1.msra.mxu0 0.0
        %3142 = vmatprep.subr.mxu0 0.0
        %3143 = vmatpush1.msra.mxu0 0.0
        %3144 = vmatprep.subr.mxu0 0.0
        %3145 = vmatpush1.msra.mxu0 0.0
        %3146 = vmatprep.subr.mxu0 0.0
        %3147 = vmatpush1.msra.mxu0 0.0
        %3148 = vmatprep.subr.mxu0 0.0
        %3149 = vmatpush1.msra.mxu0 0.0
        %3150 = vmatprep.subr.mxu0 0.0
        %3151 = vmatpush1.msra.mxu0 0.0
        %3152 = vmatprep.subr.mxu0 0.0
        %3153 = vmatpush1.msra.mxu0 0.0
        %3154 = vmatprep.subr.mxu0 0.0
        %3155 = vmatpush1.msra.mxu0 0.0
        %3156 = vmatprep.subr.mxu0 0.0
        %3157 = vmatpush1.msra.mxu0 0.0
        %3158 = vmatprep.subr.mxu0 0.0
        %3159 = vmatpush1.msra.mxu0 0.0
        %3160 = vmatprep.mubr.f32.mxu0 0.0
        %3161 = vmatmul.mubr.f32.gmra.mrb[0].mxu0 %v3049
        %v3162 = vpop.f32.mrb[0].mxu0
        %v3163 = vadd.f32 %v3041, %v3162
        %v3164 = vpop.f32.mrb[0].mxu0
        %v3165 = vadd.f32 %v3045, %v3164
        %3166 = vmatprep.mubr.f32.mxu0 0.0
        %3167 = vmatmul.mubr.f32.gmra.mrb[0].mxu0 %v3052
        %v3168 = vpop.f32.mrb[0].mxu0
        %v3169 = vadd.f32 %v3041, %v3168
        %v3170 = vpop.f32.mrb[0].mxu0
        %v3171 = vadd.f32 %v3045, %v3170
        %3172 = vmatprep.mubr.f32.mxu0 0.0
        %3173 = vmatmul.mubr.f32.gmra.mrb[0].mxu0 %v3055
        %v3174 = vpop.f32.mrb[0].mxu0
        %v3175 = vadd.f32 %v3041, %v3174
        %v3176 = vpop.f32.mrb[0].mxu0
        %v3177 = vadd.f32 %v3045, %v3176
        %3178 = vmatprep.mubr.f32.mxu0 0.0
        %3179 = vmatmul.mubr.f32.gmra.mrb[0].mxu0 %v3058
        %v3180 = vpop.f32.mrb[0].mxu0
        %v3181 = vadd.f32 %v3041, %v3180
        %v3182 = vpop.f32.mrb[0].mxu0
        %v3183 = vadd.f32 %v3045, %v3182
        %3184 = vmatprep.mubr.f32.mxu0 0.0
        %3185 = vmatmul.mubr.f32.gmra.mrb[0].mxu0 %v3061
        %v3186 = vpop.f32.mrb[0].mxu0
        %v3187 = vadd.f32 %v3041, %v3186
        %v3188 = vpop.f32.mrb[0].mxu0
        %v3189 = vadd.f32 %v3045, %v3188
        %3190 = vmatprep.mubr.f32.mxu0 0.0
        %3191 = vmatmul.mubr.f32.gmra.mrb[0].mxu0 %v3064
        %v3192 = vpop.f32.mrb[0].mxu0
        %v3193 = vadd.f32 %v3041, %v3192
        %v3194 = vpop.f32.mrb[0].mxu0
        %v3195 = vadd.f32 %v3045, %v3194
        %3196 = vmatprep.mubr.f32.mxu0 0.0
        %3197 = vmatmul.mubr.f32.gmra.mrb[0].mxu0 %v3067
        %v3198 = vpop.f32.mrb[0].mxu0
        %v3199 = vadd.f32 %v3041, %v3198
        %v3200 = vpop.f32.mrb[0].mxu0
        %v3201 = vadd.f32 %v3045, %v3200
        %3202 = vmatprep.mubr.f32.mxu0 0.0
        %3203 = vmatmul.mubr.f32.gmra.mrb[0].mxu0 %v3070
        %v3204 = vpop.f32.mrb[0].mxu0
        %v3205 = vadd.f32 %v3041, %v3204
        %v3206 = vpop.f32.mrb[0].mxu0
        %v3207 = vadd.f32 %v3045, %v3206
        %3208 = vmatprep.mubr.f32.mxu0 0.0
        %3209 = vmatmul.mubr.f32.gmra.mrb[0].mxu0 %v3073
        %v3210 = vpop.f32.mrb[0].mxu0
        %v3211 = vadd.f32 %v3041, %v3210
        %v3212 = vpop.f32.mrb[0].mxu0
        %v3213 = vadd.f32 %v3045, %v3212
        %3214 = vmatprep.mubr.f32.mxu0 0.0
        %3215 = vmatmul.mubr.f32.gmra.mrb[0].mxu0 %v3076
        %v3216 = vpop.f32.mrb[0].mxu0
        %v3217 = vadd.f32 %v3041, %v3216
        %v3218 = vpop.f32.mrb[0].mxu0
        %v3219 = vadd.f32 %v3045, %v3218
        %3220 = vmatprep.mubr.f32.mxu0 0.0
        %3221 = vmatmul.mubr.f32.gmra.mrb[0].mxu0 %v3079
        %v3222 = vpop.f32.mrb[0].mxu0
        %v3223 = vadd.f32 %v3041, %v3222
        %v3224 = vpop.f32.mrb[0].mxu0
        %v3225 = vadd.f32 %v3045, %v3224
        %3226 = vmatprep.mubr.f32.mxu0 0.0
        %3227 = vmatmul.mubr.f32.gmra.mrb[0].mxu0 %v3082
        %v3228 = vpop.f32.mrb[0].mxu0
        %v3229 = vadd.f32 %v3041, %v3228
        %v3230 = vpop.f32.mrb[0].mxu0
        %v3231 = vadd.f32 %v3045, %v3230
        %3232 = vmatprep.mubr.f32.mxu0 0.0
        %3233 = vmatmul.mubr.f32.gmra.mrb[0].mxu0 %v3085
        %v3234 = vpop.f32.mrb[0].mxu0
        %v3235 = vadd.f32 %v3041, %v3234
        %v3236 = vpop.f32.mrb[0].mxu0
        %v3237 = vadd.f32 %v3045, %v3236
        %3238 = vmatprep.mubr.f32.mxu0 0.0
        %3239 = vmatmul.mubr.f32.gmra.mrb[0].mxu0 %v3088
        %v3240 = vpop.f32.mrb[0].mxu0
        %v3241 = vadd.f32 %v3041, %v3240
        %v3242 = vpop.f32.mrb[0].mxu0
        %v3243 = vadd.f32 %v3045, %v3242
        %3244 = vmatprep.mubr.f32.mxu0 0.0
        %3245 = vmatmul.mubr.f32.gmra.mrb[0].mxu0 %v3091
        %v3246 = vpop.f32.mrb[0].mxu0
        %v3247 = vadd.f32 %v3041, %v3246
        %v3248 = vpop.f32.mrb[0].mxu0
        %v3249 = vadd.f32 %v3045, %v3248
        %3250 = vmatprep.mubr.f32.mxu0 0.0
        %3251 = vmatmul.mubr.f32.gmra.mrb[0].mxu0 %v3094
        %v3252 = vpop.f32.mrb[0].mxu0
        %v3253 = vadd.f32 %v3041, %v3252
        %v3254 = vpop.f32.mrb[0].mxu0
        %v3255 = vadd.f32 %v3045, %v3254
        %3256 = vdwg.mxu0
        %v3257 = vmax.f32 %v3163, 0.0
        %v3258 = vmax.f32 %v3165, 0.0
        %v3259 = vmax.f32 %v3169, 0.0
        %v3260 = vmax.f32 %v3171, 0.0
        %v3261 = vmax.f32 %v3175, 0.0
        %v3262 = vmax.f32 %v3177, 0.0
        %v3263 = vmax.f32 %v3181, 0.0
        %v3264 = vmax.f32 %v3183, 0.0
        %v3265 = vmax.f32 %v3187, 0.0
        %v3266 = vmax.f32 %v3189, 0.0
        %v3267 = vmax.f32 %v3193, 0.0
        %v3268 = vmax.f32 %v3195, 0.0
        %v3269 = vmax.f32 %v3199, 0.0
        %v3270 = vmax.f32 %v3201, 0.0
        %v3271 = vmax.f32 %v3205, 0.0
        %v3272 = vmax.f32 %v3207, 0.0
        %v3273 = vmax.f32 %v3211, 0.0
        %v3274 = vmax.f32 %v3213, 0.0
        %v3275 = vmax.f32 %v3217, 0.0
        %v3276 = vmax.f32 %v3219, 0.0
        %v3277 = vmax.f32 %v3223, 0.0
        %v3278 = vmax.f32 %v3225, 0.0
        %v3279 = vmax.f32 %v3229, 0.0
        %v3280 = vmax.f32 %v3231, 0.0
        %v3281 = vmax.f32 %v3235, 0.0
        %v3282 = vmax.f32 %v3237, 0.0
        %v3283 = vmax.f32 %v3241, 0.0
        %v3284 = vmax.f32 %v3243, 0.0
        %v3285 = vmax.f32 %v3247, 0.0
        %v3286 = vmax.f32 %v3249, 0.0
        %v3287 = vmax.f32 %v3253, 0.0
        %v3288 = vmax.f32 %v3255, 0.0
        %v3289 = vld [vmem:[%s15] sm:$0xff]
        %v3290 = vld [vmem:[%s15 + $0x8] sm:$0xff]
        %v3291 = vld [vmem:[%s15 + $0x10] sm:$0xff]
        %v3292 = vld [vmem:[%s15 + $0x18] sm:$0xff]
        %v3293 = vld [vmem:[%s15 + $0x20] sm:$0xff]
        %v3294 = vld [vmem:[%s15 + $0x28] sm:$0xff]
        %v3295 = vld [vmem:[%s15 + $0x30] sm:$0xff]
        %v3296 = vld [vmem:[%s15 + $0x38] sm:$0xff]
        %v3297 = vld [vmem:[%s15 + $0x40] sm:$0xff]
        %v3298 = vld [vmem:[%s15 + $0x48] sm:$0xff]
        %v3299 = vld [vmem:[%s15 + $0x50] sm:$0xff]
        %v3300 = vld [vmem:[%s15 + $0x58] sm:$0xff]
        %v3301 = vld [vmem:[%s15 + $0x60] sm:$0xff]
        %v3302 = vld [vmem:[%s15 + $0x68] sm:$0xff]
        %v3303 = vld [vmem:[%s15 + $0x70] sm:$0xff]
        %v3304 = vld [vmem:[%s15 + $0x78] sm:$0xff]
        %v3305 = vld [vmem:[%s15 + $0x80] sm:$0xff]
        %v3306 = vld [vmem:[%s15 + $0x88] sm:$0xff]
        %v3307 = vld [vmem:[%s15 + $0x90] sm:$0xff]
        %v3308 = vld [vmem:[%s15 + $0x98] sm:$0xff]
        %v3309 = vld [vmem:[%s15 + $0xa0] sm:$0xff]
        %v3310 = vld [vmem:[%s15 + $0xa8] sm:$0xff]
        %v3311 = vld [vmem:[%s15 + $0xb0] sm:$0xff]
        %v3312 = vld [vmem:[%s15 + $0xb8] sm:$0xff]
        %v3313 = vld [vmem:[%s15 + $0xc0] sm:$0xff]
        %v3314 = vld [vmem:[%s15 + $0xc8] sm:$0xff]
        %v3315 = vld [vmem:[%s15 + $0xd0] sm:$0xff]
        %v3316 = vld [vmem:[%s15 + $0xd8] sm:$0xff]
        %v3317 = vld [vmem:[%s15 + $0xe0] sm:$0xff]
        %v3318 = vld [vmem:[%s15 + $0xe8] sm:$0xff]
        %v3319 = vld [vmem:[%s15 + $0xf0] sm:$0xff]
        %v3320 = vld [vmem:[%s15 + $0xf8] sm:$0xff]
        %v3321 = vld [vmem:[%s16] sm:$0x1]
        %v3323 = vlaneseq
        %v3324 = vshrl.u32 %v3323, 7
        %v3325 = vsub.s32 0, %v3324
        %v3326 = vrot.slane %v3321, %v3325
        %3328 = vmatprep.subr.mxu0 0.0
        %3329 = vmatpush1.msra.mxu0 %v3289
        %3330 = vmatprep.subr.mxu0 0.0
        %3331 = vmatpush1.msra.mxu0 %v3290
        %3332 = vmatprep.subr.mxu0 0.0
        %3333 = vmatpush1.msra.mxu0 %v3291
        %3334 = vmatprep.subr.mxu0 0.0
        %3335 = vmatpush1.msra.mxu0 %v3292
        %3336 = vmatprep.subr.mxu0 0.0
        %3337 = vmatpush1.msra.mxu0 %v3293
        %3338 = vmatprep.subr.mxu0 0.0
        %3339 = vmatpush1.msra.mxu0 %v3294
        %3340 = vmatprep.subr.mxu0 0.0
        %3341 = vmatpush1.msra.mxu0 %v3295
        %3342 = vmatprep.subr.mxu0 0.0
        %3343 = vmatpush1.msra.mxu0 %v3296
        %3344 = vmatprep.subr.mxu0 0.0
        %3345 = vmatpush1.msra.mxu0 %v3297
        %3346 = vmatprep.subr.mxu0 0.0
        %3347 = vmatpush1.msra.mxu0 %v3298
        %3348 = vmatprep.subr.mxu0 0.0
        %3349 = vmatpush1.msra.mxu0 %v3299
        %3350 = vmatprep.subr.mxu0 0.0
        %3351 = vmatpush1.msra.mxu0 %v3300
        %3352 = vmatprep.subr.mxu0 0.0
        %3353 = vmatpush1.msra.mxu0 %v3301
        %3354 = vmatprep.subr.mxu0 0.0
        %3355 = vmatpush1.msra.mxu0 %v3302
        %3356 = vmatprep.subr.mxu0 0.0
        %3357 = vmatpush1.msra.mxu0 %v3303
        %3358 = vmatprep.subr.mxu0 0.0
        %3359 = vmatpush1.msra.mxu0 %v3304
        %3360 = vmatprep.subr.mxu0 0.0
        %3361 = vmatpush1.msra.mxu0 %v3305
        %3362 = vmatprep.subr.mxu0 0.0
        %3363 = vmatpush1.msra.mxu0 %v3306
        %3364 = vmatprep.subr.mxu0 0.0
        %3365 = vmatpush1.msra.mxu0 %v3307
        %3366 = vmatprep.subr.mxu0 0.0
        %3367 = vmatpush1.msra.mxu0 %v3308
        %3368 = vmatprep.subr.mxu0 0.0
        %3369 = vmatpush1.msra.mxu0 %v3309
        %3370 = vmatprep.subr.mxu0 0.0
        %3371 = vmatpush1.msra.mxu0 %v3310
        %3372 = vmatprep.subr.mxu0 0.0
        %3373 = vmatpush1.msra.mxu0 %v3311
        %3374 = vmatprep.subr.mxu0 0.0
        %3375 = vmatpush1.msra.mxu0 %v3312
        %3376 = vmatprep.subr.mxu0 0.0
        %3377 = vmatpush1.msra.mxu0 %v3313
        %3378 = vmatprep.subr.mxu0 0.0
        %3379 = vmatpush1.msra.mxu0 %v3314
        %3380 = vmatprep.subr.mxu0 0.0
        %3381 = vmatpush1.msra.mxu0 %v3315
        %3382 = vmatprep.subr.mxu0 0.0
        %3383 = vmatpush1.msra.mxu0 %v3316
        %3384 = vmatprep.subr.mxu0 0.0
        %3385 = vmatpush1.msra.mxu0 %v3317
        %3386 = vmatprep.subr.mxu0 0.0
        %3387 = vmatpush1.msra.mxu0 %v3318
        %3388 = vmatprep.subr.mxu0 0.0
        %3389 = vmatpush1.msra.mxu0 %v3319
        %3390 = vmatprep.subr.mxu0 0.0
        %3391 = vmatpush1.msra.mxu0 %v3320
        %3392 = vmatprep.mubr.f32.mxu0 %v3258
        %3393 = vmatmul.mubr.f32.gmra.mrb[0].mxu0 %v3257
        %v3394 = vpop.f32.mrb[0].mxu0
        %v3395 = vadd.f32 %v3326, %v3394
        %v3396 = vpop.f32.mrb[0].mxu0
        %3397 = vmatprep.mubr.f32.mxu0 %v3260
        %3398 = vmatmul.mubr.f32.gmra.mrb[0].mxu0 %v3259
        %v3399 = vpop.f32.mrb[0].mxu0
        %v3400 = vadd.f32 %v3326, %v3399
        %v3401 = vpop.f32.mrb[0].mxu0
        %3402 = vmatprep.mubr.f32.mxu0 %v3262
        %3403 = vmatmul.mubr.f32.gmra.mrb[0].mxu0 %v3261
        %v3404 = vpop.f32.mrb[0].mxu0
        %v3405 = vadd.f32 %v3326, %v3404
        %v3406 = vpop.f32.mrb[0].mxu0
        %3407 = vmatprep.mubr.f32.mxu0 %v3264
        %3408 = vmatmul.mubr.f32.gmra.mrb[0].mxu0 %v3263
        %v3409 = vpop.f32.mrb[0].mxu0
        %v3410 = vadd.f32 %v3326, %v3409
        %v3411 = vpop.f32.mrb[0].mxu0
        %3412 = vmatprep.mubr.f32.mxu0 %v3266
        %3413 = vmatmul.mubr.f32.gmra.mrb[0].mxu0 %v3265
        %v3414 = vpop.f32.mrb[0].mxu0
        %v3415 = vadd.f32 %v3326, %v3414
        %v3416 = vpop.f32.mrb[0].mxu0
        %3417 = vmatprep.mubr.f32.mxu0 %v3268
        %3418 = vmatmul.mubr.f32.gmra.mrb[0].mxu0 %v3267
        %v3419 = vpop.f32.mrb[0].mxu0
        %v3420 = vadd.f32 %v3326, %v3419
        %v3421 = vpop.f32.mrb[0].mxu0
        %3422 = vmatprep.mubr.f32.mxu0 %v3270
        %3423 = vmatmul.mubr.f32.gmra.mrb[0].mxu0 %v3269
        %v3424 = vpop.f32.mrb[0].mxu0
        %v3425 = vadd.f32 %v3326, %v3424
        %v3426 = vpop.f32.mrb[0].mxu0
        %3427 = vmatprep.mubr.f32.mxu0 %v3272
        %3428 = vmatmul.mubr.f32.gmra.mrb[0].mxu0 %v3271
        %v3429 = vpop.f32.mrb[0].mxu0
        %v3430 = vadd.f32 %v3326, %v3429
        %v3431 = vpop.f32.mrb[0].mxu0
        %3432 = vmatprep.mubr.f32.mxu0 %v3274
        %3433 = vmatmul.mubr.f32.gmra.mrb[0].mxu0 %v3273
        %v3434 = vpop.f32.mrb[0].mxu0
        %v3435 = vadd.f32 %v3326, %v3434
        %v3436 = vpop.f32.mrb[0].mxu0
        %3437 = vmatprep.mubr.f32.mxu0 %v3276
        %3438 = vmatmul.mubr.f32.gmra.mrb[0].mxu0 %v3275
        %v3439 = vpop.f32.mrb[0].mxu0
        %v3440 = vadd.f32 %v3326, %v3439
        %v3441 = vpop.f32.mrb[0].mxu0
        %3442 = vmatprep.mubr.f32.mxu0 %v3278
        %3443 = vmatmul.mubr.f32.gmra.mrb[0].mxu0 %v3277
        %v3444 = vpop.f32.mrb[0].mxu0
        %v3445 = vadd.f32 %v3326, %v3444
        %v3446 = vpop.f32.mrb[0].mxu0
        %3447 = vmatprep.mubr.f32.mxu0 %v3280
        %3448 = vmatmul.mubr.f32.gmra.mrb[0].mxu0 %v3279
        %v3449 = vpop.f32.mrb[0].mxu0
        %v3450 = vadd.f32 %v3326, %v3449
        %v3451 = vpop.f32.mrb[0].mxu0
        %3452 = vmatprep.mubr.f32.mxu0 %v3282
        %3453 = vmatmul.mubr.f32.gmra.mrb[0].mxu0 %v3281
        %v3454 = vpop.f32.mrb[0].mxu0
        %v3455 = vadd.f32 %v3326, %v3454
        %v3456 = vpop.f32.mrb[0].mxu0
        %3457 = vmatprep.mubr.f32.mxu0 %v3284
        %3458 = vmatmul.mubr.f32.gmra.mrb[0].mxu0 %v3283
        %v3459 = vpop.f32.mrb[0].mxu0
        %v3460 = vadd.f32 %v3326, %v3459
        %v3461 = vpop.f32.mrb[0].mxu0
        %3462 = vmatprep.mubr.f32.mxu0 %v3286
        %3463 = vmatmul.mubr.f32.gmra.mrb[0].mxu0 %v3285
        %v3464 = vpop.f32.mrb[0].mxu0
        %v3465 = vadd.f32 %v3326, %v3464
        %v3466 = vpop.f32.mrb[0].mxu0
        %3467 = vmatprep.mubr.f32.mxu0 %v3288
        %3468 = vmatmul.mubr.f32.gmra.mrb[0].mxu0 %v3287
        %v3469 = vpop.f32.mrb[0].mxu0
        %v3470 = vadd.f32 %v3326, %v3469
        %v3471 = vpop.f32.mrb[0].mxu0
        %3472 = vdwg.mxu0
        %v3473 = vadd.f32 %v3012, %v3395
        %v3474 = vadd.f32 %v3013, %v3400
        %v3475 = vadd.f32 %v3014, %v3405
        %v3476 = vadd.f32 %v3015, %v3410
        %v3477 = vadd.f32 %v3016, %v3415
        %v3478 = vadd.f32 %v3017, %v3420
        %v3479 = vadd.f32 %v3018, %v3425
        %v3480 = vadd.f32 %v3019, %v3430
        %v3481 = vadd.f32 %v3020, %v3435
        %v3482 = vadd.f32 %v3021, %v3440
        %v3483 = vadd.f32 %v3022, %v3445
        %v3484 = vadd.f32 %v3023, %v3450
        %v3485 = vadd.f32 %v3024, %v3455
        %v3486 = vadd.f32 %v3025, %v3460
        %v3487 = vadd.f32 %v3026, %v3465
        %v3488 = vadd.f32 %v3027, %v3470
        %v3489 = vld [vmem:[%s19] sm:$0x1]
        %v3490 = vld [vmem:[%s20] sm:$0x1]
        %v3491 = vsel %vm940, %v3473, 0.0
        %3492 = vadd.xlane.f32.xlu0 %v3491
        %v3493 = vpop.xlane.xlu0 %3492
        %v3494 = vsel %vm940, %v3474, 0.0
        %3495 = vadd.xlane.f32.xlu0 %v3494
        %v3496 = vpop.xlane.xlu0 %3495
        %v3497 = vsel %vm940, %v3475, 0.0
        %3498 = vadd.xlane.f32.xlu0 %v3497
        %v3499 = vpop.xlane.xlu0 %3498
        %v3500 = vsel %vm940, %v3476, 0.0
        %3501 = vadd.xlane.f32.xlu0 %v3500
        %v3502 = vpop.xlane.xlu0 %3501
        %v3503 = vsel %vm940, %v3477, 0.0
        %3504 = vadd.xlane.f32.xlu0 %v3503
        %v3505 = vpop.xlane.xlu0 %3504
        %v3506 = vsel %vm940, %v3478, 0.0
        %3507 = vadd.xlane.f32.xlu0 %v3506
        %v3508 = vpop.xlane.xlu0 %3507
        %v3509 = vsel %vm940, %v3479, 0.0
        %3510 = vadd.xlane.f32.xlu0 %v3509
        %v3511 = vpop.xlane.xlu0 %3510
        %v3512 = vsel %vm940, %v3480, 0.0
        %3513 = vadd.xlane.f32.xlu0 %v3512
        %v3514 = vpop.xlane.xlu0 %3513
        %v3515 = vsel %vm940, %v3481, 0.0
        %3516 = vadd.xlane.f32.xlu0 %v3515
        %v3517 = vpop.xlane.xlu0 %3516
        %v3518 = vsel %vm940, %v3482, 0.0
        %3519 = vadd.xlane.f32.xlu0 %v3518
        %v3520 = vpop.xlane.xlu0 %3519
        %v3521 = vsel %vm940, %v3483, 0.0
        %3522 = vadd.xlane.f32.xlu0 %v3521
        %v3523 = vpop.xlane.xlu0 %3522
        %v3524 = vsel %vm940, %v3484, 0.0
        %3525 = vadd.xlane.f32.xlu0 %v3524
        %v3526 = vpop.xlane.xlu0 %3525
        %v3527 = vsel %vm940, %v3485, 0.0
        %3528 = vadd.xlane.f32.xlu0 %v3527
        %v3529 = vpop.xlane.xlu0 %3528
        %v3530 = vsel %vm940, %v3486, 0.0
        %3531 = vadd.xlane.f32.xlu0 %v3530
        %v3532 = vpop.xlane.xlu0 %3531
        %v3533 = vsel %vm940, %v3487, 0.0
        %3534 = vadd.xlane.f32.xlu0 %v3533
        %v3535 = vpop.xlane.xlu0 %3534
        %v3536 = vsel %vm940, %v3488, 0.0
        %3537 = vadd.xlane.f32.xlu0 %v3536
        %v3538 = vpop.xlane.xlu0 %3537
        %v3539 = vmul.f32 %v3493, %v2823
        %v3540 = vmul.f32 %v3496, %v2823
        %v3541 = vmul.f32 %v3499, %v2823
        %v3542 = vmul.f32 %v3502, %v2823
        %v3543 = vmul.f32 %v3505, %v2823
        %v3544 = vmul.f32 %v3508, %v2823
        %v3545 = vmul.f32 %v3511, %v2823
        %v3546 = vmul.f32 %v3514, %v2823
        %v3547 = vmul.f32 %v3517, %v2823
        %v3548 = vmul.f32 %v3520, %v2823
        %v3549 = vmul.f32 %v3523, %v2823
        %v3550 = vmul.f32 %v3526, %v2823
        %v3551 = vmul.f32 %v3529, %v2823
        %v3552 = vmul.f32 %v3532, %v2823
        %v3553 = vmul.f32 %v3535, %v2823
        %v3554 = vmul.f32 %v3538, %v2823
        %v3555 = vsub.f32 %v3473, %v3539
        %v3556 = vsub.f32 %v3474, %v3540
        %v3557 = vsub.f32 %v3475, %v3541
        %v3558 = vsub.f32 %v3476, %v3542
        %v3559 = vsub.f32 %v3477, %v3543
        %v3560 = vsub.f32 %v3478, %v3544
        %v3561 = vsub.f32 %v3479, %v3545
        %v3562 = vsub.f32 %v3480, %v3546
        %v3563 = vsub.f32 %v3481, %v3547
        %v3564 = vsub.f32 %v3482, %v3548
        %v3565 = vsub.f32 %v3483, %v3549
        %v3566 = vsub.f32 %v3484, %v3550
        %v3567 = vsub.f32 %v3485, %v3551
        %v3568 = vsub.f32 %v3486, %v3552
        %v3569 = vsub.f32 %v3487, %v3553
        %v3570 = vsub.f32 %v3488, %v3554
        %v3571 = vmul.f32 %v3555, %v3555
        %v3572 = vmul.f32 %v3556, %v3556
        %v3573 = vmul.f32 %v3557, %v3557
        %v3574 = vmul.f32 %v3558, %v3558
        %v3575 = vmul.f32 %v3559, %v3559
        %v3576 = vmul.f32 %v3560, %v3560
        %v3577 = vmul.f32 %v3561, %v3561
        %v3578 = vmul.f32 %v3562, %v3562
        %v3579 = vmul.f32 %v3563, %v3563
        %v3580 = vmul.f32 %v3564, %v3564
        %v3581 = vmul.f32 %v3565, %v3565
        %v3582 = vmul.f32 %v3566, %v3566
        %v3583 = vmul.f32 %v3567, %v3567
        %v3584 = vmul.f32 %v3568, %v3568
        %v3585 = vmul.f32 %v3569, %v3569
        %v3586 = vmul.f32 %v3570, %v3570
        %v3587 = vsel %vm940, %v3571, 0.0
        %3588 = vadd.xlane.f32.xlu0 %v3587
        %v3589 = vpop.xlane.xlu0 %3588
        %v3590 = vsel %vm940, %v3572, 0.0
        %3591 = vadd.xlane.f32.xlu0 %v3590
        %v3592 = vpop.xlane.xlu0 %3591
        %v3593 = vsel %vm940, %v3573, 0.0
        %3594 = vadd.xlane.f32.xlu0 %v3593
        %v3595 = vpop.xlane.xlu0 %3594
        %v3596 = vsel %vm940, %v3574, 0.0
        %3597 = vadd.xlane.f32.xlu0 %v3596
        %v3598 = vpop.xlane.xlu0 %3597
        %v3599 = vsel %vm940, %v3575, 0.0
        %3600 = vadd.xlane.f32.xlu0 %v3599
        %v3601 = vpop.xlane.xlu0 %3600
        %v3602 = vsel %vm940, %v3576, 0.0
        %3603 = vadd.xlane.f32.xlu0 %v3602
        %v3604 = vpop.xlane.xlu0 %3603
        %v3605 = vsel %vm940, %v3577, 0.0
        %3606 = vadd.xlane.f32.xlu0 %v3605
        %v3607 = vpop.xlane.xlu0 %3606
        %v3608 = vsel %vm940, %v3578, 0.0
        %3609 = vadd.xlane.f32.xlu0 %v3608
        %v3610 = vpop.xlane.xlu0 %3609
        %v3611 = vsel %vm940, %v3579, 0.0
        %3612 = vadd.xlane.f32.xlu0 %v3611
        %v3613 = vpop.xlane.xlu0 %3612
        %v3614 = vsel %vm940, %v3580, 0.0
        %3615 = vadd.xlane.f32.xlu0 %v3614
        %v3616 = vpop.xlane.xlu0 %3615
        %v3617 = vsel %vm940, %v3581, 0.0
        %3618 = vadd.xlane.f32.xlu0 %v3617
        %v3619 = vpop.xlane.xlu0 %3618
        %v3620 = vsel %vm940, %v3582, 0.0
        %3621 = vadd.xlane.f32.xlu0 %v3620
        %v3622 = vpop.xlane.xlu0 %3621
        %v3623 = vsel %vm940, %v3583, 0.0
        %3624 = vadd.xlane.f32.xlu0 %v3623
        %v3625 = vpop.xlane.xlu0 %3624
        %v3626 = vsel %vm940, %v3584, 0.0
        %3627 = vadd.xlane.f32.xlu0 %v3626
        %v3628 = vpop.xlane.xlu0 %3627
        %v3629 = vsel %vm940, %v3585, 0.0
        %3630 = vadd.xlane.f32.xlu0 %v3629
        %v3631 = vpop.xlane.xlu0 %3630
        %v3632 = vsel %vm940, %v3586, 0.0
        %3633 = vadd.xlane.f32.xlu0 %v3632
        %v3634 = vpop.xlane.xlu0 %3633
        %v3635 = vmul.f32 %v3589, %v2823
        %v3636 = vmul.f32 %v3592, %v2823
        %v3637 = vmul.f32 %v3595, %v2823
        %v3638 = vmul.f32 %v3598, %v2823
        %v3639 = vmul.f32 %v3601, %v2823
        %v3640 = vmul.f32 %v3604, %v2823
        %v3641 = vmul.f32 %v3607, %v2823
        %v3642 = vmul.f32 %v3610, %v2823
        %v3643 = vmul.f32 %v3613, %v2823
        %v3644 = vmul.f32 %v3616, %v2823
        %v3645 = vmul.f32 %v3619, %v2823
        %v3646 = vmul.f32 %v3622, %v2823
        %v3647 = vmul.f32 %v3625, %v2823
        %v3648 = vmul.f32 %v3628, %v2823
        %v3649 = vmul.f32 %v3631, %v2823
        %v3650 = vmul.f32 %v3634, %v2823
        %v3651 = vadd.f32 %v3635, 1e-05
        %v3652 = vadd.f32 %v3636, 1e-05
        %v3653 = vadd.f32 %v3637, 1e-05
        %v3654 = vadd.f32 %v3638, 1e-05
        %v3655 = vadd.f32 %v3639, 1e-05
        %v3656 = vadd.f32 %v3640, 1e-05
        %v3657 = vadd.f32 %v3641, 1e-05
        %v3658 = vadd.f32 %v3642, 1e-05
        %v3659 = vadd.f32 %v3643, 1e-05
        %v3660 = vadd.f32 %v3644, 1e-05
        %v3661 = vadd.f32 %v3645, 1e-05
        %v3662 = vadd.f32 %v3646, 1e-05
        %v3663 = vadd.f32 %v3647, 1e-05
        %v3664 = vadd.f32 %v3648, 1e-05
        %v3665 = vadd.f32 %v3649, 1e-05
        %v3666 = vadd.f32 %v3650, 1e-05
        %v3667 = vrsqrt.pop %v3651
        %v3668 = vrsqrt.pop %v3652
        %v3669 = vrsqrt.pop %v3653
        %v3670 = vrsqrt.pop %v3654
        %v3671 = vrsqrt.pop %v3655
        %v3672 = vrsqrt.pop %v3656
        %v3673 = vrsqrt.pop %v3657
        %v3674 = vrsqrt.pop %v3658
        %v3675 = vrsqrt.pop %v3659
        %v3676 = vrsqrt.pop %v3660
        %v3677 = vrsqrt.pop %v3661
        %v3678 = vrsqrt.pop %v3662
        %v3679 = vrsqrt.pop %v3663
        %v3680 = vrsqrt.pop %v3664
        %v3681 = vrsqrt.pop %v3665
        %v3682 = vrsqrt.pop %v3666
        %v3683 = vmul.f32 %v3555, %v3667
        %v3684 = vmul.f32 %v3556, %v3668
        %v3685 = vmul.f32 %v3557, %v3669
        %v3686 = vmul.f32 %v3558, %v3670
        %v3687 = vmul.f32 %v3559, %v3671
        %v3688 = vmul.f32 %v3560, %v3672
        %v3689 = vmul.f32 %v3561, %v3673
        %v3690 = vmul.f32 %v3562, %v3674
        %v3691 = vmul.f32 %v3563, %v3675
        %v3692 = vmul.f32 %v3564, %v3676
        %v3693 = vmul.f32 %v3565, %v3677
        %v3694 = vmul.f32 %v3566, %v3678
        %v3695 = vmul.f32 %v3567, %v3679
        %v3696 = vmul.f32 %v3568, %v3680
        %v3697 = vmul.f32 %v3569, %v3681
        %v3698 = vmul.f32 %v3570, %v3682
        %v3700 = vlaneseq
        %v3701 = vshrl.u32 %v3700, 7
        %v3702 = vsub.s32 0, %v3701
        %v3703 = vrot.slane %v3489, %v3702
        %v3705 = vmul.f32 %v3683, %v3703
        %v3706 = vmul.f32 %v3684, %v3703
        %v3707 = vmul.f32 %v3685, %v3703
        %v3708 = vmul.f32 %v3686, %v3703
        %v3709 = vmul.f32 %v3687, %v3703
        %v3710 = vmul.f32 %v3688, %v3703
        %v3711 = vmul.f32 %v3689, %v3703
        %v3712 = vmul.f32 %v3690, %v3703
        %v3713 = vmul.f32 %v3691, %v3703
        %v3714 = vmul.f32 %v3692, %v3703
        %v3715 = vmul.f32 %v3693, %v3703
        %v3716 = vmul.f32 %v3694, %v3703
        %v3717 = vmul.f32 %v3695, %v3703
        %v3718 = vmul.f32 %v3696, %v3703
        %v3719 = vmul.f32 %v3697, %v3703
        %v3720 = vmul.f32 %v3698, %v3703
        %v3722 = vlaneseq
        %v3723 = vshrl.u32 %v3722, 7
        %v3724 = vsub.s32 0, %v3723
        %v3725 = vrot.slane %v3490, %v3724
        %v3727 = vadd.f32 %v3705, %v3725
        %v3728 = vadd.f32 %v3706, %v3725
        %v3729 = vadd.f32 %v3707, %v3725
        %v3730 = vadd.f32 %v3708, %v3725
        %v3731 = vadd.f32 %v3709, %v3725
        %v3732 = vadd.f32 %v3710, %v3725
        %v3733 = vadd.f32 %v3711, %v3725
        %v3734 = vadd.f32 %v3712, %v3725
        %v3735 = vadd.f32 %v3713, %v3725
        %v3736 = vadd.f32 %v3714, %v3725
        %v3737 = vadd.f32 %v3715, %v3725
        %v3738 = vadd.f32 %v3716, %v3725
        %v3739 = vadd.f32 %v3717, %v3725
        %v3740 = vadd.f32 %v3718, %v3725
        %v3741 = vadd.f32 %v3719, %v3725
        %v3742 = vadd.f32 %v3720, %v3725
        %s3743 = scalar_lea.vmem %s5, 32
        %v3744 = vld [vmem:[%s3743] sm:$0xff]
        %v3745 = vld [vmem:[%s3743 + $0x8] sm:$0xff]
        %v3746 = vld [vmem:[%s3743 + $0x10] sm:$0xff]
        %v3747 = vld [vmem:[%s3743 + $0x18] sm:$0xff]
        %s3748 = scalar_lea.vmem %s8, 1
        %v3749 = vld [vmem:[%s3748] sm:$0x1]
        %v3751 = vlaneseq
        %v3752 = vshrl.u32 %v3751, 7
        %v3753 = vsub.s32 0, %v3752
        %v3754 = vrot.slane %v3749, %v3753
        %v3757 = vsel %vm940, %v3727, 0
        %v3760 = vsel %vm940, %v3728, 0
        %v3763 = vsel %vm940, %v3729, 0
        %v3766 = vsel %vm940, %v3730, 0
        %v3769 = vsel %vm940, %v3731, 0
        %v3772 = vsel %vm940, %v3732, 0
        %v3775 = vsel %vm940, %v3733, 0
        %v3778 = vsel %vm940, %v3734, 0
        %v3781 = vsel %vm940, %v3735, 0
        %v3784 = vsel %vm940, %v3736, 0
        %v3787 = vsel %vm940, %v3737, 0
        %v3790 = vsel %vm940, %v3738, 0
        %v3793 = vsel %vm940, %v3739, 0
        %v3796 = vsel %vm940, %v3740, 0
        %v3799 = vsel %vm940, %v3741, 0
        %v3802 = vsel %vm940, %v3742, 0
        %3804 = vmatprep.subr.mxu0 0.0
        %3805 = vmatpush1.msra.mxu0 %v3744
        %3806 = vmatprep.subr.mxu0 0.0
        %3807 = vmatpush1.msra.mxu0 %v3745
        %3808 = vmatprep.subr.mxu0 0.0
        %3809 = vmatpush1.msra.mxu0 %v3746
        %3810 = vmatprep.subr.mxu0 0.0
        %3811 = vmatpush1.msra.mxu0 %v3747
        %3812 = vmatprep.subr.mxu0 0.0
        %3813 = vmatpush1.msra.mxu0 0.0
        %3814 = vmatprep.subr.mxu0 0.0
        %3815 = vmatpush1.msra.mxu0 0.0
        %3816 = vmatprep.subr.mxu0 0.0
        %3817 = vmatpush1.msra.mxu0 0.0
        %3818 = vmatprep.subr.mxu0 0.0
        %3819 = vmatpush1.msra.mxu0 0.0
        %3820 = vmatprep.subr.mxu0 0.0
        %3821 = vmatpush1.msra.mxu0 0.0
        %3822 = vmatprep.subr.mxu0 0.0
        %3823 = vmatpush1.msra.mxu0 0.0
        %3824 = vmatprep.subr.mxu0 0.0
        %3825 = vmatpush1.msra.mxu0 0.0
        %3826 = vmatprep.subr.mxu0 0.0
        %3827 = vmatpush1.msra.mxu0 0.0
        %3828 = vmatprep.subr.mxu0 0.0
        %3829 = vmatpush1.msra.mxu0 0.0
        %3830 = vmatprep.subr.mxu0 0.0
        %3831 = vmatpush1.msra.mxu0 0.0
        %3832 = vmatprep.subr.mxu0 0.0
        %3833 = vmatpush1.msra.mxu0 0.0
        %3834 = vmatprep.subr.mxu0 0.0
        %3835 = vmatpush1.msra.mxu0 0.0
        %3836 = vmatprep.subr.mxu0 0.0
        %3837 = vmatpush1.msra.mxu0 0.0
        %3838 = vmatprep.subr.mxu0 0.0
        %3839 = vmatpush1.msra.mxu0 0.0
        %3840 = vmatprep.subr.mxu0 0.0
        %3841 = vmatpush1.msra.mxu0 0.0
        %3842 = vmatprep.subr.mxu0 0.0
        %3843 = vmatpush1.msra.mxu0 0.0
        %3844 = vmatprep.subr.mxu0 0.0
        %3845 = vmatpush1.msra.mxu0 0.0
        %3846 = vmatprep.subr.mxu0 0.0
        %3847 = vmatpush1.msra.mxu0 0.0
        %3848 = vmatprep.subr.mxu0 0.0
        %3849 = vmatpush1.msra.mxu0 0.0
        %3850 = vmatprep.subr.mxu0 0.0
        %3851 = vmatpush1.msra.mxu0 0.0
        %3852 = vmatprep.subr.mxu0 0.0
        %3853 = vmatpush1.msra.mxu0 0.0
        %3854 = vmatprep.subr.mxu0 0.0
        %3855 = vmatpush1.msra.mxu0 0.0
        %3856 = vmatprep.subr.mxu0 0.0
        %3857 = vmatpush1.msra.mxu0 0.0
        %3858 = vmatprep.subr.mxu0 0.0
        %3859 = vmatpush1.msra.mxu0 0.0
        %3860 = vmatprep.subr.mxu0 0.0
        %3861 = vmatpush1.msra.mxu0 0.0
        %3862 = vmatprep.subr.mxu0 0.0
        %3863 = vmatpush1.msra.mxu0 0.0
        %3864 = vmatprep.subr.mxu0 0.0
        %3865 = vmatpush1.msra.mxu0 0.0
        %3866 = vmatprep.subr.mxu0 0.0
        %3867 = vmatpush1.msra.mxu0 0.0
        %3868 = vmatprep.mubr.f32.mxu0 0.0
        %3869 = vmatmul.mubr.f32.gmra.mrb[0].mxu0 %v3757
        %v3870 = vpop.f32.mrb[0].mxu0
        %v3871 = vadd.f32 %v3754, %v3870
        %v3872 = vpop.f32.mrb[0].mxu0
        %3873 = vmatprep.mubr.f32.mxu0 0.0
        %3874 = vmatmul.mubr.f32.gmra.mrb[0].mxu0 %v3760
        %v3875 = vpop.f32.mrb[0].mxu0
        %v3876 = vadd.f32 %v3754, %v3875
        %v3877 = vpop.f32.mrb[0].mxu0
        %3878 = vmatprep.mubr.f32.mxu0 0.0
        %3879 = vmatmul.mubr.f32.gmra.mrb[0].mxu0 %v3763
        %v3880 = vpop.f32.mrb[0].mxu0
        %v3881 = vadd.f32 %v3754, %v3880
        %v3882 = vpop.f32.mrb[0].mxu0
        %3883 = vmatprep.mubr.f32.mxu0 0.0
        %3884 = vmatmul.mubr.f32.gmra.mrb[0].mxu0 %v3766
        %v3885 = vpop.f32.mrb[0].mxu0
        %v3886 = vadd.f32 %v3754, %v3885
        %v3887 = vpop.f32.mrb[0].mxu0
        %3888 = vmatprep.mubr.f32.mxu0 0.0
        %3889 = vmatmul.mubr.f32.gmra.mrb[0].mxu0 %v3769
        %v3890 = vpop.f32.mrb[0].mxu0
        %v3891 = vadd.f32 %v3754, %v3890
        %v3892 = vpop.f32.mrb[0].mxu0
        %3893 = vmatprep.mubr.f32.mxu0 0.0
        %3894 = vmatmul.mubr.f32.gmra.mrb[0].mxu0 %v3772
        %v3895 = vpop.f32.mrb[0].mxu0
        %v3896 = vadd.f32 %v3754, %v3895
        %v3897 = vpop.f32.mrb[0].mxu0
        %3898 = vmatprep.mubr.f32.mxu0 0.0
        %3899 = vmatmul.mubr.f32.gmra.mrb[0].mxu0 %v3775
        %v3900 = vpop.f32.mrb[0].mxu0
        %v3901 = vadd.f32 %v3754, %v3900
        %v3902 = vpop.f32.mrb[0].mxu0
        %3903 = vmatprep.mubr.f32.mxu0 0.0
        %3904 = vmatmul.mubr.f32.gmra.mrb[0].mxu0 %v3778
        %v3905 = vpop.f32.mrb[0].mxu0
        %v3906 = vadd.f32 %v3754, %v3905
        %v3907 = vpop.f32.mrb[0].mxu0
        %3908 = vmatprep.mubr.f32.mxu0 0.0
        %3909 = vmatmul.mubr.f32.gmra.mrb[0].mxu0 %v3781
        %v3910 = vpop.f32.mrb[0].mxu0
        %v3911 = vadd.f32 %v3754, %v3910
        %v3912 = vpop.f32.mrb[0].mxu0
        %3913 = vmatprep.mubr.f32.mxu0 0.0
        %3914 = vmatmul.mubr.f32.gmra.mrb[0].mxu0 %v3784
        %v3915 = vpop.f32.mrb[0].mxu0
        %v3916 = vadd.f32 %v3754, %v3915
        %v3917 = vpop.f32.mrb[0].mxu0
        %3918 = vmatprep.mubr.f32.mxu0 0.0
        %3919 = vmatmul.mubr.f32.gmra.mrb[0].mxu0 %v3787
        %v3920 = vpop.f32.mrb[0].mxu0
        %v3921 = vadd.f32 %v3754, %v3920
        %v3922 = vpop.f32.mrb[0].mxu0
        %3923 = vmatprep.mubr.f32.mxu0 0.0
        %3924 = vmatmul.mubr.f32.gmra.mrb[0].mxu0 %v3790
        %v3925 = vpop.f32.mrb[0].mxu0
        %v3926 = vadd.f32 %v3754, %v3925
        %v3927 = vpop.f32.mrb[0].mxu0
        %3928 = vmatprep.mubr.f32.mxu0 0.0
        %3929 = vmatmul.mubr.f32.gmra.mrb[0].mxu0 %v3793
        %v3930 = vpop.f32.mrb[0].mxu0
        %v3931 = vadd.f32 %v3754, %v3930
        %v3932 = vpop.f32.mrb[0].mxu0
        %3933 = vmatprep.mubr.f32.mxu0 0.0
        %3934 = vmatmul.mubr.f32.gmra.mrb[0].mxu0 %v3796
        %v3935 = vpop.f32.mrb[0].mxu0
        %v3936 = vadd.f32 %v3754, %v3935
        %v3937 = vpop.f32.mrb[0].mxu0
        %3938 = vmatprep.mubr.f32.mxu0 0.0
        %3939 = vmatmul.mubr.f32.gmra.mrb[0].mxu0 %v3799
        %v3940 = vpop.f32.mrb[0].mxu0
        %v3941 = vadd.f32 %v3754, %v3940
        %v3942 = vpop.f32.mrb[0].mxu0
        %3943 = vmatprep.mubr.f32.mxu0 0.0
        %3944 = vmatmul.mubr.f32.gmra.mrb[0].mxu0 %v3802
        %v3945 = vpop.f32.mrb[0].mxu0
        %v3946 = vadd.f32 %v3754, %v3945
        %v3947 = vpop.f32.mrb[0].mxu0
        %3948 = vdwg.mxu0
        %s3949 = scalar_lea.vmem [#allocation5], 32
        %v3950 = vld [vmem:[%s3949] sm:$0xff]
        %v3951 = vld [vmem:[%s3949 + $0x8] sm:$0xff]
        %v3952 = vld [vmem:[%s3949 + $0x10] sm:$0xff]
        %v3953 = vld [vmem:[%s3949 + $0x18] sm:$0xff]
        %s3954 = scalar_lea.vmem %s9, 1
        %v3955 = vld [vmem:[%s3954] sm:$0x1]
        %v3957 = vlaneseq
        %v3958 = vshrl.u32 %v3957, 7
        %v3959 = vsub.s32 0, %v3958
        %v3960 = vrot.slane %v3955, %v3959
        %3962 = vmatprep.subr.mxu0 0.0
        %3963 = vmatpush1.msra.mxu0 %v3950
        %3964 = vmatprep.subr.mxu0 0.0
        %3965 = vmatpush1.msra.mxu0 %v3951
        %3966 = vmatprep.subr.mxu0 0.0
        %3967 = vmatpush1.msra.mxu0 %v3952
        %3968 = vmatprep.subr.mxu0 0.0
        %3969 = vmatpush1.msra.mxu0 %v3953
        %3970 = vmatprep.subr.mxu0 0.0
        %3971 = vmatpush1.msra.mxu0 0.0
        %3972 = vmatprep.subr.mxu0 0.0
        %3973 = vmatpush1.msra.mxu0 0.0
        %3974 = vmatprep.subr.mxu0 0.0
        %3975 = vmatpush1.msra.mxu0 0.0
        %3976 = vmatprep.subr.mxu0 0.0
        %3977 = vmatpush1.msra.mxu0 0.0
        %3978 = vmatprep.subr.mxu0 0.0
        %3979 = vmatpush1.msra.mxu0 0.0
        %3980 = vmatprep.subr.mxu0 0.0
        %3981 = vmatpush1.msra.mxu0 0.0
        %3982 = vmatprep.subr.mxu0 0.0
        %3983 = vmatpush1.msra.mxu0 0.0
        %3984 = vmatprep.subr.mxu0 0.0
        %3985 = vmatpush1.msra.mxu0 0.0
        %3986 = vmatprep.subr.mxu0 0.0
        %3987 = vmatpush1.msra.mxu0 0.0
        %3988 = vmatprep.subr.mxu0 0.0
        %3989 = vmatpush1.msra.mxu0 0.0
        %3990 = vmatprep.subr.mxu0 0.0
        %3991 = vmatpush1.msra.mxu0 0.0
        %3992 = vmatprep.subr.mxu0 0.0
        %3993 = vmatpush1.msra.mxu0 0.0
        %3994 = vmatprep.subr.mxu0 0.0
        %3995 = vmatpush1.msra.mxu0 0.0
        %3996 = vmatprep.subr.mxu0 0.0
        %3997 = vmatpush1.msra.mxu0 0.0
        %3998 = vmatprep.subr.mxu0 0.0
        %3999 = vmatpush1.msra.mxu0 0.0
        %4000 = vmatprep.subr.mxu0 0.0
        %4001 = vmatpush1.msra.mxu0 0.0
        %4002 = vmatprep.subr.mxu0 0.0
        %4003 = vmatpush1.msra.mxu0 0.0
        %4004 = vmatprep.subr.mxu0 0.0
        %4005 = vmatpush1.msra.mxu0 0.0
        %4006 = vmatprep.subr.mxu0 0.0
        %4007 = vmatpush1.msra.mxu0 0.0
        %4008 = vmatprep.subr.mxu0 0.0
        %4009 = vmatpush1.msra.mxu0 0.0
        %4010 = vmatprep.subr.mxu0 0.0
        %4011 = vmatpush1.msra.mxu0 0.0
        %4012 = vmatprep.subr.mxu0 0.0
        %4013 = vmatpush1.msra.mxu0 0.0
        %4014 = vmatprep.subr.mxu0 0.0
        %4015 = vmatpush1.msra.mxu0 0.0
        %4016 = vmatprep.subr.mxu0 0.0
        %4017 = vmatpush1.msra.mxu0 0.0
        %4018 = vmatprep.subr.mxu0 0.0
        %4019 = vmatpush1.msra.mxu0 0.0
        %4020 = vmatprep.subr.mxu0 0.0
        %4021 = vmatpush1.msra.mxu0 0.0
        %4022 = vmatprep.subr.mxu0 0.0
        %4023 = vmatpush1.msra.mxu0 0.0
        %4024 = vmatprep.subr.mxu0 0.0
        %4025 = vmatpush1.msra.mxu0 0.0
        %4026 = vmatprep.mubr.f32.mxu0 0.0
        %4027 = vmatmul.mubr.f32.gmra.mrb[0].mxu0 %v3757
        %v4028 = vpop.f32.mrb[0].mxu0
        %v4029 = vadd.f32 %v3960, %v4028
        %v4030 = vpop.f32.mrb[0].mxu0
        %4031 = vmatprep.mubr.f32.mxu0 0.0
        %4032 = vmatmul.mubr.f32.gmra.mrb[0].mxu0 %v3760
        %v4033 = vpop.f32.mrb[0].mxu0
        %v4034 = vadd.f32 %v3960, %v4033
        %v4035 = vpop.f32.mrb[0].mxu0
        %4036 = vmatprep.mubr.f32.mxu0 0.0
        %4037 = vmatmul.mubr.f32.gmra.mrb[0].mxu0 %v3763
        %v4038 = vpop.f32.mrb[0].mxu0
        %v4039 = vadd.f32 %v3960, %v4038
        %v4040 = vpop.f32.mrb[0].mxu0
        %4041 = vmatprep.mubr.f32.mxu0 0.0
        %4042 = vmatmul.mubr.f32.gmra.mrb[0].mxu0 %v3766
        %v4043 = vpop.f32.mrb[0].mxu0
        %v4044 = vadd.f32 %v3960, %v4043
        %v4045 = vpop.f32.mrb[0].mxu0
        %4046 = vmatprep.mubr.f32.mxu0 0.0
        %4047 = vmatmul.mubr.f32.gmra.mrb[0].mxu0 %v3769
        %v4048 = vpop.f32.mrb[0].mxu0
        %v4049 = vadd.f32 %v3960, %v4048
        %v4050 = vpop.f32.mrb[0].mxu0
        %4051 = vmatprep.mubr.f32.mxu0 0.0
        %4052 = vmatmul.mubr.f32.gmra.mrb[0].mxu0 %v3772
        %v4053 = vpop.f32.mrb[0].mxu0
        %v4054 = vadd.f32 %v3960, %v4053
        %v4055 = vpop.f32.mrb[0].mxu0
        %4056 = vmatprep.mubr.f32.mxu0 0.0
        %4057 = vmatmul.mubr.f32.gmra.mrb[0].mxu0 %v3775
        %v4058 = vpop.f32.mrb[0].mxu0
        %v4059 = vadd.f32 %v3960, %v4058
        %v4060 = vpop.f32.mrb[0].mxu0
        %4061 = vmatprep.mubr.f32.mxu0 0.0
        %4062 = vmatmul.mubr.f32.gmra.mrb[0].mxu0 %v3778
        %v4063 = vpop.f32.mrb[0].mxu0
        %v4064 = vadd.f32 %v3960, %v4063
        %v4065 = vpop.f32.mrb[0].mxu0
        %4066 = vmatprep.mubr.f32.mxu0 0.0
        %4067 = vmatmul.mubr.f32.gmra.mrb[0].mxu0 %v3781
        %v4068 = vpop.f32.mrb[0].mxu0
        %v4069 = vadd.f32 %v3960, %v4068
        %v4070 = vpop.f32.mrb[0].mxu0
        %4071 = vmatprep.mubr.f32.mxu0 0.0
        %4072 = vmatmul.mubr.f32.gmra.mrb[0].mxu0 %v3784
        %v4073 = vpop.f32.mrb[0].mxu0
        %v4074 = vadd.f32 %v3960, %v4073
        %v4075 = vpop.f32.mrb[0].mxu0
        %4076 = vmatprep.mubr.f32.mxu0 0.0
        %4077 = vmatmul.mubr.f32.gmra.mrb[0].mxu0 %v3787
        %v4078 = vpop.f32.mrb[0].mxu0
        %v4079 = vadd.f32 %v3960, %v4078
        %v4080 = vpop.f32.mrb[0].mxu0
        %4081 = vmatprep.mubr.f32.mxu0 0.0
        %4082 = vmatmul.mubr.f32.gmra.mrb[0].mxu0 %v3790
        %v4083 = vpop.f32.mrb[0].mxu0
        %v4084 = vadd.f32 %v3960, %v4083
        %v4085 = vpop.f32.mrb[0].mxu0
        %4086 = vmatprep.mubr.f32.mxu0 0.0
        %4087 = vmatmul.mubr.f32.gmra.mrb[0].mxu0 %v3793
        %v4088 = vpop.f32.mrb[0].mxu0
        %v4089 = vadd.f32 %v3960, %v4088
        %v4090 = vpop.f32.mrb[0].mxu0
        %4091 = vmatprep.mubr.f32.mxu0 0.0
        %4092 = vmatmul.mubr.f32.gmra.mrb[0].mxu0 %v3796
        %v4093 = vpop.f32.mrb[0].mxu0
        %v4094 = vadd.f32 %v3960, %v4093
        %v4095 = vpop.f32.mrb[0].mxu0
        %4096 = vmatprep.mubr.f32.mxu0 0.0
        %4097 = vmatmul.mubr.f32.gmra.mrb[0].mxu0 %v3799
        %v4098 = vpop.f32.mrb[0].mxu0
        %v4099 = vadd.f32 %v3960, %v4098
        %v4100 = vpop.f32.mrb[0].mxu0
        %4101 = vmatprep.mubr.f32.mxu0 0.0
        %4102 = vmatmul.mubr.f32.gmra.mrb[0].mxu0 %v3802
        %v4103 = vpop.f32.mrb[0].mxu0
        %v4104 = vadd.f32 %v3960, %v4103
        %v4105 = vpop.f32.mrb[0].mxu0
        %4106 = vdwg.mxu0
        %s4107 = scalar_lea.vmem [#allocation7], 32
        %v4108 = vld [vmem:[%s4107] sm:$0xff]
        %v4109 = vld [vmem:[%s4107 + $0x8] sm:$0xff]
        %v4110 = vld [vmem:[%s4107 + $0x10] sm:$0xff]
        %v4111 = vld [vmem:[%s4107 + $0x18] sm:$0xff]
        %s4112 = scalar_lea.vmem %s10, 1
        %v4113 = vld [vmem:[%s4112] sm:$0x1]
        %v4115 = vlaneseq
        %v4116 = vshrl.u32 %v4115, 7
        %v4117 = vsub.s32 0, %v4116
        %v4118 = vrot.slane %v4113, %v4117
        %4120 = vmatprep.subr.mxu0 0.0
        %4121 = vmatpush1.msra.mxu0 %v4108
        %4122 = vmatprep.subr.mxu0 0.0
        %4123 = vmatpush1.msra.mxu0 %v4109
        %4124 = vmatprep.subr.mxu0 0.0
        %4125 = vmatpush1.msra.mxu0 %v4110
        %4126 = vmatprep.subr.mxu0 0.0
        %4127 = vmatpush1.msra.mxu0 %v4111
        %4128 = vmatprep.subr.mxu0 0.0
        %4129 = vmatpush1.msra.mxu0 0.0
        %4130 = vmatprep.subr.mxu0 0.0
        %4131 = vmatpush1.msra.mxu0 0.0
        %4132 = vmatprep.subr.mxu0 0.0
        %4133 = vmatpush1.msra.mxu0 0.0
        %4134 = vmatprep.subr.mxu0 0.0
        %4135 = vmatpush1.msra.mxu0 0.0
        %4136 = vmatprep.subr.mxu0 0.0
        %4137 = vmatpush1.msra.mxu0 0.0
        %4138 = vmatprep.subr.mxu0 0.0
        %4139 = vmatpush1.msra.mxu0 0.0
        %4140 = vmatprep.subr.mxu0 0.0
        %4141 = vmatpush1.msra.mxu0 0.0
        %4142 = vmatprep.subr.mxu0 0.0
        %4143 = vmatpush1.msra.mxu0 0.0
        %4144 = vmatprep.subr.mxu0 0.0
        %4145 = vmatpush1.msra.mxu0 0.0
        %4146 = vmatprep.subr.mxu0 0.0
        %4147 = vmatpush1.msra.mxu0 0.0
        %4148 = vmatprep.subr.mxu0 0.0
        %4149 = vmatpush1.msra.mxu0 0.0
        %4150 = vmatprep.subr.mxu0 0.0
        %4151 = vmatpush1.msra.mxu0 0.0
        %4152 = vmatprep.subr.mxu0 0.0
        %4153 = vmatpush1.msra.mxu0 0.0
        %4154 = vmatprep.subr.mxu0 0.0
        %4155 = vmatpush1.msra.mxu0 0.0
        %4156 = vmatprep.subr.mxu0 0.0
        %4157 = vmatpush1.msra.mxu0 0.0
        %4158 = vmatprep.subr.mxu0 0.0
        %4159 = vmatpush1.msra.mxu0 0.0
        %4160 = vmatprep.subr.mxu0 0.0
        %4161 = vmatpush1.msra.mxu0 0.0
        %4162 = vmatprep.subr.mxu0 0.0
        %4163 = vmatpush1.msra.mxu0 0.0
        %4164 = vmatprep.subr.mxu0 0.0
        %4165 = vmatpush1.msra.mxu0 0.0
        %4166 = vmatprep.subr.mxu0 0.0
        %4167 = vmatpush1.msra.mxu0 0.0
        %4168 = vmatprep.subr.mxu0 0.0
        %4169 = vmatpush1.msra.mxu0 0.0
        %4170 = vmatprep.subr.mxu0 0.0
        %4171 = vmatpush1.msra.mxu0 0.0
        %4172 = vmatprep.subr.mxu0 0.0
        %4173 = vmatpush1.msra.mxu0 0.0
        %4174 = vmatprep.subr.mxu0 0.0
        %4175 = vmatpush1.msra.mxu0 0.0
        %4176 = vmatprep.subr.mxu0 0.0
        %4177 = vmatpush1.msra.mxu0 0.0
        %4178 = vmatprep.subr.mxu0 0.0
        %4179 = vmatpush1.msra.mxu0 0.0
        %4180 = vmatprep.subr.mxu0 0.0
        %4181 = vmatpush1.msra.mxu0 0.0
        %4182 = vmatprep.subr.mxu0 0.0
        %4183 = vmatpush1.msra.mxu0 0.0
        %4184 = vmatprep.mubr.f32.mxu0 0.0
        %4185 = vmatmul.mubr.f32.gmra.mrb[0].mxu0 %v3757
        %v4186 = vpop.f32.mrb[0].mxu0
        %v4187 = vadd.f32 %v4118, %v4186
        %v4188 = vpop.f32.mrb[0].mxu0
        %4189 = vmatprep.mubr.f32.mxu0 0.0
        %4190 = vmatmul.mubr.f32.gmra.mrb[0].mxu0 %v3760
        %v4191 = vpop.f32.mrb[0].mxu0
        %v4192 = vadd.f32 %v4118, %v4191
        %v4193 = vpop.f32.mrb[0].mxu0
        %4194 = vmatprep.mubr.f32.mxu0 0.0
        %4195 = vmatmul.mubr.f32.gmra.mrb[0].mxu0 %v3763
        %v4196 = vpop.f32.mrb[0].mxu0
        %v4197 = vadd.f32 %v4118, %v4196
        %v4198 = vpop.f32.mrb[0].mxu0
        %4199 = vmatprep.mubr.f32.mxu0 0.0
        %4200 = vmatmul.mubr.f32.gmra.mrb[0].mxu0 %v3766
        %v4201 = vpop.f32.mrb[0].mxu0
        %v4202 = vadd.f32 %v4118, %v4201
        %v4203 = vpop.f32.mrb[0].mxu0
        %4204 = vmatprep.mubr.f32.mxu0 0.0
        %4205 = vmatmul.mubr.f32.gmra.mrb[0].mxu0 %v3769
        %v4206 = vpop.f32.mrb[0].mxu0
        %v4207 = vadd.f32 %v4118, %v4206
        %v4208 = vpop.f32.mrb[0].mxu0
        %4209 = vmatprep.mubr.f32.mxu0 0.0
        %4210 = vmatmul.mubr.f32.gmra.mrb[0].mxu0 %v3772
        %v4211 = vpop.f32.mrb[0].mxu0
        %v4212 = vadd.f32 %v4118, %v4211
        %v4213 = vpop.f32.mrb[0].mxu0
        %4214 = vmatprep.mubr.f32.mxu0 0.0
        %4215 = vmatmul.mubr.f32.gmra.mrb[0].mxu0 %v3775
        %v4216 = vpop.f32.mrb[0].mxu0
        %v4217 = vadd.f32 %v4118, %v4216
        %v4218 = vpop.f32.mrb[0].mxu0
        %4219 = vmatprep.mubr.f32.mxu0 0.0
        %4220 = vmatmul.mubr.f32.gmra.mrb[0].mxu0 %v3778
        %v4221 = vpop.f32.mrb[0].mxu0
        %v4222 = vadd.f32 %v4118, %v4221
        %v4223 = vpop.f32.mrb[0].mxu0
        %4224 = vmatprep.mubr.f32.mxu0 0.0
        %4225 = vmatmul.mubr.f32.gmra.mrb[0].mxu0 %v3781
        %v4226 = vpop.f32.mrb[0].mxu0
        %v4227 = vadd.f32 %v4118, %v4226
        %v4228 = vpop.f32.mrb[0].mxu0
        %4229 = vmatprep.mubr.f32.mxu0 0.0
        %4230 = vmatmul.mubr.f32.gmra.mrb[0].mxu0 %v3784
        %v4231 = vpop.f32.mrb[0].mxu0
        %v4232 = vadd.f32 %v4118, %v4231
        %v4233 = vpop.f32.mrb[0].mxu0
        %4234 = vmatprep.mubr.f32.mxu0 0.0
        %4235 = vmatmul.mubr.f32.gmra.mrb[0].mxu0 %v3787
        %v4236 = vpop.f32.mrb[0].mxu0
        %v4237 = vadd.f32 %v4118, %v4236
        %v4238 = vpop.f32.mrb[0].mxu0
        %4239 = vmatprep.mubr.f32.mxu0 0.0
        %4240 = vmatmul.mubr.f32.gmra.mrb[0].mxu0 %v3790
        %v4241 = vpop.f32.mrb[0].mxu0
        %v4242 = vadd.f32 %v4118, %v4241
        %v4243 = vpop.f32.mrb[0].mxu0
        %4244 = vmatprep.mubr.f32.mxu0 0.0
        %4245 = vmatmul.mubr.f32.gmra.mrb[0].mxu0 %v3793
        %v4246 = vpop.f32.mrb[0].mxu0
        %v4247 = vadd.f32 %v4118, %v4246
        %v4248 = vpop.f32.mrb[0].mxu0
        %4249 = vmatprep.mubr.f32.mxu0 0.0
        %4250 = vmatmul.mubr.f32.gmra.mrb[0].mxu0 %v3796
        %v4251 = vpop.f32.mrb[0].mxu0
        %v4252 = vadd.f32 %v4118, %v4251
        %v4253 = vpop.f32.mrb[0].mxu0
        %4254 = vmatprep.mubr.f32.mxu0 0.0
        %4255 = vmatmul.mubr.f32.gmra.mrb[0].mxu0 %v3799
        %v4256 = vpop.f32.mrb[0].mxu0
        %v4257 = vadd.f32 %v4118, %v4256
        %v4258 = vpop.f32.mrb[0].mxu0
        %4259 = vmatprep.mubr.f32.mxu0 0.0
        %4260 = vmatmul.mubr.f32.gmra.mrb[0].mxu0 %v3802
        %v4261 = vpop.f32.mrb[0].mxu0
        %v4262 = vadd.f32 %v4118, %v4261
        %v4263 = vpop.f32.mrb[0].mxu0
        %4264 = vdwg.mxu0
        %v4265 = vmul.f32 %v3871, %v1451
        %v4266 = vmul.f32 %v3876, %v1451
        %v4267 = vmul.f32 %v3881, %v1451
        %v4268 = vmul.f32 %v3886, %v1451
        %v4269 = vmul.f32 %v3891, %v1451
        %v4270 = vmul.f32 %v3896, %v1451
        %v4271 = vmul.f32 %v3901, %v1451
        %v4272 = vmul.f32 %v3906, %v1451
        %v4273 = vmul.f32 %v3911, %v1451
        %v4274 = vmul.f32 %v3916, %v1451
        %v4275 = vmul.f32 %v3921, %v1451
        %v4276 = vmul.f32 %v3926, %v1451
        %v4277 = vmul.f32 %v3931, %v1451
        %v4278 = vmul.f32 %v3936, %v1451
        %v4279 = vmul.f32 %v3941, %v1451
        %v4280 = vmul.f32 %v3946, %v1451
        %v4282 = vsel %vm940, %v4265, 0
        %v4285 = vsel %vm940, %v4266, 0
        %v4288 = vsel %vm940, %v4267, 0
        %v4291 = vsel %vm940, %v4268, 0
        %v4294 = vsel %vm940, %v4269, 0
        %v4297 = vsel %vm940, %v4270, 0
        %v4300 = vsel %vm940, %v4271, 0
        %v4303 = vsel %vm940, %v4272, 0
        %v4306 = vsel %vm940, %v4273, 0
        %v4309 = vsel %vm940, %v4274, 0
        %v4312 = vsel %vm940, %v4275, 0
        %v4315 = vsel %vm940, %v4276, 0
        %v4318 = vsel %vm940, %v4277, 0
        %v4321 = vsel %vm940, %v4278, 0
        %v4324 = vsel %vm940, %v4279, 0
        %v4327 = vsel %vm940, %v4280, 0
        %v4330 = vsel %vm940, %v4029, 0
        %v4333 = vsel %vm940, %v4034, 0
        %v4336 = vsel %vm940, %v4039, 0
        %v4339 = vsel %vm940, %v4044, 0
        %v4342 = vsel %vm940, %v4049, 0
        %v4345 = vsel %vm940, %v4054, 0
        %v4348 = vsel %vm940, %v4059, 0
        %v4351 = vsel %vm940, %v4064, 0
        %v4354 = vsel %vm940, %v4069, 0
        %v4357 = vsel %vm940, %v4074, 0
        %v4360 = vsel %vm940, %v4079, 0
        %v4363 = vsel %vm940, %v4084, 0
        %v4366 = vsel %vm940, %v4089, 0
        %v4369 = vsel %vm940, %v4094, 0
        %v4372 = vsel %vm940, %v4099, 0
        %v4375 = vsel %vm940, %v4104, 0
        %4377 = vmatprep.subr.mxu0 0.0
        %4378 = vmatpush1.xpose.msra.mxu0 %v4330
        %4379 = vmatprep.subr.mxu0 0.0
        %4380 = vmatpush1.xpose.msra.mxu0 %v4333
        %4381 = vmatprep.subr.mxu0 0.0
        %4382 = vmatpush1.xpose.msra.mxu0 %v4336
        %4383 = vmatprep.subr.mxu0 0.0
        %4384 = vmatpush1.xpose.msra.mxu0 %v4339
        %4385 = vmatprep.subr.mxu0 0.0
        %4386 = vmatpush1.xpose.msra.mxu0 %v4342
        %4387 = vmatprep.subr.mxu0 0.0
        %4388 = vmatpush1.xpose.msra.mxu0 %v4345
        %4389 = vmatprep.subr.mxu0 0.0
        %4390 = vmatpush1.xpose.msra.mxu0 %v4348
        %4391 = vmatprep.subr.mxu0 0.0
        %4392 = vmatpush1.xpose.msra.mxu0 %v4351
        %4393 = vmatprep.subr.mxu0 0.0
        %4394 = vmatpush1.xpose.msra.mxu0 %v4354
        %4395 = vmatprep.subr.mxu0 0.0
        %4396 = vmatpush1.xpose.msra.mxu0 %v4357
        %4397 = vmatprep.subr.mxu0 0.0
        %4398 = vmatpush1.xpose.msra.mxu0 %v4360
        %4399 = vmatprep.subr.mxu0 0.0
        %4400 = vmatpush1.xpose.msra.mxu0 %v4363
        %4401 = vmatprep.subr.mxu0 0.0
        %4402 = vmatpush1.xpose.msra.mxu0 %v4366
        %4403 = vmatprep.subr.mxu0 0.0
        %4404 = vmatpush1.xpose.msra.mxu0 %v4369
        %4405 = vmatprep.subr.mxu0 0.0
        %4406 = vmatpush1.xpose.msra.mxu0 %v4372
        %4407 = vmatprep.subr.mxu0 0.0
        %4408 = vmatpush1.xpose.msra.mxu0 %v4375
        %4409 = vmatprep.subr.mxu0 0.0
        %4410 = vmatpush1.xpose.msra.mxu0 0.0
        %4411 = vmatprep.subr.mxu0 0.0
        %4412 = vmatpush1.xpose.msra.mxu0 0.0
        %4413 = vmatprep.subr.mxu0 0.0
        %4414 = vmatpush1.xpose.msra.mxu0 0.0
        %4415 = vmatprep.subr.mxu0 0.0
        %4416 = vmatpush1.xpose.msra.mxu0 0.0
        %4417 = vmatprep.subr.mxu0 0.0
        %4418 = vmatpush1.xpose.msra.mxu0 0.0
        %4419 = vmatprep.subr.mxu0 0.0
        %4420 = vmatpush1.xpose.msra.mxu0 0.0
        %4421 = vmatprep.subr.mxu0 0.0
        %4422 = vmatpush1.xpose.msra.mxu0 0.0
        %4423 = vmatprep.subr.mxu0 0.0
        %4424 = vmatpush1.xpose.msra.mxu0 0.0
        %4425 = vmatprep.subr.mxu0 0.0
        %4426 = vmatpush1.xpose.msra.mxu0 0.0
        %4427 = vmatprep.subr.mxu0 0.0
        %4428 = vmatpush1.xpose.msra.mxu0 0.0
        %4429 = vmatprep.subr.mxu0 0.0
        %4430 = vmatpush1.xpose.msra.mxu0 0.0
        %4431 = vmatprep.subr.mxu0 0.0
        %4432 = vmatpush1.xpose.msra.mxu0 0.0
        %4433 = vmatprep.subr.mxu0 0.0
        %4434 = vmatpush1.xpose.msra.mxu0 0.0
        %4435 = vmatprep.subr.mxu0 0.0
        %4436 = vmatpush1.xpose.msra.mxu0 0.0
        %4437 = vmatprep.subr.mxu0 0.0
        %4438 = vmatpush1.xpose.msra.mxu0 0.0
        %4439 = vmatprep.subr.mxu0 0.0
        %4440 = vmatpush1.xpose.msra.mxu0 0.0
        %4441 = vmatprep.mubr.f32.mxu0 0.0
        %4442 = vmatmul.mubr.f32.gmra.mrb[0].mxu0 %v4282
        %v4443 = vpop.f32.mrb[0].mxu0
        %v4444 = vadd.f32 %v1469, %v4443
        %v4445 = vpop.f32.mrb[0].mxu0
        %4446 = vmatprep.mubr.f32.mxu0 0.0
        %4447 = vmatmul.mubr.f32.gmra.mrb[0].mxu0 %v4285
        %v4448 = vpop.f32.mrb[0].mxu0
        %v4449 = vadd.f32 %v1470, %v4448
        %v4450 = vpop.f32.mrb[0].mxu0
        %4451 = vmatprep.mubr.f32.mxu0 0.0
        %4452 = vmatmul.mubr.f32.gmra.mrb[0].mxu0 %v4288
        %v4453 = vpop.f32.mrb[0].mxu0
        %v4454 = vadd.f32 %v1471, %v4453
        %v4455 = vpop.f32.mrb[0].mxu0
        %4456 = vmatprep.mubr.f32.mxu0 0.0
        %4457 = vmatmul.mubr.f32.gmra.mrb[0].mxu0 %v4291
        %v4458 = vpop.f32.mrb[0].mxu0
        %v4459 = vadd.f32 %v1472, %v4458
        %v4460 = vpop.f32.mrb[0].mxu0
        %4461 = vmatprep.mubr.f32.mxu0 0.0
        %4462 = vmatmul.mubr.f32.gmra.mrb[0].mxu0 %v4294
        %v4463 = vpop.f32.mrb[0].mxu0
        %v4464 = vadd.f32 %v1473, %v4463
        %v4465 = vpop.f32.mrb[0].mxu0
        %4466 = vmatprep.mubr.f32.mxu0 0.0
        %4467 = vmatmul.mubr.f32.gmra.mrb[0].mxu0 %v4297
        %v4468 = vpop.f32.mrb[0].mxu0
        %v4469 = vadd.f32 %v1474, %v4468
        %v4470 = vpop.f32.mrb[0].mxu0
        %4471 = vmatprep.mubr.f32.mxu0 0.0
        %4472 = vmatmul.mubr.f32.gmra.mrb[0].mxu0 %v4300
        %v4473 = vpop.f32.mrb[0].mxu0
        %v4474 = vadd.f32 %v1475, %v4473
        %v4475 = vpop.f32.mrb[0].mxu0
        %4476 = vmatprep.mubr.f32.mxu0 0.0
        %4477 = vmatmul.mubr.f32.gmra.mrb[0].mxu0 %v4303
        %v4478 = vpop.f32.mrb[0].mxu0
        %v4479 = vadd.f32 %v1476, %v4478
        %v4480 = vpop.f32.mrb[0].mxu0
        %4481 = vmatprep.mubr.f32.mxu0 0.0
        %4482 = vmatmul.mubr.f32.gmra.mrb[0].mxu0 %v4306
        %v4483 = vpop.f32.mrb[0].mxu0
        %v4484 = vadd.f32 %v1477, %v4483
        %v4485 = vpop.f32.mrb[0].mxu0
        %4486 = vmatprep.mubr.f32.mxu0 0.0
        %4487 = vmatmul.mubr.f32.gmra.mrb[0].mxu0 %v4309
        %v4488 = vpop.f32.mrb[0].mxu0
        %v4489 = vadd.f32 %v1478, %v4488
        %v4490 = vpop.f32.mrb[0].mxu0
        %4491 = vmatprep.mubr.f32.mxu0 0.0
        %4492 = vmatmul.mubr.f32.gmra.mrb[0].mxu0 %v4312
        %v4493 = vpop.f32.mrb[0].mxu0
        %v4494 = vadd.f32 %v1479, %v4493
        %v4495 = vpop.f32.mrb[0].mxu0
        %4496 = vmatprep.mubr.f32.mxu0 0.0
        %4497 = vmatmul.mubr.f32.gmra.mrb[0].mxu0 %v4315
        %v4498 = vpop.f32.mrb[0].mxu0
        %v4499 = vadd.f32 %v1480, %v4498
        %v4500 = vpop.f32.mrb[0].mxu0
        %4501 = vmatprep.mubr.f32.mxu0 0.0
        %4502 = vmatmul.mubr.f32.gmra.mrb[0].mxu0 %v4318
        %v4503 = vpop.f32.mrb[0].mxu0
        %v4504 = vadd.f32 %v1481, %v4503
        %v4505 = vpop.f32.mrb[0].mxu0
        %4506 = vmatprep.mubr.f32.mxu0 0.0
        %4507 = vmatmul.mubr.f32.gmra.mrb[0].mxu0 %v4321
        %v4508 = vpop.f32.mrb[0].mxu0
        %v4509 = vadd.f32 %v1482, %v4508
        %v4510 = vpop.f32.mrb[0].mxu0
        %4511 = vmatprep.mubr.f32.mxu0 0.0
        %4512 = vmatmul.mubr.f32.gmra.mrb[0].mxu0 %v4324
        %v4513 = vpop.f32.mrb[0].mxu0
        %v4514 = vadd.f32 %v1483, %v4513
        %v4515 = vpop.f32.mrb[0].mxu0
        %4516 = vmatprep.mubr.f32.mxu0 0.0
        %4517 = vmatmul.mubr.f32.gmra.mrb[0].mxu0 %v4327
        %v4518 = vpop.f32.mrb[0].mxu0
        %v4519 = vadd.f32 %v1484, %v4518
        %v4520 = vpop.f32.mrb[0].mxu0
        %4521 = vdwg.mxu0
        %4522 = vmax.xlane.f32.xlu0 %v4444
        %v4523 = vpop.xlane.xlu0 %4522
        %4524 = vmax.xlane.f32.xlu0 %v4449
        %v4525 = vpop.xlane.xlu0 %4524
        %4526 = vmax.xlane.f32.xlu0 %v4454
        %v4527 = vpop.xlane.xlu0 %4526
        %4528 = vmax.xlane.f32.xlu0 %v4459
        %v4529 = vpop.xlane.xlu0 %4528
        %4530 = vmax.xlane.f32.xlu0 %v4464
        %v4531 = vpop.xlane.xlu0 %4530
        %4532 = vmax.xlane.f32.xlu0 %v4469
        %v4533 = vpop.xlane.xlu0 %4532
        %4534 = vmax.xlane.f32.xlu0 %v4474
        %v4535 = vpop.xlane.xlu0 %4534
        %4536 = vmax.xlane.f32.xlu0 %v4479
        %v4537 = vpop.xlane.xlu0 %4536
        %4538 = vmax.xlane.f32.xlu0 %v4484
        %v4539 = vpop.xlane.xlu0 %4538
        %4540 = vmax.xlane.f32.xlu0 %v4489
        %v4541 = vpop.xlane.xlu0 %4540
        %4542 = vmax.xlane.f32.xlu0 %v4494
        %v4543 = vpop.xlane.xlu0 %4542
        %4544 = vmax.xlane.f32.xlu0 %v4499
        %v4545 = vpop.xlane.xlu0 %4544
        %4546 = vmax.xlane.f32.xlu0 %v4504
        %v4547 = vpop.xlane.xlu0 %4546
        %4548 = vmax.xlane.f32.xlu0 %v4509
        %v4549 = vpop.xlane.xlu0 %4548
        %4550 = vmax.xlane.f32.xlu0 %v4514
        %v4551 = vpop.xlane.xlu0 %4550
        %4552 = vmax.xlane.f32.xlu0 %v4519
        %v4553 = vpop.xlane.xlu0 %4552
        %v4554 = vsub.f32 %v4444, %v4523
        %v4555 = vsub.f32 %v4449, %v4525
        %v4556 = vsub.f32 %v4454, %v4527
        %v4557 = vsub.f32 %v4459, %v4529
        %v4558 = vsub.f32 %v4464, %v4531
        %v4559 = vsub.f32 %v4469, %v4533
        %v4560 = vsub.f32 %v4474, %v4535
        %v4561 = vsub.f32 %v4479, %v4537
        %v4562 = vsub.f32 %v4484, %v4539
        %v4563 = vsub.f32 %v4489, %v4541
        %v4564 = vsub.f32 %v4494, %v4543
        %v4565 = vsub.f32 %v4499, %v4545
        %v4566 = vsub.f32 %v4504, %v4547
        %v4567 = vsub.f32 %v4509, %v4549
        %v4568 = vsub.f32 %v4514, %v4551
        %v4569 = vsub.f32 %v4519, %v4553
        %v4570 = vmul.f32 %v4554, 1.442695
        %v4571 = vpow.pop %v4570
        %v4572 = vmul.f32 %v4555, 1.442695
        %v4573 = vpow.pop %v4572
        %v4574 = vmul.f32 %v4556, 1.442695
        %v4575 = vpow.pop %v4574
        %v4576 = vmul.f32 %v4557, 1.442695
        %v4577 = vpow.pop %v4576
        %v4578 = vmul.f32 %v4558, 1.442695
        %v4579 = vpow.pop %v4578
        %v4580 = vmul.f32 %v4559, 1.442695
        %v4581 = vpow.pop %v4580
        %v4582 = vmul.f32 %v4560, 1.442695
        %v4583 = vpow.pop %v4582
        %v4584 = vmul.f32 %v4561, 1.442695
        %v4585 = vpow.pop %v4584
        %v4586 = vmul.f32 %v4562, 1.442695
        %v4587 = vpow.pop %v4586
        %v4588 = vmul.f32 %v4563, 1.442695
        %v4589 = vpow.pop %v4588
        %v4590 = vmul.f32 %v4564, 1.442695
        %v4591 = vpow.pop %v4590
        %v4592 = vmul.f32 %v4565, 1.442695
        %v4593 = vpow.pop %v4592
        %v4594 = vmul.f32 %v4566, 1.442695
        %v4595 = vpow.pop %v4594
        %v4596 = vmul.f32 %v4567, 1.442695
        %v4597 = vpow.pop %v4596
        %v4598 = vmul.f32 %v4568, 1.442695
        %v4599 = vpow.pop %v4598
        %v4600 = vmul.f32 %v4569, 1.442695
        %v4601 = vpow.pop %v4600
        %4602 = vadd.xlane.f32.xlu0 %v4571
        %v4603 = vpop.xlane.xlu0 %4602
        %4604 = vadd.xlane.f32.xlu0 %v4573
        %v4605 = vpop.xlane.xlu0 %4604
        %4606 = vadd.xlane.f32.xlu0 %v4575
        %v4607 = vpop.xlane.xlu0 %4606
        %4608 = vadd.xlane.f32.xlu0 %v4577
        %v4609 = vpop.xlane.xlu0 %4608
        %4610 = vadd.xlane.f32.xlu0 %v4579
        %v4611 = vpop.xlane.xlu0 %4610
        %4612 = vadd.xlane.f32.xlu0 %v4581
        %v4613 = vpop.xlane.xlu0 %4612
        %4614 = vadd.xlane.f32.xlu0 %v4583
        %v4615 = vpop.xlane.xlu0 %4614
        %4616 = vadd.xlane.f32.xlu0 %v4585
        %v4617 = vpop.xlane.xlu0 %4616
        %4618 = vadd.xlane.f32.xlu0 %v4587
        %v4619 = vpop.xlane.xlu0 %4618
        %4620 = vadd.xlane.f32.xlu0 %v4589
        %v4621 = vpop.xlane.xlu0 %4620
        %4622 = vadd.xlane.f32.xlu0 %v4591
        %v4623 = vpop.xlane.xlu0 %4622
        %4624 = vadd.xlane.f32.xlu0 %v4593
        %v4625 = vpop.xlane.xlu0 %4624
        %4626 = vadd.xlane.f32.xlu0 %v4595
        %v4627 = vpop.xlane.xlu0 %4626
        %4628 = vadd.xlane.f32.xlu0 %v4597
        %v4629 = vpop.xlane.xlu0 %4628
        %4630 = vadd.xlane.f32.xlu0 %v4599
        %v4631 = vpop.xlane.xlu0 %4630
        %4632 = vadd.xlane.f32.xlu0 %v4601
        %v4633 = vpop.xlane.xlu0 %4632
        %v4634 = vrcp.pop %v4603
        %v4635 = vrcp.pop %v4605
        %v4636 = vrcp.pop %v4607
        %v4637 = vrcp.pop %v4609
        %v4638 = vrcp.pop %v4611
        %v4639 = vrcp.pop %v4613
        %v4640 = vrcp.pop %v4615
        %v4641 = vrcp.pop %v4617
        %v4642 = vrcp.pop %v4619
        %v4643 = vrcp.pop %v4621
        %v4644 = vrcp.pop %v4623
        %v4645 = vrcp.pop %v4625
        %v4646 = vrcp.pop %v4627
        %v4647 = vrcp.pop %v4629
        %v4648 = vrcp.pop %v4631
        %v4649 = vrcp.pop %v4633
        %v4650 = vmul.f32 %v4571, %v4634
        %v4651 = vmul.f32 %v4573, %v4635
        %v4652 = vmul.f32 %v4575, %v4636
        %v4653 = vmul.f32 %v4577, %v4637
        %v4654 = vmul.f32 %v4579, %v4638
        %v4655 = vmul.f32 %v4581, %v4639
        %v4656 = vmul.f32 %v4583, %v4640
        %v4657 = vmul.f32 %v4585, %v4641
        %v4658 = vmul.f32 %v4587, %v4642
        %v4659 = vmul.f32 %v4589, %v4643
        %v4660 = vmul.f32 %v4591, %v4644
        %v4661 = vmul.f32 %v4593, %v4645
        %v4662 = vmul.f32 %v4595, %v4646
        %v4663 = vmul.f32 %v4597, %v4647
        %v4664 = vmul.f32 %v4599, %v4648
        %v4665 = vmul.f32 %v4601, %v4649
        %v4666 = vmul.f32 %v4187, %v1451
        %v4667 = vmul.f32 %v4192, %v1451
        %v4668 = vmul.f32 %v4197, %v1451
        %v4669 = vmul.f32 %v4202, %v1451
        %v4670 = vmul.f32 %v4207, %v1451
        %v4671 = vmul.f32 %v4212, %v1451
        %v4672 = vmul.f32 %v4217, %v1451
        %v4673 = vmul.f32 %v4222, %v1451
        %v4674 = vmul.f32 %v4227, %v1451
        %v4675 = vmul.f32 %v4232, %v1451
        %v4676 = vmul.f32 %v4237, %v1451
        %v4677 = vmul.f32 %v4242, %v1451
        %v4678 = vmul.f32 %v4247, %v1451
        %v4679 = vmul.f32 %v4252, %v1451
        %v4680 = vmul.f32 %v4257, %v1451
        %v4681 = vmul.f32 %v4262, %v1451
        %v4682 = vmul.f32 %v3871, %v1892
        %v4683 = vmul.f32 %v3876, %v1892
        %v4684 = vmul.f32 %v3881, %v1892
        %v4685 = vmul.f32 %v3886, %v1892
        %v4686 = vmul.f32 %v3891, %v1892
        %v4687 = vmul.f32 %v3896, %v1892
        %v4688 = vmul.f32 %v3901, %v1892
        %v4689 = vmul.f32 %v3906, %v1892
        %v4690 = vmul.f32 %v3911, %v1892
        %v4691 = vmul.f32 %v3916, %v1892
        %v4692 = vmul.f32 %v3921, %v1892
        %v4693 = vmul.f32 %v3926, %v1892
        %v4694 = vmul.f32 %v3931, %v1892
        %v4695 = vmul.f32 %v3936, %v1892
        %v4696 = vmul.f32 %v3941, %v1892
        %v4697 = vmul.f32 %v3946, %v1892
        %v4699 = vsel %vm940, %v4682, 0
        %v4702 = vsel %vm940, %v4683, 0
        %v4705 = vsel %vm940, %v4684, 0
        %v4708 = vsel %vm940, %v4685, 0
        %v4711 = vsel %vm940, %v4686, 0
        %v4714 = vsel %vm940, %v4687, 0
        %v4717 = vsel %vm940, %v4688, 0
        %v4720 = vsel %vm940, %v4689, 0
        %v4723 = vsel %vm940, %v4690, 0
        %v4726 = vsel %vm940, %v4691, 0
        %v4729 = vsel %vm940, %v4692, 0
        %v4732 = vsel %vm940, %v4693, 0
        %v4735 = vsel %vm940, %v4694, 0
        %v4738 = vsel %vm940, %v4695, 0
        %v4741 = vsel %vm940, %v4696, 0
        %v4744 = vsel %vm940, %v4697, 0
        %4746 = vmatprep.subr.mxu0 0.0
        %4747 = vmatpush1.xpose.msra.mxu0 %v4330
        %4748 = vmatprep.subr.mxu0 0.0
        %4749 = vmatpush1.xpose.msra.mxu0 %v4333
        %4750 = vmatprep.subr.mxu0 0.0
        %4751 = vmatpush1.xpose.msra.mxu0 %v4336
        %4752 = vmatprep.subr.mxu0 0.0
        %4753 = vmatpush1.xpose.msra.mxu0 %v4339
        %4754 = vmatprep.subr.mxu0 0.0
        %4755 = vmatpush1.xpose.msra.mxu0 %v4342
        %4756 = vmatprep.subr.mxu0 0.0
        %4757 = vmatpush1.xpose.msra.mxu0 %v4345
        %4758 = vmatprep.subr.mxu0 0.0
        %4759 = vmatpush1.xpose.msra.mxu0 %v4348
        %4760 = vmatprep.subr.mxu0 0.0
        %4761 = vmatpush1.xpose.msra.mxu0 %v4351
        %4762 = vmatprep.subr.mxu0 0.0
        %4763 = vmatpush1.xpose.msra.mxu0 %v4354
        %4764 = vmatprep.subr.mxu0 0.0
        %4765 = vmatpush1.xpose.msra.mxu0 %v4357
        %4766 = vmatprep.subr.mxu0 0.0
        %4767 = vmatpush1.xpose.msra.mxu0 %v4360
        %4768 = vmatprep.subr.mxu0 0.0
        %4769 = vmatpush1.xpose.msra.mxu0 %v4363
        %4770 = vmatprep.subr.mxu0 0.0
        %4771 = vmatpush1.xpose.msra.mxu0 %v4366
        %4772 = vmatprep.subr.mxu0 0.0
        %4773 = vmatpush1.xpose.msra.mxu0 %v4369
        %4774 = vmatprep.subr.mxu0 0.0
        %4775 = vmatpush1.xpose.msra.mxu0 %v4372
        %4776 = vmatprep.subr.mxu0 0.0
        %4777 = vmatpush1.xpose.msra.mxu0 %v4375
        %4778 = vmatprep.subr.mxu0 0.0
        %4779 = vmatpush1.xpose.msra.mxu0 0.0
        %4780 = vmatprep.subr.mxu0 0.0
        %4781 = vmatpush1.xpose.msra.mxu0 0.0
        %4782 = vmatprep.subr.mxu0 0.0
        %4783 = vmatpush1.xpose.msra.mxu0 0.0
        %4784 = vmatprep.subr.mxu0 0.0
        %4785 = vmatpush1.xpose.msra.mxu0 0.0
        %4786 = vmatprep.subr.mxu0 0.0
        %4787 = vmatpush1.xpose.msra.mxu0 0.0
        %4788 = vmatprep.subr.mxu0 0.0
        %4789 = vmatpush1.xpose.msra.mxu0 0.0
        %4790 = vmatprep.subr.mxu0 0.0
        %4791 = vmatpush1.xpose.msra.mxu0 0.0
        %4792 = vmatprep.subr.mxu0 0.0
        %4793 = vmatpush1.xpose.msra.mxu0 0.0
        %4794 = vmatprep.subr.mxu0 0.0
        %4795 = vmatpush1.xpose.msra.mxu0 0.0
        %4796 = vmatprep.subr.mxu0 0.0
        %4797 = vmatpush1.xpose.msra.mxu0 0.0
        %4798 = vmatprep.subr.mxu0 0.0
        %4799 = vmatpush1.xpose.msra.mxu0 0.0
        %4800 = vmatprep.subr.mxu0 0.0
        %4801 = vmatpush1.xpose.msra.mxu0 0.0
        %4802 = vmatprep.subr.mxu0 0.0
        %4803 = vmatpush1.xpose.msra.mxu0 0.0
        %4804 = vmatprep.subr.mxu0 0.0
        %4805 = vmatpush1.xpose.msra.mxu0 0.0
        %4806 = vmatprep.subr.mxu0 0.0
        %4807 = vmatpush1.xpose.msra.mxu0 0.0
        %4808 = vmatprep.subr.mxu0 0.0
        %4809 = vmatpush1.xpose.msra.mxu0 0.0
        %4810 = vmatprep.mubr.f32.mxu0 0.0
        %4811 = vmatmul.mubr.f32.gmra.mrb[0].mxu0 %v4699
        %v4812 = vpop.f32.mrb[0].mxu0
        %v4813 = vadd.f32 %v1469, %v4812
        %v4814 = vpop.f32.mrb[0].mxu0
        %4815 = vmatprep.mubr.f32.mxu0 0.0
        %4816 = vmatmul.mubr.f32.gmra.mrb[0].mxu0 %v4702
        %v4817 = vpop.f32.mrb[0].mxu0
        %v4818 = vadd.f32 %v1470, %v4817
        %v4819 = vpop.f32.mrb[0].mxu0
        %4820 = vmatprep.mubr.f32.mxu0 0.0
        %4821 = vmatmul.mubr.f32.gmra.mrb[0].mxu0 %v4705
        %v4822 = vpop.f32.mrb[0].mxu0
        %v4823 = vadd.f32 %v1471, %v4822
        %v4824 = vpop.f32.mrb[0].mxu0
        %4825 = vmatprep.mubr.f32.mxu0 0.0
        %4826 = vmatmul.mubr.f32.gmra.mrb[0].mxu0 %v4708
        %v4827 = vpop.f32.mrb[0].mxu0
        %v4828 = vadd.f32 %v1472, %v4827
        %v4829 = vpop.f32.mrb[0].mxu0
        %4830 = vmatprep.mubr.f32.mxu0 0.0
        %4831 = vmatmul.mubr.f32.gmra.mrb[0].mxu0 %v4711
        %v4832 = vpop.f32.mrb[0].mxu0
        %v4833 = vadd.f32 %v1473, %v4832
        %v4834 = vpop.f32.mrb[0].mxu0
        %4835 = vmatprep.mubr.f32.mxu0 0.0
        %4836 = vmatmul.mubr.f32.gmra.mrb[0].mxu0 %v4714
        %v4837 = vpop.f32.mrb[0].mxu0
        %v4838 = vadd.f32 %v1474, %v4837
        %v4839 = vpop.f32.mrb[0].mxu0
        %4840 = vmatprep.mubr.f32.mxu0 0.0
        %4841 = vmatmul.mubr.f32.gmra.mrb[0].mxu0 %v4717
        %v4842 = vpop.f32.mrb[0].mxu0
        %v4843 = vadd.f32 %v1475, %v4842
        %v4844 = vpop.f32.mrb[0].mxu0
        %4845 = vmatprep.mubr.f32.mxu0 0.0
        %4846 = vmatmul.mubr.f32.gmra.mrb[0].mxu0 %v4720
        %v4847 = vpop.f32.mrb[0].mxu0
        %v4848 = vadd.f32 %v1476, %v4847
        %v4849 = vpop.f32.mrb[0].mxu0
        %4850 = vmatprep.mubr.f32.mxu0 0.0
        %4851 = vmatmul.mubr.f32.gmra.mrb[0].mxu0 %v4723
        %v4852 = vpop.f32.mrb[0].mxu0
        %v4853 = vadd.f32 %v1477, %v4852
        %v4854 = vpop.f32.mrb[0].mxu0
        %4855 = vmatprep.mubr.f32.mxu0 0.0
        %4856 = vmatmul.mubr.f32.gmra.mrb[0].mxu0 %v4726
        %v4857 = vpop.f32.mrb[0].mxu0
        %v4858 = vadd.f32 %v1478, %v4857
        %v4859 = vpop.f32.mrb[0].mxu0
        %4860 = vmatprep.mubr.f32.mxu0 0.0
        %4861 = vmatmul.mubr.f32.gmra.mrb[0].mxu0 %v4729
        %v4862 = vpop.f32.mrb[0].mxu0
        %v4863 = vadd.f32 %v1479, %v4862
        %v4864 = vpop.f32.mrb[0].mxu0
        %4865 = vmatprep.mubr.f32.mxu0 0.0
        %4866 = vmatmul.mubr.f32.gmra.mrb[0].mxu0 %v4732
        %v4867 = vpop.f32.mrb[0].mxu0
        %v4868 = vadd.f32 %v1480, %v4867
        %v4869 = vpop.f32.mrb[0].mxu0
        %4870 = vmatprep.mubr.f32.mxu0 0.0
        %4871 = vmatmul.mubr.f32.gmra.mrb[0].mxu0 %v4735
        %v4872 = vpop.f32.mrb[0].mxu0
        %v4873 = vadd.f32 %v1481, %v4872
        %v4874 = vpop.f32.mrb[0].mxu0
        %4875 = vmatprep.mubr.f32.mxu0 0.0
        %4876 = vmatmul.mubr.f32.gmra.mrb[0].mxu0 %v4738
        %v4877 = vpop.f32.mrb[0].mxu0
        %v4878 = vadd.f32 %v1482, %v4877
        %v4879 = vpop.f32.mrb[0].mxu0
        %4880 = vmatprep.mubr.f32.mxu0 0.0
        %4881 = vmatmul.mubr.f32.gmra.mrb[0].mxu0 %v4741
        %v4882 = vpop.f32.mrb[0].mxu0
        %v4883 = vadd.f32 %v1483, %v4882
        %v4884 = vpop.f32.mrb[0].mxu0
        %4885 = vmatprep.mubr.f32.mxu0 0.0
        %4886 = vmatmul.mubr.f32.gmra.mrb[0].mxu0 %v4744
        %v4887 = vpop.f32.mrb[0].mxu0
        %v4888 = vadd.f32 %v1484, %v4887
        %v4889 = vpop.f32.mrb[0].mxu0
        %4890 = vdwg.mxu0
        %4891 = vmax.xlane.f32.xlu0 %v4813
        %v4892 = vpop.xlane.xlu0 %4891
        %4893 = vmax.xlane.f32.xlu0 %v4818
        %v4894 = vpop.xlane.xlu0 %4893
        %4895 = vmax.xlane.f32.xlu0 %v4823
        %v4896 = vpop.xlane.xlu0 %4895
        %4897 = vmax.xlane.f32.xlu0 %v4828
        %v4898 = vpop.xlane.xlu0 %4897
        %4899 = vmax.xlane.f32.xlu0 %v4833
        %v4900 = vpop.xlane.xlu0 %4899
        %4901 = vmax.xlane.f32.xlu0 %v4838
        %v4902 = vpop.xlane.xlu0 %4901
        %4903 = vmax.xlane.f32.xlu0 %v4843
        %v4904 = vpop.xlane.xlu0 %4903
        %4905 = vmax.xlane.f32.xlu0 %v4848
        %v4906 = vpop.xlane.xlu0 %4905
        %4907 = vmax.xlane.f32.xlu0 %v4853
        %v4908 = vpop.xlane.xlu0 %4907
        %4909 = vmax.xlane.f32.xlu0 %v4858
        %v4910 = vpop.xlane.xlu0 %4909
        %4911 = vmax.xlane.f32.xlu0 %v4863
        %v4912 = vpop.xlane.xlu0 %4911
        %4913 = vmax.xlane.f32.xlu0 %v4868
        %v4914 = vpop.xlane.xlu0 %4913
        %4915 = vmax.xlane.f32.xlu0 %v4873
        %v4916 = vpop.xlane.xlu0 %4915
        %4917 = vmax.xlane.f32.xlu0 %v4878
        %v4918 = vpop.xlane.xlu0 %4917
        %4919 = vmax.xlane.f32.xlu0 %v4883
        %v4920 = vpop.xlane.xlu0 %4919
        %4921 = vmax.xlane.f32.xlu0 %v4888
        %v4922 = vpop.xlane.xlu0 %4921
        %v4923 = vsub.f32 %v4813, %v4892
        %v4924 = vsub.f32 %v4818, %v4894
        %v4925 = vsub.f32 %v4823, %v4896
        %v4926 = vsub.f32 %v4828, %v4898
        %v4927 = vsub.f32 %v4833, %v4900
        %v4928 = vsub.f32 %v4838, %v4902
        %v4929 = vsub.f32 %v4843, %v4904
        %v4930 = vsub.f32 %v4848, %v4906
        %v4931 = vsub.f32 %v4853, %v4908
        %v4932 = vsub.f32 %v4858, %v4910
        %v4933 = vsub.f32 %v4863, %v4912
        %v4934 = vsub.f32 %v4868, %v4914
        %v4935 = vsub.f32 %v4873, %v4916
        %v4936 = vsub.f32 %v4878, %v4918
        %v4937 = vsub.f32 %v4883, %v4920
        %v4938 = vsub.f32 %v4888, %v4922
        %v4939 = vmul.f32 %v4923, 1.442695
        %v4940 = vpow.pop %v4939
        %v4941 = vmul.f32 %v4924, 1.442695
        %v4942 = vpow.pop %v4941
        %v4943 = vmul.f32 %v4925, 1.442695
        %v4944 = vpow.pop %v4943
        %v4945 = vmul.f32 %v4926, 1.442695
        %v4946 = vpow.pop %v4945
        %v4947 = vmul.f32 %v4927, 1.442695
        %v4948 = vpow.pop %v4947
        %v4949 = vmul.f32 %v4928, 1.442695
        %v4950 = vpow.pop %v4949
        %v4951 = vmul.f32 %v4929, 1.442695
        %v4952 = vpow.pop %v4951
        %v4953 = vmul.f32 %v4930, 1.442695
        %v4954 = vpow.pop %v4953
        %v4955 = vmul.f32 %v4931, 1.442695
        %v4956 = vpow.pop %v4955
        %v4957 = vmul.f32 %v4932, 1.442695
        %v4958 = vpow.pop %v4957
        %v4959 = vmul.f32 %v4933, 1.442695
        %v4960 = vpow.pop %v4959
        %v4961 = vmul.f32 %v4934, 1.442695
        %v4962 = vpow.pop %v4961
        %v4963 = vmul.f32 %v4935, 1.442695
        %v4964 = vpow.pop %v4963
        %v4965 = vmul.f32 %v4936, 1.442695
        %v4966 = vpow.pop %v4965
        %v4967 = vmul.f32 %v4937, 1.442695
        %v4968 = vpow.pop %v4967
        %v4969 = vmul.f32 %v4938, 1.442695
        %v4970 = vpow.pop %v4969
        %4971 = vadd.xlane.f32.xlu0 %v4940
        %v4972 = vpop.xlane.xlu0 %4971
        %4973 = vadd.xlane.f32.xlu0 %v4942
        %v4974 = vpop.xlane.xlu0 %4973
        %4975 = vadd.xlane.f32.xlu0 %v4944
        %v4976 = vpop.xlane.xlu0 %4975
        %4977 = vadd.xlane.f32.xlu0 %v4946
        %v4978 = vpop.xlane.xlu0 %4977
        %4979 = vadd.xlane.f32.xlu0 %v4948
        %v4980 = vpop.xlane.xlu0 %4979
        %4981 = vadd.xlane.f32.xlu0 %v4950
        %v4982 = vpop.xlane.xlu0 %4981
        %4983 = vadd.xlane.f32.xlu0 %v4952
        %v4984 = vpop.xlane.xlu0 %4983
        %4985 = vadd.xlane.f32.xlu0 %v4954
        %v4986 = vpop.xlane.xlu0 %4985
        %4987 = vadd.xlane.f32.xlu0 %v4956
        %v4988 = vpop.xlane.xlu0 %4987
        %4989 = vadd.xlane.f32.xlu0 %v4958
        %v4990 = vpop.xlane.xlu0 %4989
        %4991 = vadd.xlane.f32.xlu0 %v4960
        %v4992 = vpop.xlane.xlu0 %4991
        %4993 = vadd.xlane.f32.xlu0 %v4962
        %v4994 = vpop.xlane.xlu0 %4993
        %4995 = vadd.xlane.f32.xlu0 %v4964
        %v4996 = vpop.xlane.xlu0 %4995
        %4997 = vadd.xlane.f32.xlu0 %v4966
        %v4998 = vpop.xlane.xlu0 %4997
        %4999 = vadd.xlane.f32.xlu0 %v4968
        %v5000 = vpop.xlane.xlu0 %4999
        %5001 = vadd.xlane.f32.xlu0 %v4970
        %v5002 = vpop.xlane.xlu0 %5001
        %v5003 = vrcp.pop %v4972
        %v5004 = vrcp.pop %v4974
        %v5005 = vrcp.pop %v4976
        %v5006 = vrcp.pop %v4978
        %v5007 = vrcp.pop %v4980
        %v5008 = vrcp.pop %v4982
        %v5009 = vrcp.pop %v4984
        %v5010 = vrcp.pop %v4986
        %v5011 = vrcp.pop %v4988
        %v5012 = vrcp.pop %v4990
        %v5013 = vrcp.pop %v4992
        %v5014 = vrcp.pop %v4994
        %v5015 = vrcp.pop %v4996
        %v5016 = vrcp.pop %v4998
        %v5017 = vrcp.pop %v5000
        %v5018 = vrcp.pop %v5002
        %v5019 = vmul.f32 %v4940, %v5003
        %v5020 = vmul.f32 %v4942, %v5004
        %v5021 = vmul.f32 %v4944, %v5005
        %v5022 = vmul.f32 %v4946, %v5006
        %v5023 = vmul.f32 %v4948, %v5007
        %v5024 = vmul.f32 %v4950, %v5008
        %v5025 = vmul.f32 %v4952, %v5009
        %v5026 = vmul.f32 %v4954, %v5010
        %v5027 = vmul.f32 %v4956, %v5011
        %v5028 = vmul.f32 %v4958, %v5012
        %v5029 = vmul.f32 %v4960, %v5013
        %v5030 = vmul.f32 %v4962, %v5014
        %v5031 = vmul.f32 %v4964, %v5015
        %v5032 = vmul.f32 %v4966, %v5016
        %v5033 = vmul.f32 %v4968, %v5017
        %v5034 = vmul.f32 %v4970, %v5018
        %v5035 = vmul.f32 %v4187, %v1892
        %v5036 = vmul.f32 %v4192, %v1892
        %v5037 = vmul.f32 %v4197, %v1892
        %v5038 = vmul.f32 %v4202, %v1892
        %v5039 = vmul.f32 %v4207, %v1892
        %v5040 = vmul.f32 %v4212, %v1892
        %v5041 = vmul.f32 %v4217, %v1892
        %v5042 = vmul.f32 %v4222, %v1892
        %v5043 = vmul.f32 %v4227, %v1892
        %v5044 = vmul.f32 %v4232, %v1892
        %v5045 = vmul.f32 %v4237, %v1892
        %v5046 = vmul.f32 %v4242, %v1892
        %v5047 = vmul.f32 %v4247, %v1892
        %v5048 = vmul.f32 %v4252, %v1892
        %v5049 = vmul.f32 %v4257, %v1892
        %v5050 = vmul.f32 %v4262, %v1892
        %5051 = vmatprep.subr.mxu0 0.0
        %5052 = vmatpush1.msra.mxu0 %v5035
        %5053 = vmatprep.subr.mxu0 0.0
        %5054 = vmatpush1.msra.mxu0 %v5036
        %5055 = vmatprep.subr.mxu0 0.0
        %5056 = vmatpush1.msra.mxu0 %v5037
        %5057 = vmatprep.subr.mxu0 0.0
        %5058 = vmatpush1.msra.mxu0 %v5038
        %5059 = vmatprep.subr.mxu0 0.0
        %5060 = vmatpush1.msra.mxu0 %v5039
        %5061 = vmatprep.subr.mxu0 0.0
        %5062 = vmatpush1.msra.mxu0 %v5040
        %5063 = vmatprep.subr.mxu0 0.0
        %5064 = vmatpush1.msra.mxu0 %v5041
        %5065 = vmatprep.subr.mxu0 0.0
        %5066 = vmatpush1.msra.mxu0 %v5042
        %5067 = vmatprep.subr.mxu0 0.0
        %5068 = vmatpush1.msra.mxu0 %v5043
        %5069 = vmatprep.subr.mxu0 0.0
        %5070 = vmatpush1.msra.mxu0 %v5044
        %5071 = vmatprep.subr.mxu0 0.0
        %5072 = vmatpush1.msra.mxu0 %v5045
        %5073 = vmatprep.subr.mxu0 0.0
        %5074 = vmatpush1.msra.mxu0 %v5046
        %5075 = vmatprep.subr.mxu0 0.0
        %5076 = vmatpush1.msra.mxu0 %v5047
        %5077 = vmatprep.subr.mxu0 0.0
        %5078 = vmatpush1.msra.mxu0 %v5048
        %5079 = vmatprep.subr.mxu0 0.0
        %5080 = vmatpush1.msra.mxu0 %v5049
        %5081 = vmatprep.subr.mxu0 0.0
        %5082 = vmatpush1.msra.mxu0 %v5050
        %5083 = vmatprep.subr.mxu0 0.0
        %5084 = vmatpush1.msra.mxu0 0.0
        %5085 = vmatprep.subr.mxu0 0.0
        %5086 = vmatpush1.msra.mxu0 0.0
        %5087 = vmatprep.subr.mxu0 0.0
        %5088 = vmatpush1.msra.mxu0 0.0
        %5089 = vmatprep.subr.mxu0 0.0
        %5090 = vmatpush1.msra.mxu0 0.0
        %5091 = vmatprep.subr.mxu0 0.0
        %5092 = vmatpush1.msra.mxu0 0.0
        %5093 = vmatprep.subr.mxu0 0.0
        %5094 = vmatpush1.msra.mxu0 0.0
        %5095 = vmatprep.subr.mxu0 0.0
        %5096 = vmatpush1.msra.mxu0 0.0
        %5097 = vmatprep.subr.mxu0 0.0
        %5098 = vmatpush1.msra.mxu0 0.0
        %5099 = vmatprep.subr.mxu0 0.0
        %5100 = vmatpush1.msra.mxu0 0.0
        %5101 = vmatprep.subr.mxu0 0.0
        %5102 = vmatpush1.msra.mxu0 0.0
        %5103 = vmatprep.subr.mxu0 0.0
        %5104 = vmatpush1.msra.mxu0 0.0
        %5105 = vmatprep.subr.mxu0 0.0
        %5106 = vmatpush1.msra.mxu0 0.0
        %5107 = vmatprep.subr.mxu0 0.0
        %5108 = vmatpush1.msra.mxu0 0.0
        %5109 = vmatprep.subr.mxu0 0.0
        %5110 = vmatpush1.msra.mxu0 0.0
        %5111 = vmatprep.subr.mxu0 0.0
        %5112 = vmatpush1.msra.mxu0 0.0
        %5113 = vmatprep.subr.mxu0 0.0
        %5114 = vmatpush1.msra.mxu0 0.0
        %5115 = vmatprep.mubr.f32.mxu0 0.0
        %5116 = vmatmul.mubr.f32.gmra.mrb[0].mxu0 %v5019
        %v5117 = vpop.f32.mrb[0].mxu0
        %v5118 = vadd.f32 0.0, %v5117
        %v5119 = vpop.f32.mrb[0].mxu0
        %5120 = vmatprep.mubr.f32.mxu0 0.0
        %5121 = vmatmul.mubr.f32.gmra.mrb[0].mxu0 %v5020
        %v5122 = vpop.f32.mrb[0].mxu0
        %v5123 = vadd.f32 0.0, %v5122
        %v5124 = vpop.f32.mrb[0].mxu0
        %5125 = vmatprep.mubr.f32.mxu0 0.0
        %5126 = vmatmul.mubr.f32.gmra.mrb[0].mxu0 %v5021
        %v5127 = vpop.f32.mrb[0].mxu0
        %v5128 = vadd.f32 0.0, %v5127
        %v5129 = vpop.f32.mrb[0].mxu0
        %5130 = vmatprep.mubr.f32.mxu0 0.0
        %5131 = vmatmul.mubr.f32.gmra.mrb[0].mxu0 %v5022
        %v5132 = vpop.f32.mrb[0].mxu0
        %v5133 = vadd.f32 0.0, %v5132
        %v5134 = vpop.f32.mrb[0].mxu0
        %5135 = vmatprep.mubr.f32.mxu0 0.0
        %5136 = vmatmul.mubr.f32.gmra.mrb[0].mxu0 %v5023
        %v5137 = vpop.f32.mrb[0].mxu0
        %v5138 = vadd.f32 0.0, %v5137
        %v5139 = vpop.f32.mrb[0].mxu0
        %5140 = vmatprep.mubr.f32.mxu0 0.0
        %5141 = vmatmul.mubr.f32.gmra.mrb[0].mxu0 %v5024
        %v5142 = vpop.f32.mrb[0].mxu0
        %v5143 = vadd.f32 0.0, %v5142
        %v5144 = vpop.f32.mrb[0].mxu0
        %5145 = vmatprep.mubr.f32.mxu0 0.0
        %5146 = vmatmul.mubr.f32.gmra.mrb[0].mxu0 %v5025
        %v5147 = vpop.f32.mrb[0].mxu0
        %v5148 = vadd.f32 0.0, %v5147
        %v5149 = vpop.f32.mrb[0].mxu0
        %5150 = vmatprep.mubr.f32.mxu0 0.0
        %5151 = vmatmul.mubr.f32.gmra.mrb[0].mxu0 %v5026
        %v5152 = vpop.f32.mrb[0].mxu0
        %v5153 = vadd.f32 0.0, %v5152
        %v5154 = vpop.f32.mrb[0].mxu0
        %5155 = vmatprep.mubr.f32.mxu0 0.0
        %5156 = vmatmul.mubr.f32.gmra.mrb[0].mxu0 %v5027
        %v5157 = vpop.f32.mrb[0].mxu0
        %v5158 = vadd.f32 0.0, %v5157
        %v5159 = vpop.f32.mrb[0].mxu0
        %5160 = vmatprep.mubr.f32.mxu0 0.0
        %5161 = vmatmul.mubr.f32.gmra.mrb[0].mxu0 %v5028
        %v5162 = vpop.f32.mrb[0].mxu0
        %v5163 = vadd.f32 0.0, %v5162
        %v5164 = vpop.f32.mrb[0].mxu0
        %5165 = vmatprep.mubr.f32.mxu0 0.0
        %5166 = vmatmul.mubr.f32.gmra.mrb[0].mxu0 %v5029
        %v5167 = vpop.f32.mrb[0].mxu0
        %v5168 = vadd.f32 0.0, %v5167
        %v5169 = vpop.f32.mrb[0].mxu0
        %5170 = vmatprep.mubr.f32.mxu0 0.0
        %5171 = vmatmul.mubr.f32.gmra.mrb[0].mxu0 %v5030
        %v5172 = vpop.f32.mrb[0].mxu0
        %v5173 = vadd.f32 0.0, %v5172
        %v5174 = vpop.f32.mrb[0].mxu0
        %5175 = vmatprep.mubr.f32.mxu0 0.0
        %5176 = vmatmul.mubr.f32.gmra.mrb[0].mxu0 %v5031
        %v5177 = vpop.f32.mrb[0].mxu0
        %v5178 = vadd.f32 0.0, %v5177
        %v5179 = vpop.f32.mrb[0].mxu0
        %5180 = vmatprep.mubr.f32.mxu0 0.0
        %5181 = vmatmul.mubr.f32.gmra.mrb[0].mxu0 %v5032
        %v5182 = vpop.f32.mrb[0].mxu0
        %v5183 = vadd.f32 0.0, %v5182
        %v5184 = vpop.f32.mrb[0].mxu0
        %5185 = vmatprep.mubr.f32.mxu0 0.0
        %5186 = vmatmul.mubr.f32.gmra.mrb[0].mxu0 %v5033
        %v5187 = vpop.f32.mrb[0].mxu0
        %v5188 = vadd.f32 0.0, %v5187
        %v5189 = vpop.f32.mrb[0].mxu0
        %5190 = vmatprep.mubr.f32.mxu0 0.0
        %5191 = vmatmul.mubr.f32.gmra.mrb[0].mxu0 %v5034
        %v5192 = vpop.f32.mrb[0].mxu0
        %v5193 = vadd.f32 0.0, %v5192
        %v5194 = vpop.f32.mrb[0].mxu0
        %5195 = vdwg.mxu0
        %5196 = vmatprep.subr.mxu0 0.0
        %5197 = vmatpush1.msra.mxu0 %v4666
        %5198 = vmatprep.subr.mxu0 0.0
        %5199 = vmatpush1.msra.mxu0 %v4667
        %5200 = vmatprep.subr.mxu0 0.0
        %5201 = vmatpush1.msra.mxu0 %v4668
        %5202 = vmatprep.subr.mxu0 0.0
        %5203 = vmatpush1.msra.mxu0 %v4669
        %5204 = vmatprep.subr.mxu0 0.0
        %5205 = vmatpush1.msra.mxu0 %v4670
        %5206 = vmatprep.subr.mxu0 0.0
        %5207 = vmatpush1.msra.mxu0 %v4671
        %5208 = vmatprep.subr.mxu0 0.0
        %5209 = vmatpush1.msra.mxu0 %v4672
        %5210 = vmatprep.subr.mxu0 0.0
        %5211 = vmatpush1.msra.mxu0 %v4673
        %5212 = vmatprep.subr.mxu0 0.0
        %5213 = vmatpush1.msra.mxu0 %v4674
        %5214 = vmatprep.subr.mxu0 0.0
        %5215 = vmatpush1.msra.mxu0 %v4675
        %5216 = vmatprep.subr.mxu0 0.0
        %5217 = vmatpush1.msra.mxu0 %v4676
        %5218 = vmatprep.subr.mxu0 0.0
        %5219 = vmatpush1.msra.mxu0 %v4677
        %5220 = vmatprep.subr.mxu0 0.0
        %5221 = vmatpush1.msra.mxu0 %v4678
        %5222 = vmatprep.subr.mxu0 0.0
        %5223 = vmatpush1.msra.mxu0 %v4679
        %5224 = vmatprep.subr.mxu0 0.0
        %5225 = vmatpush1.msra.mxu0 %v4680
        %5226 = vmatprep.subr.mxu0 0.0
        %5227 = vmatpush1.msra.mxu0 %v4681
        %5228 = vmatprep.subr.mxu0 0.0
        %5229 = vmatpush1.msra.mxu0 0.0
        %5230 = vmatprep.subr.mxu0 0.0
        %5231 = vmatpush1.msra.mxu0 0.0
        %5232 = vmatprep.subr.mxu0 0.0
        %5233 = vmatpush1.msra.mxu0 0.0
        %5234 = vmatprep.subr.mxu0 0.0
        %5235 = vmatpush1.msra.mxu0 0.0
        %5236 = vmatprep.subr.mxu0 0.0
        %5237 = vmatpush1.msra.mxu0 0.0
        %5238 = vmatprep.subr.mxu0 0.0
        %5239 = vmatpush1.msra.mxu0 0.0
        %5240 = vmatprep.subr.mxu0 0.0
        %5241 = vmatpush1.msra.mxu0 0.0
        %5242 = vmatprep.subr.mxu0 0.0
        %5243 = vmatpush1.msra.mxu0 0.0
        %5244 = vmatprep.subr.mxu0 0.0
        %5245 = vmatpush1.msra.mxu0 0.0
        %5246 = vmatprep.subr.mxu0 0.0
        %5247 = vmatpush1.msra.mxu0 0.0
        %5248 = vmatprep.subr.mxu0 0.0
        %5249 = vmatpush1.msra.mxu0 0.0
        %5250 = vmatprep.subr.mxu0 0.0
        %5251 = vmatpush1.msra.mxu0 0.0
        %5252 = vmatprep.subr.mxu0 0.0
        %5253 = vmatpush1.msra.mxu0 0.0
        %5254 = vmatprep.subr.mxu0 0.0
        %5255 = vmatpush1.msra.mxu0 0.0
        %5256 = vmatprep.subr.mxu0 0.0
        %5257 = vmatpush1.msra.mxu0 0.0
        %5258 = vmatprep.subr.mxu0 0.0
        %5259 = vmatpush1.msra.mxu0 0.0
        %5260 = vmatprep.mubr.f32.mxu0 0.0
        %5261 = vmatmul.mubr.f32.gmra.mrb[0].mxu0 %v4650
        %v5262 = vpop.f32.mrb[0].mxu0
        %v5263 = vadd.f32 %v5118, %v5262
        %v5264 = vpop.f32.mrb[0].mxu0
        %5265 = vmatprep.mubr.f32.mxu0 0.0
        %5266 = vmatmul.mubr.f32.gmra.mrb[0].mxu0 %v4651
        %v5267 = vpop.f32.mrb[0].mxu0
        %v5268 = vadd.f32 %v5123, %v5267
        %v5269 = vpop.f32.mrb[0].mxu0
        %5270 = vmatprep.mubr.f32.mxu0 0.0
        %5271 = vmatmul.mubr.f32.gmra.mrb[0].mxu0 %v4652
        %v5272 = vpop.f32.mrb[0].mxu0
        %v5273 = vadd.f32 %v5128, %v5272
        %v5274 = vpop.f32.mrb[0].mxu0
        %5275 = vmatprep.mubr.f32.mxu0 0.0
        %5276 = vmatmul.mubr.f32.gmra.mrb[0].mxu0 %v4653
        %v5277 = vpop.f32.mrb[0].mxu0
        %v5278 = vadd.f32 %v5133, %v5277
        %v5279 = vpop.f32.mrb[0].mxu0
        %5280 = vmatprep.mubr.f32.mxu0 0.0
        %5281 = vmatmul.mubr.f32.gmra.mrb[0].mxu0 %v4654
        %v5282 = vpop.f32.mrb[0].mxu0
        %v5283 = vadd.f32 %v5138, %v5282
        %v5284 = vpop.f32.mrb[0].mxu0
        %5285 = vmatprep.mubr.f32.mxu0 0.0
        %5286 = vmatmul.mubr.f32.gmra.mrb[0].mxu0 %v4655
        %v5287 = vpop.f32.mrb[0].mxu0
        %v5288 = vadd.f32 %v5143, %v5287
        %v5289 = vpop.f32.mrb[0].mxu0
        %5290 = vmatprep.mubr.f32.mxu0 0.0
        %5291 = vmatmul.mubr.f32.gmra.mrb[0].mxu0 %v4656
        %v5292 = vpop.f32.mrb[0].mxu0
        %v5293 = vadd.f32 %v5148, %v5292
        %v5294 = vpop.f32.mrb[0].mxu0
        %5295 = vmatprep.mubr.f32.mxu0 0.0
        %5296 = vmatmul.mubr.f32.gmra.mrb[0].mxu0 %v4657
        %v5297 = vpop.f32.mrb[0].mxu0
        %v5298 = vadd.f32 %v5153, %v5297
        %v5299 = vpop.f32.mrb[0].mxu0
        %5300 = vmatprep.mubr.f32.mxu0 0.0
        %5301 = vmatmul.mubr.f32.gmra.mrb[0].mxu0 %v4658
        %v5302 = vpop.f32.mrb[0].mxu0
        %v5303 = vadd.f32 %v5158, %v5302
        %v5304 = vpop.f32.mrb[0].mxu0
        %5305 = vmatprep.mubr.f32.mxu0 0.0
        %5306 = vmatmul.mubr.f32.gmra.mrb[0].mxu0 %v4659
        %v5307 = vpop.f32.mrb[0].mxu0
        %v5308 = vadd.f32 %v5163, %v5307
        %v5309 = vpop.f32.mrb[0].mxu0
        %5310 = vmatprep.mubr.f32.mxu0 0.0
        %5311 = vmatmul.mubr.f32.gmra.mrb[0].mxu0 %v4660
        %v5312 = vpop.f32.mrb[0].mxu0
        %v5313 = vadd.f32 %v5168, %v5312
        %v5314 = vpop.f32.mrb[0].mxu0
        %5315 = vmatprep.mubr.f32.mxu0 0.0
        %5316 = vmatmul.mubr.f32.gmra.mrb[0].mxu0 %v4661
        %v5317 = vpop.f32.mrb[0].mxu0
        %v5318 = vadd.f32 %v5173, %v5317
        %v5319 = vpop.f32.mrb[0].mxu0
        %5320 = vmatprep.mubr.f32.mxu0 0.0
        %5321 = vmatmul.mubr.f32.gmra.mrb[0].mxu0 %v4662
        %v5322 = vpop.f32.mrb[0].mxu0
        %v5323 = vadd.f32 %v5178, %v5322
        %v5324 = vpop.f32.mrb[0].mxu0
        %5325 = vmatprep.mubr.f32.mxu0 0.0
        %5326 = vmatmul.mubr.f32.gmra.mrb[0].mxu0 %v4663
        %v5327 = vpop.f32.mrb[0].mxu0
        %v5328 = vadd.f32 %v5183, %v5327
        %v5329 = vpop.f32.mrb[0].mxu0
        %5330 = vmatprep.mubr.f32.mxu0 0.0
        %5331 = vmatmul.mubr.f32.gmra.mrb[0].mxu0 %v4664
        %v5332 = vpop.f32.mrb[0].mxu0
        %v5333 = vadd.f32 %v5188, %v5332
        %v5334 = vpop.f32.mrb[0].mxu0
        %5335 = vmatprep.mubr.f32.mxu0 0.0
        %5336 = vmatmul.mubr.f32.gmra.mrb[0].mxu0 %v4665
        %v5337 = vpop.f32.mrb[0].mxu0
        %v5338 = vadd.f32 %v5193, %v5337
        %v5339 = vpop.f32.mrb[0].mxu0
        %5340 = vdwg.mxu0
        %s5341 = scalar_lea.vmem [#allocation8], 32
        %v5342 = vld [vmem:[%s5341] sm:$0xff]
        %v5343 = vld [vmem:[%s5341 + $0x8] sm:$0xff]
        %v5344 = vld [vmem:[%s5341 + $0x10] sm:$0xff]
        %v5345 = vld [vmem:[%s5341 + $0x18] sm:$0xff]
        %s5346 = scalar_lea.vmem %s12, 1
        %v5347 = vld [vmem:[%s5346] sm:$0x1]
        %v5349 = vlaneseq
        %v5350 = vshrl.u32 %v5349, 7
        %v5351 = vsub.s32 0, %v5350
        %v5352 = vrot.slane %v5347, %v5351
        %v5355 = vsel %vm940, %v5263, 0
        %v5358 = vsel %vm940, %v5268, 0
        %v5361 = vsel %vm940, %v5273, 0
        %v5364 = vsel %vm940, %v5278, 0
        %v5367 = vsel %vm940, %v5283, 0
        %v5370 = vsel %vm940, %v5288, 0
        %v5373 = vsel %vm940, %v5293, 0
        %v5376 = vsel %vm940, %v5298, 0
        %v5379 = vsel %vm940, %v5303, 0
        %v5382 = vsel %vm940, %v5308, 0
        %v5385 = vsel %vm940, %v5313, 0
        %v5388 = vsel %vm940, %v5318, 0
        %v5391 = vsel %vm940, %v5323, 0
        %v5394 = vsel %vm940, %v5328, 0
        %v5397 = vsel %vm940, %v5333, 0
        %v5400 = vsel %vm940, %v5338, 0
        %5402 = vmatprep.subr.mxu0 0.0
        %5403 = vmatpush1.msra.mxu0 %v5342
        %5404 = vmatprep.subr.mxu0 0.0
        %5405 = vmatpush1.msra.mxu0 %v5343
        %5406 = vmatprep.subr.mxu0 0.0
        %5407 = vmatpush1.msra.mxu0 %v5344
        %5408 = vmatprep.subr.mxu0 0.0
        %5409 = vmatpush1.msra.mxu0 %v5345
        %5410 = vmatprep.subr.mxu0 0.0
        %5411 = vmatpush1.msra.mxu0 0.0
        %5412 = vmatprep.subr.mxu0 0.0
        %5413 = vmatpush1.msra.mxu0 0.0
        %5414 = vmatprep.subr.mxu0 0.0
        %5415 = vmatpush1.msra.mxu0 0.0
        %5416 = vmatprep.subr.mxu0 0.0
        %5417 = vmatpush1.msra.mxu0 0.0
        %5418 = vmatprep.subr.mxu0 0.0
        %5419 = vmatpush1.msra.mxu0 0.0
        %5420 = vmatprep.subr.mxu0 0.0
        %5421 = vmatpush1.msra.mxu0 0.0
        %5422 = vmatprep.subr.mxu0 0.0
        %5423 = vmatpush1.msra.mxu0 0.0
        %5424 = vmatprep.subr.mxu0 0.0
        %5425 = vmatpush1.msra.mxu0 0.0
        %5426 = vmatprep.subr.mxu0 0.0
        %5427 = vmatpush1.msra.mxu0 0.0
        %5428 = vmatprep.subr.mxu0 0.0
        %5429 = vmatpush1.msra.mxu0 0.0
        %5430 = vmatprep.subr.mxu0 0.0
        %5431 = vmatpush1.msra.mxu0 0.0
        %5432 = vmatprep.subr.mxu0 0.0
        %5433 = vmatpush1.msra.mxu0 0.0
        %5434 = vmatprep.subr.mxu0 0.0
        %5435 = vmatpush1.msra.mxu0 0.0
        %5436 = vmatprep.subr.mxu0 0.0
        %5437 = vmatpush1.msra.mxu0 0.0
        %5438 = vmatprep.subr.mxu0 0.0
        %5439 = vmatpush1.msra.mxu0 0.0
        %5440 = vmatprep.subr.mxu0 0.0
        %5441 = vmatpush1.msra.mxu0 0.0
        %5442 = vmatprep.subr.mxu0 0.0
        %5443 = vmatpush1.msra.mxu0 0.0
        %5444 = vmatprep.subr.mxu0 0.0
        %5445 = vmatpush1.msra.mxu0 0.0
        %5446 = vmatprep.subr.mxu0 0.0
        %5447 = vmatpush1.msra.mxu0 0.0
        %5448 = vmatprep.subr.mxu0 0.0
        %5449 = vmatpush1.msra.mxu0 0.0
        %5450 = vmatprep.subr.mxu0 0.0
        %5451 = vmatpush1.msra.mxu0 0.0
        %5452 = vmatprep.subr.mxu0 0.0
        %5453 = vmatpush1.msra.mxu0 0.0
        %5454 = vmatprep.subr.mxu0 0.0
        %5455 = vmatpush1.msra.mxu0 0.0
        %5456 = vmatprep.subr.mxu0 0.0
        %5457 = vmatpush1.msra.mxu0 0.0
        %5458 = vmatprep.subr.mxu0 0.0
        %5459 = vmatpush1.msra.mxu0 0.0
        %5460 = vmatprep.subr.mxu0 0.0
        %5461 = vmatpush1.msra.mxu0 0.0
        %5462 = vmatprep.subr.mxu0 0.0
        %5463 = vmatpush1.msra.mxu0 0.0
        %5464 = vmatprep.subr.mxu0 0.0
        %5465 = vmatpush1.msra.mxu0 0.0
        %5466 = vmatprep.mubr.f32.mxu0 0.0
        %5467 = vmatmul.mubr.f32.gmra.mrb[0].mxu0 %v5355
        %v5468 = vpop.f32.mrb[0].mxu0
        %v5469 = vadd.f32 %v5352, %v5468
        %v5470 = vpop.f32.mrb[0].mxu0
        %5471 = vmatprep.mubr.f32.mxu0 0.0
        %5472 = vmatmul.mubr.f32.gmra.mrb[0].mxu0 %v5358
        %v5473 = vpop.f32.mrb[0].mxu0
        %v5474 = vadd.f32 %v5352, %v5473
        %v5475 = vpop.f32.mrb[0].mxu0
        %5476 = vmatprep.mubr.f32.mxu0 0.0
        %5477 = vmatmul.mubr.f32.gmra.mrb[0].mxu0 %v5361
        %v5478 = vpop.f32.mrb[0].mxu0
        %v5479 = vadd.f32 %v5352, %v5478
        %v5480 = vpop.f32.mrb[0].mxu0
        %5481 = vmatprep.mubr.f32.mxu0 0.0
        %5482 = vmatmul.mubr.f32.gmra.mrb[0].mxu0 %v5364
        %v5483 = vpop.f32.mrb[0].mxu0
        %v5484 = vadd.f32 %v5352, %v5483
        %v5485 = vpop.f32.mrb[0].mxu0
        %5486 = vmatprep.mubr.f32.mxu0 0.0
        %5487 = vmatmul.mubr.f32.gmra.mrb[0].mxu0 %v5367
        %v5488 = vpop.f32.mrb[0].mxu0
        %v5489 = vadd.f32 %v5352, %v5488
        %v5490 = vpop.f32.mrb[0].mxu0
        %5491 = vmatprep.mubr.f32.mxu0 0.0
        %5492 = vmatmul.mubr.f32.gmra.mrb[0].mxu0 %v5370
        %v5493 = vpop.f32.mrb[0].mxu0
        %v5494 = vadd.f32 %v5352, %v5493
        %v5495 = vpop.f32.mrb[0].mxu0
        %5496 = vmatprep.mubr.f32.mxu0 0.0
        %5497 = vmatmul.mubr.f32.gmra.mrb[0].mxu0 %v5373
        %v5498 = vpop.f32.mrb[0].mxu0
        %v5499 = vadd.f32 %v5352, %v5498
        %v5500 = vpop.f32.mrb[0].mxu0
        %5501 = vmatprep.mubr.f32.mxu0 0.0
        %5502 = vmatmul.mubr.f32.gmra.mrb[0].mxu0 %v5376
        %v5503 = vpop.f32.mrb[0].mxu0
        %v5504 = vadd.f32 %v5352, %v5503
        %v5505 = vpop.f32.mrb[0].mxu0
        %5506 = vmatprep.mubr.f32.mxu0 0.0
        %5507 = vmatmul.mubr.f32.gmra.mrb[0].mxu0 %v5379
        %v5508 = vpop.f32.mrb[0].mxu0
        %v5509 = vadd.f32 %v5352, %v5508
        %v5510 = vpop.f32.mrb[0].mxu0
        %5511 = vmatprep.mubr.f32.mxu0 0.0
        %5512 = vmatmul.mubr.f32.gmra.mrb[0].mxu0 %v5382
        %v5513 = vpop.f32.mrb[0].mxu0
        %v5514 = vadd.f32 %v5352, %v5513
        %v5515 = vpop.f32.mrb[0].mxu0
        %5516 = vmatprep.mubr.f32.mxu0 0.0
        %5517 = vmatmul.mubr.f32.gmra.mrb[0].mxu0 %v5385
        %v5518 = vpop.f32.mrb[0].mxu0
        %v5519 = vadd.f32 %v5352, %v5518
        %v5520 = vpop.f32.mrb[0].mxu0
        %5521 = vmatprep.mubr.f32.mxu0 0.0
        %5522 = vmatmul.mubr.f32.gmra.mrb[0].mxu0 %v5388
        %v5523 = vpop.f32.mrb[0].mxu0
        %v5524 = vadd.f32 %v5352, %v5523
        %v5525 = vpop.f32.mrb[0].mxu0
        %5526 = vmatprep.mubr.f32.mxu0 0.0
        %5527 = vmatmul.mubr.f32.gmra.mrb[0].mxu0 %v5391
        %v5528 = vpop.f32.mrb[0].mxu0
        %v5529 = vadd.f32 %v5352, %v5528
        %v5530 = vpop.f32.mrb[0].mxu0
        %5531 = vmatprep.mubr.f32.mxu0 0.0
        %5532 = vmatmul.mubr.f32.gmra.mrb[0].mxu0 %v5394
        %v5533 = vpop.f32.mrb[0].mxu0
        %v5534 = vadd.f32 %v5352, %v5533
        %v5535 = vpop.f32.mrb[0].mxu0
        %5536 = vmatprep.mubr.f32.mxu0 0.0
        %5537 = vmatmul.mubr.f32.gmra.mrb[0].mxu0 %v5397
        %v5538 = vpop.f32.mrb[0].mxu0
        %v5539 = vadd.f32 %v5352, %v5538
        %v5540 = vpop.f32.mrb[0].mxu0
        %5541 = vmatprep.mubr.f32.mxu0 0.0
        %5542 = vmatmul.mubr.f32.gmra.mrb[0].mxu0 %v5400
        %v5543 = vpop.f32.mrb[0].mxu0
        %v5544 = vadd.f32 %v5352, %v5543
        %v5545 = vpop.f32.mrb[0].mxu0
        %5546 = vdwg.mxu0
        %v5547 = vadd.f32 %v3727, %v5469
        %v5548 = vadd.f32 %v3728, %v5474
        %v5549 = vadd.f32 %v3729, %v5479
        %v5550 = vadd.f32 %v3730, %v5484
        %v5551 = vadd.f32 %v3731, %v5489
        %v5552 = vadd.f32 %v3732, %v5494
        %v5553 = vadd.f32 %v3733, %v5499
        %v5554 = vadd.f32 %v3734, %v5504
        %v5555 = vadd.f32 %v3735, %v5509
        %v5556 = vadd.f32 %v3736, %v5514
        %v5557 = vadd.f32 %v3737, %v5519
        %v5558 = vadd.f32 %v3738, %v5524
        %v5559 = vadd.f32 %v3739, %v5529
        %v5560 = vadd.f32 %v3740, %v5534
        %v5561 = vadd.f32 %v3741, %v5539
        %v5562 = vadd.f32 %v3742, %v5544
        %s5563 = scalar_lea.vmem %s17, 1
        %v5564 = vld [vmem:[%s5563] sm:$0x1]
        %s5565 = scalar_lea.vmem %s18, 1
        %v5566 = vld [vmem:[%s5565] sm:$0x1]
        %v5567 = vsel %vm940, %v5547, 0.0
        %5568 = vadd.xlane.f32.xlu0 %v5567
        %v5569 = vpop.xlane.xlu0 %5568
        %v5570 = vsel %vm940, %v5548, 0.0
        %5571 = vadd.xlane.f32.xlu0 %v5570
        %v5572 = vpop.xlane.xlu0 %5571
        %v5573 = vsel %vm940, %v5549, 0.0
        %5574 = vadd.xlane.f32.xlu0 %v5573
        %v5575 = vpop.xlane.xlu0 %5574
        %v5576 = vsel %vm940, %v5550, 0.0
        %5577 = vadd.xlane.f32.xlu0 %v5576
        %v5578 = vpop.xlane.xlu0 %5577
        %v5579 = vsel %vm940, %v5551, 0.0
        %5580 = vadd.xlane.f32.xlu0 %v5579
        %v5581 = vpop.xlane.xlu0 %5580
        %v5582 = vsel %vm940, %v5552, 0.0
        %5583 = vadd.xlane.f32.xlu0 %v5582
        %v5584 = vpop.xlane.xlu0 %5583
        %v5585 = vsel %vm940, %v5553, 0.0
        %5586 = vadd.xlane.f32.xlu0 %v5585
        %v5587 = vpop.xlane.xlu0 %5586
        %v5588 = vsel %vm940, %v5554, 0.0
        %5589 = vadd.xlane.f32.xlu0 %v5588
        %v5590 = vpop.xlane.xlu0 %5589
        %v5591 = vsel %vm940, %v5555, 0.0
        %5592 = vadd.xlane.f32.xlu0 %v5591
        %v5593 = vpop.xlane.xlu0 %5592
        %v5594 = vsel %vm940, %v5556, 0.0
        %5595 = vadd.xlane.f32.xlu0 %v5594
        %v5596 = vpop.xlane.xlu0 %5595
        %v5597 = vsel %vm940, %v5557, 0.0
        %5598 = vadd.xlane.f32.xlu0 %v5597
        %v5599 = vpop.xlane.xlu0 %5598
        %v5600 = vsel %vm940, %v5558, 0.0
        %5601 = vadd.xlane.f32.xlu0 %v5600
        %v5602 = vpop.xlane.xlu0 %5601
        %v5603 = vsel %vm940, %v5559, 0.0
        %5604 = vadd.xlane.f32.xlu0 %v5603
        %v5605 = vpop.xlane.xlu0 %5604
        %v5606 = vsel %vm940, %v5560, 0.0
        %5607 = vadd.xlane.f32.xlu0 %v5606
        %v5608 = vpop.xlane.xlu0 %5607
        %v5609 = vsel %vm940, %v5561, 0.0
        %5610 = vadd.xlane.f32.xlu0 %v5609
        %v5611 = vpop.xlane.xlu0 %5610
        %v5612 = vsel %vm940, %v5562, 0.0
        %5613 = vadd.xlane.f32.xlu0 %v5612
        %v5614 = vpop.xlane.xlu0 %5613
        %v5615 = vmul.f32 %v5569, %v2823
        %v5616 = vmul.f32 %v5572, %v2823
        %v5617 = vmul.f32 %v5575, %v2823
        %v5618 = vmul.f32 %v5578, %v2823
        %v5619 = vmul.f32 %v5581, %v2823
        %v5620 = vmul.f32 %v5584, %v2823
        %v5621 = vmul.f32 %v5587, %v2823
        %v5622 = vmul.f32 %v5590, %v2823
        %v5623 = vmul.f32 %v5593, %v2823
        %v5624 = vmul.f32 %v5596, %v2823
        %v5625 = vmul.f32 %v5599, %v2823
        %v5626 = vmul.f32 %v5602, %v2823
        %v5627 = vmul.f32 %v5605, %v2823
        %v5628 = vmul.f32 %v5608, %v2823
        %v5629 = vmul.f32 %v5611, %v2823
        %v5630 = vmul.f32 %v5614, %v2823
        %v5631 = vsub.f32 %v5547, %v5615
        %v5632 = vsub.f32 %v5548, %v5616
        %v5633 = vsub.f32 %v5549, %v5617
        %v5634 = vsub.f32 %v5550, %v5618
        %v5635 = vsub.f32 %v5551, %v5619
        %v5636 = vsub.f32 %v5552, %v5620
        %v5637 = vsub.f32 %v5553, %v5621
        %v5638 = vsub.f32 %v5554, %v5622
        %v5639 = vsub.f32 %v5555, %v5623
        %v5640 = vsub.f32 %v5556, %v5624
        %v5641 = vsub.f32 %v5557, %v5625
        %v5642 = vsub.f32 %v5558, %v5626
        %v5643 = vsub.f32 %v5559, %v5627
        %v5644 = vsub.f32 %v5560, %v5628
        %v5645 = vsub.f32 %v5561, %v5629
        %v5646 = vsub.f32 %v5562, %v5630
        %v5647 = vmul.f32 %v5631, %v5631
        %v5648 = vmul.f32 %v5632, %v5632
        %v5649 = vmul.f32 %v5633, %v5633
        %v5650 = vmul.f32 %v5634, %v5634
        %v5651 = vmul.f32 %v5635, %v5635
        %v5652 = vmul.f32 %v5636, %v5636
        %v5653 = vmul.f32 %v5637, %v5637
        %v5654 = vmul.f32 %v5638, %v5638
        %v5655 = vmul.f32 %v5639, %v5639
        %v5656 = vmul.f32 %v5640, %v5640
        %v5657 = vmul.f32 %v5641, %v5641
        %v5658 = vmul.f32 %v5642, %v5642
        %v5659 = vmul.f32 %v5643, %v5643
        %v5660 = vmul.f32 %v5644, %v5644
        %v5661 = vmul.f32 %v5645, %v5645
        %v5662 = vmul.f32 %v5646, %v5646
        %v5663 = vsel %vm940, %v5647, 0.0
        %5664 = vadd.xlane.f32.xlu0 %v5663
        %v5665 = vpop.xlane.xlu0 %5664
        %v5666 = vsel %vm940, %v5648, 0.0
        %5667 = vadd.xlane.f32.xlu0 %v5666
        %v5668 = vpop.xlane.xlu0 %5667
        %v5669 = vsel %vm940, %v5649, 0.0
        %5670 = vadd.xlane.f32.xlu0 %v5669
        %v5671 = vpop.xlane.xlu0 %5670
        %v5672 = vsel %vm940, %v5650, 0.0
        %5673 = vadd.xlane.f32.xlu0 %v5672
        %v5674 = vpop.xlane.xlu0 %5673
        %v5675 = vsel %vm940, %v5651, 0.0
        %5676 = vadd.xlane.f32.xlu0 %v5675
        %v5677 = vpop.xlane.xlu0 %5676
        %v5678 = vsel %vm940, %v5652, 0.0
        %5679 = vadd.xlane.f32.xlu0 %v5678
        %v5680 = vpop.xlane.xlu0 %5679
        %v5681 = vsel %vm940, %v5653, 0.0
        %5682 = vadd.xlane.f32.xlu0 %v5681
        %v5683 = vpop.xlane.xlu0 %5682
        %v5684 = vsel %vm940, %v5654, 0.0
        %5685 = vadd.xlane.f32.xlu0 %v5684
        %v5686 = vpop.xlane.xlu0 %5685
        %v5687 = vsel %vm940, %v5655, 0.0
        %5688 = vadd.xlane.f32.xlu0 %v5687
        %v5689 = vpop.xlane.xlu0 %5688
        %v5690 = vsel %vm940, %v5656, 0.0
        %5691 = vadd.xlane.f32.xlu0 %v5690
        %v5692 = vpop.xlane.xlu0 %5691
        %v5693 = vsel %vm940, %v5657, 0.0
        %5694 = vadd.xlane.f32.xlu0 %v5693
        %v5695 = vpop.xlane.xlu0 %5694
        %v5696 = vsel %vm940, %v5658, 0.0
        %5697 = vadd.xlane.f32.xlu0 %v5696
        %v5698 = vpop.xlane.xlu0 %5697
        %v5699 = vsel %vm940, %v5659, 0.0
        %5700 = vadd.xlane.f32.xlu0 %v5699
        %v5701 = vpop.xlane.xlu0 %5700
        %v5702 = vsel %vm940, %v5660, 0.0
        %5703 = vadd.xlane.f32.xlu0 %v5702
        %v5704 = vpop.xlane.xlu0 %5703
        %v5705 = vsel %vm940, %v5661, 0.0
        %5706 = vadd.xlane.f32.xlu0 %v5705
        %v5707 = vpop.xlane.xlu0 %5706
        %v5708 = vsel %vm940, %v5662, 0.0
        %5709 = vadd.xlane.f32.xlu0 %v5708
        %v5710 = vpop.xlane.xlu0 %5709
        %v5711 = vmul.f32 %v5665, %v2823
        %v5712 = vmul.f32 %v5668, %v2823
        %v5713 = vmul.f32 %v5671, %v2823
        %v5714 = vmul.f32 %v5674, %v2823
        %v5715 = vmul.f32 %v5677, %v2823
        %v5716 = vmul.f32 %v5680, %v2823
        %v5717 = vmul.f32 %v5683, %v2823
        %v5718 = vmul.f32 %v5686, %v2823
        %v5719 = vmul.f32 %v5689, %v2823
        %v5720 = vmul.f32 %v5692, %v2823
        %v5721 = vmul.f32 %v5695, %v2823
        %v5722 = vmul.f32 %v5698, %v2823
        %v5723 = vmul.f32 %v5701, %v2823
        %v5724 = vmul.f32 %v5704, %v2823
        %v5725 = vmul.f32 %v5707, %v2823
        %v5726 = vmul.f32 %v5710, %v2823
        %v5727 = vadd.f32 %v5711, 1e-05
        %v5728 = vadd.f32 %v5712, 1e-05
        %v5729 = vadd.f32 %v5713, 1e-05
        %v5730 = vadd.f32 %v5714, 1e-05
        %v5731 = vadd.f32 %v5715, 1e-05
        %v5732 = vadd.f32 %v5716, 1e-05
        %v5733 = vadd.f32 %v5717, 1e-05
        %v5734 = vadd.f32 %v5718, 1e-05
        %v5735 = vadd.f32 %v5719, 1e-05
        %v5736 = vadd.f32 %v5720, 1e-05
        %v5737 = vadd.f32 %v5721, 1e-05
        %v5738 = vadd.f32 %v5722, 1e-05
        %v5739 = vadd.f32 %v5723, 1e-05
        %v5740 = vadd.f32 %v5724, 1e-05
        %v5741 = vadd.f32 %v5725, 1e-05
        %v5742 = vadd.f32 %v5726, 1e-05
        %v5743 = vrsqrt.pop %v5727
        %v5744 = vrsqrt.pop %v5728
        %v5745 = vrsqrt.pop %v5729
        %v5746 = vrsqrt.pop %v5730
        %v5747 = vrsqrt.pop %v5731
        %v5748 = vrsqrt.pop %v5732
        %v5749 = vrsqrt.pop %v5733
        %v5750 = vrsqrt.pop %v5734
        %v5751 = vrsqrt.pop %v5735
        %v5752 = vrsqrt.pop %v5736
        %v5753 = vrsqrt.pop %v5737
        %v5754 = vrsqrt.pop %v5738
        %v5755 = vrsqrt.pop %v5739
        %v5756 = vrsqrt.pop %v5740
        %v5757 = vrsqrt.pop %v5741
        %v5758 = vrsqrt.pop %v5742
        %v5759 = vmul.f32 %v5631, %v5743
        %v5760 = vmul.f32 %v5632, %v5744
        %v5761 = vmul.f32 %v5633, %v5745
        %v5762 = vmul.f32 %v5634, %v5746
        %v5763 = vmul.f32 %v5635, %v5747
        %v5764 = vmul.f32 %v5636, %v5748
        %v5765 = vmul.f32 %v5637, %v5749
        %v5766 = vmul.f32 %v5638, %v5750
        %v5767 = vmul.f32 %v5639, %v5751
        %v5768 = vmul.f32 %v5640, %v5752
        %v5769 = vmul.f32 %v5641, %v5753
        %v5770 = vmul.f32 %v5642, %v5754
        %v5771 = vmul.f32 %v5643, %v5755
        %v5772 = vmul.f32 %v5644, %v5756
        %v5773 = vmul.f32 %v5645, %v5757
        %v5774 = vmul.f32 %v5646, %v5758
        %v5776 = vlaneseq
        %v5777 = vshrl.u32 %v5776, 7
        %v5778 = vsub.s32 0, %v5777
        %v5779 = vrot.slane %v5564, %v5778
        %v5781 = vmul.f32 %v5759, %v5779
        %v5782 = vmul.f32 %v5760, %v5779
        %v5783 = vmul.f32 %v5761, %v5779
        %v5784 = vmul.f32 %v5762, %v5779
        %v5785 = vmul.f32 %v5763, %v5779
        %v5786 = vmul.f32 %v5764, %v5779
        %v5787 = vmul.f32 %v5765, %v5779
        %v5788 = vmul.f32 %v5766, %v5779
        %v5789 = vmul.f32 %v5767, %v5779
        %v5790 = vmul.f32 %v5768, %v5779
        %v5791 = vmul.f32 %v5769, %v5779
        %v5792 = vmul.f32 %v5770, %v5779
        %v5793 = vmul.f32 %v5771, %v5779
        %v5794 = vmul.f32 %v5772, %v5779
        %v5795 = vmul.f32 %v5773, %v5779
        %v5796 = vmul.f32 %v5774, %v5779
        %v5798 = vlaneseq
        %v5799 = vshrl.u32 %v5798, 7
        %v5800 = vsub.s32 0, %v5799
        %v5801 = vrot.slane %v5566, %v5800
        %v5803 = vadd.f32 %v5781, %v5801
        %v5804 = vadd.f32 %v5782, %v5801
        %v5805 = vadd.f32 %v5783, %v5801
        %v5806 = vadd.f32 %v5784, %v5801
        %v5807 = vadd.f32 %v5785, %v5801
        %v5808 = vadd.f32 %v5786, %v5801
        %v5809 = vadd.f32 %v5787, %v5801
        %v5810 = vadd.f32 %v5788, %v5801
        %v5811 = vadd.f32 %v5789, %v5801
        %v5812 = vadd.f32 %v5790, %v5801
        %v5813 = vadd.f32 %v5791, %v5801
        %v5814 = vadd.f32 %v5792, %v5801
        %v5815 = vadd.f32 %v5793, %v5801
        %v5816 = vadd.f32 %v5794, %v5801
        %v5817 = vadd.f32 %v5795, %v5801
        %v5818 = vadd.f32 %v5796, %v5801
        %s5819 = scalar_lea.vmem %s13, 64
        %v5820 = vld [vmem:[%s5819] sm:$0xff]
        %v5821 = vld [vmem:[%s5819 + $0x8] sm:$0xff]
        %v5822 = vld [vmem:[%s5819 + $0x10] sm:$0xff]
        %v5823 = vld [vmem:[%s5819 + $0x18] sm:$0xff]
        %v5824 = vld [vmem:[%s5819 + $0x20] sm:$0xff]
        %v5825 = vld [vmem:[%s5819 + $0x28] sm:$0xff]
        %v5826 = vld [vmem:[%s5819 + $0x30] sm:$0xff]
        %v5827 = vld [vmem:[%s5819 + $0x38] sm:$0xff]
        %s5828 = scalar_lea.vmem %s14, 2
        %v5829 = vld [vmem:[%s5828] sm:$0x3]
        %v5831 = vlaneseq
        %v5832 = vshrl.u32 %v5831, 7
        %v5833 = vsub.s32 0, %v5832
        %v5834 = vrot.slane %v5829, %v5833
        %v5835 = vlaneseq
        %v5836 = vshrl.u32 %v5835, 7
        %v5837 = vsub.s32 1, %v5836
        %v5838 = vrot.slane %v5829, %v5837
        %v5842 = vsel %vm940, %v5803, 0
        %v5845 = vsel %vm940, %v5804, 0
        %v5848 = vsel %vm940, %v5805, 0
        %v5851 = vsel %vm940, %v5806, 0
        %v5854 = vsel %vm940, %v5807, 0
        %v5857 = vsel %vm940, %v5808, 0
        %v5860 = vsel %vm940, %v5809, 0
        %v5863 = vsel %vm940, %v5810, 0
        %v5866 = vsel %vm940, %v5811, 0
        %v5869 = vsel %vm940, %v5812, 0
        %v5872 = vsel %vm940, %v5813, 0
        %v5875 = vsel %vm940, %v5814, 0
        %v5878 = vsel %vm940, %v5815, 0
        %v5881 = vsel %vm940, %v5816, 0
        %v5884 = vsel %vm940, %v5817, 0
        %v5887 = vsel %vm940, %v5818, 0
        %5889 = vmatprep.subr.mxu0 %v5821
        %5890 = vmatpush1.msra.mxu0 %v5820
        %5891 = vmatprep.subr.mxu0 %v5823
        %5892 = vmatpush1.msra.mxu0 %v5822
        %5893 = vmatprep.subr.mxu0 %v5825
        %5894 = vmatpush1.msra.mxu0 %v5824
        %5895 = vmatprep.subr.mxu0 %v5827
        %5896 = vmatpush1.msra.mxu0 %v5826
        %5897 = vmatprep.subr.mxu0 0.0
        %5898 = vmatpush1.msra.mxu0 0.0
        %5899 = vmatprep.subr.mxu0 0.0
        %5900 = vmatpush1.msra.mxu0 0.0
        %5901 = vmatprep.subr.mxu0 0.0
        %5902 = vmatpush1.msra.mxu0 0.0
        %5903 = vmatprep.subr.mxu0 0.0
        %5904 = vmatpush1.msra.mxu0 0.0
        %5905 = vmatprep.subr.mxu0 0.0
        %5906 = vmatpush1.msra.mxu0 0.0
        %5907 = vmatprep.subr.mxu0 0.0
        %5908 = vmatpush1.msra.mxu0 0.0
        %5909 = vmatprep.subr.mxu0 0.0
        %5910 = vmatpush1.msra.mxu0 0.0
        %5911 = vmatprep.subr.mxu0 0.0
        %5912 = vmatpush1.msra.mxu0 0.0
        %5913 = vmatprep.subr.mxu0 0.0
        %5914 = vmatpush1.msra.mxu0 0.0
        %5915 = vmatprep.subr.mxu0 0.0
        %5916 = vmatpush1.msra.mxu0 0.0
        %5917 = vmatprep.subr.mxu0 0.0
        %5918 = vmatpush1.msra.mxu0 0.0
        %5919 = vmatprep.subr.mxu0 0.0
        %5920 = vmatpush1.msra.mxu0 0.0
        %5921 = vmatprep.subr.mxu0 0.0
        %5922 = vmatpush1.msra.mxu0 0.0
        %5923 = vmatprep.subr.mxu0 0.0
        %5924 = vmatpush1.msra.mxu0 0.0
        %5925 = vmatprep.subr.mxu0 0.0
        %5926 = vmatpush1.msra.mxu0 0.0
        %5927 = vmatprep.subr.mxu0 0.0
        %5928 = vmatpush1.msra.mxu0 0.0
        %5929 = vmatprep.subr.mxu0 0.0
        %5930 = vmatpush1.msra.mxu0 0.0
        %5931 = vmatprep.subr.mxu0 0.0
        %5932 = vmatpush1.msra.mxu0 0.0
        %5933 = vmatprep.subr.mxu0 0.0
        %5934 = vmatpush1.msra.mxu0 0.0
        %5935 = vmatprep.subr.mxu0 0.0
        %5936 = vmatpush1.msra.mxu0 0.0
        %5937 = vmatprep.subr.mxu0 0.0
        %5938 = vmatpush1.msra.mxu0 0.0
        %5939 = vmatprep.subr.mxu0 0.0
        %5940 = vmatpush1.msra.mxu0 0.0
        %5941 = vmatprep.subr.mxu0 0.0
        %5942 = vmatpush1.msra.mxu0 0.0
        %5943 = vmatprep.subr.mxu0 0.0
        %5944 = vmatpush1.msra.mxu0 0.0
        %5945 = vmatprep.subr.mxu0 0.0
        %5946 = vmatpush1.msra.mxu0 0.0
        %5947 = vmatprep.subr.mxu0 0.0
        %5948 = vmatpush1.msra.mxu0 0.0
        %5949 = vmatprep.subr.mxu0 0.0
        %5950 = vmatpush1.msra.mxu0 0.0
        %5951 = vmatprep.subr.mxu0 0.0
        %5952 = vmatpush1.msra.mxu0 0.0
        %5953 = vmatprep.mubr.f32.mxu0 0.0
        %5954 = vmatmul.mubr.f32.gmra.mrb[0].mxu0 %v5842
        %v5955 = vpop.f32.mrb[0].mxu0
        %v5956 = vadd.f32 %v5834, %v5955
        %v5957 = vpop.f32.mrb[0].mxu0
        %v5958 = vadd.f32 %v5838, %v5957
        %5959 = vmatprep.mubr.f32.mxu0 0.0
        %5960 = vmatmul.mubr.f32.gmra.mrb[0].mxu0 %v5845
        %v5961 = vpop.f32.mrb[0].mxu0
        %v5962 = vadd.f32 %v5834, %v5961
        %v5963 = vpop.f32.mrb[0].mxu0
        %v5964 = vadd.f32 %v5838, %v5963
        %5965 = vmatprep.mubr.f32.mxu0 0.0
        %5966 = vmatmul.mubr.f32.gmra.mrb[0].mxu0 %v5848
        %v5967 = vpop.f32.mrb[0].mxu0
        %v5968 = vadd.f32 %v5834, %v5967
        %v5969 = vpop.f32.mrb[0].mxu0
        %v5970 = vadd.f32 %v5838, %v5969
        %5971 = vmatprep.mubr.f32.mxu0 0.0
        %5972 = vmatmul.mubr.f32.gmra.mrb[0].mxu0 %v5851
        %v5973 = vpop.f32.mrb[0].mxu0
        %v5974 = vadd.f32 %v5834, %v5973
        %v5975 = vpop.f32.mrb[0].mxu0
        %v5976 = vadd.f32 %v5838, %v5975
        %5977 = vmatprep.mubr.f32.mxu0 0.0
        %5978 = vmatmul.mubr.f32.gmra.mrb[0].mxu0 %v5854
        %v5979 = vpop.f32.mrb[0].mxu0
        %v5980 = vadd.f32 %v5834, %v5979
        %v5981 = vpop.f32.mrb[0].mxu0
        %v5982 = vadd.f32 %v5838, %v5981
        %5983 = vmatprep.mubr.f32.mxu0 0.0
        %5984 = vmatmul.mubr.f32.gmra.mrb[0].mxu0 %v5857
        %v5985 = vpop.f32.mrb[0].mxu0
        %v5986 = vadd.f32 %v5834, %v5985
        %v5987 = vpop.f32.mrb[0].mxu0
        %v5988 = vadd.f32 %v5838, %v5987
        %5989 = vmatprep.mubr.f32.mxu0 0.0
        %5990 = vmatmul.mubr.f32.gmra.mrb[0].mxu0 %v5860
        %v5991 = vpop.f32.mrb[0].mxu0
        %v5992 = vadd.f32 %v5834, %v5991
        %v5993 = vpop.f32.mrb[0].mxu0
        %v5994 = vadd.f32 %v5838, %v5993
        %5995 = vmatprep.mubr.f32.mxu0 0.0
        %5996 = vmatmul.mubr.f32.gmra.mrb[0].mxu0 %v5863
        %v5997 = vpop.f32.mrb[0].mxu0
        %v5998 = vadd.f32 %v5834, %v5997
        %v5999 = vpop.f32.mrb[0].mxu0
        %v6000 = vadd.f32 %v5838, %v5999
        %6001 = vmatprep.mubr.f32.mxu0 0.0
        %6002 = vmatmul.mubr.f32.gmra.mrb[0].mxu0 %v5866
        %v6003 = vpop.f32.mrb[0].mxu0
        %v6004 = vadd.f32 %v5834, %v6003
        %v6005 = vpop.f32.mrb[0].mxu0
        %v6006 = vadd.f32 %v5838, %v6005
        %6007 = vmatprep.mubr.f32.mxu0 0.0
        %6008 = vmatmul.mubr.f32.gmra.mrb[0].mxu0 %v5869
        %v6009 = vpop.f32.mrb[0].mxu0
        %v6010 = vadd.f32 %v5834, %v6009
        %v6011 = vpop.f32.mrb[0].mxu0
        %v6012 = vadd.f32 %v5838, %v6011
        %6013 = vmatprep.mubr.f32.mxu0 0.0
        %6014 = vmatmul.mubr.f32.gmra.mrb[0].mxu0 %v5872
        %v6015 = vpop.f32.mrb[0].mxu0
        %v6016 = vadd.f32 %v5834, %v6015
        %v6017 = vpop.f32.mrb[0].mxu0
        %v6018 = vadd.f32 %v5838, %v6017
        %6019 = vmatprep.mubr.f32.mxu0 0.0
        %6020 = vmatmul.mubr.f32.gmra.mrb[0].mxu0 %v5875
        %v6021 = vpop.f32.mrb[0].mxu0
        %v6022 = vadd.f32 %v5834, %v6021
        %v6023 = vpop.f32.mrb[0].mxu0
        %v6024 = vadd.f32 %v5838, %v6023
        %6025 = vmatprep.mubr.f32.mxu0 0.0
        %6026 = vmatmul.mubr.f32.gmra.mrb[0].mxu0 %v5878
        %v6027 = vpop.f32.mrb[0].mxu0
        %v6028 = vadd.f32 %v5834, %v6027
        %v6029 = vpop.f32.mrb[0].mxu0
        %v6030 = vadd.f32 %v5838, %v6029
        %6031 = vmatprep.mubr.f32.mxu0 0.0
        %6032 = vmatmul.mubr.f32.gmra.mrb[0].mxu0 %v5881
        %v6033 = vpop.f32.mrb[0].mxu0
        %v6034 = vadd.f32 %v5834, %v6033
        %v6035 = vpop.f32.mrb[0].mxu0
        %v6036 = vadd.f32 %v5838, %v6035
        %6037 = vmatprep.mubr.f32.mxu0 0.0
        %6038 = vmatmul.mubr.f32.gmra.mrb[0].mxu0 %v5884
        %v6039 = vpop.f32.mrb[0].mxu0
        %v6040 = vadd.f32 %v5834, %v6039
        %v6041 = vpop.f32.mrb[0].mxu0
        %v6042 = vadd.f32 %v5838, %v6041
        %6043 = vmatprep.mubr.f32.mxu0 0.0
        %6044 = vmatmul.mubr.f32.gmra.mrb[0].mxu0 %v5887
        %v6045 = vpop.f32.mrb[0].mxu0
        %v6046 = vadd.f32 %v5834, %v6045
        %v6047 = vpop.f32.mrb[0].mxu0
        %v6048 = vadd.f32 %v5838, %v6047
        %6049 = vdwg.mxu0
        %v6050 = vmax.f32 %v5956, 0.0
        %v6051 = vmax.f32 %v5958, 0.0
        %v6052 = vmax.f32 %v5962, 0.0
        %v6053 = vmax.f32 %v5964, 0.0
        %v6054 = vmax.f32 %v5968, 0.0
        %v6055 = vmax.f32 %v5970, 0.0
        %v6056 = vmax.f32 %v5974, 0.0
        %v6057 = vmax.f32 %v5976, 0.0
        %v6058 = vmax.f32 %v5980, 0.0
        %v6059 = vmax.f32 %v5982, 0.0
        %v6060 = vmax.f32 %v5986, 0.0
        %v6061 = vmax.f32 %v5988, 0.0
        %v6062 = vmax.f32 %v5992, 0.0
        %v6063 = vmax.f32 %v5994, 0.0
        %v6064 = vmax.f32 %v5998, 0.0
        %v6065 = vmax.f32 %v6000, 0.0
        %v6066 = vmax.f32 %v6004, 0.0
        %v6067 = vmax.f32 %v6006, 0.0
        %v6068 = vmax.f32 %v6010, 0.0
        %v6069 = vmax.f32 %v6012, 0.0
        %v6070 = vmax.f32 %v6016, 0.0
        %v6071 = vmax.f32 %v6018, 0.0
        %v6072 = vmax.f32 %v6022, 0.0
        %v6073 = vmax.f32 %v6024, 0.0
        %v6074 = vmax.f32 %v6028, 0.0
        %v6075 = vmax.f32 %v6030, 0.0
        %v6076 = vmax.f32 %v6034, 0.0
        %v6077 = vmax.f32 %v6036, 0.0
        %v6078 = vmax.f32 %v6040, 0.0
        %v6079 = vmax.f32 %v6042, 0.0
        %v6080 = vmax.f32 %v6046, 0.0
        %v6081 = vmax.f32 %v6048, 0.0
        %s6082 = scalar_lea.vmem %s15, 256
        %v6083 = vld [vmem:[%s6082] sm:$0xff]
        %v6084 = vld [vmem:[%s6082 + $0x8] sm:$0xff]
        %v6085 = vld [vmem:[%s6082 + $0x10] sm:$0xff]
        %v6086 = vld [vmem:[%s6082 + $0x18] sm:$0xff]
        %v6087 = vld [vmem:[%s6082 + $0x20] sm:$0xff]
        %v6088 = vld [vmem:[%s6082 + $0x28] sm:$0xff]
        %v6089 = vld [vmem:[%s6082 + $0x30] sm:$0xff]
        %v6090 = vld [vmem:[%s6082 + $0x38] sm:$0xff]
        %v6091 = vld [vmem:[%s6082 + $0x40] sm:$0xff]
        %v6092 = vld [vmem:[%s6082 + $0x48] sm:$0xff]
        %v6093 = vld [vmem:[%s6082 + $0x50] sm:$0xff]
        %v6094 = vld [vmem:[%s6082 + $0x58] sm:$0xff]
        %v6095 = vld [vmem:[%s6082 + $0x60] sm:$0xff]
        %v6096 = vld [vmem:[%s6082 + $0x68] sm:$0xff]
        %v6097 = vld [vmem:[%s6082 + $0x70] sm:$0xff]
        %v6098 = vld [vmem:[%s6082 + $0x78] sm:$0xff]
        %v6099 = vld [vmem:[%s6082 + $0x80] sm:$0xff]
        %v6100 = vld [vmem:[%s6082 + $0x88] sm:$0xff]
        %v6101 = vld [vmem:[%s6082 + $0x90] sm:$0xff]
        %v6102 = vld [vmem:[%s6082 + $0x98] sm:$0xff]
        %v6103 = vld [vmem:[%s6082 + $0xa0] sm:$0xff]
        %v6104 = vld [vmem:[%s6082 + $0xa8] sm:$0xff]
        %v6105 = vld [vmem:[%s6082 + $0xb0] sm:$0xff]
        %v6106 = vld [vmem:[%s6082 + $0xb8] sm:$0xff]
        %v6107 = vld [vmem:[%s6082 + $0xc0] sm:$0xff]
        %v6108 = vld [vmem:[%s6082 + $0xc8] sm:$0xff]
        %v6109 = vld [vmem:[%s6082 + $0xd0] sm:$0xff]
        %v6110 = vld [vmem:[%s6082 + $0xd8] sm:$0xff]
        %v6111 = vld [vmem:[%s6082 + $0xe0] sm:$0xff]
        %v6112 = vld [vmem:[%s6082 + $0xe8] sm:$0xff]
        %v6113 = vld [vmem:[%s6082 + $0xf0] sm:$0xff]
        %v6114 = vld [vmem:[%s6082 + $0xf8] sm:$0xff]
        %s6115 = scalar_lea.vmem %s16, 1
        %v6116 = vld [vmem:[%s6115] sm:$0x1]
        %v6118 = vlaneseq
        %v6119 = vshrl.u32 %v6118, 7
        %v6120 = vsub.s32 0, %v6119
        %v6121 = vrot.slane %v6116, %v6120
        %6123 = vmatprep.subr.mxu0 0.0
        %6124 = vmatpush1.msra.mxu0 %v6083
        %6125 = vmatprep.subr.mxu0 0.0
        %6126 = vmatpush1.msra.mxu0 %v6084
        %6127 = vmatprep.subr.mxu0 0.0
        %6128 = vmatpush1.msra.mxu0 %v6085
        %6129 = vmatprep.subr.mxu0 0.0
        %6130 = vmatpush1.msra.mxu0 %v6086
        %6131 = vmatprep.subr.mxu0 0.0
        %6132 = vmatpush1.msra.mxu0 %v6087
        %6133 = vmatprep.subr.mxu0 0.0
        %6134 = vmatpush1.msra.mxu0 %v6088
        %6135 = vmatprep.subr.mxu0 0.0
        %6136 = vmatpush1.msra.mxu0 %v6089
        %6137 = vmatprep.subr.mxu0 0.0
        %6138 = vmatpush1.msra.mxu0 %v6090
        %6139 = vmatprep.subr.mxu0 0.0
        %6140 = vmatpush1.msra.mxu0 %v6091
        %6141 = vmatprep.subr.mxu0 0.0
        %6142 = vmatpush1.msra.mxu0 %v6092
        %6143 = vmatprep.subr.mxu0 0.0
        %6144 = vmatpush1.msra.mxu0 %v6093
        %6145 = vmatprep.subr.mxu0 0.0
        %6146 = vmatpush1.msra.mxu0 %v6094
        %6147 = vmatprep.subr.mxu0 0.0
        %6148 = vmatpush1.msra.mxu0 %v6095
        %6149 = vmatprep.subr.mxu0 0.0
        %6150 = vmatpush1.msra.mxu0 %v6096
        %6151 = vmatprep.subr.mxu0 0.0
        %6152 = vmatpush1.msra.mxu0 %v6097
        %6153 = vmatprep.subr.mxu0 0.0
        %6154 = vmatpush1.msra.mxu0 %v6098
        %6155 = vmatprep.subr.mxu0 0.0
        %6156 = vmatpush1.msra.mxu0 %v6099
        %6157 = vmatprep.subr.mxu0 0.0
        %6158 = vmatpush1.msra.mxu0 %v6100
        %6159 = vmatprep.subr.mxu0 0.0
        %6160 = vmatpush1.msra.mxu0 %v6101
        %6161 = vmatprep.subr.mxu0 0.0
        %6162 = vmatpush1.msra.mxu0 %v6102
        %6163 = vmatprep.subr.mxu0 0.0
        %6164 = vmatpush1.msra.mxu0 %v6103
        %6165 = vmatprep.subr.mxu0 0.0
        %6166 = vmatpush1.msra.mxu0 %v6104
        %6167 = vmatprep.subr.mxu0 0.0
        %6168 = vmatpush1.msra.mxu0 %v6105
        %6169 = vmatprep.subr.mxu0 0.0
        %6170 = vmatpush1.msra.mxu0 %v6106
        %6171 = vmatprep.subr.mxu0 0.0
        %6172 = vmatpush1.msra.mxu0 %v6107
        %6173 = vmatprep.subr.mxu0 0.0
        %6174 = vmatpush1.msra.mxu0 %v6108
        %6175 = vmatprep.subr.mxu0 0.0
        %6176 = vmatpush1.msra.mxu0 %v6109
        %6177 = vmatprep.subr.mxu0 0.0
        %6178 = vmatpush1.msra.mxu0 %v6110
        %6179 = vmatprep.subr.mxu0 0.0
        %6180 = vmatpush1.msra.mxu0 %v6111
        %6181 = vmatprep.subr.mxu0 0.0
        %6182 = vmatpush1.msra.mxu0 %v6112
        %6183 = vmatprep.subr.mxu0 0.0
        %6184 = vmatpush1.msra.mxu0 %v6113
        %6185 = vmatprep.subr.mxu0 0.0
        %6186 = vmatpush1.msra.mxu0 %v6114
        %6187 = vmatprep.mubr.f32.mxu0 %v6051
        %6188 = vmatmul.mubr.f32.gmra.mrb[0].mxu0 %v6050
        %v6189 = vpop.f32.mrb[0].mxu0
        %v6190 = vadd.f32 %v6121, %v6189
        %v6191 = vpop.f32.mrb[0].mxu0
        %6192 = vmatprep.mubr.f32.mxu0 %v6053
        %6193 = vmatmul.mubr.f32.gmra.mrb[0].mxu0 %v6052
        %v6194 = vpop.f32.mrb[0].mxu0
        %v6195 = vadd.f32 %v6121, %v6194
        %v6196 = vpop.f32.mrb[0].mxu0
        %6197 = vmatprep.mubr.f32.mxu0 %v6055
        %6198 = vmatmul.mubr.f32.gmra.mrb[0].mxu0 %v6054
        %v6199 = vpop.f32.mrb[0].mxu0
        %v6200 = vadd.f32 %v6121, %v6199
        %v6201 = vpop.f32.mrb[0].mxu0
        %6202 = vmatprep.mubr.f32.mxu0 %v6057
        %6203 = vmatmul.mubr.f32.gmra.mrb[0].mxu0 %v6056
        %v6204 = vpop.f32.mrb[0].mxu0
        %v6205 = vadd.f32 %v6121, %v6204
        %v6206 = vpop.f32.mrb[0].mxu0
        %6207 = vmatprep.mubr.f32.mxu0 %v6059
        %6208 = vmatmul.mubr.f32.gmra.mrb[0].mxu0 %v6058
        %v6209 = vpop.f32.mrb[0].mxu0
        %v6210 = vadd.f32 %v6121, %v6209
        %v6211 = vpop.f32.mrb[0].mxu0
        %6212 = vmatprep.mubr.f32.mxu0 %v6061
        %6213 = vmatmul.mubr.f32.gmra.mrb[0].mxu0 %v6060
        %v6214 = vpop.f32.mrb[0].mxu0
        %v6215 = vadd.f32 %v6121, %v6214
        %v6216 = vpop.f32.mrb[0].mxu0
        %6217 = vmatprep.mubr.f32.mxu0 %v6063
        %6218 = vmatmul.mubr.f32.gmra.mrb[0].mxu0 %v6062
        %v6219 = vpop.f32.mrb[0].mxu0
        %v6220 = vadd.f32 %v6121, %v6219
        %v6221 = vpop.f32.mrb[0].mxu0
        %6222 = vmatprep.mubr.f32.mxu0 %v6065
        %6223 = vmatmul.mubr.f32.gmra.mrb[0].mxu0 %v6064
        %v6224 = vpop.f32.mrb[0].mxu0
        %v6225 = vadd.f32 %v6121, %v6224
        %v6226 = vpop.f32.mrb[0].mxu0
        %6227 = vmatprep.mubr.f32.mxu0 %v6067
        %6228 = vmatmul.mubr.f32.gmra.mrb[0].mxu0 %v6066
        %v6229 = vpop.f32.mrb[0].mxu0
        %v6230 = vadd.f32 %v6121, %v6229
        %v6231 = vpop.f32.mrb[0].mxu0
        %6232 = vmatprep.mubr.f32.mxu0 %v6069
        %6233 = vmatmul.mubr.f32.gmra.mrb[0].mxu0 %v6068
        %v6234 = vpop.f32.mrb[0].mxu0
        %v6235 = vadd.f32 %v6121, %v6234
        %v6236 = vpop.f32.mrb[0].mxu0
        %6237 = vmatprep.mubr.f32.mxu0 %v6071
        %6238 = vmatmul.mubr.f32.gmra.mrb[0].mxu0 %v6070
        %v6239 = vpop.f32.mrb[0].mxu0
        %v6240 = vadd.f32 %v6121, %v6239
        %v6241 = vpop.f32.mrb[0].mxu0
        %6242 = vmatprep.mubr.f32.mxu0 %v6073
        %6243 = vmatmul.mubr.f32.gmra.mrb[0].mxu0 %v6072
        %v6244 = vpop.f32.mrb[0].mxu0
        %v6245 = vadd.f32 %v6121, %v6244
        %v6246 = vpop.f32.mrb[0].mxu0
        %6247 = vmatprep.mubr.f32.mxu0 %v6075
        %6248 = vmatmul.mubr.f32.gmra.mrb[0].mxu0 %v6074
        %v6249 = vpop.f32.mrb[0].mxu0
        %v6250 = vadd.f32 %v6121, %v6249
        %v6251 = vpop.f32.mrb[0].mxu0
        %6252 = vmatprep.mubr.f32.mxu0 %v6077
        %6253 = vmatmul.mubr.f32.gmra.mrb[0].mxu0 %v6076
        %v6254 = vpop.f32.mrb[0].mxu0
        %v6255 = vadd.f32 %v6121, %v6254
        %v6256 = vpop.f32.mrb[0].mxu0
        %6257 = vmatprep.mubr.f32.mxu0 %v6079
        %6258 = vmatmul.mubr.f32.gmra.mrb[0].mxu0 %v6078
        %v6259 = vpop.f32.mrb[0].mxu0
        %v6260 = vadd.f32 %v6121, %v6259
        %v6261 = vpop.f32.mrb[0].mxu0
        %6262 = vmatprep.mubr.f32.mxu0 %v6081
        %6263 = vmatmul.mubr.f32.gmra.mrb[0].mxu0 %v6080
        %v6264 = vpop.f32.mrb[0].mxu0
        %v6265 = vadd.f32 %v6121, %v6264
        %v6266 = vpop.f32.mrb[0].mxu0
        %6267 = vdwg.mxu0
        %v6268 = vadd.f32 %v5803, %v6190
        %v6269 = vadd.f32 %v5804, %v6195
        %v6270 = vadd.f32 %v5805, %v6200
        %v6271 = vadd.f32 %v5806, %v6205
        %v6272 = vadd.f32 %v5807, %v6210
        %v6273 = vadd.f32 %v5808, %v6215
        %v6274 = vadd.f32 %v5809, %v6220
        %v6275 = vadd.f32 %v5810, %v6225
        %v6276 = vadd.f32 %v5811, %v6230
        %v6277 = vadd.f32 %v5812, %v6235
        %v6278 = vadd.f32 %v5813, %v6240
        %v6279 = vadd.f32 %v5814, %v6245
        %v6280 = vadd.f32 %v5815, %v6250
        %v6281 = vadd.f32 %v5816, %v6255
        %v6282 = vadd.f32 %v5817, %v6260
        %v6283 = vadd.f32 %v5818, %v6265
        %s6284 = scalar_lea.vmem %s19, 1
        %v6285 = vld [vmem:[%s6284] sm:$0x1]
        %s6286 = scalar_lea.vmem %s20, 1
        %v6287 = vld [vmem:[%s6286] sm:$0x1]
        %v6288 = vsel %vm940, %v6268, 0.0
        %6289 = vadd.xlane.f32.xlu0 %v6288
        %v6290 = vpop.xlane.xlu0 %6289
        %v6291 = vsel %vm940, %v6269, 0.0
        %6292 = vadd.xlane.f32.xlu0 %v6291
        %v6293 = vpop.xlane.xlu0 %6292
        %v6294 = vsel %vm940, %v6270, 0.0
        %6295 = vadd.xlane.f32.xlu0 %v6294
        %v6296 = vpop.xlane.xlu0 %6295
        %v6297 = vsel %vm940, %v6271, 0.0
        %6298 = vadd.xlane.f32.xlu0 %v6297
        %v6299 = vpop.xlane.xlu0 %6298
        %v6300 = vsel %vm940, %v6272, 0.0
        %6301 = vadd.xlane.f32.xlu0 %v6300
        %v6302 = vpop.xlane.xlu0 %6301
        %v6303 = vsel %vm940, %v6273, 0.0
        %6304 = vadd.xlane.f32.xlu0 %v6303
        %v6305 = vpop.xlane.xlu0 %6304
        %v6306 = vsel %vm940, %v6274, 0.0
        %6307 = vadd.xlane.f32.xlu0 %v6306
        %v6308 = vpop.xlane.xlu0 %6307
        %v6309 = vsel %vm940, %v6275, 0.0
        %6310 = vadd.xlane.f32.xlu0 %v6309
        %v6311 = vpop.xlane.xlu0 %6310
        %v6312 = vsel %vm940, %v6276, 0.0
        %6313 = vadd.xlane.f32.xlu0 %v6312
        %v6314 = vpop.xlane.xlu0 %6313
        %v6315 = vsel %vm940, %v6277, 0.0
        %6316 = vadd.xlane.f32.xlu0 %v6315
        %v6317 = vpop.xlane.xlu0 %6316
        %v6318 = vsel %vm940, %v6278, 0.0
        %6319 = vadd.xlane.f32.xlu0 %v6318
        %v6320 = vpop.xlane.xlu0 %6319
        %v6321 = vsel %vm940, %v6279, 0.0
        %6322 = vadd.xlane.f32.xlu0 %v6321
        %v6323 = vpop.xlane.xlu0 %6322
        %v6324 = vsel %vm940, %v6280, 0.0
        %6325 = vadd.xlane.f32.xlu0 %v6324
        %v6326 = vpop.xlane.xlu0 %6325
        %v6327 = vsel %vm940, %v6281, 0.0
        %6328 = vadd.xlane.f32.xlu0 %v6327
        %v6329 = vpop.xlane.xlu0 %6328
        %v6330 = vsel %vm940, %v6282, 0.0
        %6331 = vadd.xlane.f32.xlu0 %v6330
        %v6332 = vpop.xlane.xlu0 %6331
        %v6333 = vsel %vm940, %v6283, 0.0
        %6334 = vadd.xlane.f32.xlu0 %v6333
        %v6335 = vpop.xlane.xlu0 %6334
        %v6336 = vmul.f32 %v6290, %v2823
        %v6337 = vmul.f32 %v6293, %v2823
        %v6338 = vmul.f32 %v6296, %v2823
        %v6339 = vmul.f32 %v6299, %v2823
        %v6340 = vmul.f32 %v6302, %v2823
        %v6341 = vmul.f32 %v6305, %v2823
        %v6342 = vmul.f32 %v6308, %v2823
        %v6343 = vmul.f32 %v6311, %v2823
        %v6344 = vmul.f32 %v6314, %v2823
        %v6345 = vmul.f32 %v6317, %v2823
        %v6346 = vmul.f32 %v6320, %v2823
        %v6347 = vmul.f32 %v6323, %v2823
        %v6348 = vmul.f32 %v6326, %v2823
        %v6349 = vmul.f32 %v6329, %v2823
        %v6350 = vmul.f32 %v6332, %v2823
        %v6351 = vmul.f32 %v6335, %v2823
        %v6352 = vsub.f32 %v6268, %v6336
        %v6353 = vsub.f32 %v6269, %v6337
        %v6354 = vsub.f32 %v6270, %v6338
        %v6355 = vsub.f32 %v6271, %v6339
        %v6356 = vsub.f32 %v6272, %v6340
        %v6357 = vsub.f32 %v6273, %v6341
        %v6358 = vsub.f32 %v6274, %v6342
        %v6359 = vsub.f32 %v6275, %v6343
        %v6360 = vsub.f32 %v6276, %v6344
        %v6361 = vsub.f32 %v6277, %v6345
        %v6362 = vsub.f32 %v6278, %v6346
        %v6363 = vsub.f32 %v6279, %v6347
        %v6364 = vsub.f32 %v6280, %v6348
        %v6365 = vsub.f32 %v6281, %v6349
        %v6366 = vsub.f32 %v6282, %v6350
        %v6367 = vsub.f32 %v6283, %v6351
        %v6368 = vmul.f32 %v6352, %v6352
        %v6369 = vmul.f32 %v6353, %v6353
        %v6370 = vmul.f32 %v6354, %v6354
        %v6371 = vmul.f32 %v6355, %v6355
        %v6372 = vmul.f32 %v6356, %v6356
        %v6373 = vmul.f32 %v6357, %v6357
        %v6374 = vmul.f32 %v6358, %v6358
        %v6375 = vmul.f32 %v6359, %v6359
        %v6376 = vmul.f32 %v6360, %v6360
        %v6377 = vmul.f32 %v6361, %v6361
        %v6378 = vmul.f32 %v6362, %v6362
        %v6379 = vmul.f32 %v6363, %v6363
        %v6380 = vmul.f32 %v6364, %v6364
        %v6381 = vmul.f32 %v6365, %v6365
        %v6382 = vmul.f32 %v6366, %v6366
        %v6383 = vmul.f32 %v6367, %v6367
        %v6384 = vsel %vm940, %v6368, 0.0
        %6385 = vadd.xlane.f32.xlu0 %v6384
        %v6386 = vpop.xlane.xlu0 %6385
        %v6387 = vsel %vm940, %v6369, 0.0
        %6388 = vadd.xlane.f32.xlu0 %v6387
        %v6389 = vpop.xlane.xlu0 %6388
        %v6390 = vsel %vm940, %v6370, 0.0
        %6391 = vadd.xlane.f32.xlu0 %v6390
        %v6392 = vpop.xlane.xlu0 %6391
        %v6393 = vsel %vm940, %v6371, 0.0
        %6394 = vadd.xlane.f32.xlu0 %v6393
        %v6395 = vpop.xlane.xlu0 %6394
        %v6396 = vsel %vm940, %v6372, 0.0
        %6397 = vadd.xlane.f32.xlu0 %v6396
        %v6398 = vpop.xlane.xlu0 %6397
        %v6399 = vsel %vm940, %v6373, 0.0
        %6400 = vadd.xlane.f32.xlu0 %v6399
        %v6401 = vpop.xlane.xlu0 %6400
        %v6402 = vsel %vm940, %v6374, 0.0
        %6403 = vadd.xlane.f32.xlu0 %v6402
        %v6404 = vpop.xlane.xlu0 %6403
        %v6405 = vsel %vm940, %v6375, 0.0
        %6406 = vadd.xlane.f32.xlu0 %v6405
        %v6407 = vpop.xlane.xlu0 %6406
        %v6408 = vsel %vm940, %v6376, 0.0
        %6409 = vadd.xlane.f32.xlu0 %v6408
        %v6410 = vpop.xlane.xlu0 %6409
        %v6411 = vsel %vm940, %v6377, 0.0
        %6412 = vadd.xlane.f32.xlu0 %v6411
        %v6413 = vpop.xlane.xlu0 %6412
        %v6414 = vsel %vm940, %v6378, 0.0
        %6415 = vadd.xlane.f32.xlu0 %v6414
        %v6416 = vpop.xlane.xlu0 %6415
        %v6417 = vsel %vm940, %v6379, 0.0
        %6418 = vadd.xlane.f32.xlu0 %v6417
        %v6419 = vpop.xlane.xlu0 %6418
        %v6420 = vsel %vm940, %v6380, 0.0
        %6421 = vadd.xlane.f32.xlu0 %v6420
        %v6422 = vpop.xlane.xlu0 %6421
        %v6423 = vsel %vm940, %v6381, 0.0
        %6424 = vadd.xlane.f32.xlu0 %v6423
        %v6425 = vpop.xlane.xlu0 %6424
        %v6426 = vsel %vm940, %v6382, 0.0
        %6427 = vadd.xlane.f32.xlu0 %v6426
        %v6428 = vpop.xlane.xlu0 %6427
        %v6429 = vsel %vm940, %v6383, 0.0
        %6430 = vadd.xlane.f32.xlu0 %v6429
        %v6431 = vpop.xlane.xlu0 %6430
        %v6432 = vmul.f32 %v6386, %v2823
        %v6433 = vmul.f32 %v6389, %v2823
        %v6434 = vmul.f32 %v6392, %v2823
        %v6435 = vmul.f32 %v6395, %v2823
        %v6436 = vmul.f32 %v6398, %v2823
        %v6437 = vmul.f32 %v6401, %v2823
        %v6438 = vmul.f32 %v6404, %v2823
        %v6439 = vmul.f32 %v6407, %v2823
        %v6440 = vmul.f32 %v6410, %v2823
        %v6441 = vmul.f32 %v6413, %v2823
        %v6442 = vmul.f32 %v6416, %v2823
        %v6443 = vmul.f32 %v6419, %v2823
        %v6444 = vmul.f32 %v6422, %v2823
        %v6445 = vmul.f32 %v6425, %v2823
        %v6446 = vmul.f32 %v6428, %v2823
        %v6447 = vmul.f32 %v6431, %v2823
        %v6448 = vadd.f32 %v6432, 1e-05
        %v6449 = vadd.f32 %v6433, 1e-05
        %v6450 = vadd.f32 %v6434, 1e-05
        %v6451 = vadd.f32 %v6435, 1e-05
        %v6452 = vadd.f32 %v6436, 1e-05
        %v6453 = vadd.f32 %v6437, 1e-05
        %v6454 = vadd.f32 %v6438, 1e-05
        %v6455 = vadd.f32 %v6439, 1e-05
        %v6456 = vadd.f32 %v6440, 1e-05
        %v6457 = vadd.f32 %v6441, 1e-05
        %v6458 = vadd.f32 %v6442, 1e-05
        %v6459 = vadd.f32 %v6443, 1e-05
        %v6460 = vadd.f32 %v6444, 1e-05
        %v6461 = vadd.f32 %v6445, 1e-05
        %v6462 = vadd.f32 %v6446, 1e-05
        %v6463 = vadd.f32 %v6447, 1e-05
        %v6464 = vrsqrt.pop %v6448
        %v6465 = vrsqrt.pop %v6449
        %v6466 = vrsqrt.pop %v6450
        %v6467 = vrsqrt.pop %v6451
        %v6468 = vrsqrt.pop %v6452
        %v6469 = vrsqrt.pop %v6453
        %v6470 = vrsqrt.pop %v6454
        %v6471 = vrsqrt.pop %v6455
        %v6472 = vrsqrt.pop %v6456
        %v6473 = vrsqrt.pop %v6457
        %v6474 = vrsqrt.pop %v6458
        %v6475 = vrsqrt.pop %v6459
        %v6476 = vrsqrt.pop %v6460
        %v6477 = vrsqrt.pop %v6461
        %v6478 = vrsqrt.pop %v6462
        %v6479 = vrsqrt.pop %v6463
        %v6480 = vmul.f32 %v6352, %v6464
        %v6481 = vmul.f32 %v6353, %v6465
        %v6482 = vmul.f32 %v6354, %v6466
        %v6483 = vmul.f32 %v6355, %v6467
        %v6484 = vmul.f32 %v6356, %v6468
        %v6485 = vmul.f32 %v6357, %v6469
        %v6486 = vmul.f32 %v6358, %v6470
        %v6487 = vmul.f32 %v6359, %v6471
        %v6488 = vmul.f32 %v6360, %v6472
        %v6489 = vmul.f32 %v6361, %v6473
        %v6490 = vmul.f32 %v6362, %v6474
        %v6491 = vmul.f32 %v6363, %v6475
        %v6492 = vmul.f32 %v6364, %v6476
        %v6493 = vmul.f32 %v6365, %v6477
        %v6494 = vmul.f32 %v6366, %v6478
        %v6495 = vmul.f32 %v6367, %v6479
        %v6497 = vlaneseq
        %v6498 = vshrl.u32 %v6497, 7
        %v6499 = vsub.s32 0, %v6498
        %v6500 = vrot.slane %v6285, %v6499
        %v6502 = vmul.f32 %v6480, %v6500
        %v6503 = vmul.f32 %v6481, %v6500
        %v6504 = vmul.f32 %v6482, %v6500
        %v6505 = vmul.f32 %v6483, %v6500
        %v6506 = vmul.f32 %v6484, %v6500
        %v6507 = vmul.f32 %v6485, %v6500
        %v6508 = vmul.f32 %v6486, %v6500
        %v6509 = vmul.f32 %v6487, %v6500
        %v6510 = vmul.f32 %v6488, %v6500
        %v6511 = vmul.f32 %v6489, %v6500
        %v6512 = vmul.f32 %v6490, %v6500
        %v6513 = vmul.f32 %v6491, %v6500
        %v6514 = vmul.f32 %v6492, %v6500
        %v6515 = vmul.f32 %v6493, %v6500
        %v6516 = vmul.f32 %v6494, %v6500
        %v6517 = vmul.f32 %v6495, %v6500
        %v6519 = vlaneseq
        %v6520 = vshrl.u32 %v6519, 7
        %v6521 = vsub.s32 0, %v6520
        %v6522 = vrot.slane %v6287, %v6521
        %v6524 = vadd.f32 %v6502, %v6522
        %v6525 = vadd.f32 %v6503, %v6522
        %v6526 = vadd.f32 %v6504, %v6522
        %v6527 = vadd.f32 %v6505, %v6522
        %v6528 = vadd.f32 %v6506, %v6522
        %v6529 = vadd.f32 %v6507, %v6522
        %v6530 = vadd.f32 %v6508, %v6522
        %v6531 = vadd.f32 %v6509, %v6522
        %v6532 = vadd.f32 %v6510, %v6522
        %v6533 = vadd.f32 %v6511, %v6522
        %v6534 = vadd.f32 %v6512, %v6522
        %v6535 = vadd.f32 %v6513, %v6522
        %v6536 = vadd.f32 %v6514, %v6522
        %v6537 = vadd.f32 %v6515, %v6522
        %v6538 = vadd.f32 %v6516, %v6522
        %v6539 = vadd.f32 %v6517, %v6522
        %v6540 = vld [vmem:[#allocation2] sm:$0xff]
        %v6541 = vld [vmem:[#allocation2 + $0x8] sm:$0xff]
        %6542 = vmatprep.subr.mxu0 0.0
        %6543 = vmatpush1.msra.mxu0 %v6524
        %6544 = vmatprep.subr.mxu0 0.0
        %6545 = vmatpush1.msra.mxu0 %v6525
        %6546 = vmatprep.subr.mxu0 0.0
        %6547 = vmatpush1.msra.mxu0 %v6526
        %6548 = vmatprep.subr.mxu0 0.0
        %6549 = vmatpush1.msra.mxu0 %v6527
        %6550 = vmatprep.subr.mxu0 0.0
        %6551 = vmatpush1.msra.mxu0 %v6528
        %6552 = vmatprep.subr.mxu0 0.0
        %6553 = vmatpush1.msra.mxu0 %v6529
        %6554 = vmatprep.subr.mxu0 0.0
        %6555 = vmatpush1.msra.mxu0 %v6530
        %6556 = vmatprep.subr.mxu0 0.0
        %6557 = vmatpush1.msra.mxu0 %v6531
        %6558 = vmatprep.subr.mxu0 0.0
        %6559 = vmatpush1.msra.mxu0 %v6532
        %6560 = vmatprep.subr.mxu0 0.0
        %6561 = vmatpush1.msra.mxu0 %v6533
        %6562 = vmatprep.subr.mxu0 0.0
        %6563 = vmatpush1.msra.mxu0 %v6534
        %6564 = vmatprep.subr.mxu0 0.0
        %6565 = vmatpush1.msra.mxu0 %v6535
        %6566 = vmatprep.subr.mxu0 0.0
        %6567 = vmatpush1.msra.mxu0 %v6536
        %6568 = vmatprep.subr.mxu0 0.0
        %6569 = vmatpush1.msra.mxu0 %v6537
        %6570 = vmatprep.subr.mxu0 0.0
        %6571 = vmatpush1.msra.mxu0 %v6538
        %6572 = vmatprep.subr.mxu0 0.0
        %6573 = vmatpush1.msra.mxu0 %v6539
        %6574 = vmatprep.subr.mxu0 0.0
        %6575 = vmatpush1.msra.mxu0 0.0
        %6576 = vmatprep.subr.mxu0 0.0
        %6577 = vmatpush1.msra.mxu0 0.0
        %6578 = vmatprep.subr.mxu0 0.0
        %6579 = vmatpush1.msra.mxu0 0.0
        %6580 = vmatprep.subr.mxu0 0.0
        %6581 = vmatpush1.msra.mxu0 0.0
        %6582 = vmatprep.subr.mxu0 0.0
        %6583 = vmatpush1.msra.mxu0 0.0
        %6584 = vmatprep.subr.mxu0 0.0
        %6585 = vmatpush1.msra.mxu0 0.0
        %6586 = vmatprep.subr.mxu0 0.0
        %6587 = vmatpush1.msra.mxu0 0.0
        %6588 = vmatprep.subr.mxu0 0.0
        %6589 = vmatpush1.msra.mxu0 0.0
        %6590 = vmatprep.subr.mxu0 0.0
        %6591 = vmatpush1.msra.mxu0 0.0
        %6592 = vmatprep.subr.mxu0 0.0
        %6593 = vmatpush1.msra.mxu0 0.0
        %6594 = vmatprep.subr.mxu0 0.0
        %6595 = vmatpush1.msra.mxu0 0.0
        %6596 = vmatprep.subr.mxu0 0.0
        %6597 = vmatpush1.msra.mxu0 0.0
        %6598 = vmatprep.subr.mxu0 0.0
        %6599 = vmatpush1.msra.mxu0 0.0
        %6600 = vmatprep.subr.mxu0 0.0
        %6601 = vmatpush1.msra.mxu0 0.0
        %6602 = vmatprep.subr.mxu0 0.0
        %6603 = vmatpush1.msra.mxu0 0.0
        %6604 = vmatprep.subr.mxu0 0.0
        %6605 = vmatpush1.msra.mxu0 0.0
        %6606 = vmatprep.mubr.f32.mxu0 0.0
        %6607 = vmatmul.mubr.f32.gmra.mrb[0].mxu0 %v6540
        %v6608 = vpop.f32.mrb[0].mxu0
        %v6609 = vadd.f32 0.0, %v6608
        %v6610 = vpop.f32.mrb[0].mxu0
        %6611 = vmatprep.mubr.f32.mxu0 0.0
        %6612 = vmatmul.mubr.f32.gmra.mrb[0].mxu0 %v6541
        %v6613 = vpop.f32.mrb[0].mxu0
        %v6614 = vadd.f32 0.0, %v6613
        %v6615 = vpop.f32.mrb[0].mxu0
        %6616 = vdwg.mxu0
        %6617 = vst.msk [vmem:[%s711] sm:$0xff] %vm940, %v6609
        %6618 = vst.msk [vmem:[%s711 + $0x8] sm:$0xff] %vm940, %v6614
        %s6619 = sand.u32 %s492, 1
        %s6620 = scalar_lea.sflag [#allocation4], %s6619
        %s6621 = sand.u32 %s492, 1
        %s6622 = smul.addr %s6621, 16
        %s6623 = scalar_lea.vmem [#allocation10], %s6622
        // Predicated region
        $region121: #{tpu_custom_call.1} parent=103 // pred_check
          %p6624 = pneg %p502
        $region122: #{tpu_custom_call.1} parent=103 // pred_check_branch
          %6626 = sbr.rel (%p6624) target = $region124
        $region123: #{tpu_custom_call.1} parent=103 // pred_region
          %s6627 = smul.u32 2, %s38
          %s6629 = ssub.s32 256, 256
          %6630 = vsyncadd %s6620, %s6629
          %s6631 = smul.addr %s6627, 128
          %s6632 = scalar_lea.hbm %s21, %s6631
          %s6633 = sshll.u32 %s6623, 4
          %s6634 = int_to_ptr.vmem [resolvable:$true] %s6633
          %6639 = dma.vmem_to_hbm [thread:$0]  %s6634, 256, %s6632, %s6620, 128, 128, 8
        $region124: #{tpu_custom_call.1} parent=103 // pred_fallthru
          _
      $region104: #{tpu_custom_call.1} parent=5 // pred_fallthru
        _
      %p6640 = scmp.le.s32.totalorder 2, %s33
      // Predicated region
      $region125: #{tpu_custom_call.1} parent=5 // pred_check
        %p6641 = pneg %p6640
      $region126: #{tpu_custom_call.1} parent=5 // pred_check_branch
        %6643 = sbr.rel (%p6641) target = $region128
      $region127: #{tpu_custom_call.1} parent=5 // pred_region
        %s6644 = ssub.s32 %s33, 2
        // Predicated region
        $region129: #{tpu_custom_call.1} parent=127 // pred_check
          %p6645 = pneg %p508
        $region130: #{tpu_custom_call.1} parent=127 // pred_check_branch
          %6647 = sbr.rel (%p6645) target = $region132
        $region131: #{tpu_custom_call.1} parent=127 // pred_region
          %s6648 = sand.u32 %s493, 1
          %s6649 = scalar_lea.sflag [#allocation4], %s6648
          %s6650 = sand.u32 %s493, 1
          %s6651 = smul.addr %s6650, 16
          %s6652 = scalar_lea.vmem [#allocation10], %s6651
          %6653 = dma.done %s6649, 256
        $region132: #{tpu_custom_call.1} parent=127 // pred_fallthru
          _
      $region128: #{tpu_custom_call.1} parent=5 // pred_fallthru
        _
    $region6: #{tpu_custom_call.1} parent=1 // loop_footer
      %s37 = sadd.s32 1, %s33
    $region7: #{tpu_custom_call.1} parent=1 // loop_footer_branch
      %32 = sbr.rel target = $region3
    $region8: #{tpu_custom_call.1} parent=1 // loop_exit
      _
    %6654 = vsyncpa [#allocation3], 1
    %s6655 = scalar_lea.sflag [#allocation3], 1
    %6656 = vsyncpa %s6655, 1
    %6657 = vsyncpa [#allocation6], 1
    %6658 = vsyncpa [#allocation9], 1
    %6659 = vsyncpa [#allocation4], 1
    %s6660 = scalar_lea.sflag [#allocation4], 1
    %6661 = vsyncpa %s6660, 1

</llo_original>
